<compile_context>
chip_gen: v7x
topology: tpu7x:2x2x1
jax: 0.10.0
libtpu: 0.0.40
codegen_flags: <defaults>
</compile_context>

<pallas_src>
import functools
import math

import jax
import jax.numpy as jnp
from jax.experimental import pallas as pl
from jax.experimental.pallas import tpu as pltpu

NUM_CLASSES = 2
SEQUENCE_LENGTH = 30
D_MODEL = 64
DIM_FEEDFORWARD = 2048        # nn.TransformerEncoderLayer default
LN_EPS = 1e-5                 # nn.LayerNorm default
NEG_BIAS = -1e9               # additive mask for cross-position attention entries


# ----------------------------------------------------------------------------- utils
def _layer_norm(x, w, b):
    mu = jnp.mean(x, axis=-1, keepdims=True)
    xc = x - mu
    var = jnp.mean(xc * xc, axis=-1, keepdims=True)
    return xc * jax.lax.rsqrt(var + LN_EPS) * w + b


def create_positional_encoding(seq_len, d_model):
    position = jnp.arange(seq_len, dtype=jnp.float32)[:, None]
    div_term = jnp.exp(
        jnp.arange(0, d_model, 2, dtype=jnp.float32) * (-math.log(10000.0) / d_model)
    )
    pe = jnp.zeros((seq_len, d_model), dtype=jnp.float32)
    pe = pe.at[:, 0::2].set(jnp.sin(position * div_term))
    pe = pe.at[:, 1::2].set(jnp.cos(position * div_term))
    return pe


# ----------------------------------------------------------------------------- kernel
def make_kernel(num_heads, num_layers):
    D = D_MODEL
    HD = D // num_heads
    scale = 1.0 / math.sqrt(HD)
    bf16 = jnp.bfloat16

    def kernel(x_ref, pos_ref, bias_ref, pool_ref,
               emb_w_ref, emb_b_ref,
               ipw_ref, ipb_ref, opw_ref, opb_ref,
               l1w_ref, l1b_ref, l2w_ref, l2b_ref,
               n1w_ref, n1b_ref, n2w_ref, n2b_ref,
               out_ref):
        # ---- embedding + positional encoding over the full (RP, F) slab ----
        h = jnp.dot(x_ref[...].astype(bf16), emb_w_ref[...],
                    preferred_element_type=jnp.float32) + emb_b_ref[...]
        h = h + pos_ref[...]                                            # (RP, D) f32

        attn_bias = bias_ref[...]                                       # (RP, RP) f32

        for layer in range(num_layers):
            # --- multi-head self attention (mixes across B within each position) ---
            qkv = jnp.dot(h.astype(bf16), ipw_ref[layer],
                          preferred_element_type=jnp.float32) + ipb_ref[layer]  # (RP, 3D)
            q = qkv[:, :D] * scale                                       # scale Q once
            att = opb_ref[layer]                                         # (1, D) -> broadcasts
            for hh in range(num_heads):
                qh = q[:, hh * HD:(hh + 1) * HD]                         # (RP, HD)
                kh = qkv[:, D + hh * HD:D + (hh + 1) * HD]
                vh = qkv[:, 2 * D + hh * HD:2 * D + (hh + 1) * HD]
                sc = jax.lax.dot_general(
                    qh, kh, (((1,), (1,)), ((), ())),
                    preferred_element_type=jnp.float32)                  # (RP, RP)
                sc = sc + attn_bias                                      # block-diagonal mask
                sc = sc - jnp.max(sc, axis=-1, keepdims=True)
                p = jnp.exp(sc)
                p = p * pl.reciprocal(jnp.sum(p, axis=-1, keepdims=True), approx=True)
                head = jnp.dot(p, vh, preferred_element_type=jnp.float32)  # (RP, HD)
                # fold head straight through its slice of the output projection
                att = att + jnp.dot(head.astype(bf16),
                                    opw_ref[layer, hh * HD:(hh + 1) * HD, :],
                                    preferred_element_type=jnp.float32)
            # dropout layers are identity here (inference semantics)
            h = _layer_norm(h + att, n1w_ref[layer], n1b_ref[layer])

            # --- feed forward ---
            ff = jnp.dot(h.astype(bf16), l1w_ref[layer],
                         preferred_element_type=jnp.float32) + l1b_ref[layer]
            ff = jnp.maximum(ff, 0.0)
            ff = jnp.dot(ff.astype(bf16), l2w_ref[layer],
                         preferred_element_type=jnp.float32) + l2b_ref[layer]
            h = _layer_norm(h + ff, n2w_ref[layer], n2b_ref[layer])

        # ---- mean pool over the sequence via a (B, RP) pooling matrix ----
        out_ref[...] = jnp.dot(pool_ref[...], h, preferred_element_type=jnp.float32)

    return kernel


# ----------------------------------------------------------------------------- wrapper
@functools.partial(jax.jit, static_argnums=(2, 3))
def earthquake_transformer_forward(x, params, num_heads, num_layers):
    # x: (B, S=30, feature_dim), same orientation as the PyTorch usage.
    B, S, F = x.shape
    D = D_MODEL
    R = S * B
    RP = ((R + 7) // 8) * 8                       # sublane-aligned row count
    bf16 = jnp.bfloat16

    # seq-major rows: row r = s*B + b; attention mixes rows sharing the same s.
    x_rows = jnp.transpose(x, (1, 0, 2)).reshape(R, F).astype(jnp.float32)
    x_rows = jnp.pad(x_rows, ((0, RP - R), (0, 0)))
    pos_rows = jnp.broadcast_to(params["pos"][:, None, :], (S, B, D)).reshape(R, D)
    pos_rows = jnp.pad(pos_rows, ((0, RP - R), (0, 0)))

    row = jnp.arange(RP, dtype=jnp.int32)
    # real rows: group = position index; padded rows: unique private group (self-attend only)
    pos_id = jnp.where(row < R, row // B, S + row)
    attn_bias = jnp.where(pos_id[:, None] == pos_id[None, :],
                          0.0, NEG_BIAS).astype(jnp.float32)             # (RP, RP)

    b_id = row % B
    pool = (((jnp.arange(B, dtype=jnp.int32)[:, None] == b_id[None, :])
             & (row[None, :] < R)).astype(jnp.float32) / S)             # (B, RP)

    operands = (
        x_rows, pos_rows, attn_bias, pool,
        params["emb_w_t"].astype(bf16), params["emb_b"],
        params["ipw_t"].astype(bf16), params["ipb"],
        params["opw_t"].astype(bf16), params["opb"],
        params["l1w_t"].astype(bf16), params["l1b"],
        params["l2w_t"].astype(bf16), params["l2b"],
        params["n1w"], params["n1b"],
        params["n2w"], params["n2b"],
    )

    vmem = pl.BlockSpec(memory_space=pltpu.MemorySpace.VMEM)
    pooled = pl.pallas_call(
        make_kernel(num_heads, num_layers),
        out_shape=jax.ShapeDtypeStruct((B, D), jnp.float32),
        in_specs=[vmem] * len(operands),
        out_specs=vmem,
    )(*operands)

    # Final classifier (output width 2) kept in XLA: avoids a masked 2-lane store
    # path in the kernel epilogue (lane-density recommendation).
    return pooled @ params["fc_w_t"] + params["fc_b"][0]


# ----------------------------------------------------------------------------- params
def init_params(key, feature_dim, num_layers):
    D, FF, C, L = D_MODEL, DIM_FEEDFORWARD, NUM_CLASSES, num_layers
    keys = iter(jax.random.split(key, 16))

    def w(shape, scale=0.05):
        return (scale * jax.random.normal(next(keys), shape)).astype(jnp.float32)

    return {
        "pos": create_positional_encoding(SEQUENCE_LENGTH, D),
        # all Linear weights stored pre-transposed to (in, out) so the kernel does x @ W
        "emb_w_t": w((feature_dim, D)),
        "emb_b": w((1, D)),
        "ipw_t": w((L, D, 3 * D)),
        "ipb": w((L, 1, 3 * D)),
        "opw_t": w((L, D, D)),
        "opb": w((L, 1, D)),
        "l1w_t": w((L, D, FF)),
        "l1b": w((L, 1, FF)),
        "l2w_t": w((L, FF, D)),
        "l2b": w((L, 1, D)),
        "n1w": jnp.ones((L, 1, D), jnp.float32),
        "n1b": jnp.zeros((L, 1, D), jnp.float32),
        "n2w": jnp.ones((L, 1, D), jnp.float32),
        "n2b": jnp.zeros((L, 1, D), jnp.float32),
        "fc_w_t": w((D, C)),
        "fc_b": w((1, C)),
    }


# ----------------------------------------------------------------------------- reference
def reference_forward(x, params, num_heads, num_layers):
    # Plain-JAX replica of the exact PyTorch forward (batch_first=False semantics).
    D = D_MODEL
    HD = D // num_heads
    B, S, F = x.shape
    hp = "highest"
    h = jnp.einsum("bsf,fd->bsd", x, params["emb_w_t"], precision=hp) + params["emb_b"][0]
    h = h + params["pos"][None]                                   # (B, S, D)
    for l in range(num_layers):
        qkv = jnp.einsum("bsd,de->bse", h, params["ipw_t"][l], precision=hp) + params["ipb"][l][0]
        q, k, v = qkv[..., :D], qkv[..., D:2 * D], qkv[..., 2 * D:]
        q = q.reshape(B, S, num_heads, HD)
        k = k.reshape(B, S, num_heads, HD)
        v = v.reshape(B, S, num_heads, HD)
        # attention over axis 0 (B), batched over axis 1 (S) -- batch_first=False
        sc = jnp.einsum("lnhd,mnhd->nhlm", q, k, precision=hp) / math.sqrt(HD)
        p = jax.nn.softmax(sc, axis=-1)
        o = jnp.einsum("nhlm,mnhd->lnhd", p, v, precision=hp).reshape(B, S, D)
        att = jnp.einsum("bsd,de->bse", o, params["opw_t"][l], precision=hp) + params["opb"][l][0]
        h = _layer_norm(h + att, params["n1w"][l][0], params["n1b"][l][0])
        ff = jnp.einsum("bsd,df->bsf", h, params["l1w_t"][l], precision=hp) + params["l1b"][l][0]
        ff = jnp.maximum(ff, 0.0)
        ff = jnp.einsum("bsf,fd->bsd", ff, params["l2w_t"][l], precision=hp) + params["l2b"][l][0]
        h = _layer_norm(h + ff, params["n2w"][l][0], params["n2b"][l][0])
    pooled = jnp.mean(h, axis=1)                                  # mean over seq dim (=dim 1)
    return jnp.einsum("bd,dc->bc", pooled, params["fc_w_t"], precision=hp) + params["fc_b"][0]


# ----------------------------------------------------------------------------- main
if __name__ == "__main__":
    feature_dim, num_heads, num_layers = 8, 4, 2
    batch = 2

    root = jax.random.PRNGKey(0)
    kx, kp = jax.random.split(root)
    x = jax.random.normal(kx, (batch, SEQUENCE_LENGTH, feature_dim), dtype=jnp.float32)
    params = init_params(kp, feature_dim, num_layers)

    out = earthquake_transformer_forward(x, params, num_heads, num_layers)
    out = jax.block_until_ready(out)
    assert out.shape == (batch, NUM_CLASSES) and out.dtype == jnp.float32

    ref = jax.block_until_ready(reference_forward(x, params, num_heads, num_layers))
    # bf16 matmul operands + approx reciprocal in softmax -> slightly looser atol
    assert jnp.allclose(out, ref, rtol=5e-2, atol=2e-2), (out, ref)

    print("KERNEL_OK")
</pallas_src>

<mosaic_0001>
module attributes {stable_mosaic.version = 11 : i64} {
  func.func @kernel(%arg0: memref<64x8xf32, #tpu.memory_space<vmem>>, %arg1: memref<64x64xf32, #tpu.memory_space<vmem>>, %arg2: memref<64x64xf32, #tpu.memory_space<vmem>>, %arg3: memref<2x64xf32, #tpu.memory_space<vmem>>, %arg4: memref<8x64xbf16, #tpu.memory_space<vmem>>, %arg5: memref<1x64xf32, #tpu.memory_space<vmem>>, %arg6: memref<2x64x192xbf16, #tpu.memory_space<vmem>>, %arg7: memref<2x1x192xf32, #tpu.memory_space<vmem>>, %arg8: memref<2x64x64xbf16, #tpu.memory_space<vmem>>, %arg9: memref<2x1x64xf32, #tpu.memory_space<vmem>>, %arg10: memref<2x64x2048xbf16, #tpu.memory_space<vmem>>, %arg11: memref<2x1x2048xf32, #tpu.memory_space<vmem>>, %arg12: memref<2x2048x64xbf16, #tpu.memory_space<vmem>>, %arg13: memref<2x1x64xf32, #tpu.memory_space<vmem>>, %arg14: memref<2x1x64xf32, #tpu.memory_space<vmem>>, %arg15: memref<2x1x64xf32, #tpu.memory_space<vmem>>, %arg16: memref<2x1x64xf32, #tpu.memory_space<vmem>>, %arg17: memref<2x1x64xf32, #tpu.memory_space<vmem>>, %arg18: memref<2x64xf32, #tpu.memory_space<vmem>>) attributes {dimension_semantics = [], scalar_prefetch = 0 : i64, scratch_operands = 0 : i64, tpu.core_type = #tpu.core_type<tc>} {
    %c0 = arith.constant 0 : index
    %c0_0 = arith.constant 0 : index
    %0 = vector.load %arg0[%c0, %c0_0] : memref<64x8xf32, #tpu.memory_space<vmem>>, vector<64x8xf32>
    %1 = arith.truncf %0 : vector<64x8xf32> to vector<64x8xbf16>
    %c0_1 = arith.constant 0 : index
    %c0_2 = arith.constant 0 : index
    %2 = vector.load %arg4[%c0_1, %c0_2] : memref<8x64xbf16, #tpu.memory_space<vmem>>, vector<8x64xbf16>
    %cst = arith.constant dense<0.000000e+00> : vector<64x64xf32>
    %3 = tpu.matmul %1, %2, %cst {dimension_numbers = #tpu.dot_dimension_numbers<[1], [0], [0], [1], [0, 0, 1, 1], [], []>} : vector<64x8xbf16>, vector<8x64xbf16>, vector<64x64xf32> -> vector<64x64xf32>
    %c0_3 = arith.constant 0 : index
    %c0_4 = arith.constant 0 : index
    %4 = vector.load %arg5[%c0_3, %c0_4] : memref<1x64xf32, #tpu.memory_space<vmem>>, vector<1x64xf32>
    %5 = vector.broadcast %4 : vector<1x64xf32> to vector<64x64xf32>
    %6 = arith.addf %3, %5 : vector<64x64xf32>
    %c0_5 = arith.constant 0 : index
    %c0_6 = arith.constant 0 : index
    %7 = vector.load %arg1[%c0_5, %c0_6] : memref<64x64xf32, #tpu.memory_space<vmem>>, vector<64x64xf32>
    %8 = arith.addf %6, %7 : vector<64x64xf32>
    %c0_7 = arith.constant 0 : index
    %c0_8 = arith.constant 0 : index
    %9 = vector.load %arg2[%c0_7, %c0_8] : memref<64x64xf32, #tpu.memory_space<vmem>>, vector<64x64xf32>
    %10 = arith.truncf %8 : vector<64x64xf32> to vector<64x64xbf16>
    %c0_9 = arith.constant 0 : index
    %c0_10 = arith.constant 0 : index
    %c0_11 = arith.constant 0 : index
    %11 = vector.load %arg6[%c0_9, %c0_10, %c0_11] : memref<2x64x192xbf16, #tpu.memory_space<vmem>>, vector<1x64x192xbf16>
    %12 = vector.shape_cast %11 : vector<1x64x192xbf16> to vector<64x192xbf16>
    %cst_12 = arith.constant dense<0.000000e+00> : vector<64x192xf32>
    %13 = tpu.matmul %10, %12, %cst_12 {dimension_numbers = #tpu.dot_dimension_numbers<[1], [0], [0], [1], [0, 0, 1, 1], [], []>} : vector<64x64xbf16>, vector<64x192xbf16>, vector<64x192xf32> -> vector<64x192xf32>
    %c0_13 = arith.constant 0 : index
    %c0_14 = arith.constant 0 : index
    %c0_15 = arith.constant 0 : index
    %14 = vector.load %arg7[%c0_13, %c0_14, %c0_15] : memref<2x1x192xf32, #tpu.memory_space<vmem>>, vector<1x1x192xf32>
    %15 = vector.shape_cast %14 : vector<1x1x192xf32> to vector<1x192xf32>
    %16 = vector.broadcast %15 : vector<1x192xf32> to vector<64x192xf32>
    %17 = arith.addf %13, %16 : vector<64x192xf32>
    %18 = vector.extract_strided_slice %17 {offsets = [0, 0], sizes = [64, 64], strides = [1, 1]} : vector<64x192xf32> to vector<64x64xf32>
    %cst_16 = arith.constant 2.500000e-01 : f32
    %19 = vector.broadcast %cst_16 : f32 to vector<64x64xf32>
    %20 = arith.mulf %18, %19 : vector<64x64xf32>
    %c0_17 = arith.constant 0 : index
    %c0_18 = arith.constant 0 : index
    %c0_19 = arith.constant 0 : index
    %21 = vector.load %arg9[%c0_17, %c0_18, %c0_19] : memref<2x1x64xf32, #tpu.memory_space<vmem>>, vector<1x1x64xf32>
    %22 = vector.shape_cast %21 : vector<1x1x64xf32> to vector<1x64xf32>
    %23 = vector.extract_strided_slice %20 {offsets = [0, 0], sizes = [64, 16], strides = [1, 1]} : vector<64x64xf32> to vector<64x16xf32>
    %24 = vector.extract_strided_slice %17 {offsets = [0, 64], sizes = [64, 16], strides = [1, 1]} : vector<64x192xf32> to vector<64x16xf32>
    %25 = vector.extract_strided_slice %17 {offsets = [0, 128], sizes = [64, 16], strides = [1, 1]} : vector<64x192xf32> to vector<64x16xf32>
    %cst_20 = arith.constant dense<0.000000e+00> : vector<64x64xf32>
    %26 = tpu.matmul %23, %24, %cst_20 {dimension_numbers = #tpu.dot_dimension_numbers<[1], [1], [0], [0], [0, 0, 1, 0], [], []>} : vector<64x16xf32>, vector<64x16xf32>, vector<64x64xf32> -> vector<64x64xf32>
    %27 = arith.addf %26, %9 : vector<64x64xf32>
    %cst_21 = arith.constant dense<0xFF800000> : vector<64xf32>
    %28 = vector.multi_reduction <maximumf>, %27, %cst_21 [1] : vector<64x64xf32> to vector<64xf32>
    %29 = vector.shape_cast %28 : vector<64xf32> to vector<64x1xf32>
    %30 = vector.broadcast %29 : vector<64x1xf32> to vector<64x64xf32>
    %31 = arith.subf %27, %30 : vector<64x64xf32>
    %32 = math.exp %31 : vector<64x64xf32>
    %cst_22 = arith.constant dense<0.000000e+00> : vector<64xf32>
    %33 = vector.multi_reduction <add>, %32, %cst_22 [1] : vector<64x64xf32> to vector<64xf32>
    %34 = vector.shape_cast %33 : vector<64xf32> to vector<64x1xf32>
    %35 = tpu.reciprocal %34 {approx = true} : vector<64x1xf32> -> vector<64x1xf32>
    %36 = vector.broadcast %35 : vector<64x1xf32> to vector<64x64xf32>
    %37 = arith.mulf %32, %36 : vector<64x64xf32>
    %cst_23 = arith.constant dense<0.000000e+00> : vector<64x16xf32>
    %38 = tpu.matmul %37, %25, %cst_23 {dimension_numbers = #tpu.dot_dimension_numbers<[1], [0], [0], [1], [0, 0, 1, 1], [], []>} : vector<64x64xf32>, vector<64x16xf32>, vector<64x16xf32> -> vector<64x16xf32>
    %39 = arith.truncf %38 : vector<64x16xf32> to vector<64x16xbf16>
    %c0_24 = arith.constant 0 : index
    %c0_25 = arith.constant 0 : index
    %c0_26 = arith.constant 0 : index
    %40 = vector.load %arg8[%c0_24, %c0_25, %c0_26] : memref<2x64x64xbf16, #tpu.memory_space<vmem>>, vector<1x16x64xbf16>
    %41 = vector.shape_cast %40 : vector<1x16x64xbf16> to vector<16x64xbf16>
    %cst_27 = arith.constant dense<0.000000e+00> : vector<64x64xf32>
    %42 = tpu.matmul %39, %41, %cst_27 {dimension_numbers = #tpu.dot_dimension_numbers<[1], [0], [0], [1], [0, 0, 1, 1], [], []>} : vector<64x16xbf16>, vector<16x64xbf16>, vector<64x64xf32> -> vector<64x64xf32>
    %43 = vector.broadcast %22 : vector<1x64xf32> to vector<64x64xf32>
    %44 = arith.addf %43, %42 : vector<64x64xf32>
    %45 = vector.extract_strided_slice %20 {offsets = [0, 16], sizes = [64, 16], strides = [1, 1]} : vector<64x64xf32> to vector<64x16xf32>
    %46 = vector.extract_strided_slice %17 {offsets = [0, 80], sizes = [64, 16], strides = [1, 1]} : vector<64x192xf32> to vector<64x16xf32>
    %47 = vector.extract_strided_slice %17 {offsets = [0, 144], sizes = [64, 16], strides = [1, 1]} : vector<64x192xf32> to vector<64x16xf32>
    %cst_28 = arith.constant dense<0.000000e+00> : vector<64x64xf32>
    %48 = tpu.matmul %45, %46, %cst_28 {dimension_numbers = #tpu.dot_dimension_numbers<[1], [1], [0], [0], [0, 0, 1, 0], [], []>} : vector<64x16xf32>, vector<64x16xf32>, vector<64x64xf32> -> vector<64x64xf32>
    %49 = arith.addf %48, %9 : vector<64x64xf32>
    %cst_29 = arith.constant dense<0xFF800000> : vector<64xf32>
    %50 = vector.multi_reduction <maximumf>, %49, %cst_29 [1] : vector<64x64xf32> to vector<64xf32>
    %51 = vector.shape_cast %50 : vector<64xf32> to vector<64x1xf32>
    %52 = vector.broadcast %51 : vector<64x1xf32> to vector<64x64xf32>
    %53 = arith.subf %49, %52 : vector<64x64xf32>
    %54 = math.exp %53 : vector<64x64xf32>
    %cst_30 = arith.constant dense<0.000000e+00> : vector<64xf32>
    %55 = vector.multi_reduction <add>, %54, %cst_30 [1] : vector<64x64xf32> to vector<64xf32>
    %56 = vector.shape_cast %55 : vector<64xf32> to vector<64x1xf32>
    %57 = tpu.reciprocal %56 {approx = true} : vector<64x1xf32> -> vector<64x1xf32>
    %58 = vector.broadcast %57 : vector<64x1xf32> to vector<64x64xf32>
    %59 = arith.mulf %54, %58 : vector<64x64xf32>
    %cst_31 = arith.constant dense<0.000000e+00> : vector<64x16xf32>
    %60 = tpu.matmul %59, %47, %cst_31 {dimension_numbers = #tpu.dot_dimension_numbers<[1], [0], [0], [1], [0, 0, 1, 1], [], []>} : vector<64x64xf32>, vector<64x16xf32>, vector<64x16xf32> -> vector<64x16xf32>
    %61 = arith.truncf %60 : vector<64x16xf32> to vector<64x16xbf16>
    %c0_32 = arith.constant 0 : index
    %c16 = arith.constant 16 : index
    %c0_33 = arith.constant 0 : index
    %62 = vector.load %arg8[%c0_32, %c16, %c0_33] : memref<2x64x64xbf16, #tpu.memory_space<vmem>>, vector<1x16x64xbf16>
    %63 = vector.shape_cast %62 : vector<1x16x64xbf16> to vector<16x64xbf16>
    %cst_34 = arith.constant dense<0.000000e+00> : vector<64x64xf32>
    %64 = tpu.matmul %61, %63, %cst_34 {dimension_numbers = #tpu.dot_dimension_numbers<[1], [0], [0], [1], [0, 0, 1, 1], [], []>} : vector<64x16xbf16>, vector<16x64xbf16>, vector<64x64xf32> -> vector<64x64xf32>
    %65 = arith.addf %44, %64 : vector<64x64xf32>
    %66 = vector.extract_strided_slice %20 {offsets = [0, 32], sizes = [64, 16], strides = [1, 1]} : vector<64x64xf32> to vector<64x16xf32>
    %67 = vector.extract_strided_slice %17 {offsets = [0, 96], sizes = [64, 16], strides = [1, 1]} : vector<64x192xf32> to vector<64x16xf32>
    %68 = vector.extract_strided_slice %17 {offsets = [0, 160], sizes = [64, 16], strides = [1, 1]} : vector<64x192xf32> to vector<64x16xf32>
    %cst_35 = arith.constant dense<0.000000e+00> : vector<64x64xf32>
    %69 = tpu.matmul %66, %67, %cst_35 {dimension_numbers = #tpu.dot_dimension_numbers<[1], [1], [0], [0], [0, 0, 1, 0], [], []>} : vector<64x16xf32>, vector<64x16xf32>, vector<64x64xf32> -> vector<64x64xf32>
    %70 = arith.addf %69, %9 : vector<64x64xf32>
    %cst_36 = arith.constant dense<0xFF800000> : vector<64xf32>
    %71 = vector.multi_reduction <maximumf>, %70, %cst_36 [1] : vector<64x64xf32> to vector<64xf32>
    %72 = vector.shape_cast %71 : vector<64xf32> to vector<64x1xf32>
    %73 = vector.broadcast %72 : vector<64x1xf32> to vector<64x64xf32>
    %74 = arith.subf %70, %73 : vector<64x64xf32>
    %75 = math.exp %74 : vector<64x64xf32>
    %cst_37 = arith.constant dense<0.000000e+00> : vector<64xf32>
    %76 = vector.multi_reduction <add>, %75, %cst_37 [1] : vector<64x64xf32> to vector<64xf32>
    %77 = vector.shape_cast %76 : vector<64xf32> to vector<64x1xf32>
    %78 = tpu.reciprocal %77 {approx = true} : vector<64x1xf32> -> vector<64x1xf32>
    %79 = vector.broadcast %78 : vector<64x1xf32> to vector<64x64xf32>
    %80 = arith.mulf %75, %79 : vector<64x64xf32>
    %cst_38 = arith.constant dense<0.000000e+00> : vector<64x16xf32>
    %81 = tpu.matmul %80, %68, %cst_38 {dimension_numbers = #tpu.dot_dimension_numbers<[1], [0], [0], [1], [0, 0, 1, 1], [], []>} : vector<64x64xf32>, vector<64x16xf32>, vector<64x16xf32> -> vector<64x16xf32>
    %82 = arith.truncf %81 : vector<64x16xf32> to vector<64x16xbf16>
    %c0_39 = arith.constant 0 : index
    %c32 = arith.constant 32 : index
    %c0_40 = arith.constant 0 : index
    %83 = vector.load %arg8[%c0_39, %c32, %c0_40] : memref<2x64x64xbf16, #tpu.memory_space<vmem>>, vector<1x16x64xbf16>
    %84 = vector.shape_cast %83 : vector<1x16x64xbf16> to vector<16x64xbf16>
    %cst_41 = arith.constant dense<0.000000e+00> : vector<64x64xf32>
    %85 = tpu.matmul %82, %84, %cst_41 {dimension_numbers = #tpu.dot_dimension_numbers<[1], [0], [0], [1], [0, 0, 1, 1], [], []>} : vector<64x16xbf16>, vector<16x64xbf16>, vector<64x64xf32> -> vector<64x64xf32>
    %86 = arith.addf %65, %85 : vector<64x64xf32>
    %87 = vector.extract_strided_slice %20 {offsets = [0, 48], sizes = [64, 16], strides = [1, 1]} : vector<64x64xf32> to vector<64x16xf32>
    %88 = vector.extract_strided_slice %17 {offsets = [0, 112], sizes = [64, 16], strides = [1, 1]} : vector<64x192xf32> to vector<64x16xf32>
    %89 = vector.extract_strided_slice %17 {offsets = [0, 176], sizes = [64, 16], strides = [1, 1]} : vector<64x192xf32> to vector<64x16xf32>
    %cst_42 = arith.constant dense<0.000000e+00> : vector<64x64xf32>
    %90 = tpu.matmul %87, %88, %cst_42 {dimension_numbers = #tpu.dot_dimension_numbers<[1], [1], [0], [0], [0, 0, 1, 0], [], []>} : vector<64x16xf32>, vector<64x16xf32>, vector<64x64xf32> -> vector<64x64xf32>
    %91 = arith.addf %90, %9 : vector<64x64xf32>
    %cst_43 = arith.constant dense<0xFF800000> : vector<64xf32>
    %92 = vector.multi_reduction <maximumf>, %91, %cst_43 [1] : vector<64x64xf32> to vector<64xf32>
    %93 = vector.shape_cast %92 : vector<64xf32> to vector<64x1xf32>
    %94 = vector.broadcast %93 : vector<64x1xf32> to vector<64x64xf32>
    %95 = arith.subf %91, %94 : vector<64x64xf32>
    %96 = math.exp %95 : vector<64x64xf32>
    %cst_44 = arith.constant dense<0.000000e+00> : vector<64xf32>
    %97 = vector.multi_reduction <add>, %96, %cst_44 [1] : vector<64x64xf32> to vector<64xf32>
    %98 = vector.shape_cast %97 : vector<64xf32> to vector<64x1xf32>
    %99 = tpu.reciprocal %98 {approx = true} : vector<64x1xf32> -> vector<64x1xf32>
    %100 = vector.broadcast %99 : vector<64x1xf32> to vector<64x64xf32>
    %101 = arith.mulf %96, %100 : vector<64x64xf32>
    %cst_45 = arith.constant dense<0.000000e+00> : vector<64x16xf32>
    %102 = tpu.matmul %101, %89, %cst_45 {dimension_numbers = #tpu.dot_dimension_numbers<[1], [0], [0], [1], [0, 0, 1, 1], [], []>} : vector<64x64xf32>, vector<64x16xf32>, vector<64x16xf32> -> vector<64x16xf32>
    %103 = arith.truncf %102 : vector<64x16xf32> to vector<64x16xbf16>
    %c0_46 = arith.constant 0 : index
    %c48 = arith.constant 48 : index
    %c0_47 = arith.constant 0 : index
    %104 = vector.load %arg8[%c0_46, %c48, %c0_47] : memref<2x64x64xbf16, #tpu.memory_space<vmem>>, vector<1x16x64xbf16>
    %105 = vector.shape_cast %104 : vector<1x16x64xbf16> to vector<16x64xbf16>
    %cst_48 = arith.constant dense<0.000000e+00> : vector<64x64xf32>
    %106 = tpu.matmul %103, %105, %cst_48 {dimension_numbers = #tpu.dot_dimension_numbers<[1], [0], [0], [1], [0, 0, 1, 1], [], []>} : vector<64x16xbf16>, vector<16x64xbf16>, vector<64x64xf32> -> vector<64x64xf32>
    %107 = arith.addf %86, %106 : vector<64x64xf32>
    %108 = arith.addf %8, %107 : vector<64x64xf32>
    %c0_49 = arith.constant 0 : index
    %c0_50 = arith.constant 0 : index
    %c0_51 = arith.constant 0 : index
    %109 = vector.load %arg14[%c0_49, %c0_50, %c0_51] : memref<2x1x64xf32, #tpu.memory_space<vmem>>, vector<1x1x64xf32>
    %110 = vector.shape_cast %109 : vector<1x1x64xf32> to vector<1x64xf32>
    %c0_52 = arith.constant 0 : index
    %c0_53 = arith.constant 0 : index
    %c0_54 = arith.constant 0 : index
    %111 = vector.load %arg15[%c0_52, %c0_53, %c0_54] : memref<2x1x64xf32, #tpu.memory_space<vmem>>, vector<1x1x64xf32>
    %112 = vector.shape_cast %111 : vector<1x1x64xf32> to vector<1x64xf32>
    %cst_55 = arith.constant dense<0.000000e+00> : vector<64xf32>
    %113 = vector.multi_reduction <add>, %108, %cst_55 [1] : vector<64x64xf32> to vector<64xf32>
    %114 = vector.shape_cast %113 : vector<64xf32> to vector<64x1xf32>
    %cst_56 = arith.constant 6.400000e+01 : f32
    %115 = vector.broadcast %cst_56 : f32 to vector<64x1xf32>
    %116 = arith.divf %114, %115 : vector<64x1xf32>
    %117 = vector.broadcast %116 : vector<64x1xf32> to vector<64x64xf32>
    %118 = arith.subf %108, %117 : vector<64x64xf32>
    %119 = arith.mulf %118, %118 : vector<64x64xf32>
    %cst_57 = arith.constant dense<0.000000e+00> : vector<64xf32>
    %120 = vector.multi_reduction <add>, %119, %cst_57 [1] : vector<64x64xf32> to vector<64xf32>
    %121 = vector.shape_cast %120 : vector<64xf32> to vector<64x1xf32>
    %cst_58 = arith.constant 6.400000e+01 : f32
    %122 = vector.broadcast %cst_58 : f32 to vector<64x1xf32>
    %123 = arith.divf %121, %122 : vector<64x1xf32>
    %cst_59 = arith.constant 9.99999974E-6 : f32
    %124 = vector.broadcast %cst_59 : f32 to vector<64x1xf32>
    %125 = arith.addf %123, %124 : vector<64x1xf32>
    %126 = math.rsqrt %125 : vector<64x1xf32>
    %127 = vector.broadcast %126 : vector<64x1xf32> to vector<64x64xf32>
    %128 = arith.mulf %118, %127 : vector<64x64xf32>
    %129 = vector.broadcast %110 : vector<1x64xf32> to vector<64x64xf32>
    %130 = arith.mulf %128, %129 : vector<64x64xf32>
    %131 = vector.broadcast %112 : vector<1x64xf32> to vector<64x64xf32>
    %132 = arith.addf %130, %131 : vector<64x64xf32>
    %133 = arith.truncf %132 : vector<64x64xf32> to vector<64x64xbf16>
    %c0_60 = arith.constant 0 : index
    %c0_61 = arith.constant 0 : index
    %c0_62 = arith.constant 0 : index
    %134 = vector.load %arg10[%c0_60, %c0_61, %c0_62] : memref<2x64x2048xbf16, #tpu.memory_space<vmem>>, vector<1x64x2048xbf16>
    %135 = vector.shape_cast %134 : vector<1x64x2048xbf16> to vector<64x2048xbf16>
    %cst_63 = arith.constant dense<0.000000e+00> : vector<64x2048xf32>
    %136 = tpu.matmul %133, %135, %cst_63 {dimension_numbers = #tpu.dot_dimension_numbers<[1], [0], [0], [1], [0, 0, 1, 1], [], []>} : vector<64x64xbf16>, vector<64x2048xbf16>, vector<64x2048xf32> -> vector<64x2048xf32>
    %c0_64 = arith.constant 0 : index
    %c0_65 = arith.constant 0 : index
    %c0_66 = arith.constant 0 : index
    %137 = vector.load %arg11[%c0_64, %c0_65, %c0_66] : memref<2x1x2048xf32, #tpu.memory_space<vmem>>, vector<1x1x2048xf32>
    %138 = vector.shape_cast %137 : vector<1x1x2048xf32> to vector<1x2048xf32>
    %139 = vector.broadcast %138 : vector<1x2048xf32> to vector<64x2048xf32>
    %140 = arith.addf %136, %139 : vector<64x2048xf32>
    %cst_67 = arith.constant 0.000000e+00 : f32
    %141 = vector.broadcast %cst_67 : f32 to vector<64x2048xf32>
    %142 = arith.maximumf %140, %141 : vector<64x2048xf32>
    %143 = arith.truncf %142 : vector<64x2048xf32> to vector<64x2048xbf16>
    %c0_68 = arith.constant 0 : index
    %c0_69 = arith.constant 0 : index
    %c0_70 = arith.constant 0 : index
    %144 = vector.load %arg12[%c0_68, %c0_69, %c0_70] : memref<2x2048x64xbf16, #tpu.memory_space<vmem>>, vector<1x2048x64xbf16>
    %145 = vector.shape_cast %144 : vector<1x2048x64xbf16> to vector<2048x64xbf16>
    %cst_71 = arith.constant dense<0.000000e+00> : vector<64x64xf32>
    %146 = tpu.matmul %143, %145, %cst_71 {dimension_numbers = #tpu.dot_dimension_numbers<[1], [0], [0], [1], [0, 0, 1, 1], [], []>} : vector<64x2048xbf16>, vector<2048x64xbf16>, vector<64x64xf32> -> vector<64x64xf32>
    %c0_72 = arith.constant 0 : index
    %c0_73 = arith.constant 0 : index
    %c0_74 = arith.constant 0 : index
    %147 = vector.load %arg13[%c0_72, %c0_73, %c0_74] : memref<2x1x64xf32, #tpu.memory_space<vmem>>, vector<1x1x64xf32>
    %148 = vector.shape_cast %147 : vector<1x1x64xf32> to vector<1x64xf32>
    %149 = vector.broadcast %148 : vector<1x64xf32> to vector<64x64xf32>
    %150 = arith.addf %146, %149 : vector<64x64xf32>
    %151 = arith.addf %132, %150 : vector<64x64xf32>
    %c0_75 = arith.constant 0 : index
    %c0_76 = arith.constant 0 : index
    %c0_77 = arith.constant 0 : index
    %152 = vector.load %arg16[%c0_75, %c0_76, %c0_77] : memref<2x1x64xf32, #tpu.memory_space<vmem>>, vector<1x1x64xf32>
    %153 = vector.shape_cast %152 : vector<1x1x64xf32> to vector<1x64xf32>
    %c0_78 = arith.constant 0 : index
    %c0_79 = arith.constant 0 : index
    %c0_80 = arith.constant 0 : index
    %154 = vector.load %arg17[%c0_78, %c0_79, %c0_80] : memref<2x1x64xf32, #tpu.memory_space<vmem>>, vector<1x1x64xf32>
    %155 = vector.shape_cast %154 : vector<1x1x64xf32> to vector<1x64xf32>
    %cst_81 = arith.constant dense<0.000000e+00> : vector<64xf32>
    %156 = vector.multi_reduction <add>, %151, %cst_81 [1] : vector<64x64xf32> to vector<64xf32>
    %157 = vector.shape_cast %156 : vector<64xf32> to vector<64x1xf32>
    %cst_82 = arith.constant 6.400000e+01 : f32
    %158 = vector.broadcast %cst_82 : f32 to vector<64x1xf32>
    %159 = arith.divf %157, %158 : vector<64x1xf32>
    %160 = vector.broadcast %159 : vector<64x1xf32> to vector<64x64xf32>
    %161 = arith.subf %151, %160 : vector<64x64xf32>
    %162 = arith.mulf %161, %161 : vector<64x64xf32>
    %cst_83 = arith.constant dense<0.000000e+00> : vector<64xf32>
    %163 = vector.multi_reduction <add>, %162, %cst_83 [1] : vector<64x64xf32> to vector<64xf32>
    %164 = vector.shape_cast %163 : vector<64xf32> to vector<64x1xf32>
    %cst_84 = arith.constant 6.400000e+01 : f32
    %165 = vector.broadcast %cst_84 : f32 to vector<64x1xf32>
    %166 = arith.divf %164, %165 : vector<64x1xf32>
    %cst_85 = arith.constant 9.99999974E-6 : f32
    %167 = vector.broadcast %cst_85 : f32 to vector<64x1xf32>
    %168 = arith.addf %166, %167 : vector<64x1xf32>
    %169 = math.rsqrt %168 : vector<64x1xf32>
    %170 = vector.broadcast %169 : vector<64x1xf32> to vector<64x64xf32>
    %171 = arith.mulf %161, %170 : vector<64x64xf32>
    %172 = vector.broadcast %153 : vector<1x64xf32> to vector<64x64xf32>
    %173 = arith.mulf %171, %172 : vector<64x64xf32>
    %174 = vector.broadcast %155 : vector<1x64xf32> to vector<64x64xf32>
    %175 = arith.addf %173, %174 : vector<64x64xf32>
    %176 = arith.truncf %175 : vector<64x64xf32> to vector<64x64xbf16>
    %c1 = arith.constant 1 : index
    %c0_86 = arith.constant 0 : index
    %c0_87 = arith.constant 0 : index
    %177 = vector.load %arg6[%c1, %c0_86, %c0_87] : memref<2x64x192xbf16, #tpu.memory_space<vmem>>, vector<1x64x192xbf16>
    %178 = vector.shape_cast %177 : vector<1x64x192xbf16> to vector<64x192xbf16>
    %cst_88 = arith.constant dense<0.000000e+00> : vector<64x192xf32>
    %179 = tpu.matmul %176, %178, %cst_88 {dimension_numbers = #tpu.dot_dimension_numbers<[1], [0], [0], [1], [0, 0, 1, 1], [], []>} : vector<64x64xbf16>, vector<64x192xbf16>, vector<64x192xf32> -> vector<64x192xf32>
    %c1_89 = arith.constant 1 : index
    %c0_90 = arith.constant 0 : index
    %c0_91 = arith.constant 0 : index
    %180 = vector.load %arg7[%c1_89, %c0_90, %c0_91] : memref<2x1x192xf32, #tpu.memory_space<vmem>>, vector<1x1x192xf32>
    %181 = vector.shape_cast %180 : vector<1x1x192xf32> to vector<1x192xf32>
    %182 = vector.broadcast %181 : vector<1x192xf32> to vector<64x192xf32>
    %183 = arith.addf %179, %182 : vector<64x192xf32>
    %184 = vector.extract_strided_slice %183 {offsets = [0, 0], sizes = [64, 64], strides = [1, 1]} : vector<64x192xf32> to vector<64x64xf32>
    %cst_92 = arith.constant 2.500000e-01 : f32
    %185 = vector.broadcast %cst_92 : f32 to vector<64x64xf32>
    %186 = arith.mulf %184, %185 : vector<64x64xf32>
    %c1_93 = arith.constant 1 : index
    %c0_94 = arith.constant 0 : index
    %c0_95 = arith.constant 0 : index
    %187 = vector.load %arg9[%c1_93, %c0_94, %c0_95] : memref<2x1x64xf32, #tpu.memory_space<vmem>>, vector<1x1x64xf32>
    %188 = vector.shape_cast %187 : vector<1x1x64xf32> to vector<1x64xf32>
    %189 = vector.extract_strided_slice %186 {offsets = [0, 0], sizes = [64, 16], strides = [1, 1]} : vector<64x64xf32> to vector<64x16xf32>
    %190 = vector.extract_strided_slice %183 {offsets = [0, 64], sizes = [64, 16], strides = [1, 1]} : vector<64x192xf32> to vector<64x16xf32>
    %191 = vector.extract_strided_slice %183 {offsets = [0, 128], sizes = [64, 16], strides = [1, 1]} : vector<64x192xf32> to vector<64x16xf32>
    %cst_96 = arith.constant dense<0.000000e+00> : vector<64x64xf32>
    %192 = tpu.matmul %189, %190, %cst_96 {dimension_numbers = #tpu.dot_dimension_numbers<[1], [1], [0], [0], [0, 0, 1, 0], [], []>} : vector<64x16xf32>, vector<64x16xf32>, vector<64x64xf32> -> vector<64x64xf32>
    %193 = arith.addf %192, %9 : vector<64x64xf32>
    %cst_97 = arith.constant dense<0xFF800000> : vector<64xf32>
    %194 = vector.multi_reduction <maximumf>, %193, %cst_97 [1] : vector<64x64xf32> to vector<64xf32>
    %195 = vector.shape_cast %194 : vector<64xf32> to vector<64x1xf32>
    %196 = vector.broadcast %195 : vector<64x1xf32> to vector<64x64xf32>
    %197 = arith.subf %193, %196 : vector<64x64xf32>
    %198 = math.exp %197 : vector<64x64xf32>
    %cst_98 = arith.constant dense<0.000000e+00> : vector<64xf32>
    %199 = vector.multi_reduction <add>, %198, %cst_98 [1] : vector<64x64xf32> to vector<64xf32>
    %200 = vector.shape_cast %199 : vector<64xf32> to vector<64x1xf32>
    %201 = tpu.reciprocal %200 {approx = true} : vector<64x1xf32> -> vector<64x1xf32>
    %202 = vector.broadcast %201 : vector<64x1xf32> to vector<64x64xf32>
    %203 = arith.mulf %198, %202 : vector<64x64xf32>
    %cst_99 = arith.constant dense<0.000000e+00> : vector<64x16xf32>
    %204 = tpu.matmul %203, %191, %cst_99 {dimension_numbers = #tpu.dot_dimension_numbers<[1], [0], [0], [1], [0, 0, 1, 1], [], []>} : vector<64x64xf32>, vector<64x16xf32>, vector<64x16xf32> -> vector<64x16xf32>
    %205 = arith.truncf %204 : vector<64x16xf32> to vector<64x16xbf16>
    %c1_100 = arith.constant 1 : index
    %c0_101 = arith.constant 0 : index
    %c0_102 = arith.constant 0 : index
    %206 = vector.load %arg8[%c1_100, %c0_101, %c0_102] : memref<2x64x64xbf16, #tpu.memory_space<vmem>>, vector<1x16x64xbf16>
    %207 = vector.shape_cast %206 : vector<1x16x64xbf16> to vector<16x64xbf16>
    %cst_103 = arith.constant dense<0.000000e+00> : vector<64x64xf32>
    %208 = tpu.matmul %205, %207, %cst_103 {dimension_numbers = #tpu.dot_dimension_numbers<[1], [0], [0], [1], [0, 0, 1, 1], [], []>} : vector<64x16xbf16>, vector<16x64xbf16>, vector<64x64xf32> -> vector<64x64xf32>
    %209 = vector.broadcast %188 : vector<1x64xf32> to vector<64x64xf32>
    %210 = arith.addf %209, %208 : vector<64x64xf32>
    %211 = vector.extract_strided_slice %186 {offsets = [0, 16], sizes = [64, 16], strides = [1, 1]} : vector<64x64xf32> to vector<64x16xf32>
    %212 = vector.extract_strided_slice %183 {offsets = [0, 80], sizes = [64, 16], strides = [1, 1]} : vector<64x192xf32> to vector<64x16xf32>
    %213 = vector.extract_strided_slice %183 {offsets = [0, 144], sizes = [64, 16], strides = [1, 1]} : vector<64x192xf32> to vector<64x16xf32>
    %cst_104 = arith.constant dense<0.000000e+00> : vector<64x64xf32>
    %214 = tpu.matmul %211, %212, %cst_104 {dimension_numbers = #tpu.dot_dimension_numbers<[1], [1], [0], [0], [0, 0, 1, 0], [], []>} : vector<64x16xf32>, vector<64x16xf32>, vector<64x64xf32> -> vector<64x64xf32>
    %215 = arith.addf %214, %9 : vector<64x64xf32>
    %cst_105 = arith.constant dense<0xFF800000> : vector<64xf32>
    %216 = vector.multi_reduction <maximumf>, %215, %cst_105 [1] : vector<64x64xf32> to vector<64xf32>
    %217 = vector.shape_cast %216 : vector<64xf32> to vector<64x1xf32>
    %218 = vector.broadcast %217 : vector<64x1xf32> to vector<64x64xf32>
    %219 = arith.subf %215, %218 : vector<64x64xf32>
    %220 = math.exp %219 : vector<64x64xf32>
    %cst_106 = arith.constant dense<0.000000e+00> : vector<64xf32>
    %221 = vector.multi_reduction <add>, %220, %cst_106 [1] : vector<64x64xf32> to vector<64xf32>
    %222 = vector.shape_cast %221 : vector<64xf32> to vector<64x1xf32>
    %223 = tpu.reciprocal %222 {approx = true} : vector<64x1xf32> -> vector<64x1xf32>
    %224 = vector.broadcast %223 : vector<64x1xf32> to vector<64x64xf32>
    %225 = arith.mulf %220, %224 : vector<64x64xf32>
    %cst_107 = arith.constant dense<0.000000e+00> : vector<64x16xf32>
    %226 = tpu.matmul %225, %213, %cst_107 {dimension_numbers = #tpu.dot_dimension_numbers<[1], [0], [0], [1], [0, 0, 1, 1], [], []>} : vector<64x64xf32>, vector<64x16xf32>, vector<64x16xf32> -> vector<64x16xf32>
    %227 = arith.truncf %226 : vector<64x16xf32> to vector<64x16xbf16>
    %c1_108 = arith.constant 1 : index
    %c16_109 = arith.constant 16 : index
    %c0_110 = arith.constant 0 : index
    %228 = vector.load %arg8[%c1_108, %c16_109, %c0_110] : memref<2x64x64xbf16, #tpu.memory_space<vmem>>, vector<1x16x64xbf16>
    %229 = vector.shape_cast %228 : vector<1x16x64xbf16> to vector<16x64xbf16>
    %cst_111 = arith.constant dense<0.000000e+00> : vector<64x64xf32>
    %230 = tpu.matmul %227, %229, %cst_111 {dimension_numbers = #tpu.dot_dimension_numbers<[1], [0], [0], [1], [0, 0, 1, 1], [], []>} : vector<64x16xbf16>, vector<16x64xbf16>, vector<64x64xf32> -> vector<64x64xf32>
    %231 = arith.addf %210, %230 : vector<64x64xf32>
    %232 = vector.extract_strided_slice %186 {offsets = [0, 32], sizes = [64, 16], strides = [1, 1]} : vector<64x64xf32> to vector<64x16xf32>
    %233 = vector.extract_strided_slice %183 {offsets = [0, 96], sizes = [64, 16], strides = [1, 1]} : vector<64x192xf32> to vector<64x16xf32>
    %234 = vector.extract_strided_slice %183 {offsets = [0, 160], sizes = [64, 16], strides = [1, 1]} : vector<64x192xf32> to vector<64x16xf32>
    %cst_112 = arith.constant dense<0.000000e+00> : vector<64x64xf32>
    %235 = tpu.matmul %232, %233, %cst_112 {dimension_numbers = #tpu.dot_dimension_numbers<[1], [1], [0], [0], [0, 0, 1, 0], [], []>} : vector<64x16xf32>, vector<64x16xf32>, vector<64x64xf32> -> vector<64x64xf32>
    %236 = arith.addf %235, %9 : vector<64x64xf32>
    %cst_113 = arith.constant dense<0xFF800000> : vector<64xf32>
    %237 = vector.multi_reduction <maximumf>, %236, %cst_113 [1] : vector<64x64xf32> to vector<64xf32>
    %238 = vector.shape_cast %237 : vector<64xf32> to vector<64x1xf32>
    %239 = vector.broadcast %238 : vector<64x1xf32> to vector<64x64xf32>
    %240 = arith.subf %236, %239 : vector<64x64xf32>
    %241 = math.exp %240 : vector<64x64xf32>
    %cst_114 = arith.constant dense<0.000000e+00> : vector<64xf32>
    %242 = vector.multi_reduction <add>, %241, %cst_114 [1] : vector<64x64xf32> to vector<64xf32>
    %243 = vector.shape_cast %242 : vector<64xf32> to vector<64x1xf32>
    %244 = tpu.reciprocal %243 {approx = true} : vector<64x1xf32> -> vector<64x1xf32>
    %245 = vector.broadcast %244 : vector<64x1xf32> to vector<64x64xf32>
    %246 = arith.mulf %241, %245 : vector<64x64xf32>
    %cst_115 = arith.constant dense<0.000000e+00> : vector<64x16xf32>
    %247 = tpu.matmul %246, %234, %cst_115 {dimension_numbers = #tpu.dot_dimension_numbers<[1], [0], [0], [1], [0, 0, 1, 1], [], []>} : vector<64x64xf32>, vector<64x16xf32>, vector<64x16xf32> -> vector<64x16xf32>
    %248 = arith.truncf %247 : vector<64x16xf32> to vector<64x16xbf16>
    %c1_116 = arith.constant 1 : index
    %c32_117 = arith.constant 32 : index
    %c0_118 = arith.constant 0 : index
    %249 = vector.load %arg8[%c1_116, %c32_117, %c0_118] : memref<2x64x64xbf16, #tpu.memory_space<vmem>>, vector<1x16x64xbf16>
    %250 = vector.shape_cast %249 : vector<1x16x64xbf16> to vector<16x64xbf16>
    %cst_119 = arith.constant dense<0.000000e+00> : vector<64x64xf32>
    %251 = tpu.matmul %248, %250, %cst_119 {dimension_numbers = #tpu.dot_dimension_numbers<[1], [0], [0], [1], [0, 0, 1, 1], [], []>} : vector<64x16xbf16>, vector<16x64xbf16>, vector<64x64xf32> -> vector<64x64xf32>
    %252 = arith.addf %231, %251 : vector<64x64xf32>
    %253 = vector.extract_strided_slice %186 {offsets = [0, 48], sizes = [64, 16], strides = [1, 1]} : vector<64x64xf32> to vector<64x16xf32>
    %254 = vector.extract_strided_slice %183 {offsets = [0, 112], sizes = [64, 16], strides = [1, 1]} : vector<64x192xf32> to vector<64x16xf32>
    %255 = vector.extract_strided_slice %183 {offsets = [0, 176], sizes = [64, 16], strides = [1, 1]} : vector<64x192xf32> to vector<64x16xf32>
    %cst_120 = arith.constant dense<0.000000e+00> : vector<64x64xf32>
    %256 = tpu.matmul %253, %254, %cst_120 {dimension_numbers = #tpu.dot_dimension_numbers<[1], [1], [0], [0], [0, 0, 1, 0], [], []>} : vector<64x16xf32>, vector<64x16xf32>, vector<64x64xf32> -> vector<64x64xf32>
    %257 = arith.addf %256, %9 : vector<64x64xf32>
    %cst_121 = arith.constant dense<0xFF800000> : vector<64xf32>
    %258 = vector.multi_reduction <maximumf>, %257, %cst_121 [1] : vector<64x64xf32> to vector<64xf32>
    %259 = vector.shape_cast %258 : vector<64xf32> to vector<64x1xf32>
    %260 = vector.broadcast %259 : vector<64x1xf32> to vector<64x64xf32>
    %261 = arith.subf %257, %260 : vector<64x64xf32>
    %262 = math.exp %261 : vector<64x64xf32>
    %cst_122 = arith.constant dense<0.000000e+00> : vector<64xf32>
    %263 = vector.multi_reduction <add>, %262, %cst_122 [1] : vector<64x64xf32> to vector<64xf32>
    %264 = vector.shape_cast %263 : vector<64xf32> to vector<64x1xf32>
    %265 = tpu.reciprocal %264 {approx = true} : vector<64x1xf32> -> vector<64x1xf32>
    %266 = vector.broadcast %265 : vector<64x1xf32> to vector<64x64xf32>
    %267 = arith.mulf %262, %266 : vector<64x64xf32>
    %cst_123 = arith.constant dense<0.000000e+00> : vector<64x16xf32>
    %268 = tpu.matmul %267, %255, %cst_123 {dimension_numbers = #tpu.dot_dimension_numbers<[1], [0], [0], [1], [0, 0, 1, 1], [], []>} : vector<64x64xf32>, vector<64x16xf32>, vector<64x16xf32> -> vector<64x16xf32>
    %269 = arith.truncf %268 : vector<64x16xf32> to vector<64x16xbf16>
    %c1_124 = arith.constant 1 : index
    %c48_125 = arith.constant 48 : index
    %c0_126 = arith.constant 0 : index
    %270 = vector.load %arg8[%c1_124, %c48_125, %c0_126] : memref<2x64x64xbf16, #tpu.memory_space<vmem>>, vector<1x16x64xbf16>
    %271 = vector.shape_cast %270 : vector<1x16x64xbf16> to vector<16x64xbf16>
    %cst_127 = arith.constant dense<0.000000e+00> : vector<64x64xf32>
    %272 = tpu.matmul %269, %271, %cst_127 {dimension_numbers = #tpu.dot_dimension_numbers<[1], [0], [0], [1], [0, 0, 1, 1], [], []>} : vector<64x16xbf16>, vector<16x64xbf16>, vector<64x64xf32> -> vector<64x64xf32>
    %273 = arith.addf %252, %272 : vector<64x64xf32>
    %274 = arith.addf %175, %273 : vector<64x64xf32>
    %c1_128 = arith.constant 1 : index
    %c0_129 = arith.constant 0 : index
    %c0_130 = arith.constant 0 : index
    %275 = vector.load %arg14[%c1_128, %c0_129, %c0_130] : memref<2x1x64xf32, #tpu.memory_space<vmem>>, vector<1x1x64xf32>
    %276 = vector.shape_cast %275 : vector<1x1x64xf32> to vector<1x64xf32>
    %c1_131 = arith.constant 1 : index
    %c0_132 = arith.constant 0 : index
    %c0_133 = arith.constant 0 : index
    %277 = vector.load %arg15[%c1_131, %c0_132, %c0_133] : memref<2x1x64xf32, #tpu.memory_space<vmem>>, vector<1x1x64xf32>
    %278 = vector.shape_cast %277 : vector<1x1x64xf32> to vector<1x64xf32>
    %cst_134 = arith.constant dense<0.000000e+00> : vector<64xf32>
    %279 = vector.multi_reduction <add>, %274, %cst_134 [1] : vector<64x64xf32> to vector<64xf32>
    %280 = vector.shape_cast %279 : vector<64xf32> to vector<64x1xf32>
    %cst_135 = arith.constant 6.400000e+01 : f32
    %281 = vector.broadcast %cst_135 : f32 to vector<64x1xf32>
    %282 = arith.divf %280, %281 : vector<64x1xf32>
    %283 = vector.broadcast %282 : vector<64x1xf32> to vector<64x64xf32>
    %284 = arith.subf %274, %283 : vector<64x64xf32>
    %285 = arith.mulf %284, %284 : vector<64x64xf32>
    %cst_136 = arith.constant dense<0.000000e+00> : vector<64xf32>
    %286 = vector.multi_reduction <add>, %285, %cst_136 [1] : vector<64x64xf32> to vector<64xf32>
    %287 = vector.shape_cast %286 : vector<64xf32> to vector<64x1xf32>
    %cst_137 = arith.constant 6.400000e+01 : f32
    %288 = vector.broadcast %cst_137 : f32 to vector<64x1xf32>
    %289 = arith.divf %287, %288 : vector<64x1xf32>
    %cst_138 = arith.constant 9.99999974E-6 : f32
    %290 = vector.broadcast %cst_138 : f32 to vector<64x1xf32>
    %291 = arith.addf %289, %290 : vector<64x1xf32>
    %292 = math.rsqrt %291 : vector<64x1xf32>
    %293 = vector.broadcast %292 : vector<64x1xf32> to vector<64x64xf32>
    %294 = arith.mulf %284, %293 : vector<64x64xf32>
    %295 = vector.broadcast %276 : vector<1x64xf32> to vector<64x64xf32>
    %296 = arith.mulf %294, %295 : vector<64x64xf32>
    %297 = vector.broadcast %278 : vector<1x64xf32> to vector<64x64xf32>
    %298 = arith.addf %296, %297 : vector<64x64xf32>
    %299 = arith.truncf %298 : vector<64x64xf32> to vector<64x64xbf16>
    %c1_139 = arith.constant 1 : index
    %c0_140 = arith.constant 0 : index
    %c0_141 = arith.constant 0 : index
    %300 = vector.load %arg10[%c1_139, %c0_140, %c0_141] : memref<2x64x2048xbf16, #tpu.memory_space<vmem>>, vector<1x64x2048xbf16>
    %301 = vector.shape_cast %300 : vector<1x64x2048xbf16> to vector<64x2048xbf16>
    %cst_142 = arith.constant dense<0.000000e+00> : vector<64x2048xf32>
    %302 = tpu.matmul %299, %301, %cst_142 {dimension_numbers = #tpu.dot_dimension_numbers<[1], [0], [0], [1], [0, 0, 1, 1], [], []>} : vector<64x64xbf16>, vector<64x2048xbf16>, vector<64x2048xf32> -> vector<64x2048xf32>
    %c1_143 = arith.constant 1 : index
    %c0_144 = arith.constant 0 : index
    %c0_145 = arith.constant 0 : index
    %303 = vector.load %arg11[%c1_143, %c0_144, %c0_145] : memref<2x1x2048xf32, #tpu.memory_space<vmem>>, vector<1x1x2048xf32>
    %304 = vector.shape_cast %303 : vector<1x1x2048xf32> to vector<1x2048xf32>
    %305 = vector.broadcast %304 : vector<1x2048xf32> to vector<64x2048xf32>
    %306 = arith.addf %302, %305 : vector<64x2048xf32>
    %cst_146 = arith.constant 0.000000e+00 : f32
    %307 = vector.broadcast %cst_146 : f32 to vector<64x2048xf32>
    %308 = arith.maximumf %306, %307 : vector<64x2048xf32>
    %309 = arith.truncf %308 : vector<64x2048xf32> to vector<64x2048xbf16>
    %c1_147 = arith.constant 1 : index
    %c0_148 = arith.constant 0 : index
    %c0_149 = arith.constant 0 : index
    %310 = vector.load %arg12[%c1_147, %c0_148, %c0_149] : memref<2x2048x64xbf16, #tpu.memory_space<vmem>>, vector<1x2048x64xbf16>
    %311 = vector.shape_cast %310 : vector<1x2048x64xbf16> to vector<2048x64xbf16>
    %cst_150 = arith.constant dense<0.000000e+00> : vector<64x64xf32>
    %312 = tpu.matmul %309, %311, %cst_150 {dimension_numbers = #tpu.dot_dimension_numbers<[1], [0], [0], [1], [0, 0, 1, 1], [], []>} : vector<64x2048xbf16>, vector<2048x64xbf16>, vector<64x64xf32> -> vector<64x64xf32>
    %c1_151 = arith.constant 1 : index
    %c0_152 = arith.constant 0 : index
    %c0_153 = arith.constant 0 : index
    %313 = vector.load %arg13[%c1_151, %c0_152, %c0_153] : memref<2x1x64xf32, #tpu.memory_space<vmem>>, vector<1x1x64xf32>
    %314 = vector.shape_cast %313 : vector<1x1x64xf32> to vector<1x64xf32>
    %315 = vector.broadcast %314 : vector<1x64xf32> to vector<64x64xf32>
    %316 = arith.addf %312, %315 : vector<64x64xf32>
    %317 = arith.addf %298, %316 : vector<64x64xf32>
    %c1_154 = arith.constant 1 : index
    %c0_155 = arith.constant 0 : index
    %c0_156 = arith.constant 0 : index
    %318 = vector.load %arg16[%c1_154, %c0_155, %c0_156] : memref<2x1x64xf32, #tpu.memory_space<vmem>>, vector<1x1x64xf32>
    %319 = vector.shape_cast %318 : vector<1x1x64xf32> to vector<1x64xf32>
    %c1_157 = arith.constant 1 : index
    %c0_158 = arith.constant 0 : index
    %c0_159 = arith.constant 0 : index
    %320 = vector.load %arg17[%c1_157, %c0_158, %c0_159] : memref<2x1x64xf32, #tpu.memory_space<vmem>>, vector<1x1x64xf32>
    %321 = vector.shape_cast %320 : vector<1x1x64xf32> to vector<1x64xf32>
    %cst_160 = arith.constant dense<0.000000e+00> : vector<64xf32>
    %322 = vector.multi_reduction <add>, %317, %cst_160 [1] : vector<64x64xf32> to vector<64xf32>
    %323 = vector.shape_cast %322 : vector<64xf32> to vector<64x1xf32>
    %cst_161 = arith.constant 6.400000e+01 : f32
    %324 = vector.broadcast %cst_161 : f32 to vector<64x1xf32>
    %325 = arith.divf %323, %324 : vector<64x1xf32>
    %326 = vector.broadcast %325 : vector<64x1xf32> to vector<64x64xf32>
    %327 = arith.subf %317, %326 : vector<64x64xf32>
    %328 = arith.mulf %327, %327 : vector<64x64xf32>
    %cst_162 = arith.constant dense<0.000000e+00> : vector<64xf32>
    %329 = vector.multi_reduction <add>, %328, %cst_162 [1] : vector<64x64xf32> to vector<64xf32>
    %330 = vector.shape_cast %329 : vector<64xf32> to vector<64x1xf32>
    %cst_163 = arith.constant 6.400000e+01 : f32
    %331 = vector.broadcast %cst_163 : f32 to vector<64x1xf32>
    %332 = arith.divf %330, %331 : vector<64x1xf32>
    %cst_164 = arith.constant 9.99999974E-6 : f32
    %333 = vector.broadcast %cst_164 : f32 to vector<64x1xf32>
    %334 = arith.addf %332, %333 : vector<64x1xf32>
    %335 = math.rsqrt %334 : vector<64x1xf32>
    %336 = vector.broadcast %335 : vector<64x1xf32> to vector<64x64xf32>
    %337 = arith.mulf %327, %336 : vector<64x64xf32>
    %338 = vector.broadcast %319 : vector<1x64xf32> to vector<64x64xf32>
    %339 = arith.mulf %337, %338 : vector<64x64xf32>
    %340 = vector.broadcast %321 : vector<1x64xf32> to vector<64x64xf32>
    %341 = arith.addf %339, %340 : vector<64x64xf32>
    %c0_165 = arith.constant 0 : index
    %c0_166 = arith.constant 0 : index
    %342 = vector.load %arg3[%c0_165, %c0_166] : memref<2x64xf32, #tpu.memory_space<vmem>>, vector<2x64xf32>
    %cst_167 = arith.constant dense<0.000000e+00> : vector<2x64xf32>
    %343 = tpu.matmul %342, %341, %cst_167 {dimension_numbers = #tpu.dot_dimension_numbers<[1], [0], [0], [1], [0, 0, 1, 1], [], []>} : vector<2x64xf32>, vector<64x64xf32>, vector<2x64xf32> -> vector<2x64xf32>
    %c0_168 = arith.constant 0 : index
    %c0_169 = arith.constant 0 : index
    %344 = vector.load %arg18[%c0_168, %c0_169] : memref<2x64xf32, #tpu.memory_space<vmem>>, vector<2x64xf32>
    tpu.vector_store %arg18[%c0_168, %c0_169], %343 {strides = array<i32>} : memref<2x64xf32, #tpu.memory_space<vmem>>, vector<2x64xf32>,
    return
  }
}

</mosaic_0001>

<llo_original>
// kernel: earthquake_transformer_forward.1
$region0: #{earthquake_transformer_forward.1}
  #allocation0 [shape = 'u32[]', space=smem, size = 0x4, offset = 0x4, fixed_abs, tag = 'smem constant byte address 0x4 - core index']
  #allocation1 [shape = 'u32[144,128]{1,0:T(1,128)}', space=vmem, size = 0x12000, scoped, tag = 'internal scratch']
  %s0 = inlined_call_operand.vmem [shape: f32[64,8], index: 0, kind: input, shape index: {}]
  %s1 = inlined_call_operand.vmem [shape: f32[64,64], index: 1, kind: input, shape index: {}]
  %s2 = inlined_call_operand.vmem [shape: f32[64,64], index: 2, kind: input, shape index: {}]
  %s3 = inlined_call_operand.vmem [shape: f32[2,64], index: 3, kind: input, shape index: {}]
  %s4 = inlined_call_operand.vmem [shape: bf16[8,64], index: 4, kind: input, shape index: {}]
  %s5 = inlined_call_operand.vmem [shape: f32[1,64], index: 5, kind: input, shape index: {}]
  %s6 = inlined_call_operand.vmem [shape: bf16[2,64,192], index: 6, kind: input, shape index: {}]
  %s7 = inlined_call_operand.vmem [shape: f32[2,1,192], index: 7, kind: input, shape index: {}]
  %s8 = inlined_call_operand.vmem [shape: bf16[2,64,64], index: 8, kind: input, shape index: {}]
  %s9 = inlined_call_operand.vmem [shape: f32[2,1,64], index: 9, kind: input, shape index: {}]
  %s10 = inlined_call_operand.vmem [shape: bf16[2,64,2048], index: 10, kind: input, shape index: {}]
  %s11 = inlined_call_operand.vmem [shape: f32[2,1,2048], index: 11, kind: input, shape index: {}]
  %s12 = inlined_call_operand.vmem [shape: bf16[2,2048,64], index: 12, kind: input, shape index: {}]
  %s13 = inlined_call_operand.vmem [shape: f32[2,1,64], index: 13, kind: input, shape index: {}]
  %s14 = inlined_call_operand.vmem [shape: f32[2,1,64], index: 14, kind: input, shape index: {}]
  %s15 = inlined_call_operand.vmem [shape: f32[2,1,64], index: 15, kind: input, shape index: {}]
  %s16 = inlined_call_operand.vmem [shape: f32[2,1,64], index: 16, kind: input, shape index: {}]
  %s17 = inlined_call_operand.vmem [shape: f32[2,1,64], index: 17, kind: input, shape index: {}]
  %s18 = inlined_call_operand.vmem [shape: f32[2,64], index: 18, kind: output, shape index: {}]
  %s19 = sld [smem:[#allocation0]]
  $region82: #{earthquake_transformer_forward.1} parent=0
    _
  %s21 = ssub.s32 1, %s19
  %s22 = scalar_select 0, %s21, %s19
  // Predicated region
  $region2: #{earthquake_transformer_forward.1} parent=0 // pred_check
    _
  $region3: #{earthquake_transformer_forward.1} parent=0 // pred_check_branch
    %24 = sbr.rel (0) target = $region5
  $region4: #{earthquake_transformer_forward.1} parent=0 // pred_region
    _
  $region5: #{earthquake_transformer_forward.1} parent=0 // pred_fallthru
    _
  // Predicated region
  $region6: #{earthquake_transformer_forward.1} parent=0 // pred_check
    _
  $region7: #{earthquake_transformer_forward.1} parent=0 // pred_check_branch
    %26 = sbr.rel (0) target = $region9
  $region8: #{earthquake_transformer_forward.1} parent=0 // pred_region
    _
  $region9: #{earthquake_transformer_forward.1} parent=0 // pred_fallthru
    _
  // Predicated region
  $region10: #{earthquake_transformer_forward.1} parent=0 // pred_check
    _
  $region11: #{earthquake_transformer_forward.1} parent=0 // pred_check_branch
    %28 = sbr.rel (0) target = $region13
  $region12: #{earthquake_transformer_forward.1} parent=0 // pred_region
    _
  $region13: #{earthquake_transformer_forward.1} parent=0 // pred_fallthru
    _
  // Predicated region
  $region14: #{earthquake_transformer_forward.1} parent=0 // pred_check
    _
  $region15: #{earthquake_transformer_forward.1} parent=0 // pred_check_branch
    %30 = sbr.rel (0) target = $region17
  $region16: #{earthquake_transformer_forward.1} parent=0 // pred_region
    _
  $region17: #{earthquake_transformer_forward.1} parent=0 // pred_fallthru
    _
  // Predicated region
  $region18: #{earthquake_transformer_forward.1} parent=0 // pred_check
    _
  $region19: #{earthquake_transformer_forward.1} parent=0 // pred_check_branch
    %32 = sbr.rel (0) target = $region21
  $region20: #{earthquake_transformer_forward.1} parent=0 // pred_region
    _
  $region21: #{earthquake_transformer_forward.1} parent=0 // pred_fallthru
    _
  // Predicated region
  $region22: #{earthquake_transformer_forward.1} parent=0 // pred_check
    _
  $region23: #{earthquake_transformer_forward.1} parent=0 // pred_check_branch
    %34 = sbr.rel (0) target = $region25
  $region24: #{earthquake_transformer_forward.1} parent=0 // pred_region
    _
  $region25: #{earthquake_transformer_forward.1} parent=0 // pred_fallthru
    _
  // Predicated region
  $region26: #{earthquake_transformer_forward.1} parent=0 // pred_check
    _
  $region27: #{earthquake_transformer_forward.1} parent=0 // pred_check_branch
    %36 = sbr.rel (0) target = $region29
  $region28: #{earthquake_transformer_forward.1} parent=0 // pred_region
    _
  $region29: #{earthquake_transformer_forward.1} parent=0 // pred_fallthru
    _
  // Predicated region
  $region30: #{earthquake_transformer_forward.1} parent=0 // pred_check
    _
  $region31: #{earthquake_transformer_forward.1} parent=0 // pred_check_branch
    %38 = sbr.rel (0) target = $region33
  $region32: #{earthquake_transformer_forward.1} parent=0 // pred_region
    _
  $region33: #{earthquake_transformer_forward.1} parent=0 // pred_fallthru
    _
  // Predicated region
  $region34: #{earthquake_transformer_forward.1} parent=0 // pred_check
    _
  $region35: #{earthquake_transformer_forward.1} parent=0 // pred_check_branch
    %40 = sbr.rel (0) target = $region37
  $region36: #{earthquake_transformer_forward.1} parent=0 // pred_region
    _
  $region37: #{earthquake_transformer_forward.1} parent=0 // pred_fallthru
    _
  // Predicated region
  $region38: #{earthquake_transformer_forward.1} parent=0 // pred_check
    _
  $region39: #{earthquake_transformer_forward.1} parent=0 // pred_check_branch
    %42 = sbr.rel (0) target = $region41
  $region40: #{earthquake_transformer_forward.1} parent=0 // pred_region
    _
  $region41: #{earthquake_transformer_forward.1} parent=0 // pred_fallthru
    _
  // Predicated region
  $region42: #{earthquake_transformer_forward.1} parent=0 // pred_check
    _
  $region43: #{earthquake_transformer_forward.1} parent=0 // pred_check_branch
    %44 = sbr.rel (0) target = $region45
  $region44: #{earthquake_transformer_forward.1} parent=0 // pred_region
    _
  $region45: #{earthquake_transformer_forward.1} parent=0 // pred_fallthru
    _
  // Predicated region
  $region46: #{earthquake_transformer_forward.1} parent=0 // pred_check
    _
  $region47: #{earthquake_transformer_forward.1} parent=0 // pred_check_branch
    %46 = sbr.rel (0) target = $region49
  $region48: #{earthquake_transformer_forward.1} parent=0 // pred_region
    _
  $region49: #{earthquake_transformer_forward.1} parent=0 // pred_fallthru
    _
  // Predicated region
  $region50: #{earthquake_transformer_forward.1} parent=0 // pred_check
    _
  $region51: #{earthquake_transformer_forward.1} parent=0 // pred_check_branch
    %48 = sbr.rel (0) target = $region53
  $region52: #{earthquake_transformer_forward.1} parent=0 // pred_region
    _
  $region53: #{earthquake_transformer_forward.1} parent=0 // pred_fallthru
    _
  // Predicated region
  $region54: #{earthquake_transformer_forward.1} parent=0 // pred_check
    _
  $region55: #{earthquake_transformer_forward.1} parent=0 // pred_check_branch
    %50 = sbr.rel (0) target = $region57
  $region56: #{earthquake_transformer_forward.1} parent=0 // pred_region
    _
  $region57: #{earthquake_transformer_forward.1} parent=0 // pred_fallthru
    _
  // Predicated region
  $region58: #{earthquake_transformer_forward.1} parent=0 // pred_check
    _
  $region59: #{earthquake_transformer_forward.1} parent=0 // pred_check_branch
    %52 = sbr.rel (0) target = $region61
  $region60: #{earthquake_transformer_forward.1} parent=0 // pred_region
    _
  $region61: #{earthquake_transformer_forward.1} parent=0 // pred_fallthru
    _
  // Predicated region
  $region62: #{earthquake_transformer_forward.1} parent=0 // pred_check
    _
  $region63: #{earthquake_transformer_forward.1} parent=0 // pred_check_branch
    %54 = sbr.rel (0) target = $region65
  $region64: #{earthquake_transformer_forward.1} parent=0 // pred_region
    _
  $region65: #{earthquake_transformer_forward.1} parent=0 // pred_fallthru
    _
  // Predicated region
  $region66: #{earthquake_transformer_forward.1} parent=0 // pred_check
    _
  $region67: #{earthquake_transformer_forward.1} parent=0 // pred_check_branch
    %56 = sbr.rel (0) target = $region69
  $region68: #{earthquake_transformer_forward.1} parent=0 // pred_region
    _
  $region69: #{earthquake_transformer_forward.1} parent=0 // pred_fallthru
    _
  // Predicated region
  $region70: #{earthquake_transformer_forward.1} parent=0 // pred_check
    _
  $region71: #{earthquake_transformer_forward.1} parent=0 // pred_check_branch
    %58 = sbr.rel (0) target = $region73
  $region72: #{earthquake_transformer_forward.1} parent=0 // pred_region
    _
  $region73: #{earthquake_transformer_forward.1} parent=0 // pred_fallthru
    _
  %v60 = vld [vmem:[%s0] sm:$0xff]
  %v61 = vld [vmem:[%s0 + $0x8] sm:$0xff]
  %v62 = vld [vmem:[%s0 + $0x10] sm:$0xff]
  %v63 = vld [vmem:[%s0 + $0x18] sm:$0xff]
  %v64 = vld [vmem:[%s0 + $0x20] sm:$0xff]
  %v65 = vld [vmem:[%s0 + $0x28] sm:$0xff]
  %v66 = vld [vmem:[%s0 + $0x30] sm:$0xff]
  %v67 = vld [vmem:[%s0 + $0x38] sm:$0xff]
  %v68 = vpack.c.bf16 %v61, %v60
  %v69 = vpack.c.bf16 %v63, %v62
  %v70 = vpack.c.bf16 %v65, %v64
  %v71 = vpack.c.bf16 %v67, %v66
  %v72 = vld [vmem:[%s4] sm:$0xf]
  %v73 = vld [vmem:[%s5] sm:$0x1]
  %v75 = vlaneseq
  %v76 = vshrl.u32 %v75, 7
  %v77 = vsub.s32 0, %v76
  %v78 = vrot.slane %v73, %v77
  %vm80 = vcmask 64512
  %v82 = vsel %vm80, %v68, 0
  %v85 = vsel %vm80, %v69, 0
  %v88 = vsel %vm80, %v70, 0
  %v91 = vsel %vm80, %v71, 0
  %vm93 = vcmask 1043456
  %v95 = vsel %vm93, %v72, 0
  %97 = vmatprep.subr.bf16.mxu0 0
  %98 = vmatpush1.bf16.msra.mxu0 %v95
  %99 = vmatprep.subr.bf16.mxu0 0
  %100 = vmatpush1.bf16.msra.mxu0 0
  %101 = vmatprep.subr.bf16.mxu0 0
  %102 = vmatpush1.bf16.msra.mxu0 0
  %103 = vmatprep.subr.bf16.mxu0 0
  %104 = vmatpush1.bf16.msra.mxu0 0
  %105 = vmatprep.subr.bf16.mxu0 0
  %106 = vmatpush1.bf16.msra.mxu0 0
  %107 = vmatprep.subr.bf16.mxu0 0
  %108 = vmatpush1.bf16.msra.mxu0 0
  %109 = vmatprep.subr.bf16.mxu0 0
  %110 = vmatpush1.bf16.msra.mxu0 0
  %111 = vmatprep.subr.bf16.mxu0 0
  %112 = vmatpush1.bf16.msra.mxu0 0
  %113 = vmatprep.subr.bf16.mxu0 0
  %114 = vmatpush1.bf16.msra.mxu0 0
  %115 = vmatprep.subr.bf16.mxu0 0
  %116 = vmatpush1.bf16.msra.mxu0 0
  %117 = vmatprep.subr.bf16.mxu0 0
  %118 = vmatpush1.bf16.msra.mxu0 0
  %119 = vmatprep.subr.bf16.mxu0 0
  %120 = vmatpush1.bf16.msra.mxu0 0
  %121 = vmatprep.subr.bf16.mxu0 0
  %122 = vmatpush1.bf16.msra.mxu0 0
  %123 = vmatprep.subr.bf16.mxu0 0
  %124 = vmatpush1.bf16.msra.mxu0 0
  %125 = vmatprep.subr.bf16.mxu0 0
  %126 = vmatpush1.bf16.msra.mxu0 0
  %127 = vmatprep.subr.bf16.mxu0 0
  %128 = vmatpush1.bf16.msra.mxu0 0
  %129 = vmatprep.mubr.bf16.mxu0 0
  %130 = vmatmul.mubr.bf16.gmra.mrb[0].mxu0 %v82
  %v131 = vpop.f32.mrb[0].mxu0
  %v132 = vadd.f32 %v78, %v131
  %v133 = vpop.f32.mrb[0].mxu0
  %v134 = vpop.f32.mrb[0].mxu0
  %v135 = vadd.f32 %v78, %v134
  %v136 = vpop.f32.mrb[0].mxu0
  %137 = vmatprep.mubr.bf16.mxu0 0
  %138 = vmatmul.mubr.bf16.gmra.mrb[0].mxu0 %v85
  %v139 = vpop.f32.mrb[0].mxu0
  %v140 = vadd.f32 %v78, %v139
  %v141 = vpop.f32.mrb[0].mxu0
  %v142 = vpop.f32.mrb[0].mxu0
  %v143 = vadd.f32 %v78, %v142
  %v144 = vpop.f32.mrb[0].mxu0
  %145 = vmatprep.mubr.bf16.mxu0 0
  %146 = vmatmul.mubr.bf16.gmra.mrb[0].mxu0 %v88
  %v147 = vpop.f32.mrb[0].mxu0
  %v148 = vadd.f32 %v78, %v147
  %v149 = vpop.f32.mrb[0].mxu0
  %v150 = vpop.f32.mrb[0].mxu0
  %v151 = vadd.f32 %v78, %v150
  %v152 = vpop.f32.mrb[0].mxu0
  %153 = vmatprep.mubr.bf16.mxu0 0
  %154 = vmatmul.mubr.bf16.gmra.mrb[0].mxu0 %v91
  %v155 = vpop.f32.mrb[0].mxu0
  %v156 = vadd.f32 %v78, %v155
  %v157 = vpop.f32.mrb[0].mxu0
  %v158 = vpop.f32.mrb[0].mxu0
  %v159 = vadd.f32 %v78, %v158
  %v160 = vpop.f32.mrb[0].mxu0
  %161 = vdwg.mxu0
  %v162 = vld [vmem:[%s1] sm:$0xff]
  %v163 = vld [vmem:[%s1 + $0x8] sm:$0xff]
  %v164 = vld [vmem:[%s1 + $0x10] sm:$0xff]
  %v165 = vld [vmem:[%s1 + $0x18] sm:$0xff]
  %v166 = vld [vmem:[%s1 + $0x20] sm:$0xff]
  %v167 = vld [vmem:[%s1 + $0x28] sm:$0xff]
  %v168 = vld [vmem:[%s1 + $0x30] sm:$0xff]
  %v169 = vld [vmem:[%s1 + $0x38] sm:$0xff]
  %v170 = vadd.f32 %v132, %v162
  %v171 = vadd.f32 %v135, %v163
  %v172 = vadd.f32 %v140, %v164
  %v173 = vadd.f32 %v143, %v165
  %v174 = vadd.f32 %v148, %v166
  %v175 = vadd.f32 %v151, %v167
  %v176 = vadd.f32 %v156, %v168
  %v177 = vadd.f32 %v159, %v169
  %v178 = vld [vmem:[%s2] sm:$0xff]
  %v179 = vld [vmem:[%s2 + $0x8] sm:$0xff]
  %v180 = vld [vmem:[%s2 + $0x10] sm:$0xff]
  %v181 = vld [vmem:[%s2 + $0x18] sm:$0xff]
  %v182 = vld [vmem:[%s2 + $0x20] sm:$0xff]
  %v183 = vld [vmem:[%s2 + $0x28] sm:$0xff]
  %v184 = vld [vmem:[%s2 + $0x30] sm:$0xff]
  %v185 = vld [vmem:[%s2 + $0x38] sm:$0xff]
  %v186 = vpack.c.bf16 %v171, %v170
  %v187 = vpack.c.bf16 %v173, %v172
  %v188 = vpack.c.bf16 %v175, %v174
  %v189 = vpack.c.bf16 %v177, %v176
  %v190 = vld [vmem:[%s6] sm:$0xff]
  %v191 = vld [vmem:[%s6 + $0x8] sm:$0xff]
  %v192 = vld [vmem:[%s6 + $0x10] sm:$0xff]
  %v193 = vld [vmem:[%s6 + $0x18] sm:$0xff]
  %v194 = vld [vmem:[%s6 + $0x20] sm:$0xff]
  %v195 = vld [vmem:[%s6 + $0x28] sm:$0xff]
  %v196 = vld [vmem:[%s6 + $0x30] sm:$0xff]
  %v197 = vld [vmem:[%s6 + $0x38] sm:$0xff]
  %v198 = vld [vmem:[%s7] sm:$0x3]
  %v200 = vlaneseq
  %v201 = vshrl.u32 %v200, 7
  %v202 = vsub.s32 0, %v201
  %v203 = vrot.slane %v198, %v202
  %v204 = vlaneseq
  %v205 = vshrl.u32 %v204, 7
  %v206 = vsub.s32 1, %v205
  %v207 = vrot.slane %v198, %v206
  %v218 = vunpack.c.l.b16 %v190
  %v219 = vunpack.c.h.b16 %v190
  %v220 = vunpack.c.l.b16 %v191
  %v221 = vunpack.c.h.b16 %v191
  %v222 = vunpack.c.l.b16 %v192
  %v223 = vunpack.c.h.b16 %v192
  %v224 = vunpack.c.l.b16 %v193
  %v225 = vunpack.c.h.b16 %v193
  %v226 = vunpack.c.l.b16 %v194
  %v227 = vunpack.c.h.b16 %v194
  %v228 = vunpack.c.l.b16 %v195
  %v229 = vunpack.c.h.b16 %v195
  %v230 = vunpack.c.l.b16 %v196
  %v231 = vunpack.c.h.b16 %v196
  %v232 = vunpack.c.l.b16 %v197
  %v233 = vunpack.c.h.b16 %v197
  %v234 = vpack.c.b16 %v220, %v218
  %v235 = vpack.c.b16 %v221, %v219
  %v236 = vpack.c.b16 %v224, %v222
  %v237 = vpack.c.b16 %v225, %v223
  %v238 = vpack.c.b16 %v228, %v226
  %v239 = vpack.c.b16 %v229, %v227
  %v240 = vpack.c.b16 %v232, %v230
  %v241 = vpack.c.b16 %v233, %v231
  %vm250 = vcmask 523264
  %v252 = vsel %vm250, %v186, 0
  %v255 = vsel %vm250, %v187, 0
  %v258 = vsel %vm250, %v188, 0
  %v261 = vsel %vm250, %v189, 0
  %263 = vmatprep.subr.bf16.mxu0 %v235
  %264 = vmatpush1.bf16.msra.mxu0 %v234
  %265 = vmatprep.subr.bf16.mxu0 %v237
  %266 = vmatpush1.bf16.msra.mxu0 %v236
  %267 = vmatprep.subr.bf16.mxu0 %v239
  %268 = vmatpush1.bf16.msra.mxu0 %v238
  %269 = vmatprep.subr.bf16.mxu0 %v241
  %270 = vmatpush1.bf16.msra.mxu0 %v240
  %271 = vmatprep.subr.bf16.mxu0 0
  %272 = vmatpush1.bf16.msra.mxu0 0
  %273 = vmatprep.subr.bf16.mxu0 0
  %274 = vmatpush1.bf16.msra.mxu0 0
  %275 = vmatprep.subr.bf16.mxu0 0
  %276 = vmatpush1.bf16.msra.mxu0 0
  %277 = vmatprep.subr.bf16.mxu0 0
  %278 = vmatpush1.bf16.msra.mxu0 0
  %279 = vmatprep.subr.bf16.mxu0 0
  %280 = vmatpush1.bf16.msra.mxu0 0
  %281 = vmatprep.subr.bf16.mxu0 0
  %282 = vmatpush1.bf16.msra.mxu0 0
  %283 = vmatprep.subr.bf16.mxu0 0
  %284 = vmatpush1.bf16.msra.mxu0 0
  %285 = vmatprep.subr.bf16.mxu0 0
  %286 = vmatpush1.bf16.msra.mxu0 0
  %287 = vmatprep.subr.bf16.mxu0 0
  %288 = vmatpush1.bf16.msra.mxu0 0
  %289 = vmatprep.subr.bf16.mxu0 0
  %290 = vmatpush1.bf16.msra.mxu0 0
  %291 = vmatprep.subr.bf16.mxu0 0
  %292 = vmatpush1.bf16.msra.mxu0 0
  %293 = vmatprep.subr.bf16.mxu0 0
  %294 = vmatpush1.bf16.msra.mxu0 0
  %295 = vmatprep.mubr.bf16.mxu0 0
  %296 = vmatmul.mubr.bf16.gmra.mrb[0].mxu0 %v252
  %v297 = vpop.f32.mrb[0].mxu0
  %v298 = vadd.f32 %v203, %v297
  %v299 = vpop.f32.mrb[0].mxu0
  %v300 = vadd.f32 %v207, %v299
  %v301 = vpop.f32.mrb[0].mxu0
  %v302 = vadd.f32 %v203, %v301
  %v303 = vpop.f32.mrb[0].mxu0
  %v304 = vadd.f32 %v207, %v303
  %305 = vmatprep.mubr.bf16.mxu0 0
  %306 = vmatmul.mubr.bf16.gmra.mrb[0].mxu0 %v255
  %v307 = vpop.f32.mrb[0].mxu0
  %v308 = vadd.f32 %v203, %v307
  %v309 = vpop.f32.mrb[0].mxu0
  %v310 = vadd.f32 %v207, %v309
  %v311 = vpop.f32.mrb[0].mxu0
  %v312 = vadd.f32 %v203, %v311
  %v313 = vpop.f32.mrb[0].mxu0
  %v314 = vadd.f32 %v207, %v313
  %315 = vmatprep.mubr.bf16.mxu0 0
  %316 = vmatmul.mubr.bf16.gmra.mrb[0].mxu0 %v258
  %v317 = vpop.f32.mrb[0].mxu0
  %v318 = vadd.f32 %v203, %v317
  %v319 = vpop.f32.mrb[0].mxu0
  %v320 = vadd.f32 %v207, %v319
  %v321 = vpop.f32.mrb[0].mxu0
  %v322 = vadd.f32 %v203, %v321
  %v323 = vpop.f32.mrb[0].mxu0
  %v324 = vadd.f32 %v207, %v323
  %325 = vmatprep.mubr.bf16.mxu0 0
  %326 = vmatmul.mubr.bf16.gmra.mrb[0].mxu0 %v261
  %v327 = vpop.f32.mrb[0].mxu0
  %v328 = vadd.f32 %v203, %v327
  %v329 = vpop.f32.mrb[0].mxu0
  %v330 = vadd.f32 %v207, %v329
  %v331 = vpop.f32.mrb[0].mxu0
  %v332 = vadd.f32 %v203, %v331
  %v333 = vpop.f32.mrb[0].mxu0
  %v334 = vadd.f32 %v207, %v333
  %335 = vdwg.mxu0
  %v336 = vmul.f32 %v298, 0.25
  %v337 = vmul.f32 %v302, 0.25
  %v338 = vmul.f32 %v308, 0.25
  %v339 = vmul.f32 %v312, 0.25
  %v340 = vmul.f32 %v318, 0.25
  %v341 = vmul.f32 %v322, 0.25
  %v342 = vmul.f32 %v328, 0.25
  %v343 = vmul.f32 %v332, 0.25
  %v344 = vld [vmem:[%s9] sm:$0x1]
  %353 = vrot.lane.b32.xlu0 %v298, 64
  %v354 = vpop.permute.xlu0 %353
  %355 = vrot.lane.b32.xlu0 %v302, 64
  %v356 = vpop.permute.xlu0 %355
  %357 = vrot.lane.b32.xlu0 %v308, 64
  %v358 = vpop.permute.xlu0 %357
  %359 = vrot.lane.b32.xlu0 %v312, 64
  %v360 = vpop.permute.xlu0 %359
  %361 = vrot.lane.b32.xlu0 %v318, 64
  %v362 = vpop.permute.xlu0 %361
  %363 = vrot.lane.b32.xlu0 %v322, 64
  %v364 = vpop.permute.xlu0 %363
  %365 = vrot.lane.b32.xlu0 %v328, 64
  %v366 = vpop.permute.xlu0 %365
  %367 = vrot.lane.b32.xlu0 %v332, 64
  %v368 = vpop.permute.xlu0 %367
  %vm369 = vcmask 130048
  %v371 = vsel %vm369, %v336, 0
  %v374 = vsel %vm369, %v337, 0
  %v377 = vsel %vm369, %v338, 0
  %v380 = vsel %vm369, %v339, 0
  %v383 = vsel %vm369, %v340, 0
  %v386 = vsel %vm369, %v341, 0
  %v389 = vsel %vm369, %v342, 0
  %v392 = vsel %vm369, %v343, 0
  %v394 = vsel %vm369, %v354, 0
  %v396 = vsel %vm369, %v356, 0
  %v398 = vsel %vm369, %v358, 0
  %v400 = vsel %vm369, %v360, 0
  %v402 = vsel %vm369, %v362, 0
  %v404 = vsel %vm369, %v364, 0
  %v406 = vsel %vm369, %v366, 0
  %v408 = vsel %vm369, %v368, 0
  %410 = vmatprep.subr.mxu0 0.0
  %411 = vmatpush1.xpose.msra.mxu0 %v394
  %412 = vmatprep.subr.mxu0 0.0
  %413 = vmatpush1.xpose.msra.mxu0 %v396
  %414 = vmatprep.subr.mxu0 0.0
  %415 = vmatpush1.xpose.msra.mxu0 %v398
  %416 = vmatprep.subr.mxu0 0.0
  %417 = vmatpush1.xpose.msra.mxu0 %v400
  %418 = vmatprep.subr.mxu0 0.0
  %419 = vmatpush1.xpose.msra.mxu0 %v402
  %420 = vmatprep.subr.mxu0 0.0
  %421 = vmatpush1.xpose.msra.mxu0 %v404
  %422 = vmatprep.subr.mxu0 0.0
  %423 = vmatpush1.xpose.msra.mxu0 %v406
  %424 = vmatprep.subr.mxu0 0.0
  %425 = vmatpush1.xpose.msra.mxu0 %v408
  %426 = vmatprep.subr.mxu0 0.0
  %427 = vmatpush1.xpose.msra.mxu0 0.0
  %428 = vmatprep.subr.mxu0 0.0
  %429 = vmatpush1.xpose.msra.mxu0 0.0
  %430 = vmatprep.subr.mxu0 0.0
  %431 = vmatpush1.xpose.msra.mxu0 0.0
  %432 = vmatprep.subr.mxu0 0.0
  %433 = vmatpush1.xpose.msra.mxu0 0.0
  %434 = vmatprep.subr.mxu0 0.0
  %435 = vmatpush1.xpose.msra.mxu0 0.0
  %436 = vmatprep.subr.mxu0 0.0
  %437 = vmatpush1.xpose.msra.mxu0 0.0
  %438 = vmatprep.subr.mxu0 0.0
  %439 = vmatpush1.xpose.msra.mxu0 0.0
  %440 = vmatprep.subr.mxu0 0.0
  %441 = vmatpush1.xpose.msra.mxu0 0.0
  %442 = vmatprep.subr.mxu0 0.0
  %443 = vmatpush1.xpose.msra.mxu0 0.0
  %444 = vmatprep.subr.mxu0 0.0
  %445 = vmatpush1.xpose.msra.mxu0 0.0
  %446 = vmatprep.subr.mxu0 0.0
  %447 = vmatpush1.xpose.msra.mxu0 0.0
  %448 = vmatprep.subr.mxu0 0.0
  %449 = vmatpush1.xpose.msra.mxu0 0.0
  %450 = vmatprep.subr.mxu0 0.0
  %451 = vmatpush1.xpose.msra.mxu0 0.0
  %452 = vmatprep.subr.mxu0 0.0
  %453 = vmatpush1.xpose.msra.mxu0 0.0
  %454 = vmatprep.subr.mxu0 0.0
  %455 = vmatpush1.xpose.msra.mxu0 0.0
  %456 = vmatprep.subr.mxu0 0.0
  %457 = vmatpush1.xpose.msra.mxu0 0.0
  %458 = vmatprep.subr.mxu0 0.0
  %459 = vmatpush1.xpose.msra.mxu0 0.0
  %460 = vmatprep.subr.mxu0 0.0
  %461 = vmatpush1.xpose.msra.mxu0 0.0
  %462 = vmatprep.subr.mxu0 0.0
  %463 = vmatpush1.xpose.msra.mxu0 0.0
  %464 = vmatprep.subr.mxu0 0.0
  %465 = vmatpush1.xpose.msra.mxu0 0.0
  %466 = vmatprep.subr.mxu0 0.0
  %467 = vmatpush1.xpose.msra.mxu0 0.0
  %468 = vmatprep.subr.mxu0 0.0
  %469 = vmatpush1.xpose.msra.mxu0 0.0
  %470 = vmatprep.subr.mxu0 0.0
  %471 = vmatpush1.xpose.msra.mxu0 0.0
  %472 = vmatprep.subr.mxu0 0.0
  %473 = vmatpush1.xpose.msra.mxu0 0.0
  %474 = vmatprep.mubr.f32.mxu0 0.0
  %475 = vmatmul.mubr.f32.gmra.mrb[0].mxu0 %v371
  %v476 = vpop.f32.mrb[0].mxu0
  %v477 = vadd.f32 %v178, %v476
  %v478 = vpop.f32.mrb[0].mxu0
  %479 = vmatprep.mubr.f32.mxu0 0.0
  %480 = vmatmul.mubr.f32.gmra.mrb[0].mxu0 %v374
  %v481 = vpop.f32.mrb[0].mxu0
  %v482 = vadd.f32 %v179, %v481
  %v483 = vpop.f32.mrb[0].mxu0
  %484 = vmatprep.mubr.f32.mxu0 0.0
  %485 = vmatmul.mubr.f32.gmra.mrb[0].mxu0 %v377
  %v486 = vpop.f32.mrb[0].mxu0
  %v487 = vadd.f32 %v180, %v486
  %v488 = vpop.f32.mrb[0].mxu0
  %489 = vmatprep.mubr.f32.mxu0 0.0
  %490 = vmatmul.mubr.f32.gmra.mrb[0].mxu0 %v380
  %v491 = vpop.f32.mrb[0].mxu0
  %v492 = vadd.f32 %v181, %v491
  %v493 = vpop.f32.mrb[0].mxu0
  %494 = vmatprep.mubr.f32.mxu0 0.0
  %495 = vmatmul.mubr.f32.gmra.mrb[0].mxu0 %v383
  %v496 = vpop.f32.mrb[0].mxu0
  %v497 = vadd.f32 %v182, %v496
  %v498 = vpop.f32.mrb[0].mxu0
  %499 = vmatprep.mubr.f32.mxu0 0.0
  %500 = vmatmul.mubr.f32.gmra.mrb[0].mxu0 %v386
  %v501 = vpop.f32.mrb[0].mxu0
  %v502 = vadd.f32 %v183, %v501
  %v503 = vpop.f32.mrb[0].mxu0
  %504 = vmatprep.mubr.f32.mxu0 0.0
  %505 = vmatmul.mubr.f32.gmra.mrb[0].mxu0 %v389
  %v506 = vpop.f32.mrb[0].mxu0
  %v507 = vadd.f32 %v184, %v506
  %v508 = vpop.f32.mrb[0].mxu0
  %509 = vmatprep.mubr.f32.mxu0 0.0
  %510 = vmatmul.mubr.f32.gmra.mrb[0].mxu0 %v392
  %v511 = vpop.f32.mrb[0].mxu0
  %v512 = vadd.f32 %v185, %v511
  %v513 = vpop.f32.mrb[0].mxu0
  %514 = vdwg.mxu0
  %v515 = vsel %vm250, %v477, -inf
  %516 = vmax.xlane.f32.xlu0 %v515
  %v517 = vpop.xlane.xlu0 %516
  %v518 = vsel %vm250, %v482, -inf
  %519 = vmax.xlane.f32.xlu0 %v518
  %v520 = vpop.xlane.xlu0 %519
  %v521 = vsel %vm250, %v487, -inf
  %522 = vmax.xlane.f32.xlu0 %v521
  %v523 = vpop.xlane.xlu0 %522
  %v524 = vsel %vm250, %v492, -inf
  %525 = vmax.xlane.f32.xlu0 %v524
  %v526 = vpop.xlane.xlu0 %525
  %v527 = vsel %vm250, %v497, -inf
  %528 = vmax.xlane.f32.xlu0 %v527
  %v529 = vpop.xlane.xlu0 %528
  %v530 = vsel %vm250, %v502, -inf
  %531 = vmax.xlane.f32.xlu0 %v530
  %v532 = vpop.xlane.xlu0 %531
  %v533 = vsel %vm250, %v507, -inf
  %534 = vmax.xlane.f32.xlu0 %v533
  %v535 = vpop.xlane.xlu0 %534
  %v536 = vsel %vm250, %v512, -inf
  %537 = vmax.xlane.f32.xlu0 %v536
  %v538 = vpop.xlane.xlu0 %537
  %v539 = vsub.f32 %v477, %v517
  %v540 = vsub.f32 %v482, %v520
  %v541 = vsub.f32 %v487, %v523
  %v542 = vsub.f32 %v492, %v526
  %v543 = vsub.f32 %v497, %v529
  %v544 = vsub.f32 %v502, %v532
  %v545 = vsub.f32 %v507, %v535
  %v546 = vsub.f32 %v512, %v538
  %v547 = vmul.f32 %v539, 1.442695
  %v548 = vpow.pop %v547
  %v549 = vmul.f32 %v540, 1.442695
  %v550 = vpow.pop %v549
  %v551 = vmul.f32 %v541, 1.442695
  %v552 = vpow.pop %v551
  %v553 = vmul.f32 %v542, 1.442695
  %v554 = vpow.pop %v553
  %v555 = vmul.f32 %v543, 1.442695
  %v556 = vpow.pop %v555
  %v557 = vmul.f32 %v544, 1.442695
  %v558 = vpow.pop %v557
  %v559 = vmul.f32 %v545, 1.442695
  %v560 = vpow.pop %v559
  %v561 = vmul.f32 %v546, 1.442695
  %v562 = vpow.pop %v561
  %v563 = vsel %vm250, %v548, 0.0
  %564 = vadd.xlane.f32.xlu0 %v563
  %v565 = vpop.xlane.xlu0 %564
  %v566 = vsel %vm250, %v550, 0.0
  %567 = vadd.xlane.f32.xlu0 %v566
  %v568 = vpop.xlane.xlu0 %567
  %v569 = vsel %vm250, %v552, 0.0
  %570 = vadd.xlane.f32.xlu0 %v569
  %v571 = vpop.xlane.xlu0 %570
  %v572 = vsel %vm250, %v554, 0.0
  %573 = vadd.xlane.f32.xlu0 %v572
  %v574 = vpop.xlane.xlu0 %573
  %v575 = vsel %vm250, %v556, 0.0
  %576 = vadd.xlane.f32.xlu0 %v575
  %v577 = vpop.xlane.xlu0 %576
  %v578 = vsel %vm250, %v558, 0.0
  %579 = vadd.xlane.f32.xlu0 %v578
  %v580 = vpop.xlane.xlu0 %579
  %v581 = vsel %vm250, %v560, 0.0
  %582 = vadd.xlane.f32.xlu0 %v581
  %v583 = vpop.xlane.xlu0 %582
  %v584 = vsel %vm250, %v562, 0.0
  %585 = vadd.xlane.f32.xlu0 %v584
  %v586 = vpop.xlane.xlu0 %585
  %v587 = vrcp.pop %v565
  %v588 = vrcp.pop %v568
  %v589 = vrcp.pop %v571
  %v590 = vrcp.pop %v574
  %v591 = vrcp.pop %v577
  %v592 = vrcp.pop %v580
  %v593 = vrcp.pop %v583
  %v594 = vrcp.pop %v586
  %v595 = vmul.f32 %v548, %v587
  %v596 = vmul.f32 %v550, %v588
  %v597 = vmul.f32 %v552, %v589
  %v598 = vmul.f32 %v554, %v590
  %v599 = vmul.f32 %v556, %v591
  %v600 = vmul.f32 %v558, %v592
  %v601 = vmul.f32 %v560, %v593
  %v602 = vmul.f32 %v562, %v594
  %v604 = vsel %vm250, %v595, 0
  %v607 = vsel %vm250, %v596, 0
  %v610 = vsel %vm250, %v597, 0
  %v613 = vsel %vm250, %v598, 0
  %v616 = vsel %vm250, %v599, 0
  %v619 = vsel %vm250, %v600, 0
  %v622 = vsel %vm250, %v601, 0
  %v625 = vsel %vm250, %v602, 0
  %627 = vmatprep.subr.mxu0 0.0
  %628 = vmatpush1.msra.mxu0 %v300
  %629 = vmatprep.subr.mxu0 0.0
  %630 = vmatpush1.msra.mxu0 %v304
  %631 = vmatprep.subr.mxu0 0.0
  %632 = vmatpush1.msra.mxu0 %v310
  %633 = vmatprep.subr.mxu0 0.0
  %634 = vmatpush1.msra.mxu0 %v314
  %635 = vmatprep.subr.mxu0 0.0
  %636 = vmatpush1.msra.mxu0 %v320
  %637 = vmatprep.subr.mxu0 0.0
  %638 = vmatpush1.msra.mxu0 %v324
  %639 = vmatprep.subr.mxu0 0.0
  %640 = vmatpush1.msra.mxu0 %v330
  %641 = vmatprep.subr.mxu0 0.0
  %642 = vmatpush1.msra.mxu0 %v334
  %643 = vmatprep.subr.mxu0 0.0
  %644 = vmatpush1.msra.mxu0 0.0
  %645 = vmatprep.subr.mxu0 0.0
  %646 = vmatpush1.msra.mxu0 0.0
  %647 = vmatprep.subr.mxu0 0.0
  %648 = vmatpush1.msra.mxu0 0.0
  %649 = vmatprep.subr.mxu0 0.0
  %650 = vmatpush1.msra.mxu0 0.0
  %651 = vmatprep.subr.mxu0 0.0
  %652 = vmatpush1.msra.mxu0 0.0
  %653 = vmatprep.subr.mxu0 0.0
  %654 = vmatpush1.msra.mxu0 0.0
  %655 = vmatprep.subr.mxu0 0.0
  %656 = vmatpush1.msra.mxu0 0.0
  %657 = vmatprep.subr.mxu0 0.0
  %658 = vmatpush1.msra.mxu0 0.0
  %659 = vmatprep.subr.mxu0 0.0
  %660 = vmatpush1.msra.mxu0 0.0
  %661 = vmatprep.subr.mxu0 0.0
  %662 = vmatpush1.msra.mxu0 0.0
  %663 = vmatprep.subr.mxu0 0.0
  %664 = vmatpush1.msra.mxu0 0.0
  %665 = vmatprep.subr.mxu0 0.0
  %666 = vmatpush1.msra.mxu0 0.0
  %667 = vmatprep.subr.mxu0 0.0
  %668 = vmatpush1.msra.mxu0 0.0
  %669 = vmatprep.subr.mxu0 0.0
  %670 = vmatpush1.msra.mxu0 0.0
  %671 = vmatprep.subr.mxu0 0.0
  %672 = vmatpush1.msra.mxu0 0.0
  %673 = vmatprep.subr.mxu0 0.0
  %674 = vmatpush1.msra.mxu0 0.0
  %675 = vmatprep.subr.mxu0 0.0
  %676 = vmatpush1.msra.mxu0 0.0
  %677 = vmatprep.subr.mxu0 0.0
  %678 = vmatpush1.msra.mxu0 0.0
  %679 = vmatprep.subr.mxu0 0.0
  %680 = vmatpush1.msra.mxu0 0.0
  %681 = vmatprep.subr.mxu0 0.0
  %682 = vmatpush1.msra.mxu0 0.0
  %683 = vmatprep.subr.mxu0 0.0
  %684 = vmatpush1.msra.mxu0 0.0
  %685 = vmatprep.subr.mxu0 0.0
  %686 = vmatpush1.msra.mxu0 0.0
  %687 = vmatprep.subr.mxu0 0.0
  %688 = vmatpush1.msra.mxu0 0.0
  %689 = vmatprep.subr.mxu0 0.0
  %690 = vmatpush1.msra.mxu0 0.0
  %691 = vmatprep.mubr.f32.mxu0 0.0
  %692 = vmatmul.mubr.f32.gmra.mrb[0].mxu0 %v604
  %v693 = vpop.f32.mrb[0].mxu0
  %v694 = vadd.f32 0.0, %v693
  %v695 = vpop.f32.mrb[0].mxu0
  %696 = vmatprep.mubr.f32.mxu0 0.0
  %697 = vmatmul.mubr.f32.gmra.mrb[0].mxu0 %v607
  %v698 = vpop.f32.mrb[0].mxu0
  %v699 = vadd.f32 0.0, %v698
  %v700 = vpop.f32.mrb[0].mxu0
  %701 = vmatprep.mubr.f32.mxu0 0.0
  %702 = vmatmul.mubr.f32.gmra.mrb[0].mxu0 %v610
  %v703 = vpop.f32.mrb[0].mxu0
  %v704 = vadd.f32 0.0, %v703
  %v705 = vpop.f32.mrb[0].mxu0
  %706 = vmatprep.mubr.f32.mxu0 0.0
  %707 = vmatmul.mubr.f32.gmra.mrb[0].mxu0 %v613
  %v708 = vpop.f32.mrb[0].mxu0
  %v709 = vadd.f32 0.0, %v708
  %v710 = vpop.f32.mrb[0].mxu0
  %711 = vmatprep.mubr.f32.mxu0 0.0
  %712 = vmatmul.mubr.f32.gmra.mrb[0].mxu0 %v616
  %v713 = vpop.f32.mrb[0].mxu0
  %v714 = vadd.f32 0.0, %v713
  %v715 = vpop.f32.mrb[0].mxu0
  %716 = vmatprep.mubr.f32.mxu0 0.0
  %717 = vmatmul.mubr.f32.gmra.mrb[0].mxu0 %v619
  %v718 = vpop.f32.mrb[0].mxu0
  %v719 = vadd.f32 0.0, %v718
  %v720 = vpop.f32.mrb[0].mxu0
  %721 = vmatprep.mubr.f32.mxu0 0.0
  %722 = vmatmul.mubr.f32.gmra.mrb[0].mxu0 %v622
  %v723 = vpop.f32.mrb[0].mxu0
  %v724 = vadd.f32 0.0, %v723
  %v725 = vpop.f32.mrb[0].mxu0
  %726 = vmatprep.mubr.f32.mxu0 0.0
  %727 = vmatmul.mubr.f32.gmra.mrb[0].mxu0 %v625
  %v728 = vpop.f32.mrb[0].mxu0
  %v729 = vadd.f32 0.0, %v728
  %v730 = vpop.f32.mrb[0].mxu0
  %731 = vdwg.mxu0
  %v732 = vpack.c.bf16 %v699, %v694
  %v733 = vpack.c.bf16 %v709, %v704
  %v734 = vpack.c.bf16 %v719, %v714
  %v735 = vpack.c.bf16 %v729, %v724
  %v736 = vld [vmem:[%s8] sm:$0xf]
  %v737 = vld [vmem:[%s8 + $0x4] sm:$0xf]
  %v740 = vunpack.c.l.b16 %v736
  %v741 = vunpack.c.l.b16 %v737
  %v742 = vpack.c.b16 %v741, %v740
  %v745 = vsel %vm369, %v732, 0
  %v748 = vsel %vm369, %v733, 0
  %v751 = vsel %vm369, %v734, 0
  %v754 = vsel %vm369, %v735, 0
  %756 = vmatprep.subr.bf16.mxu0 0
  %757 = vmatpush1.bf16.msra.mxu0 %v742
  %758 = vmatprep.subr.bf16.mxu0 0
  %759 = vmatpush1.bf16.msra.mxu0 0
  %760 = vmatprep.subr.bf16.mxu0 0
  %761 = vmatpush1.bf16.msra.mxu0 0
  %762 = vmatprep.subr.bf16.mxu0 0
  %763 = vmatpush1.bf16.msra.mxu0 0
  %764 = vmatprep.subr.bf16.mxu0 0
  %765 = vmatpush1.bf16.msra.mxu0 0
  %766 = vmatprep.subr.bf16.mxu0 0
  %767 = vmatpush1.bf16.msra.mxu0 0
  %768 = vmatprep.subr.bf16.mxu0 0
  %769 = vmatpush1.bf16.msra.mxu0 0
  %770 = vmatprep.subr.bf16.mxu0 0
  %771 = vmatpush1.bf16.msra.mxu0 0
  %772 = vmatprep.subr.bf16.mxu0 0
  %773 = vmatpush1.bf16.msra.mxu0 0
  %774 = vmatprep.subr.bf16.mxu0 0
  %775 = vmatpush1.bf16.msra.mxu0 0
  %776 = vmatprep.subr.bf16.mxu0 0
  %777 = vmatpush1.bf16.msra.mxu0 0
  %778 = vmatprep.subr.bf16.mxu0 0
  %779 = vmatpush1.bf16.msra.mxu0 0
  %780 = vmatprep.subr.bf16.mxu0 0
  %781 = vmatpush1.bf16.msra.mxu0 0
  %782 = vmatprep.subr.bf16.mxu0 0
  %783 = vmatpush1.bf16.msra.mxu0 0
  %784 = vmatprep.subr.bf16.mxu0 0
  %785 = vmatpush1.bf16.msra.mxu0 0
  %786 = vmatprep.subr.bf16.mxu0 0
  %787 = vmatpush1.bf16.msra.mxu0 0
  %788 = vmatprep.mubr.bf16.mxu0 0
  %789 = vmatmul.mubr.bf16.gmra.mrb[0].mxu0 %v745
  %v790 = vpop.f32.mrb[0].mxu0
  %v791 = vadd.f32 0.0, %v790
  %v792 = vpop.f32.mrb[0].mxu0
  %v793 = vpop.f32.mrb[0].mxu0
  %v794 = vadd.f32 0.0, %v793
  %v795 = vpop.f32.mrb[0].mxu0
  %796 = vmatprep.mubr.bf16.mxu0 0
  %797 = vmatmul.mubr.bf16.gmra.mrb[0].mxu0 %v748
  %v798 = vpop.f32.mrb[0].mxu0
  %v799 = vadd.f32 0.0, %v798
  %v800 = vpop.f32.mrb[0].mxu0
  %v801 = vpop.f32.mrb[0].mxu0
  %v802 = vadd.f32 0.0, %v801
  %v803 = vpop.f32.mrb[0].mxu0
  %804 = vmatprep.mubr.bf16.mxu0 0
  %805 = vmatmul.mubr.bf16.gmra.mrb[0].mxu0 %v751
  %v806 = vpop.f32.mrb[0].mxu0
  %v807 = vadd.f32 0.0, %v806
  %v808 = vpop.f32.mrb[0].mxu0
  %v809 = vpop.f32.mrb[0].mxu0
  %v810 = vadd.f32 0.0, %v809
  %v811 = vpop.f32.mrb[0].mxu0
  %812 = vmatprep.mubr.bf16.mxu0 0
  %813 = vmatmul.mubr.bf16.gmra.mrb[0].mxu0 %v754
  %v814 = vpop.f32.mrb[0].mxu0
  %v815 = vadd.f32 0.0, %v814
  %v816 = vpop.f32.mrb[0].mxu0
  %v817 = vpop.f32.mrb[0].mxu0
  %v818 = vadd.f32 0.0, %v817
  %v819 = vpop.f32.mrb[0].mxu0
  %820 = vdwg.mxu0
  %v822 = vlaneseq
  %v823 = vshrl.u32 %v822, 7
  %v824 = vsub.s32 0, %v823
  %v825 = vrot.slane %v344, %v824
  %v827 = vadd.f32 %v825, %v791
  %v828 = vadd.f32 %v825, %v794
  %v829 = vadd.f32 %v825, %v799
  %v830 = vadd.f32 %v825, %v802
  %v831 = vadd.f32 %v825, %v807
  %v832 = vadd.f32 %v825, %v810
  %v833 = vadd.f32 %v825, %v815
  %v834 = vadd.f32 %v825, %v818
  %835 = vrot.lane.b32.xlu0 %v336, 112
  %v836 = vpop.permute.xlu0 %835
  %837 = vrot.lane.b32.xlu0 %v337, 112
  %v838 = vpop.permute.xlu0 %837
  %839 = vrot.lane.b32.xlu0 %v338, 112
  %v840 = vpop.permute.xlu0 %839
  %841 = vrot.lane.b32.xlu0 %v339, 112
  %v842 = vpop.permute.xlu0 %841
  %843 = vrot.lane.b32.xlu0 %v340, 112
  %v844 = vpop.permute.xlu0 %843
  %845 = vrot.lane.b32.xlu0 %v341, 112
  %v846 = vpop.permute.xlu0 %845
  %847 = vrot.lane.b32.xlu0 %v342, 112
  %v848 = vpop.permute.xlu0 %847
  %849 = vrot.lane.b32.xlu0 %v343, 112
  %v850 = vpop.permute.xlu0 %849
  %851 = vrot.lane.b32.xlu0 %v298, 48
  %v852 = vpop.permute.xlu0 %851
  %853 = vrot.lane.b32.xlu0 %v302, 48
  %v854 = vpop.permute.xlu0 %853
  %855 = vrot.lane.b32.xlu0 %v308, 48
  %v856 = vpop.permute.xlu0 %855
  %857 = vrot.lane.b32.xlu0 %v312, 48
  %v858 = vpop.permute.xlu0 %857
  %859 = vrot.lane.b32.xlu0 %v318, 48
  %v860 = vpop.permute.xlu0 %859
  %861 = vrot.lane.b32.xlu0 %v322, 48
  %v862 = vpop.permute.xlu0 %861
  %863 = vrot.lane.b32.xlu0 %v328, 48
  %v864 = vpop.permute.xlu0 %863
  %865 = vrot.lane.b32.xlu0 %v332, 48
  %v866 = vpop.permute.xlu0 %865
  %v867 = vsel %vm369, %v836, 0
  %v869 = vsel %vm369, %v838, 0
  %v871 = vsel %vm369, %v840, 0
  %v873 = vsel %vm369, %v842, 0
  %v875 = vsel %vm369, %v844, 0
  %v877 = vsel %vm369, %v846, 0
  %v879 = vsel %vm369, %v848, 0
  %v881 = vsel %vm369, %v850, 0
  %v883 = vsel %vm369, %v852, 0
  %v885 = vsel %vm369, %v854, 0
  %v887 = vsel %vm369, %v856, 0
  %v889 = vsel %vm369, %v858, 0
  %v891 = vsel %vm369, %v860, 0
  %v893 = vsel %vm369, %v862, 0
  %v895 = vsel %vm369, %v864, 0
  %v897 = vsel %vm369, %v866, 0
  %899 = vmatprep.subr.mxu0 0.0
  %900 = vmatpush1.xpose.msra.mxu0 %v883
  %901 = vmatprep.subr.mxu0 0.0
  %902 = vmatpush1.xpose.msra.mxu0 %v885
  %903 = vmatprep.subr.mxu0 0.0
  %904 = vmatpush1.xpose.msra.mxu0 %v887
  %905 = vmatprep.subr.mxu0 0.0
  %906 = vmatpush1.xpose.msra.mxu0 %v889
  %907 = vmatprep.subr.mxu0 0.0
  %908 = vmatpush1.xpose.msra.mxu0 %v891
  %909 = vmatprep.subr.mxu0 0.0
  %910 = vmatpush1.xpose.msra.mxu0 %v893
  %911 = vmatprep.subr.mxu0 0.0
  %912 = vmatpush1.xpose.msra.mxu0 %v895
  %913 = vmatprep.subr.mxu0 0.0
  %914 = vmatpush1.xpose.msra.mxu0 %v897
  %915 = vmatprep.subr.mxu0 0.0
  %916 = vmatpush1.xpose.msra.mxu0 0.0
  %917 = vmatprep.subr.mxu0 0.0
  %918 = vmatpush1.xpose.msra.mxu0 0.0
  %919 = vmatprep.subr.mxu0 0.0
  %920 = vmatpush1.xpose.msra.mxu0 0.0
  %921 = vmatprep.subr.mxu0 0.0
  %922 = vmatpush1.xpose.msra.mxu0 0.0
  %923 = vmatprep.subr.mxu0 0.0
  %924 = vmatpush1.xpose.msra.mxu0 0.0
  %925 = vmatprep.subr.mxu0 0.0
  %926 = vmatpush1.xpose.msra.mxu0 0.0
  %927 = vmatprep.subr.mxu0 0.0
  %928 = vmatpush1.xpose.msra.mxu0 0.0
  %929 = vmatprep.subr.mxu0 0.0
  %930 = vmatpush1.xpose.msra.mxu0 0.0
  %931 = vmatprep.subr.mxu0 0.0
  %932 = vmatpush1.xpose.msra.mxu0 0.0
  %933 = vmatprep.subr.mxu0 0.0
  %934 = vmatpush1.xpose.msra.mxu0 0.0
  %935 = vmatprep.subr.mxu0 0.0
  %936 = vmatpush1.xpose.msra.mxu0 0.0
  %937 = vmatprep.subr.mxu0 0.0
  %938 = vmatpush1.xpose.msra.mxu0 0.0
  %939 = vmatprep.subr.mxu0 0.0
  %940 = vmatpush1.xpose.msra.mxu0 0.0
  %941 = vmatprep.subr.mxu0 0.0
  %942 = vmatpush1.xpose.msra.mxu0 0.0
  %943 = vmatprep.subr.mxu0 0.0
  %944 = vmatpush1.xpose.msra.mxu0 0.0
  %945 = vmatprep.subr.mxu0 0.0
  %946 = vmatpush1.xpose.msra.mxu0 0.0
  %947 = vmatprep.subr.mxu0 0.0
  %948 = vmatpush1.xpose.msra.mxu0 0.0
  %949 = vmatprep.subr.mxu0 0.0
  %950 = vmatpush1.xpose.msra.mxu0 0.0
  %951 = vmatprep.subr.mxu0 0.0
  %952 = vmatpush1.xpose.msra.mxu0 0.0
  %953 = vmatprep.subr.mxu0 0.0
  %954 = vmatpush1.xpose.msra.mxu0 0.0
  %955 = vmatprep.subr.mxu0 0.0
  %956 = vmatpush1.xpose.msra.mxu0 0.0
  %957 = vmatprep.subr.mxu0 0.0
  %958 = vmatpush1.xpose.msra.mxu0 0.0
  %959 = vmatprep.subr.mxu0 0.0
  %960 = vmatpush1.xpose.msra.mxu0 0.0
  %961 = vmatprep.subr.mxu0 0.0
  %962 = vmatpush1.xpose.msra.mxu0 0.0
  %963 = vmatprep.mubr.f32.mxu0 0.0
  %964 = vmatmul.mubr.f32.gmra.mrb[0].mxu0 %v867
  %v965 = vpop.f32.mrb[0].mxu0
  %v966 = vadd.f32 %v178, %v965
  %v967 = vpop.f32.mrb[0].mxu0
  %968 = vmatprep.mubr.f32.mxu0 0.0
  %969 = vmatmul.mubr.f32.gmra.mrb[0].mxu0 %v869
  %v970 = vpop.f32.mrb[0].mxu0
  %v971 = vadd.f32 %v179, %v970
  %v972 = vpop.f32.mrb[0].mxu0
  %973 = vmatprep.mubr.f32.mxu0 0.0
  %974 = vmatmul.mubr.f32.gmra.mrb[0].mxu0 %v871
  %v975 = vpop.f32.mrb[0].mxu0
  %v976 = vadd.f32 %v180, %v975
  %v977 = vpop.f32.mrb[0].mxu0
  %978 = vmatprep.mubr.f32.mxu0 0.0
  %979 = vmatmul.mubr.f32.gmra.mrb[0].mxu0 %v873
  %v980 = vpop.f32.mrb[0].mxu0
  %v981 = vadd.f32 %v181, %v980
  %v982 = vpop.f32.mrb[0].mxu0
  %983 = vmatprep.mubr.f32.mxu0 0.0
  %984 = vmatmul.mubr.f32.gmra.mrb[0].mxu0 %v875
  %v985 = vpop.f32.mrb[0].mxu0
  %v986 = vadd.f32 %v182, %v985
  %v987 = vpop.f32.mrb[0].mxu0
  %988 = vmatprep.mubr.f32.mxu0 0.0
  %989 = vmatmul.mubr.f32.gmra.mrb[0].mxu0 %v877
  %v990 = vpop.f32.mrb[0].mxu0
  %v991 = vadd.f32 %v183, %v990
  %v992 = vpop.f32.mrb[0].mxu0
  %993 = vmatprep.mubr.f32.mxu0 0.0
  %994 = vmatmul.mubr.f32.gmra.mrb[0].mxu0 %v879
  %v995 = vpop.f32.mrb[0].mxu0
  %v996 = vadd.f32 %v184, %v995
  %v997 = vpop.f32.mrb[0].mxu0
  %998 = vmatprep.mubr.f32.mxu0 0.0
  %999 = vmatmul.mubr.f32.gmra.mrb[0].mxu0 %v881
  %v1000 = vpop.f32.mrb[0].mxu0
  %v1001 = vadd.f32 %v185, %v1000
  %v1002 = vpop.f32.mrb[0].mxu0
  %1003 = vdwg.mxu0
  %v1004 = vsel %vm250, %v966, -inf
  %1005 = vmax.xlane.f32.xlu0 %v1004
  %v1006 = vpop.xlane.xlu0 %1005
  %v1007 = vsel %vm250, %v971, -inf
  %1008 = vmax.xlane.f32.xlu0 %v1007
  %v1009 = vpop.xlane.xlu0 %1008
  %v1010 = vsel %vm250, %v976, -inf
  %1011 = vmax.xlane.f32.xlu0 %v1010
  %v1012 = vpop.xlane.xlu0 %1011
  %v1013 = vsel %vm250, %v981, -inf
  %1014 = vmax.xlane.f32.xlu0 %v1013
  %v1015 = vpop.xlane.xlu0 %1014
  %v1016 = vsel %vm250, %v986, -inf
  %1017 = vmax.xlane.f32.xlu0 %v1016
  %v1018 = vpop.xlane.xlu0 %1017
  %v1019 = vsel %vm250, %v991, -inf
  %1020 = vmax.xlane.f32.xlu0 %v1019
  %v1021 = vpop.xlane.xlu0 %1020
  %v1022 = vsel %vm250, %v996, -inf
  %1023 = vmax.xlane.f32.xlu0 %v1022
  %v1024 = vpop.xlane.xlu0 %1023
  %v1025 = vsel %vm250, %v1001, -inf
  %1026 = vmax.xlane.f32.xlu0 %v1025
  %v1027 = vpop.xlane.xlu0 %1026
  %v1028 = vsub.f32 %v966, %v1006
  %v1029 = vsub.f32 %v971, %v1009
  %v1030 = vsub.f32 %v976, %v1012
  %v1031 = vsub.f32 %v981, %v1015
  %v1032 = vsub.f32 %v986, %v1018
  %v1033 = vsub.f32 %v991, %v1021
  %v1034 = vsub.f32 %v996, %v1024
  %v1035 = vsub.f32 %v1001, %v1027
  %v1036 = vmul.f32 %v1028, 1.442695
  %v1037 = vpow.pop %v1036
  %v1038 = vmul.f32 %v1029, 1.442695
  %v1039 = vpow.pop %v1038
  %v1040 = vmul.f32 %v1030, 1.442695
  %v1041 = vpow.pop %v1040
  %v1042 = vmul.f32 %v1031, 1.442695
  %v1043 = vpow.pop %v1042
  %v1044 = vmul.f32 %v1032, 1.442695
  %v1045 = vpow.pop %v1044
  %v1046 = vmul.f32 %v1033, 1.442695
  %v1047 = vpow.pop %v1046
  %v1048 = vmul.f32 %v1034, 1.442695
  %v1049 = vpow.pop %v1048
  %v1050 = vmul.f32 %v1035, 1.442695
  %v1051 = vpow.pop %v1050
  %v1052 = vsel %vm250, %v1037, 0.0
  %1053 = vadd.xlane.f32.xlu0 %v1052
  %v1054 = vpop.xlane.xlu0 %1053
  %v1055 = vsel %vm250, %v1039, 0.0
  %1056 = vadd.xlane.f32.xlu0 %v1055
  %v1057 = vpop.xlane.xlu0 %1056
  %v1058 = vsel %vm250, %v1041, 0.0
  %1059 = vadd.xlane.f32.xlu0 %v1058
  %v1060 = vpop.xlane.xlu0 %1059
  %v1061 = vsel %vm250, %v1043, 0.0
  %1062 = vadd.xlane.f32.xlu0 %v1061
  %v1063 = vpop.xlane.xlu0 %1062
  %v1064 = vsel %vm250, %v1045, 0.0
  %1065 = vadd.xlane.f32.xlu0 %v1064
  %v1066 = vpop.xlane.xlu0 %1065
  %v1067 = vsel %vm250, %v1047, 0.0
  %1068 = vadd.xlane.f32.xlu0 %v1067
  %v1069 = vpop.xlane.xlu0 %1068
  %v1070 = vsel %vm250, %v1049, 0.0
  %1071 = vadd.xlane.f32.xlu0 %v1070
  %v1072 = vpop.xlane.xlu0 %1071
  %v1073 = vsel %vm250, %v1051, 0.0
  %1074 = vadd.xlane.f32.xlu0 %v1073
  %v1075 = vpop.xlane.xlu0 %1074
  %v1076 = vrcp.pop %v1054
  %v1077 = vrcp.pop %v1057
  %v1078 = vrcp.pop %v1060
  %v1079 = vrcp.pop %v1063
  %v1080 = vrcp.pop %v1066
  %v1081 = vrcp.pop %v1069
  %v1082 = vrcp.pop %v1072
  %v1083 = vrcp.pop %v1075
  %v1084 = vmul.f32 %v1037, %v1076
  %v1085 = vmul.f32 %v1039, %v1077
  %v1086 = vmul.f32 %v1041, %v1078
  %v1087 = vmul.f32 %v1043, %v1079
  %v1088 = vmul.f32 %v1045, %v1080
  %v1089 = vmul.f32 %v1047, %v1081
  %v1090 = vmul.f32 %v1049, %v1082
  %v1091 = vmul.f32 %v1051, %v1083
  %1100 = vrot.lane.b32.xlu0 %v300, 112
  %v1101 = vpop.permute.xlu0 %1100
  %1102 = vrot.lane.b32.xlu0 %v304, 112
  %v1103 = vpop.permute.xlu0 %1102
  %1104 = vrot.lane.b32.xlu0 %v310, 112
  %v1105 = vpop.permute.xlu0 %1104
  %1106 = vrot.lane.b32.xlu0 %v314, 112
  %v1107 = vpop.permute.xlu0 %1106
  %1108 = vrot.lane.b32.xlu0 %v320, 112
  %v1109 = vpop.permute.xlu0 %1108
  %1110 = vrot.lane.b32.xlu0 %v324, 112
  %v1111 = vpop.permute.xlu0 %1110
  %1112 = vrot.lane.b32.xlu0 %v330, 112
  %v1113 = vpop.permute.xlu0 %1112
  %1114 = vrot.lane.b32.xlu0 %v334, 112
  %v1115 = vpop.permute.xlu0 %1114
  %v1125 = vsel %vm250, %v1084, 0
  %v1128 = vsel %vm250, %v1085, 0
  %v1131 = vsel %vm250, %v1086, 0
  %v1134 = vsel %vm250, %v1087, 0
  %v1137 = vsel %vm250, %v1088, 0
  %v1140 = vsel %vm250, %v1089, 0
  %v1143 = vsel %vm250, %v1090, 0
  %v1146 = vsel %vm250, %v1091, 0
  %1148 = vmatprep.subr.mxu0 0.0
  %1149 = vmatpush1.msra.mxu0 %v1101
  %1150 = vmatprep.subr.mxu0 0.0
  %1151 = vmatpush1.msra.mxu0 %v1103
  %1152 = vmatprep.subr.mxu0 0.0
  %1153 = vmatpush1.msra.mxu0 %v1105
  %1154 = vmatprep.subr.mxu0 0.0
  %1155 = vmatpush1.msra.mxu0 %v1107
  %1156 = vmatprep.subr.mxu0 0.0
  %1157 = vmatpush1.msra.mxu0 %v1109
  %1158 = vmatprep.subr.mxu0 0.0
  %1159 = vmatpush1.msra.mxu0 %v1111
  %1160 = vmatprep.subr.mxu0 0.0
  %1161 = vmatpush1.msra.mxu0 %v1113
  %1162 = vmatprep.subr.mxu0 0.0
  %1163 = vmatpush1.msra.mxu0 %v1115
  %1164 = vmatprep.subr.mxu0 0.0
  %1165 = vmatpush1.msra.mxu0 0.0
  %1166 = vmatprep.subr.mxu0 0.0
  %1167 = vmatpush1.msra.mxu0 0.0
  %1168 = vmatprep.subr.mxu0 0.0
  %1169 = vmatpush1.msra.mxu0 0.0
  %1170 = vmatprep.subr.mxu0 0.0
  %1171 = vmatpush1.msra.mxu0 0.0
  %1172 = vmatprep.subr.mxu0 0.0
  %1173 = vmatpush1.msra.mxu0 0.0
  %1174 = vmatprep.subr.mxu0 0.0
  %1175 = vmatpush1.msra.mxu0 0.0
  %1176 = vmatprep.subr.mxu0 0.0
  %1177 = vmatpush1.msra.mxu0 0.0
  %1178 = vmatprep.subr.mxu0 0.0
  %1179 = vmatpush1.msra.mxu0 0.0
  %1180 = vmatprep.subr.mxu0 0.0
  %1181 = vmatpush1.msra.mxu0 0.0
  %1182 = vmatprep.subr.mxu0 0.0
  %1183 = vmatpush1.msra.mxu0 0.0
  %1184 = vmatprep.subr.mxu0 0.0
  %1185 = vmatpush1.msra.mxu0 0.0
  %1186 = vmatprep.subr.mxu0 0.0
  %1187 = vmatpush1.msra.mxu0 0.0
  %1188 = vmatprep.subr.mxu0 0.0
  %1189 = vmatpush1.msra.mxu0 0.0
  %1190 = vmatprep.subr.mxu0 0.0
  %1191 = vmatpush1.msra.mxu0 0.0
  %1192 = vmatprep.subr.mxu0 0.0
  %1193 = vmatpush1.msra.mxu0 0.0
  %1194 = vmatprep.subr.mxu0 0.0
  %1195 = vmatpush1.msra.mxu0 0.0
  %1196 = vmatprep.subr.mxu0 0.0
  %1197 = vmatpush1.msra.mxu0 0.0
  %1198 = vmatprep.subr.mxu0 0.0
  %1199 = vmatpush1.msra.mxu0 0.0
  %1200 = vmatprep.subr.mxu0 0.0
  %1201 = vmatpush1.msra.mxu0 0.0
  %1202 = vmatprep.subr.mxu0 0.0
  %1203 = vmatpush1.msra.mxu0 0.0
  %1204 = vmatprep.subr.mxu0 0.0
  %1205 = vmatpush1.msra.mxu0 0.0
  %1206 = vmatprep.subr.mxu0 0.0
  %1207 = vmatpush1.msra.mxu0 0.0
  %1208 = vmatprep.subr.mxu0 0.0
  %1209 = vmatpush1.msra.mxu0 0.0
  %1210 = vmatprep.subr.mxu0 0.0
  %1211 = vmatpush1.msra.mxu0 0.0
  %1212 = vmatprep.mubr.f32.mxu0 0.0
  %1213 = vmatmul.mubr.f32.gmra.mrb[0].mxu0 %v1125
  %v1214 = vpop.f32.mrb[0].mxu0
  %v1215 = vadd.f32 0.0, %v1214
  %v1216 = vpop.f32.mrb[0].mxu0
  %1217 = vmatprep.mubr.f32.mxu0 0.0
  %1218 = vmatmul.mubr.f32.gmra.mrb[0].mxu0 %v1128
  %v1219 = vpop.f32.mrb[0].mxu0
  %v1220 = vadd.f32 0.0, %v1219
  %v1221 = vpop.f32.mrb[0].mxu0
  %1222 = vmatprep.mubr.f32.mxu0 0.0
  %1223 = vmatmul.mubr.f32.gmra.mrb[0].mxu0 %v1131
  %v1224 = vpop.f32.mrb[0].mxu0
  %v1225 = vadd.f32 0.0, %v1224
  %v1226 = vpop.f32.mrb[0].mxu0
  %1227 = vmatprep.mubr.f32.mxu0 0.0
  %1228 = vmatmul.mubr.f32.gmra.mrb[0].mxu0 %v1134
  %v1229 = vpop.f32.mrb[0].mxu0
  %v1230 = vadd.f32 0.0, %v1229
  %v1231 = vpop.f32.mrb[0].mxu0
  %1232 = vmatprep.mubr.f32.mxu0 0.0
  %1233 = vmatmul.mubr.f32.gmra.mrb[0].mxu0 %v1137
  %v1234 = vpop.f32.mrb[0].mxu0
  %v1235 = vadd.f32 0.0, %v1234
  %v1236 = vpop.f32.mrb[0].mxu0
  %1237 = vmatprep.mubr.f32.mxu0 0.0
  %1238 = vmatmul.mubr.f32.gmra.mrb[0].mxu0 %v1140
  %v1239 = vpop.f32.mrb[0].mxu0
  %v1240 = vadd.f32 0.0, %v1239
  %v1241 = vpop.f32.mrb[0].mxu0
  %1242 = vmatprep.mubr.f32.mxu0 0.0
  %1243 = vmatmul.mubr.f32.gmra.mrb[0].mxu0 %v1143
  %v1244 = vpop.f32.mrb[0].mxu0
  %v1245 = vadd.f32 0.0, %v1244
  %v1246 = vpop.f32.mrb[0].mxu0
  %1247 = vmatprep.mubr.f32.mxu0 0.0
  %1248 = vmatmul.mubr.f32.gmra.mrb[0].mxu0 %v1146
  %v1249 = vpop.f32.mrb[0].mxu0
  %v1250 = vadd.f32 0.0, %v1249
  %v1251 = vpop.f32.mrb[0].mxu0
  %1252 = vdwg.mxu0
  %v1253 = vpack.c.bf16 %v1220, %v1215
  %v1254 = vpack.c.bf16 %v1230, %v1225
  %v1255 = vpack.c.bf16 %v1240, %v1235
  %v1256 = vpack.c.bf16 %v1250, %v1245
  %v1257 = vld [vmem:[%s8 + $0x8] sm:$0xf]
  %v1258 = vld [vmem:[%s8 + $0xc] sm:$0xf]
  %v1261 = vunpack.c.l.b16 %v1257
  %v1262 = vunpack.c.l.b16 %v1258
  %v1263 = vpack.c.b16 %v1262, %v1261
  %v1266 = vsel %vm369, %v1253, 0
  %v1269 = vsel %vm369, %v1254, 0
  %v1272 = vsel %vm369, %v1255, 0
  %v1275 = vsel %vm369, %v1256, 0
  %1277 = vmatprep.subr.bf16.mxu0 0
  %1278 = vmatpush1.bf16.msra.mxu0 %v1263
  %1279 = vmatprep.subr.bf16.mxu0 0
  %1280 = vmatpush1.bf16.msra.mxu0 0
  %1281 = vmatprep.subr.bf16.mxu0 0
  %1282 = vmatpush1.bf16.msra.mxu0 0
  %1283 = vmatprep.subr.bf16.mxu0 0
  %1284 = vmatpush1.bf16.msra.mxu0 0
  %1285 = vmatprep.subr.bf16.mxu0 0
  %1286 = vmatpush1.bf16.msra.mxu0 0
  %1287 = vmatprep.subr.bf16.mxu0 0
  %1288 = vmatpush1.bf16.msra.mxu0 0
  %1289 = vmatprep.subr.bf16.mxu0 0
  %1290 = vmatpush1.bf16.msra.mxu0 0
  %1291 = vmatprep.subr.bf16.mxu0 0
  %1292 = vmatpush1.bf16.msra.mxu0 0
  %1293 = vmatprep.subr.bf16.mxu0 0
  %1294 = vmatpush1.bf16.msra.mxu0 0
  %1295 = vmatprep.subr.bf16.mxu0 0
  %1296 = vmatpush1.bf16.msra.mxu0 0
  %1297 = vmatprep.subr.bf16.mxu0 0
  %1298 = vmatpush1.bf16.msra.mxu0 0
  %1299 = vmatprep.subr.bf16.mxu0 0
  %1300 = vmatpush1.bf16.msra.mxu0 0
  %1301 = vmatprep.subr.bf16.mxu0 0
  %1302 = vmatpush1.bf16.msra.mxu0 0
  %1303 = vmatprep.subr.bf16.mxu0 0
  %1304 = vmatpush1.bf16.msra.mxu0 0
  %1305 = vmatprep.subr.bf16.mxu0 0
  %1306 = vmatpush1.bf16.msra.mxu0 0
  %1307 = vmatprep.subr.bf16.mxu0 0
  %1308 = vmatpush1.bf16.msra.mxu0 0
  %1309 = vmatprep.mubr.bf16.mxu0 0
  %1310 = vmatmul.mubr.bf16.gmra.mrb[0].mxu0 %v1266
  %v1311 = vpop.f32.mrb[0].mxu0
  %v1312 = vadd.f32 0.0, %v1311
  %v1313 = vpop.f32.mrb[0].mxu0
  %v1314 = vpop.f32.mrb[0].mxu0
  %v1315 = vadd.f32 0.0, %v1314
  %v1316 = vpop.f32.mrb[0].mxu0
  %1317 = vmatprep.mubr.bf16.mxu0 0
  %1318 = vmatmul.mubr.bf16.gmra.mrb[0].mxu0 %v1269
  %v1319 = vpop.f32.mrb[0].mxu0
  %v1320 = vadd.f32 0.0, %v1319
  %v1321 = vpop.f32.mrb[0].mxu0
  %v1322 = vpop.f32.mrb[0].mxu0
  %v1323 = vadd.f32 0.0, %v1322
  %v1324 = vpop.f32.mrb[0].mxu0
  %1325 = vmatprep.mubr.bf16.mxu0 0
  %1326 = vmatmul.mubr.bf16.gmra.mrb[0].mxu0 %v1272
  %v1327 = vpop.f32.mrb[0].mxu0
  %v1328 = vadd.f32 0.0, %v1327
  %v1329 = vpop.f32.mrb[0].mxu0
  %v1330 = vpop.f32.mrb[0].mxu0
  %v1331 = vadd.f32 0.0, %v1330
  %v1332 = vpop.f32.mrb[0].mxu0
  %1333 = vmatprep.mubr.bf16.mxu0 0
  %1334 = vmatmul.mubr.bf16.gmra.mrb[0].mxu0 %v1275
  %v1335 = vpop.f32.mrb[0].mxu0
  %v1336 = vadd.f32 0.0, %v1335
  %v1337 = vpop.f32.mrb[0].mxu0
  %v1338 = vpop.f32.mrb[0].mxu0
  %v1339 = vadd.f32 0.0, %v1338
  %v1340 = vpop.f32.mrb[0].mxu0
  %1341 = vdwg.mxu0
  %v1342 = vadd.f32 %v827, %v1312
  %v1343 = vadd.f32 %v828, %v1315
  %v1344 = vadd.f32 %v829, %v1320
  %v1345 = vadd.f32 %v830, %v1323
  %v1346 = vadd.f32 %v831, %v1328
  %v1347 = vadd.f32 %v832, %v1331
  %v1348 = vadd.f32 %v833, %v1336
  %v1349 = vadd.f32 %v834, %v1339
  %1350 = vrot.lane.b32.xlu0 %v336, 96
  %v1351 = vpop.permute.xlu0 %1350
  %1352 = vrot.lane.b32.xlu0 %v337, 96
  %v1353 = vpop.permute.xlu0 %1352
  %1354 = vrot.lane.b32.xlu0 %v338, 96
  %v1355 = vpop.permute.xlu0 %1354
  %1356 = vrot.lane.b32.xlu0 %v339, 96
  %v1357 = vpop.permute.xlu0 %1356
  %1358 = vrot.lane.b32.xlu0 %v340, 96
  %v1359 = vpop.permute.xlu0 %1358
  %1360 = vrot.lane.b32.xlu0 %v341, 96
  %v1361 = vpop.permute.xlu0 %1360
  %1362 = vrot.lane.b32.xlu0 %v342, 96
  %v1363 = vpop.permute.xlu0 %1362
  %1364 = vrot.lane.b32.xlu0 %v343, 96
  %v1365 = vpop.permute.xlu0 %1364
  %1366 = vrot.lane.b32.xlu0 %v298, 32
  %v1367 = vpop.permute.xlu0 %1366
  %1368 = vrot.lane.b32.xlu0 %v302, 32
  %v1369 = vpop.permute.xlu0 %1368
  %1370 = vrot.lane.b32.xlu0 %v308, 32
  %v1371 = vpop.permute.xlu0 %1370
  %1372 = vrot.lane.b32.xlu0 %v312, 32
  %v1373 = vpop.permute.xlu0 %1372
  %1374 = vrot.lane.b32.xlu0 %v318, 32
  %v1375 = vpop.permute.xlu0 %1374
  %1376 = vrot.lane.b32.xlu0 %v322, 32
  %v1377 = vpop.permute.xlu0 %1376
  %1378 = vrot.lane.b32.xlu0 %v328, 32
  %v1379 = vpop.permute.xlu0 %1378
  %1380 = vrot.lane.b32.xlu0 %v332, 32
  %v1381 = vpop.permute.xlu0 %1380
  %v1382 = vsel %vm369, %v1351, 0
  %v1384 = vsel %vm369, %v1353, 0
  %v1386 = vsel %vm369, %v1355, 0
  %v1388 = vsel %vm369, %v1357, 0
  %v1390 = vsel %vm369, %v1359, 0
  %v1392 = vsel %vm369, %v1361, 0
  %v1394 = vsel %vm369, %v1363, 0
  %v1396 = vsel %vm369, %v1365, 0
  %v1398 = vsel %vm369, %v1367, 0
  %v1400 = vsel %vm369, %v1369, 0
  %v1402 = vsel %vm369, %v1371, 0
  %v1404 = vsel %vm369, %v1373, 0
  %v1406 = vsel %vm369, %v1375, 0
  %v1408 = vsel %vm369, %v1377, 0
  %v1410 = vsel %vm369, %v1379, 0
  %v1412 = vsel %vm369, %v1381, 0
  %1414 = vmatprep.subr.mxu0 0.0
  %1415 = vmatpush1.xpose.msra.mxu0 %v1398
  %1416 = vmatprep.subr.mxu0 0.0
  %1417 = vmatpush1.xpose.msra.mxu0 %v1400
  %1418 = vmatprep.subr.mxu0 0.0
  %1419 = vmatpush1.xpose.msra.mxu0 %v1402
  %1420 = vmatprep.subr.mxu0 0.0
  %1421 = vmatpush1.xpose.msra.mxu0 %v1404
  %1422 = vmatprep.subr.mxu0 0.0
  %1423 = vmatpush1.xpose.msra.mxu0 %v1406
  %1424 = vmatprep.subr.mxu0 0.0
  %1425 = vmatpush1.xpose.msra.mxu0 %v1408
  %1426 = vmatprep.subr.mxu0 0.0
  %1427 = vmatpush1.xpose.msra.mxu0 %v1410
  %1428 = vmatprep.subr.mxu0 0.0
  %1429 = vmatpush1.xpose.msra.mxu0 %v1412
  %1430 = vmatprep.subr.mxu0 0.0
  %1431 = vmatpush1.xpose.msra.mxu0 0.0
  %1432 = vmatprep.subr.mxu0 0.0
  %1433 = vmatpush1.xpose.msra.mxu0 0.0
  %1434 = vmatprep.subr.mxu0 0.0
  %1435 = vmatpush1.xpose.msra.mxu0 0.0
  %1436 = vmatprep.subr.mxu0 0.0
  %1437 = vmatpush1.xpose.msra.mxu0 0.0
  %1438 = vmatprep.subr.mxu0 0.0
  %1439 = vmatpush1.xpose.msra.mxu0 0.0
  %1440 = vmatprep.subr.mxu0 0.0
  %1441 = vmatpush1.xpose.msra.mxu0 0.0
  %1442 = vmatprep.subr.mxu0 0.0
  %1443 = vmatpush1.xpose.msra.mxu0 0.0
  %1444 = vmatprep.subr.mxu0 0.0
  %1445 = vmatpush1.xpose.msra.mxu0 0.0
  %1446 = vmatprep.subr.mxu0 0.0
  %1447 = vmatpush1.xpose.msra.mxu0 0.0
  %1448 = vmatprep.subr.mxu0 0.0
  %1449 = vmatpush1.xpose.msra.mxu0 0.0
  %1450 = vmatprep.subr.mxu0 0.0
  %1451 = vmatpush1.xpose.msra.mxu0 0.0
  %1452 = vmatprep.subr.mxu0 0.0
  %1453 = vmatpush1.xpose.msra.mxu0 0.0
  %1454 = vmatprep.subr.mxu0 0.0
  %1455 = vmatpush1.xpose.msra.mxu0 0.0
  %1456 = vmatprep.subr.mxu0 0.0
  %1457 = vmatpush1.xpose.msra.mxu0 0.0
  %1458 = vmatprep.subr.mxu0 0.0
  %1459 = vmatpush1.xpose.msra.mxu0 0.0
  %1460 = vmatprep.subr.mxu0 0.0
  %1461 = vmatpush1.xpose.msra.mxu0 0.0
  %1462 = vmatprep.subr.mxu0 0.0
  %1463 = vmatpush1.xpose.msra.mxu0 0.0
  %1464 = vmatprep.subr.mxu0 0.0
  %1465 = vmatpush1.xpose.msra.mxu0 0.0
  %1466 = vmatprep.subr.mxu0 0.0
  %1467 = vmatpush1.xpose.msra.mxu0 0.0
  %1468 = vmatprep.subr.mxu0 0.0
  %1469 = vmatpush1.xpose.msra.mxu0 0.0
  %1470 = vmatprep.subr.mxu0 0.0
  %1471 = vmatpush1.xpose.msra.mxu0 0.0
  %1472 = vmatprep.subr.mxu0 0.0
  %1473 = vmatpush1.xpose.msra.mxu0 0.0
  %1474 = vmatprep.subr.mxu0 0.0
  %1475 = vmatpush1.xpose.msra.mxu0 0.0
  %1476 = vmatprep.subr.mxu0 0.0
  %1477 = vmatpush1.xpose.msra.mxu0 0.0
  %1478 = vmatprep.mubr.f32.mxu0 0.0
  %1479 = vmatmul.mubr.f32.gmra.mrb[0].mxu0 %v1382
  %v1480 = vpop.f32.mrb[0].mxu0
  %v1481 = vadd.f32 %v178, %v1480
  %v1482 = vpop.f32.mrb[0].mxu0
  %1483 = vmatprep.mubr.f32.mxu0 0.0
  %1484 = vmatmul.mubr.f32.gmra.mrb[0].mxu0 %v1384
  %v1485 = vpop.f32.mrb[0].mxu0
  %v1486 = vadd.f32 %v179, %v1485
  %v1487 = vpop.f32.mrb[0].mxu0
  %1488 = vmatprep.mubr.f32.mxu0 0.0
  %1489 = vmatmul.mubr.f32.gmra.mrb[0].mxu0 %v1386
  %v1490 = vpop.f32.mrb[0].mxu0
  %v1491 = vadd.f32 %v180, %v1490
  %v1492 = vpop.f32.mrb[0].mxu0
  %1493 = vmatprep.mubr.f32.mxu0 0.0
  %1494 = vmatmul.mubr.f32.gmra.mrb[0].mxu0 %v1388
  %v1495 = vpop.f32.mrb[0].mxu0
  %v1496 = vadd.f32 %v181, %v1495
  %v1497 = vpop.f32.mrb[0].mxu0
  %1498 = vmatprep.mubr.f32.mxu0 0.0
  %1499 = vmatmul.mubr.f32.gmra.mrb[0].mxu0 %v1390
  %v1500 = vpop.f32.mrb[0].mxu0
  %v1501 = vadd.f32 %v182, %v1500
  %v1502 = vpop.f32.mrb[0].mxu0
  %1503 = vmatprep.mubr.f32.mxu0 0.0
  %1504 = vmatmul.mubr.f32.gmra.mrb[0].mxu0 %v1392
  %v1505 = vpop.f32.mrb[0].mxu0
  %v1506 = vadd.f32 %v183, %v1505
  %v1507 = vpop.f32.mrb[0].mxu0
  %1508 = vmatprep.mubr.f32.mxu0 0.0
  %1509 = vmatmul.mubr.f32.gmra.mrb[0].mxu0 %v1394
  %v1510 = vpop.f32.mrb[0].mxu0
  %v1511 = vadd.f32 %v184, %v1510
  %v1512 = vpop.f32.mrb[0].mxu0
  %1513 = vmatprep.mubr.f32.mxu0 0.0
  %1514 = vmatmul.mubr.f32.gmra.mrb[0].mxu0 %v1396
  %v1515 = vpop.f32.mrb[0].mxu0
  %v1516 = vadd.f32 %v185, %v1515
  %v1517 = vpop.f32.mrb[0].mxu0
  %1518 = vdwg.mxu0
  %v1519 = vsel %vm250, %v1481, -inf
  %1520 = vmax.xlane.f32.xlu0 %v1519
  %v1521 = vpop.xlane.xlu0 %1520
  %v1522 = vsel %vm250, %v1486, -inf
  %1523 = vmax.xlane.f32.xlu0 %v1522
  %v1524 = vpop.xlane.xlu0 %1523
  %v1525 = vsel %vm250, %v1491, -inf
  %1526 = vmax.xlane.f32.xlu0 %v1525
  %v1527 = vpop.xlane.xlu0 %1526
  %v1528 = vsel %vm250, %v1496, -inf
  %1529 = vmax.xlane.f32.xlu0 %v1528
  %v1530 = vpop.xlane.xlu0 %1529
  %v1531 = vsel %vm250, %v1501, -inf
  %1532 = vmax.xlane.f32.xlu0 %v1531
  %v1533 = vpop.xlane.xlu0 %1532
  %v1534 = vsel %vm250, %v1506, -inf
  %1535 = vmax.xlane.f32.xlu0 %v1534
  %v1536 = vpop.xlane.xlu0 %1535
  %v1537 = vsel %vm250, %v1511, -inf
  %1538 = vmax.xlane.f32.xlu0 %v1537
  %v1539 = vpop.xlane.xlu0 %1538
  %v1540 = vsel %vm250, %v1516, -inf
  %1541 = vmax.xlane.f32.xlu0 %v1540
  %v1542 = vpop.xlane.xlu0 %1541
  %v1543 = vsub.f32 %v1481, %v1521
  %v1544 = vsub.f32 %v1486, %v1524
  %v1545 = vsub.f32 %v1491, %v1527
  %v1546 = vsub.f32 %v1496, %v1530
  %v1547 = vsub.f32 %v1501, %v1533
  %v1548 = vsub.f32 %v1506, %v1536
  %v1549 = vsub.f32 %v1511, %v1539
  %v1550 = vsub.f32 %v1516, %v1542
  %v1551 = vmul.f32 %v1543, 1.442695
  %v1552 = vpow.pop %v1551
  %v1553 = vmul.f32 %v1544, 1.442695
  %v1554 = vpow.pop %v1553
  %v1555 = vmul.f32 %v1545, 1.442695
  %v1556 = vpow.pop %v1555
  %v1557 = vmul.f32 %v1546, 1.442695
  %v1558 = vpow.pop %v1557
  %v1559 = vmul.f32 %v1547, 1.442695
  %v1560 = vpow.pop %v1559
  %v1561 = vmul.f32 %v1548, 1.442695
  %v1562 = vpow.pop %v1561
  %v1563 = vmul.f32 %v1549, 1.442695
  %v1564 = vpow.pop %v1563
  %v1565 = vmul.f32 %v1550, 1.442695
  %v1566 = vpow.pop %v1565
  %v1567 = vsel %vm250, %v1552, 0.0
  %1568 = vadd.xlane.f32.xlu0 %v1567
  %v1569 = vpop.xlane.xlu0 %1568
  %v1570 = vsel %vm250, %v1554, 0.0
  %1571 = vadd.xlane.f32.xlu0 %v1570
  %v1572 = vpop.xlane.xlu0 %1571
  %v1573 = vsel %vm250, %v1556, 0.0
  %1574 = vadd.xlane.f32.xlu0 %v1573
  %v1575 = vpop.xlane.xlu0 %1574
  %v1576 = vsel %vm250, %v1558, 0.0
  %1577 = vadd.xlane.f32.xlu0 %v1576
  %v1578 = vpop.xlane.xlu0 %1577
  %v1579 = vsel %vm250, %v1560, 0.0
  %1580 = vadd.xlane.f32.xlu0 %v1579
  %v1581 = vpop.xlane.xlu0 %1580
  %v1582 = vsel %vm250, %v1562, 0.0
  %1583 = vadd.xlane.f32.xlu0 %v1582
  %v1584 = vpop.xlane.xlu0 %1583
  %v1585 = vsel %vm250, %v1564, 0.0
  %1586 = vadd.xlane.f32.xlu0 %v1585
  %v1587 = vpop.xlane.xlu0 %1586
  %v1588 = vsel %vm250, %v1566, 0.0
  %1589 = vadd.xlane.f32.xlu0 %v1588
  %v1590 = vpop.xlane.xlu0 %1589
  %v1591 = vrcp.pop %v1569
  %v1592 = vrcp.pop %v1572
  %v1593 = vrcp.pop %v1575
  %v1594 = vrcp.pop %v1578
  %v1595 = vrcp.pop %v1581
  %v1596 = vrcp.pop %v1584
  %v1597 = vrcp.pop %v1587
  %v1598 = vrcp.pop %v1590
  %v1599 = vmul.f32 %v1552, %v1591
  %v1600 = vmul.f32 %v1554, %v1592
  %v1601 = vmul.f32 %v1556, %v1593
  %v1602 = vmul.f32 %v1558, %v1594
  %v1603 = vmul.f32 %v1560, %v1595
  %v1604 = vmul.f32 %v1562, %v1596
  %v1605 = vmul.f32 %v1564, %v1597
  %v1606 = vmul.f32 %v1566, %v1598
  %1607 = vrot.lane.b32.xlu0 %v300, 96
  %v1608 = vpop.permute.xlu0 %1607
  %1609 = vrot.lane.b32.xlu0 %v304, 96
  %v1610 = vpop.permute.xlu0 %1609
  %1611 = vrot.lane.b32.xlu0 %v310, 96
  %v1612 = vpop.permute.xlu0 %1611
  %1613 = vrot.lane.b32.xlu0 %v314, 96
  %v1614 = vpop.permute.xlu0 %1613
  %1615 = vrot.lane.b32.xlu0 %v320, 96
  %v1616 = vpop.permute.xlu0 %1615
  %1617 = vrot.lane.b32.xlu0 %v324, 96
  %v1618 = vpop.permute.xlu0 %1617
  %1619 = vrot.lane.b32.xlu0 %v330, 96
  %v1620 = vpop.permute.xlu0 %1619
  %1621 = vrot.lane.b32.xlu0 %v334, 96
  %v1622 = vpop.permute.xlu0 %1621
  %v1632 = vsel %vm250, %v1599, 0
  %v1635 = vsel %vm250, %v1600, 0
  %v1638 = vsel %vm250, %v1601, 0
  %v1641 = vsel %vm250, %v1602, 0
  %v1644 = vsel %vm250, %v1603, 0
  %v1647 = vsel %vm250, %v1604, 0
  %v1650 = vsel %vm250, %v1605, 0
  %v1653 = vsel %vm250, %v1606, 0
  %1655 = vmatprep.subr.mxu0 0.0
  %1656 = vmatpush1.msra.mxu0 %v1608
  %1657 = vmatprep.subr.mxu0 0.0
  %1658 = vmatpush1.msra.mxu0 %v1610
  %1659 = vmatprep.subr.mxu0 0.0
  %1660 = vmatpush1.msra.mxu0 %v1612
  %1661 = vmatprep.subr.mxu0 0.0
  %1662 = vmatpush1.msra.mxu0 %v1614
  %1663 = vmatprep.subr.mxu0 0.0
  %1664 = vmatpush1.msra.mxu0 %v1616
  %1665 = vmatprep.subr.mxu0 0.0
  %1666 = vmatpush1.msra.mxu0 %v1618
  %1667 = vmatprep.subr.mxu0 0.0
  %1668 = vmatpush1.msra.mxu0 %v1620
  %1669 = vmatprep.subr.mxu0 0.0
  %1670 = vmatpush1.msra.mxu0 %v1622
  %1671 = vmatprep.subr.mxu0 0.0
  %1672 = vmatpush1.msra.mxu0 0.0
  %1673 = vmatprep.subr.mxu0 0.0
  %1674 = vmatpush1.msra.mxu0 0.0
  %1675 = vmatprep.subr.mxu0 0.0
  %1676 = vmatpush1.msra.mxu0 0.0
  %1677 = vmatprep.subr.mxu0 0.0
  %1678 = vmatpush1.msra.mxu0 0.0
  %1679 = vmatprep.subr.mxu0 0.0
  %1680 = vmatpush1.msra.mxu0 0.0
  %1681 = vmatprep.subr.mxu0 0.0
  %1682 = vmatpush1.msra.mxu0 0.0
  %1683 = vmatprep.subr.mxu0 0.0
  %1684 = vmatpush1.msra.mxu0 0.0
  %1685 = vmatprep.subr.mxu0 0.0
  %1686 = vmatpush1.msra.mxu0 0.0
  %1687 = vmatprep.subr.mxu0 0.0
  %1688 = vmatpush1.msra.mxu0 0.0
  %1689 = vmatprep.subr.mxu0 0.0
  %1690 = vmatpush1.msra.mxu0 0.0
  %1691 = vmatprep.subr.mxu0 0.0
  %1692 = vmatpush1.msra.mxu0 0.0
  %1693 = vmatprep.subr.mxu0 0.0
  %1694 = vmatpush1.msra.mxu0 0.0
  %1695 = vmatprep.subr.mxu0 0.0
  %1696 = vmatpush1.msra.mxu0 0.0
  %1697 = vmatprep.subr.mxu0 0.0
  %1698 = vmatpush1.msra.mxu0 0.0
  %1699 = vmatprep.subr.mxu0 0.0
  %1700 = vmatpush1.msra.mxu0 0.0
  %1701 = vmatprep.subr.mxu0 0.0
  %1702 = vmatpush1.msra.mxu0 0.0
  %1703 = vmatprep.subr.mxu0 0.0
  %1704 = vmatpush1.msra.mxu0 0.0
  %1705 = vmatprep.subr.mxu0 0.0
  %1706 = vmatpush1.msra.mxu0 0.0
  %1707 = vmatprep.subr.mxu0 0.0
  %1708 = vmatpush1.msra.mxu0 0.0
  %1709 = vmatprep.subr.mxu0 0.0
  %1710 = vmatpush1.msra.mxu0 0.0
  %1711 = vmatprep.subr.mxu0 0.0
  %1712 = vmatpush1.msra.mxu0 0.0
  %1713 = vmatprep.subr.mxu0 0.0
  %1714 = vmatpush1.msra.mxu0 0.0
  %1715 = vmatprep.subr.mxu0 0.0
  %1716 = vmatpush1.msra.mxu0 0.0
  %1717 = vmatprep.subr.mxu0 0.0
  %1718 = vmatpush1.msra.mxu0 0.0
  %1719 = vmatprep.mubr.f32.mxu0 0.0
  %1720 = vmatmul.mubr.f32.gmra.mrb[0].mxu0 %v1632
  %v1721 = vpop.f32.mrb[0].mxu0
  %v1722 = vadd.f32 0.0, %v1721
  %v1723 = vpop.f32.mrb[0].mxu0
  %1724 = vmatprep.mubr.f32.mxu0 0.0
  %1725 = vmatmul.mubr.f32.gmra.mrb[0].mxu0 %v1635
  %v1726 = vpop.f32.mrb[0].mxu0
  %v1727 = vadd.f32 0.0, %v1726
  %v1728 = vpop.f32.mrb[0].mxu0
  %1729 = vmatprep.mubr.f32.mxu0 0.0
  %1730 = vmatmul.mubr.f32.gmra.mrb[0].mxu0 %v1638
  %v1731 = vpop.f32.mrb[0].mxu0
  %v1732 = vadd.f32 0.0, %v1731
  %v1733 = vpop.f32.mrb[0].mxu0
  %1734 = vmatprep.mubr.f32.mxu0 0.0
  %1735 = vmatmul.mubr.f32.gmra.mrb[0].mxu0 %v1641
  %v1736 = vpop.f32.mrb[0].mxu0
  %v1737 = vadd.f32 0.0, %v1736
  %v1738 = vpop.f32.mrb[0].mxu0
  %1739 = vmatprep.mubr.f32.mxu0 0.0
  %1740 = vmatmul.mubr.f32.gmra.mrb[0].mxu0 %v1644
  %v1741 = vpop.f32.mrb[0].mxu0
  %v1742 = vadd.f32 0.0, %v1741
  %v1743 = vpop.f32.mrb[0].mxu0
  %1744 = vmatprep.mubr.f32.mxu0 0.0
  %1745 = vmatmul.mubr.f32.gmra.mrb[0].mxu0 %v1647
  %v1746 = vpop.f32.mrb[0].mxu0
  %v1747 = vadd.f32 0.0, %v1746
  %v1748 = vpop.f32.mrb[0].mxu0
  %1749 = vmatprep.mubr.f32.mxu0 0.0
  %1750 = vmatmul.mubr.f32.gmra.mrb[0].mxu0 %v1650
  %v1751 = vpop.f32.mrb[0].mxu0
  %v1752 = vadd.f32 0.0, %v1751
  %v1753 = vpop.f32.mrb[0].mxu0
  %1754 = vmatprep.mubr.f32.mxu0 0.0
  %1755 = vmatmul.mubr.f32.gmra.mrb[0].mxu0 %v1653
  %v1756 = vpop.f32.mrb[0].mxu0
  %v1757 = vadd.f32 0.0, %v1756
  %v1758 = vpop.f32.mrb[0].mxu0
  %1759 = vdwg.mxu0
  %v1760 = vpack.c.bf16 %v1727, %v1722
  %v1761 = vpack.c.bf16 %v1737, %v1732
  %v1762 = vpack.c.bf16 %v1747, %v1742
  %v1763 = vpack.c.bf16 %v1757, %v1752
  %v1764 = vld [vmem:[%s8 + $0x10] sm:$0xf]
  %v1765 = vld [vmem:[%s8 + $0x14] sm:$0xf]
  %v1768 = vunpack.c.l.b16 %v1764
  %v1769 = vunpack.c.l.b16 %v1765
  %v1770 = vpack.c.b16 %v1769, %v1768
  %v1773 = vsel %vm369, %v1760, 0
  %v1776 = vsel %vm369, %v1761, 0
  %v1779 = vsel %vm369, %v1762, 0
  %v1782 = vsel %vm369, %v1763, 0
  %1784 = vmatprep.subr.bf16.mxu0 0
  %1785 = vmatpush1.bf16.msra.mxu0 %v1770
  %1786 = vmatprep.subr.bf16.mxu0 0
  %1787 = vmatpush1.bf16.msra.mxu0 0
  %1788 = vmatprep.subr.bf16.mxu0 0
  %1789 = vmatpush1.bf16.msra.mxu0 0
  %1790 = vmatprep.subr.bf16.mxu0 0
  %1791 = vmatpush1.bf16.msra.mxu0 0
  %1792 = vmatprep.subr.bf16.mxu0 0
  %1793 = vmatpush1.bf16.msra.mxu0 0
  %1794 = vmatprep.subr.bf16.mxu0 0
  %1795 = vmatpush1.bf16.msra.mxu0 0
  %1796 = vmatprep.subr.bf16.mxu0 0
  %1797 = vmatpush1.bf16.msra.mxu0 0
  %1798 = vmatprep.subr.bf16.mxu0 0
  %1799 = vmatpush1.bf16.msra.mxu0 0
  %1800 = vmatprep.subr.bf16.mxu0 0
  %1801 = vmatpush1.bf16.msra.mxu0 0
  %1802 = vmatprep.subr.bf16.mxu0 0
  %1803 = vmatpush1.bf16.msra.mxu0 0
  %1804 = vmatprep.subr.bf16.mxu0 0
  %1805 = vmatpush1.bf16.msra.mxu0 0
  %1806 = vmatprep.subr.bf16.mxu0 0
  %1807 = vmatpush1.bf16.msra.mxu0 0
  %1808 = vmatprep.subr.bf16.mxu0 0
  %1809 = vmatpush1.bf16.msra.mxu0 0
  %1810 = vmatprep.subr.bf16.mxu0 0
  %1811 = vmatpush1.bf16.msra.mxu0 0
  %1812 = vmatprep.subr.bf16.mxu0 0
  %1813 = vmatpush1.bf16.msra.mxu0 0
  %1814 = vmatprep.subr.bf16.mxu0 0
  %1815 = vmatpush1.bf16.msra.mxu0 0
  %1816 = vmatprep.mubr.bf16.mxu0 0
  %1817 = vmatmul.mubr.bf16.gmra.mrb[0].mxu0 %v1773
  %v1818 = vpop.f32.mrb[0].mxu0
  %v1819 = vadd.f32 0.0, %v1818
  %v1820 = vpop.f32.mrb[0].mxu0
  %v1821 = vpop.f32.mrb[0].mxu0
  %v1822 = vadd.f32 0.0, %v1821
  %v1823 = vpop.f32.mrb[0].mxu0
  %1824 = vmatprep.mubr.bf16.mxu0 0
  %1825 = vmatmul.mubr.bf16.gmra.mrb[0].mxu0 %v1776
  %v1826 = vpop.f32.mrb[0].mxu0
  %v1827 = vadd.f32 0.0, %v1826
  %v1828 = vpop.f32.mrb[0].mxu0
  %v1829 = vpop.f32.mrb[0].mxu0
  %v1830 = vadd.f32 0.0, %v1829
  %v1831 = vpop.f32.mrb[0].mxu0
  %1832 = vmatprep.mubr.bf16.mxu0 0
  %1833 = vmatmul.mubr.bf16.gmra.mrb[0].mxu0 %v1779
  %v1834 = vpop.f32.mrb[0].mxu0
  %v1835 = vadd.f32 0.0, %v1834
  %v1836 = vpop.f32.mrb[0].mxu0
  %v1837 = vpop.f32.mrb[0].mxu0
  %v1838 = vadd.f32 0.0, %v1837
  %v1839 = vpop.f32.mrb[0].mxu0
  %1840 = vmatprep.mubr.bf16.mxu0 0
  %1841 = vmatmul.mubr.bf16.gmra.mrb[0].mxu0 %v1782
  %v1842 = vpop.f32.mrb[0].mxu0
  %v1843 = vadd.f32 0.0, %v1842
  %v1844 = vpop.f32.mrb[0].mxu0
  %v1845 = vpop.f32.mrb[0].mxu0
  %v1846 = vadd.f32 0.0, %v1845
  %v1847 = vpop.f32.mrb[0].mxu0
  %1848 = vdwg.mxu0
  %v1849 = vadd.f32 %v1342, %v1819
  %v1850 = vadd.f32 %v1343, %v1822
  %v1851 = vadd.f32 %v1344, %v1827
  %v1852 = vadd.f32 %v1345, %v1830
  %v1853 = vadd.f32 %v1346, %v1835
  %v1854 = vadd.f32 %v1347, %v1838
  %v1855 = vadd.f32 %v1348, %v1843
  %v1856 = vadd.f32 %v1349, %v1846
  %1857 = vrot.lane.b32.xlu0 %v336, 80
  %v1858 = vpop.permute.xlu0 %1857
  %1859 = vrot.lane.b32.xlu0 %v337, 80
  %v1860 = vpop.permute.xlu0 %1859
  %1861 = vrot.lane.b32.xlu0 %v338, 80
  %v1862 = vpop.permute.xlu0 %1861
  %1863 = vrot.lane.b32.xlu0 %v339, 80
  %v1864 = vpop.permute.xlu0 %1863
  %1865 = vrot.lane.b32.xlu0 %v340, 80
  %v1866 = vpop.permute.xlu0 %1865
  %1867 = vrot.lane.b32.xlu0 %v341, 80
  %v1868 = vpop.permute.xlu0 %1867
  %1869 = vrot.lane.b32.xlu0 %v342, 80
  %v1870 = vpop.permute.xlu0 %1869
  %1871 = vrot.lane.b32.xlu0 %v343, 80
  %v1872 = vpop.permute.xlu0 %1871
  %1873 = vrot.lane.b32.xlu0 %v298, 16
  %v1874 = vpop.permute.xlu0 %1873
  %1875 = vrot.lane.b32.xlu0 %v302, 16
  %v1876 = vpop.permute.xlu0 %1875
  %1877 = vrot.lane.b32.xlu0 %v308, 16
  %v1878 = vpop.permute.xlu0 %1877
  %1879 = vrot.lane.b32.xlu0 %v312, 16
  %v1880 = vpop.permute.xlu0 %1879
  %1881 = vrot.lane.b32.xlu0 %v318, 16
  %v1882 = vpop.permute.xlu0 %1881
  %1883 = vrot.lane.b32.xlu0 %v322, 16
  %v1884 = vpop.permute.xlu0 %1883
  %1885 = vrot.lane.b32.xlu0 %v328, 16
  %v1886 = vpop.permute.xlu0 %1885
  %1887 = vrot.lane.b32.xlu0 %v332, 16
  %v1888 = vpop.permute.xlu0 %1887
  %v1889 = vsel %vm369, %v1858, 0
  %v1891 = vsel %vm369, %v1860, 0
  %v1893 = vsel %vm369, %v1862, 0
  %v1895 = vsel %vm369, %v1864, 0
  %v1897 = vsel %vm369, %v1866, 0
  %v1899 = vsel %vm369, %v1868, 0
  %v1901 = vsel %vm369, %v1870, 0
  %v1903 = vsel %vm369, %v1872, 0
  %v1905 = vsel %vm369, %v1874, 0
  %v1907 = vsel %vm369, %v1876, 0
  %v1909 = vsel %vm369, %v1878, 0
  %v1911 = vsel %vm369, %v1880, 0
  %v1913 = vsel %vm369, %v1882, 0
  %v1915 = vsel %vm369, %v1884, 0
  %v1917 = vsel %vm369, %v1886, 0
  %v1919 = vsel %vm369, %v1888, 0
  %1921 = vmatprep.subr.mxu0 0.0
  %1922 = vmatpush1.xpose.msra.mxu0 %v1905
  %1923 = vmatprep.subr.mxu0 0.0
  %1924 = vmatpush1.xpose.msra.mxu0 %v1907
  %1925 = vmatprep.subr.mxu0 0.0
  %1926 = vmatpush1.xpose.msra.mxu0 %v1909
  %1927 = vmatprep.subr.mxu0 0.0
  %1928 = vmatpush1.xpose.msra.mxu0 %v1911
  %1929 = vmatprep.subr.mxu0 0.0
  %1930 = vmatpush1.xpose.msra.mxu0 %v1913
  %1931 = vmatprep.subr.mxu0 0.0
  %1932 = vmatpush1.xpose.msra.mxu0 %v1915
  %1933 = vmatprep.subr.mxu0 0.0
  %1934 = vmatpush1.xpose.msra.mxu0 %v1917
  %1935 = vmatprep.subr.mxu0 0.0
  %1936 = vmatpush1.xpose.msra.mxu0 %v1919
  %1937 = vmatprep.subr.mxu0 0.0
  %1938 = vmatpush1.xpose.msra.mxu0 0.0
  %1939 = vmatprep.subr.mxu0 0.0
  %1940 = vmatpush1.xpose.msra.mxu0 0.0
  %1941 = vmatprep.subr.mxu0 0.0
  %1942 = vmatpush1.xpose.msra.mxu0 0.0
  %1943 = vmatprep.subr.mxu0 0.0
  %1944 = vmatpush1.xpose.msra.mxu0 0.0
  %1945 = vmatprep.subr.mxu0 0.0
  %1946 = vmatpush1.xpose.msra.mxu0 0.0
  %1947 = vmatprep.subr.mxu0 0.0
  %1948 = vmatpush1.xpose.msra.mxu0 0.0
  %1949 = vmatprep.subr.mxu0 0.0
  %1950 = vmatpush1.xpose.msra.mxu0 0.0
  %1951 = vmatprep.subr.mxu0 0.0
  %1952 = vmatpush1.xpose.msra.mxu0 0.0
  %1953 = vmatprep.subr.mxu0 0.0
  %1954 = vmatpush1.xpose.msra.mxu0 0.0
  %1955 = vmatprep.subr.mxu0 0.0
  %1956 = vmatpush1.xpose.msra.mxu0 0.0
  %1957 = vmatprep.subr.mxu0 0.0
  %1958 = vmatpush1.xpose.msra.mxu0 0.0
  %1959 = vmatprep.subr.mxu0 0.0
  %1960 = vmatpush1.xpose.msra.mxu0 0.0
  %1961 = vmatprep.subr.mxu0 0.0
  %1962 = vmatpush1.xpose.msra.mxu0 0.0
  %1963 = vmatprep.subr.mxu0 0.0
  %1964 = vmatpush1.xpose.msra.mxu0 0.0
  %1965 = vmatprep.subr.mxu0 0.0
  %1966 = vmatpush1.xpose.msra.mxu0 0.0
  %1967 = vmatprep.subr.mxu0 0.0
  %1968 = vmatpush1.xpose.msra.mxu0 0.0
  %1969 = vmatprep.subr.mxu0 0.0
  %1970 = vmatpush1.xpose.msra.mxu0 0.0
  %1971 = vmatprep.subr.mxu0 0.0
  %1972 = vmatpush1.xpose.msra.mxu0 0.0
  %1973 = vmatprep.subr.mxu0 0.0
  %1974 = vmatpush1.xpose.msra.mxu0 0.0
  %1975 = vmatprep.subr.mxu0 0.0
  %1976 = vmatpush1.xpose.msra.mxu0 0.0
  %1977 = vmatprep.subr.mxu0 0.0
  %1978 = vmatpush1.xpose.msra.mxu0 0.0
  %1979 = vmatprep.subr.mxu0 0.0
  %1980 = vmatpush1.xpose.msra.mxu0 0.0
  %1981 = vmatprep.subr.mxu0 0.0
  %1982 = vmatpush1.xpose.msra.mxu0 0.0
  %1983 = vmatprep.subr.mxu0 0.0
  %1984 = vmatpush1.xpose.msra.mxu0 0.0
  %1985 = vmatprep.mubr.f32.mxu0 0.0
  %1986 = vmatmul.mubr.f32.gmra.mrb[0].mxu0 %v1889
  %v1987 = vpop.f32.mrb[0].mxu0
  %v1988 = vadd.f32 %v178, %v1987
  %v1989 = vpop.f32.mrb[0].mxu0
  %1990 = vmatprep.mubr.f32.mxu0 0.0
  %1991 = vmatmul.mubr.f32.gmra.mrb[0].mxu0 %v1891
  %v1992 = vpop.f32.mrb[0].mxu0
  %v1993 = vadd.f32 %v179, %v1992
  %v1994 = vpop.f32.mrb[0].mxu0
  %1995 = vmatprep.mubr.f32.mxu0 0.0
  %1996 = vmatmul.mubr.f32.gmra.mrb[0].mxu0 %v1893
  %v1997 = vpop.f32.mrb[0].mxu0
  %v1998 = vadd.f32 %v180, %v1997
  %v1999 = vpop.f32.mrb[0].mxu0
  %2000 = vmatprep.mubr.f32.mxu0 0.0
  %2001 = vmatmul.mubr.f32.gmra.mrb[0].mxu0 %v1895
  %v2002 = vpop.f32.mrb[0].mxu0
  %v2003 = vadd.f32 %v181, %v2002
  %v2004 = vpop.f32.mrb[0].mxu0
  %2005 = vmatprep.mubr.f32.mxu0 0.0
  %2006 = vmatmul.mubr.f32.gmra.mrb[0].mxu0 %v1897
  %v2007 = vpop.f32.mrb[0].mxu0
  %v2008 = vadd.f32 %v182, %v2007
  %v2009 = vpop.f32.mrb[0].mxu0
  %2010 = vmatprep.mubr.f32.mxu0 0.0
  %2011 = vmatmul.mubr.f32.gmra.mrb[0].mxu0 %v1899
  %v2012 = vpop.f32.mrb[0].mxu0
  %v2013 = vadd.f32 %v183, %v2012
  %v2014 = vpop.f32.mrb[0].mxu0
  %2015 = vmatprep.mubr.f32.mxu0 0.0
  %2016 = vmatmul.mubr.f32.gmra.mrb[0].mxu0 %v1901
  %v2017 = vpop.f32.mrb[0].mxu0
  %v2018 = vadd.f32 %v184, %v2017
  %v2019 = vpop.f32.mrb[0].mxu0
  %2020 = vmatprep.mubr.f32.mxu0 0.0
  %2021 = vmatmul.mubr.f32.gmra.mrb[0].mxu0 %v1903
  %v2022 = vpop.f32.mrb[0].mxu0
  %v2023 = vadd.f32 %v185, %v2022
  %v2024 = vpop.f32.mrb[0].mxu0
  %2025 = vdwg.mxu0
  %v2026 = vsel %vm250, %v1988, -inf
  %2027 = vmax.xlane.f32.xlu0 %v2026
  %v2028 = vpop.xlane.xlu0 %2027
  %v2029 = vsel %vm250, %v1993, -inf
  %2030 = vmax.xlane.f32.xlu0 %v2029
  %v2031 = vpop.xlane.xlu0 %2030
  %v2032 = vsel %vm250, %v1998, -inf
  %2033 = vmax.xlane.f32.xlu0 %v2032
  %v2034 = vpop.xlane.xlu0 %2033
  %v2035 = vsel %vm250, %v2003, -inf
  %2036 = vmax.xlane.f32.xlu0 %v2035
  %v2037 = vpop.xlane.xlu0 %2036
  %v2038 = vsel %vm250, %v2008, -inf
  %2039 = vmax.xlane.f32.xlu0 %v2038
  %v2040 = vpop.xlane.xlu0 %2039
  %v2041 = vsel %vm250, %v2013, -inf
  %2042 = vmax.xlane.f32.xlu0 %v2041
  %v2043 = vpop.xlane.xlu0 %2042
  %v2044 = vsel %vm250, %v2018, -inf
  %2045 = vmax.xlane.f32.xlu0 %v2044
  %v2046 = vpop.xlane.xlu0 %2045
  %v2047 = vsel %vm250, %v2023, -inf
  %2048 = vmax.xlane.f32.xlu0 %v2047
  %v2049 = vpop.xlane.xlu0 %2048
  %v2050 = vsub.f32 %v1988, %v2028
  %v2051 = vsub.f32 %v1993, %v2031
  %v2052 = vsub.f32 %v1998, %v2034
  %v2053 = vsub.f32 %v2003, %v2037
  %v2054 = vsub.f32 %v2008, %v2040
  %v2055 = vsub.f32 %v2013, %v2043
  %v2056 = vsub.f32 %v2018, %v2046
  %v2057 = vsub.f32 %v2023, %v2049
  %v2058 = vmul.f32 %v2050, 1.442695
  %v2059 = vpow.pop %v2058
  %v2060 = vmul.f32 %v2051, 1.442695
  %v2061 = vpow.pop %v2060
  %v2062 = vmul.f32 %v2052, 1.442695
  %v2063 = vpow.pop %v2062
  %v2064 = vmul.f32 %v2053, 1.442695
  %v2065 = vpow.pop %v2064
  %v2066 = vmul.f32 %v2054, 1.442695
  %v2067 = vpow.pop %v2066
  %v2068 = vmul.f32 %v2055, 1.442695
  %v2069 = vpow.pop %v2068
  %v2070 = vmul.f32 %v2056, 1.442695
  %v2071 = vpow.pop %v2070
  %v2072 = vmul.f32 %v2057, 1.442695
  %v2073 = vpow.pop %v2072
  %v2074 = vsel %vm250, %v2059, 0.0
  %2075 = vadd.xlane.f32.xlu0 %v2074
  %v2076 = vpop.xlane.xlu0 %2075
  %v2077 = vsel %vm250, %v2061, 0.0
  %2078 = vadd.xlane.f32.xlu0 %v2077
  %v2079 = vpop.xlane.xlu0 %2078
  %v2080 = vsel %vm250, %v2063, 0.0
  %2081 = vadd.xlane.f32.xlu0 %v2080
  %v2082 = vpop.xlane.xlu0 %2081
  %v2083 = vsel %vm250, %v2065, 0.0
  %2084 = vadd.xlane.f32.xlu0 %v2083
  %v2085 = vpop.xlane.xlu0 %2084
  %v2086 = vsel %vm250, %v2067, 0.0
  %2087 = vadd.xlane.f32.xlu0 %v2086
  %v2088 = vpop.xlane.xlu0 %2087
  %v2089 = vsel %vm250, %v2069, 0.0
  %2090 = vadd.xlane.f32.xlu0 %v2089
  %v2091 = vpop.xlane.xlu0 %2090
  %v2092 = vsel %vm250, %v2071, 0.0
  %2093 = vadd.xlane.f32.xlu0 %v2092
  %v2094 = vpop.xlane.xlu0 %2093
  %v2095 = vsel %vm250, %v2073, 0.0
  %2096 = vadd.xlane.f32.xlu0 %v2095
  %v2097 = vpop.xlane.xlu0 %2096
  %v2098 = vrcp.pop %v2076
  %v2099 = vrcp.pop %v2079
  %v2100 = vrcp.pop %v2082
  %v2101 = vrcp.pop %v2085
  %v2102 = vrcp.pop %v2088
  %v2103 = vrcp.pop %v2091
  %v2104 = vrcp.pop %v2094
  %v2105 = vrcp.pop %v2097
  %v2106 = vmul.f32 %v2059, %v2098
  %v2107 = vmul.f32 %v2061, %v2099
  %v2108 = vmul.f32 %v2063, %v2100
  %v2109 = vmul.f32 %v2065, %v2101
  %v2110 = vmul.f32 %v2067, %v2102
  %v2111 = vmul.f32 %v2069, %v2103
  %v2112 = vmul.f32 %v2071, %v2104
  %v2113 = vmul.f32 %v2073, %v2105
  %2114 = vrot.lane.b32.xlu0 %v300, 80
  %v2115 = vpop.permute.xlu0 %2114
  %2116 = vrot.lane.b32.xlu0 %v304, 80
  %v2117 = vpop.permute.xlu0 %2116
  %2118 = vrot.lane.b32.xlu0 %v310, 80
  %v2119 = vpop.permute.xlu0 %2118
  %2120 = vrot.lane.b32.xlu0 %v314, 80
  %v2121 = vpop.permute.xlu0 %2120
  %2122 = vrot.lane.b32.xlu0 %v320, 80
  %v2123 = vpop.permute.xlu0 %2122
  %2124 = vrot.lane.b32.xlu0 %v324, 80
  %v2125 = vpop.permute.xlu0 %2124
  %2126 = vrot.lane.b32.xlu0 %v330, 80
  %v2127 = vpop.permute.xlu0 %2126
  %2128 = vrot.lane.b32.xlu0 %v334, 80
  %v2129 = vpop.permute.xlu0 %2128
  %v2139 = vsel %vm250, %v2106, 0
  %v2142 = vsel %vm250, %v2107, 0
  %v2145 = vsel %vm250, %v2108, 0
  %v2148 = vsel %vm250, %v2109, 0
  %v2151 = vsel %vm250, %v2110, 0
  %v2154 = vsel %vm250, %v2111, 0
  %v2157 = vsel %vm250, %v2112, 0
  %v2160 = vsel %vm250, %v2113, 0
  %2162 = vmatprep.subr.mxu0 0.0
  %2163 = vmatpush1.msra.mxu0 %v2115
  %2164 = vmatprep.subr.mxu0 0.0
  %2165 = vmatpush1.msra.mxu0 %v2117
  %2166 = vmatprep.subr.mxu0 0.0
  %2167 = vmatpush1.msra.mxu0 %v2119
  %2168 = vmatprep.subr.mxu0 0.0
  %2169 = vmatpush1.msra.mxu0 %v2121
  %2170 = vmatprep.subr.mxu0 0.0
  %2171 = vmatpush1.msra.mxu0 %v2123
  %2172 = vmatprep.subr.mxu0 0.0
  %2173 = vmatpush1.msra.mxu0 %v2125
  %2174 = vmatprep.subr.mxu0 0.0
  %2175 = vmatpush1.msra.mxu0 %v2127
  %2176 = vmatprep.subr.mxu0 0.0
  %2177 = vmatpush1.msra.mxu0 %v2129
  %2178 = vmatprep.subr.mxu0 0.0
  %2179 = vmatpush1.msra.mxu0 0.0
  %2180 = vmatprep.subr.mxu0 0.0
  %2181 = vmatpush1.msra.mxu0 0.0
  %2182 = vmatprep.subr.mxu0 0.0
  %2183 = vmatpush1.msra.mxu0 0.0
  %2184 = vmatprep.subr.mxu0 0.0
  %2185 = vmatpush1.msra.mxu0 0.0
  %2186 = vmatprep.subr.mxu0 0.0
  %2187 = vmatpush1.msra.mxu0 0.0
  %2188 = vmatprep.subr.mxu0 0.0
  %2189 = vmatpush1.msra.mxu0 0.0
  %2190 = vmatprep.subr.mxu0 0.0
  %2191 = vmatpush1.msra.mxu0 0.0
  %2192 = vmatprep.subr.mxu0 0.0
  %2193 = vmatpush1.msra.mxu0 0.0
  %2194 = vmatprep.subr.mxu0 0.0
  %2195 = vmatpush1.msra.mxu0 0.0
  %2196 = vmatprep.subr.mxu0 0.0
  %2197 = vmatpush1.msra.mxu0 0.0
  %2198 = vmatprep.subr.mxu0 0.0
  %2199 = vmatpush1.msra.mxu0 0.0
  %2200 = vmatprep.subr.mxu0 0.0
  %2201 = vmatpush1.msra.mxu0 0.0
  %2202 = vmatprep.subr.mxu0 0.0
  %2203 = vmatpush1.msra.mxu0 0.0
  %2204 = vmatprep.subr.mxu0 0.0
  %2205 = vmatpush1.msra.mxu0 0.0
  %2206 = vmatprep.subr.mxu0 0.0
  %2207 = vmatpush1.msra.mxu0 0.0
  %2208 = vmatprep.subr.mxu0 0.0
  %2209 = vmatpush1.msra.mxu0 0.0
  %2210 = vmatprep.subr.mxu0 0.0
  %2211 = vmatpush1.msra.mxu0 0.0
  %2212 = vmatprep.subr.mxu0 0.0
  %2213 = vmatpush1.msra.mxu0 0.0
  %2214 = vmatprep.subr.mxu0 0.0
  %2215 = vmatpush1.msra.mxu0 0.0
  %2216 = vmatprep.subr.mxu0 0.0
  %2217 = vmatpush1.msra.mxu0 0.0
  %2218 = vmatprep.subr.mxu0 0.0
  %2219 = vmatpush1.msra.mxu0 0.0
  %2220 = vmatprep.subr.mxu0 0.0
  %2221 = vmatpush1.msra.mxu0 0.0
  %2222 = vmatprep.subr.mxu0 0.0
  %2223 = vmatpush1.msra.mxu0 0.0
  %2224 = vmatprep.subr.mxu0 0.0
  %2225 = vmatpush1.msra.mxu0 0.0
  %2226 = vmatprep.mubr.f32.mxu0 0.0
  %2227 = vmatmul.mubr.f32.gmra.mrb[0].mxu0 %v2139
  %v2228 = vpop.f32.mrb[0].mxu0
  %v2229 = vadd.f32 0.0, %v2228
  %v2230 = vpop.f32.mrb[0].mxu0
  %2231 = vmatprep.mubr.f32.mxu0 0.0
  %2232 = vmatmul.mubr.f32.gmra.mrb[0].mxu0 %v2142
  %v2233 = vpop.f32.mrb[0].mxu0
  %v2234 = vadd.f32 0.0, %v2233
  %v2235 = vpop.f32.mrb[0].mxu0
  %2236 = vmatprep.mubr.f32.mxu0 0.0
  %2237 = vmatmul.mubr.f32.gmra.mrb[0].mxu0 %v2145
  %v2238 = vpop.f32.mrb[0].mxu0
  %v2239 = vadd.f32 0.0, %v2238
  %v2240 = vpop.f32.mrb[0].mxu0
  %2241 = vmatprep.mubr.f32.mxu0 0.0
  %2242 = vmatmul.mubr.f32.gmra.mrb[0].mxu0 %v2148
  %v2243 = vpop.f32.mrb[0].mxu0
  %v2244 = vadd.f32 0.0, %v2243
  %v2245 = vpop.f32.mrb[0].mxu0
  %2246 = vmatprep.mubr.f32.mxu0 0.0
  %2247 = vmatmul.mubr.f32.gmra.mrb[0].mxu0 %v2151
  %v2248 = vpop.f32.mrb[0].mxu0
  %v2249 = vadd.f32 0.0, %v2248
  %v2250 = vpop.f32.mrb[0].mxu0
  %2251 = vmatprep.mubr.f32.mxu0 0.0
  %2252 = vmatmul.mubr.f32.gmra.mrb[0].mxu0 %v2154
  %v2253 = vpop.f32.mrb[0].mxu0
  %v2254 = vadd.f32 0.0, %v2253
  %v2255 = vpop.f32.mrb[0].mxu0
  %2256 = vmatprep.mubr.f32.mxu0 0.0
  %2257 = vmatmul.mubr.f32.gmra.mrb[0].mxu0 %v2157
  %v2258 = vpop.f32.mrb[0].mxu0
  %v2259 = vadd.f32 0.0, %v2258
  %v2260 = vpop.f32.mrb[0].mxu0
  %2261 = vmatprep.mubr.f32.mxu0 0.0
  %2262 = vmatmul.mubr.f32.gmra.mrb[0].mxu0 %v2160
  %v2263 = vpop.f32.mrb[0].mxu0
  %v2264 = vadd.f32 0.0, %v2263
  %v2265 = vpop.f32.mrb[0].mxu0
  %2266 = vdwg.mxu0
  %v2267 = vpack.c.bf16 %v2234, %v2229
  %v2268 = vpack.c.bf16 %v2244, %v2239
  %v2269 = vpack.c.bf16 %v2254, %v2249
  %v2270 = vpack.c.bf16 %v2264, %v2259
  %v2271 = vld [vmem:[%s8 + $0x18] sm:$0xf]
  %v2272 = vld [vmem:[%s8 + $0x1c] sm:$0xf]
  %v2275 = vunpack.c.l.b16 %v2271
  %v2276 = vunpack.c.l.b16 %v2272
  %v2277 = vpack.c.b16 %v2276, %v2275
  %v2280 = vsel %vm369, %v2267, 0
  %v2283 = vsel %vm369, %v2268, 0
  %v2286 = vsel %vm369, %v2269, 0
  %v2289 = vsel %vm369, %v2270, 0
  %2291 = vmatprep.subr.bf16.mxu0 0
  %2292 = vmatpush1.bf16.msra.mxu0 %v2277
  %2293 = vmatprep.subr.bf16.mxu0 0
  %2294 = vmatpush1.bf16.msra.mxu0 0
  %2295 = vmatprep.subr.bf16.mxu0 0
  %2296 = vmatpush1.bf16.msra.mxu0 0
  %2297 = vmatprep.subr.bf16.mxu0 0
  %2298 = vmatpush1.bf16.msra.mxu0 0
  %2299 = vmatprep.subr.bf16.mxu0 0
  %2300 = vmatpush1.bf16.msra.mxu0 0
  %2301 = vmatprep.subr.bf16.mxu0 0
  %2302 = vmatpush1.bf16.msra.mxu0 0
  %2303 = vmatprep.subr.bf16.mxu0 0
  %2304 = vmatpush1.bf16.msra.mxu0 0
  %2305 = vmatprep.subr.bf16.mxu0 0
  %2306 = vmatpush1.bf16.msra.mxu0 0
  %2307 = vmatprep.subr.bf16.mxu0 0
  %2308 = vmatpush1.bf16.msra.mxu0 0
  %2309 = vmatprep.subr.bf16.mxu0 0
  %2310 = vmatpush1.bf16.msra.mxu0 0
  %2311 = vmatprep.subr.bf16.mxu0 0
  %2312 = vmatpush1.bf16.msra.mxu0 0
  %2313 = vmatprep.subr.bf16.mxu0 0
  %2314 = vmatpush1.bf16.msra.mxu0 0
  %2315 = vmatprep.subr.bf16.mxu0 0
  %2316 = vmatpush1.bf16.msra.mxu0 0
  %2317 = vmatprep.subr.bf16.mxu0 0
  %2318 = vmatpush1.bf16.msra.mxu0 0
  %2319 = vmatprep.subr.bf16.mxu0 0
  %2320 = vmatpush1.bf16.msra.mxu0 0
  %2321 = vmatprep.subr.bf16.mxu0 0
  %2322 = vmatpush1.bf16.msra.mxu0 0
  %2323 = vmatprep.mubr.bf16.mxu0 0
  %2324 = vmatmul.mubr.bf16.gmra.mrb[0].mxu0 %v2280
  %v2325 = vpop.f32.mrb[0].mxu0
  %v2326 = vadd.f32 0.0, %v2325
  %v2327 = vpop.f32.mrb[0].mxu0
  %v2328 = vpop.f32.mrb[0].mxu0
  %v2329 = vadd.f32 0.0, %v2328
  %v2330 = vpop.f32.mrb[0].mxu0
  %2331 = vmatprep.mubr.bf16.mxu0 0
  %2332 = vmatmul.mubr.bf16.gmra.mrb[0].mxu0 %v2283
  %v2333 = vpop.f32.mrb[0].mxu0
  %v2334 = vadd.f32 0.0, %v2333
  %v2335 = vpop.f32.mrb[0].mxu0
  %v2336 = vpop.f32.mrb[0].mxu0
  %v2337 = vadd.f32 0.0, %v2336
  %v2338 = vpop.f32.mrb[0].mxu0
  %2339 = vmatprep.mubr.bf16.mxu0 0
  %2340 = vmatmul.mubr.bf16.gmra.mrb[0].mxu0 %v2286
  %v2341 = vpop.f32.mrb[0].mxu0
  %v2342 = vadd.f32 0.0, %v2341
  %v2343 = vpop.f32.mrb[0].mxu0
  %v2344 = vpop.f32.mrb[0].mxu0
  %v2345 = vadd.f32 0.0, %v2344
  %v2346 = vpop.f32.mrb[0].mxu0
  %2347 = vmatprep.mubr.bf16.mxu0 0
  %2348 = vmatmul.mubr.bf16.gmra.mrb[0].mxu0 %v2289
  %v2349 = vpop.f32.mrb[0].mxu0
  %v2350 = vadd.f32 0.0, %v2349
  %v2351 = vpop.f32.mrb[0].mxu0
  %v2352 = vpop.f32.mrb[0].mxu0
  %v2353 = vadd.f32 0.0, %v2352
  %v2354 = vpop.f32.mrb[0].mxu0
  %2355 = vdwg.mxu0
  %v2356 = vadd.f32 %v1849, %v2326
  %v2357 = vadd.f32 %v1850, %v2329
  %v2358 = vadd.f32 %v1851, %v2334
  %v2359 = vadd.f32 %v1852, %v2337
  %v2360 = vadd.f32 %v1853, %v2342
  %v2361 = vadd.f32 %v1854, %v2345
  %v2362 = vadd.f32 %v1855, %v2350
  %v2363 = vadd.f32 %v1856, %v2353
  %v2364 = vadd.f32 %v170, %v2356
  %v2365 = vadd.f32 %v171, %v2357
  %v2366 = vadd.f32 %v172, %v2358
  %v2367 = vadd.f32 %v173, %v2359
  %v2368 = vadd.f32 %v174, %v2360
  %v2369 = vadd.f32 %v175, %v2361
  %v2370 = vadd.f32 %v176, %v2362
  %v2371 = vadd.f32 %v177, %v2363
  %v2372 = vld [vmem:[%s14] sm:$0x1]
  %v2373 = vld [vmem:[%s15] sm:$0x1]
  %v2374 = vsel %vm250, %v2364, 0.0
  %2375 = vadd.xlane.f32.xlu0 %v2374
  %v2376 = vpop.xlane.xlu0 %2375
  %v2377 = vsel %vm250, %v2365, 0.0
  %2378 = vadd.xlane.f32.xlu0 %v2377
  %v2379 = vpop.xlane.xlu0 %2378
  %v2380 = vsel %vm250, %v2366, 0.0
  %2381 = vadd.xlane.f32.xlu0 %v2380
  %v2382 = vpop.xlane.xlu0 %2381
  %v2383 = vsel %vm250, %v2367, 0.0
  %2384 = vadd.xlane.f32.xlu0 %v2383
  %v2385 = vpop.xlane.xlu0 %2384
  %v2386 = vsel %vm250, %v2368, 0.0
  %2387 = vadd.xlane.f32.xlu0 %v2386
  %v2388 = vpop.xlane.xlu0 %2387
  %v2389 = vsel %vm250, %v2369, 0.0
  %2390 = vadd.xlane.f32.xlu0 %v2389
  %v2391 = vpop.xlane.xlu0 %2390
  %v2392 = vsel %vm250, %v2370, 0.0
  %2393 = vadd.xlane.f32.xlu0 %v2392
  %v2394 = vpop.xlane.xlu0 %2393
  %v2395 = vsel %vm250, %v2371, 0.0
  %2396 = vadd.xlane.f32.xlu0 %v2395
  %v2397 = vpop.xlane.xlu0 %2396
  %v2398 = vrcp.pop 64.0
  %v2399 = vmul.f32 %v2376, %v2398
  %v2400 = vmul.f32 %v2379, %v2398
  %v2401 = vmul.f32 %v2382, %v2398
  %v2402 = vmul.f32 %v2385, %v2398
  %v2403 = vmul.f32 %v2388, %v2398
  %v2404 = vmul.f32 %v2391, %v2398
  %v2405 = vmul.f32 %v2394, %v2398
  %v2406 = vmul.f32 %v2397, %v2398
  %v2407 = vsub.f32 %v2364, %v2399
  %v2408 = vsub.f32 %v2365, %v2400
  %v2409 = vsub.f32 %v2366, %v2401
  %v2410 = vsub.f32 %v2367, %v2402
  %v2411 = vsub.f32 %v2368, %v2403
  %v2412 = vsub.f32 %v2369, %v2404
  %v2413 = vsub.f32 %v2370, %v2405
  %v2414 = vsub.f32 %v2371, %v2406
  %v2415 = vmul.f32 %v2407, %v2407
  %v2416 = vmul.f32 %v2408, %v2408
  %v2417 = vmul.f32 %v2409, %v2409
  %v2418 = vmul.f32 %v2410, %v2410
  %v2419 = vmul.f32 %v2411, %v2411
  %v2420 = vmul.f32 %v2412, %v2412
  %v2421 = vmul.f32 %v2413, %v2413
  %v2422 = vmul.f32 %v2414, %v2414
  %v2423 = vsel %vm250, %v2415, 0.0
  %2424 = vadd.xlane.f32.xlu0 %v2423
  %v2425 = vpop.xlane.xlu0 %2424
  %v2426 = vsel %vm250, %v2416, 0.0
  %2427 = vadd.xlane.f32.xlu0 %v2426
  %v2428 = vpop.xlane.xlu0 %2427
  %v2429 = vsel %vm250, %v2417, 0.0
  %2430 = vadd.xlane.f32.xlu0 %v2429
  %v2431 = vpop.xlane.xlu0 %2430
  %v2432 = vsel %vm250, %v2418, 0.0
  %2433 = vadd.xlane.f32.xlu0 %v2432
  %v2434 = vpop.xlane.xlu0 %2433
  %v2435 = vsel %vm250, %v2419, 0.0
  %2436 = vadd.xlane.f32.xlu0 %v2435
  %v2437 = vpop.xlane.xlu0 %2436
  %v2438 = vsel %vm250, %v2420, 0.0
  %2439 = vadd.xlane.f32.xlu0 %v2438
  %v2440 = vpop.xlane.xlu0 %2439
  %v2441 = vsel %vm250, %v2421, 0.0
  %2442 = vadd.xlane.f32.xlu0 %v2441
  %v2443 = vpop.xlane.xlu0 %2442
  %v2444 = vsel %vm250, %v2422, 0.0
  %2445 = vadd.xlane.f32.xlu0 %v2444
  %v2446 = vpop.xlane.xlu0 %2445
  %v2447 = vmul.f32 %v2425, %v2398
  %v2448 = vmul.f32 %v2428, %v2398
  %v2449 = vmul.f32 %v2431, %v2398
  %v2450 = vmul.f32 %v2434, %v2398
  %v2451 = vmul.f32 %v2437, %v2398
  %v2452 = vmul.f32 %v2440, %v2398
  %v2453 = vmul.f32 %v2443, %v2398
  %v2454 = vmul.f32 %v2446, %v2398
  %v2455 = vadd.f32 %v2447, 1e-05
  %v2456 = vadd.f32 %v2448, 1e-05
  %v2457 = vadd.f32 %v2449, 1e-05
  %v2458 = vadd.f32 %v2450, 1e-05
  %v2459 = vadd.f32 %v2451, 1e-05
  %v2460 = vadd.f32 %v2452, 1e-05
  %v2461 = vadd.f32 %v2453, 1e-05
  %v2462 = vadd.f32 %v2454, 1e-05
  %v2463 = vrsqrt.pop %v2455
  %v2464 = vrsqrt.pop %v2456
  %v2465 = vrsqrt.pop %v2457
  %v2466 = vrsqrt.pop %v2458
  %v2467 = vrsqrt.pop %v2459
  %v2468 = vrsqrt.pop %v2460
  %v2469 = vrsqrt.pop %v2461
  %v2470 = vrsqrt.pop %v2462
  %v2471 = vmul.f32 %v2407, %v2463
  %v2472 = vmul.f32 %v2408, %v2464
  %v2473 = vmul.f32 %v2409, %v2465
  %v2474 = vmul.f32 %v2410, %v2466
  %v2475 = vmul.f32 %v2411, %v2467
  %v2476 = vmul.f32 %v2412, %v2468
  %v2477 = vmul.f32 %v2413, %v2469
  %v2478 = vmul.f32 %v2414, %v2470
  %v2480 = vlaneseq
  %v2481 = vshrl.u32 %v2480, 7
  %v2482 = vsub.s32 0, %v2481
  %v2483 = vrot.slane %v2372, %v2482
  %v2485 = vmul.f32 %v2471, %v2483
  %v2486 = vmul.f32 %v2472, %v2483
  %v2487 = vmul.f32 %v2473, %v2483
  %v2488 = vmul.f32 %v2474, %v2483
  %v2489 = vmul.f32 %v2475, %v2483
  %v2490 = vmul.f32 %v2476, %v2483
  %v2491 = vmul.f32 %v2477, %v2483
  %v2492 = vmul.f32 %v2478, %v2483
  %v2494 = vlaneseq
  %v2495 = vshrl.u32 %v2494, 7
  %v2496 = vsub.s32 0, %v2495
  %v2497 = vrot.slane %v2373, %v2496
  %v2499 = vadd.f32 %v2485, %v2497
  %v2500 = vadd.f32 %v2486, %v2497
  %v2501 = vadd.f32 %v2487, %v2497
  %v2502 = vadd.f32 %v2488, %v2497
  %v2503 = vadd.f32 %v2489, %v2497
  %v2504 = vadd.f32 %v2490, %v2497
  %v2505 = vadd.f32 %v2491, %v2497
  %v2506 = vadd.f32 %v2492, %v2497
  %v2507 = vpack.c.bf16 %v2500, %v2499
  %v2508 = vpack.c.bf16 %v2502, %v2501
  %v2509 = vpack.c.bf16 %v2504, %v2503
  %v2510 = vpack.c.bf16 %v2506, %v2505
  %v2511 = vld [vmem:[%s10] sm:$0xff]
  %v2512 = vld [vmem:[%s10 + $0x8] sm:$0xff]
  %v2513 = vld [vmem:[%s10 + $0x10] sm:$0xff]
  %v2514 = vld [vmem:[%s10 + $0x18] sm:$0xff]
  %v2515 = vld [vmem:[%s10 + $0x20] sm:$0xff]
  %v2516 = vld [vmem:[%s10 + $0x28] sm:$0xff]
  %v2517 = vld [vmem:[%s10 + $0x30] sm:$0xff]
  %v2518 = vld [vmem:[%s10 + $0x38] sm:$0xff]
  %v2519 = vld [vmem:[%s10 + $0x40] sm:$0xff]
  %v2520 = vld [vmem:[%s10 + $0x48] sm:$0xff]
  %v2521 = vld [vmem:[%s10 + $0x50] sm:$0xff]
  %v2522 = vld [vmem:[%s10 + $0x58] sm:$0xff]
  %v2523 = vld [vmem:[%s10 + $0x60] sm:$0xff]
  %v2524 = vld [vmem:[%s10 + $0x68] sm:$0xff]
  %v2525 = vld [vmem:[%s10 + $0x70] sm:$0xff]
  %v2526 = vld [vmem:[%s10 + $0x78] sm:$0xff]
  %v2527 = vld [vmem:[%s10 + $0x80] sm:$0xff]
  %v2528 = vld [vmem:[%s10 + $0x88] sm:$0xff]
  %v2529 = vld [vmem:[%s10 + $0x90] sm:$0xff]
  %v2530 = vld [vmem:[%s10 + $0x98] sm:$0xff]
  %v2531 = vld [vmem:[%s10 + $0xa0] sm:$0xff]
  %v2532 = vld [vmem:[%s10 + $0xa8] sm:$0xff]
  %v2533 = vld [vmem:[%s10 + $0xb0] sm:$0xff]
  %v2534 = vld [vmem:[%s10 + $0xb8] sm:$0xff]
  %v2535 = vld [vmem:[%s10 + $0xc0] sm:$0xff]
  %v2536 = vld [vmem:[%s10 + $0xc8] sm:$0xff]
  %v2537 = vld [vmem:[%s10 + $0xd0] sm:$0xff]
  %v2538 = vld [vmem:[%s10 + $0xd8] sm:$0xff]
  %v2539 = vld [vmem:[%s10 + $0xe0] sm:$0xff]
  %v2540 = vld [vmem:[%s10 + $0xe8] sm:$0xff]
  %v2541 = vld [vmem:[%s10 + $0xf0] sm:$0xff]
  %v2542 = vld [vmem:[%s10 + $0xf8] sm:$0xff]
  %v2543 = vld [vmem:[%s10 + $0x100] sm:$0xff]
  %v2544 = vld [vmem:[%s10 + $0x108] sm:$0xff]
  %v2545 = vld [vmem:[%s10 + $0x110] sm:$0xff]
  %v2546 = vld [vmem:[%s10 + $0x118] sm:$0xff]
  %v2547 = vld [vmem:[%s10 + $0x120] sm:$0xff]
  %v2548 = vld [vmem:[%s10 + $0x128] sm:$0xff]
  %v2549 = vld [vmem:[%s10 + $0x130] sm:$0xff]
  %v2550 = vld [vmem:[%s10 + $0x138] sm:$0xff]
  %v2551 = vld [vmem:[%s10 + $0x140] sm:$0xff]
  %v2552 = vld [vmem:[%s10 + $0x148] sm:$0xff]
  %v2553 = vld [vmem:[%s10 + $0x150] sm:$0xff]
  %v2554 = vld [vmem:[%s10 + $0x158] sm:$0xff]
  %v2555 = vld [vmem:[%s10 + $0x160] sm:$0xff]
  %v2556 = vld [vmem:[%s10 + $0x168] sm:$0xff]
  %v2557 = vld [vmem:[%s10 + $0x170] sm:$0xff]
  %v2558 = vld [vmem:[%s10 + $0x178] sm:$0xff]
  %v2559 = vld [vmem:[%s10 + $0x180] sm:$0xff]
  %v2560 = vld [vmem:[%s10 + $0x188] sm:$0xff]
  %v2561 = vld [vmem:[%s10 + $0x190] sm:$0xff]
  %v2562 = vld [vmem:[%s10 + $0x198] sm:$0xff]
  %v2563 = vld [vmem:[%s10 + $0x1a0] sm:$0xff]
  %v2564 = vld [vmem:[%s10 + $0x1a8] sm:$0xff]
  %v2565 = vld [vmem:[%s10 + $0x1b0] sm:$0xff]
  %v2566 = vld [vmem:[%s10 + $0x1b8] sm:$0xff]
  %v2567 = vld [vmem:[%s10 + $0x1c0] sm:$0xff]
  %v2568 = vld [vmem:[%s10 + $0x1c8] sm:$0xff]
  %v2569 = vld [vmem:[%s10 + $0x1d0] sm:$0xff]
  %v2570 = vld [vmem:[%s10 + $0x1d8] sm:$0xff]
  %v2571 = vld [vmem:[%s10 + $0x1e0] sm:$0xff]
  %v2572 = vld [vmem:[%s10 + $0x1e8] sm:$0xff]
  %v2573 = vld [vmem:[%s10 + $0x1f0] sm:$0xff]
  %v2574 = vld [vmem:[%s10 + $0x1f8] sm:$0xff]
  %v2575 = vld [vmem:[%s11] sm:$0xff]
  %v2576 = vld [vmem:[%s11 + $0x8] sm:$0xff]
  %v2579 = vlaneseq
  %v2580 = vshrl.u32 %v2579, 7
  %v2581 = vsub.s32 0, %v2580
  %v2582 = vrot.slane %v2575, %v2581
  %v2583 = vlaneseq
  %v2584 = vshrl.u32 %v2583, 7
  %v2585 = vsub.s32 1, %v2584
  %v2586 = vrot.slane %v2575, %v2585
  %v2587 = vlaneseq
  %v2588 = vshrl.u32 %v2587, 7
  %v2589 = vsub.s32 2, %v2588
  %v2590 = vrot.slane %v2575, %v2589
  %v2591 = vlaneseq
  %v2592 = vshrl.u32 %v2591, 7
  %v2593 = vsub.s32 3, %v2592
  %v2594 = vrot.slane %v2575, %v2593
  %v2595 = vlaneseq
  %v2596 = vshrl.u32 %v2595, 7
  %v2597 = vsub.s32 4, %v2596
  %v2598 = vrot.slane %v2575, %v2597
  %v2599 = vlaneseq
  %v2600 = vshrl.u32 %v2599, 7
  %v2601 = vsub.s32 5, %v2600
  %v2602 = vrot.slane %v2575, %v2601
  %v2603 = vlaneseq
  %v2604 = vshrl.u32 %v2603, 7
  %v2605 = vsub.s32 6, %v2604
  %v2606 = vrot.slane %v2575, %v2605
  %v2607 = vlaneseq
  %v2608 = vshrl.u32 %v2607, 7
  %v2609 = vsub.s32 7, %v2608
  %v2610 = vrot.slane %v2575, %v2609
  %v2611 = vlaneseq
  %v2612 = vshrl.u32 %v2611, 7
  %v2613 = vsub.s32 0, %v2612
  %v2614 = vrot.slane %v2576, %v2613
  %v2615 = vlaneseq
  %v2616 = vshrl.u32 %v2615, 7
  %v2617 = vsub.s32 1, %v2616
  %v2618 = vrot.slane %v2576, %v2617
  %v2619 = vlaneseq
  %v2620 = vshrl.u32 %v2619, 7
  %v2621 = vsub.s32 2, %v2620
  %v2622 = vrot.slane %v2576, %v2621
  %v2623 = vlaneseq
  %v2624 = vshrl.u32 %v2623, 7
  %v2625 = vsub.s32 3, %v2624
  %v2626 = vrot.slane %v2576, %v2625
  %v2627 = vlaneseq
  %v2628 = vshrl.u32 %v2627, 7
  %v2629 = vsub.s32 4, %v2628
  %v2630 = vrot.slane %v2576, %v2629
  %v2631 = vlaneseq
  %v2632 = vshrl.u32 %v2631, 7
  %v2633 = vsub.s32 5, %v2632
  %v2634 = vrot.slane %v2576, %v2633
  %v2635 = vlaneseq
  %v2636 = vshrl.u32 %v2635, 7
  %v2637 = vsub.s32 6, %v2636
  %v2638 = vrot.slane %v2576, %v2637
  %v2639 = vlaneseq
  %v2640 = vshrl.u32 %v2639, 7
  %v2641 = vsub.s32 7, %v2640
  %v2642 = vrot.slane %v2576, %v2641
  %v2723 = vunpack.c.l.b16 %v2511
  %v2724 = vunpack.c.h.b16 %v2511
  %v2725 = vunpack.c.l.b16 %v2512
  %v2726 = vunpack.c.h.b16 %v2512
  %v2727 = vunpack.c.l.b16 %v2513
  %v2728 = vunpack.c.h.b16 %v2513
  %v2729 = vunpack.c.l.b16 %v2514
  %v2730 = vunpack.c.h.b16 %v2514
  %v2731 = vunpack.c.l.b16 %v2515
  %v2732 = vunpack.c.h.b16 %v2515
  %v2733 = vunpack.c.l.b16 %v2516
  %v2734 = vunpack.c.h.b16 %v2516
  %v2735 = vunpack.c.l.b16 %v2517
  %v2736 = vunpack.c.h.b16 %v2517
  %v2737 = vunpack.c.l.b16 %v2518
  %v2738 = vunpack.c.h.b16 %v2518
  %v2739 = vunpack.c.l.b16 %v2519
  %v2740 = vunpack.c.h.b16 %v2519
  %v2741 = vunpack.c.l.b16 %v2520
  %v2742 = vunpack.c.h.b16 %v2520
  %v2743 = vunpack.c.l.b16 %v2521
  %v2744 = vunpack.c.h.b16 %v2521
  %v2745 = vunpack.c.l.b16 %v2522
  %v2746 = vunpack.c.h.b16 %v2522
  %v2747 = vunpack.c.l.b16 %v2523
  %v2748 = vunpack.c.h.b16 %v2523
  %v2749 = vunpack.c.l.b16 %v2524
  %v2750 = vunpack.c.h.b16 %v2524
  %v2751 = vunpack.c.l.b16 %v2525
  %v2752 = vunpack.c.h.b16 %v2525
  %v2753 = vunpack.c.l.b16 %v2526
  %v2754 = vunpack.c.h.b16 %v2526
  %v2755 = vunpack.c.l.b16 %v2527
  %v2756 = vunpack.c.h.b16 %v2527
  %v2757 = vunpack.c.l.b16 %v2528
  %v2758 = vunpack.c.h.b16 %v2528
  %v2759 = vunpack.c.l.b16 %v2529
  %v2760 = vunpack.c.h.b16 %v2529
  %v2761 = vunpack.c.l.b16 %v2530
  %v2762 = vunpack.c.h.b16 %v2530
  %v2763 = vunpack.c.l.b16 %v2531
  %v2764 = vunpack.c.h.b16 %v2531
  %v2765 = vunpack.c.l.b16 %v2532
  %v2766 = vunpack.c.h.b16 %v2532
  %v2767 = vunpack.c.l.b16 %v2533
  %v2768 = vunpack.c.h.b16 %v2533
  %v2769 = vunpack.c.l.b16 %v2534
  %v2770 = vunpack.c.h.b16 %v2534
  %v2771 = vunpack.c.l.b16 %v2535
  %v2772 = vunpack.c.h.b16 %v2535
  %v2773 = vunpack.c.l.b16 %v2536
  %v2774 = vunpack.c.h.b16 %v2536
  %v2775 = vunpack.c.l.b16 %v2537
  %v2776 = vunpack.c.h.b16 %v2537
  %v2777 = vunpack.c.l.b16 %v2538
  %v2778 = vunpack.c.h.b16 %v2538
  %v2779 = vunpack.c.l.b16 %v2539
  %v2780 = vunpack.c.h.b16 %v2539
  %v2781 = vunpack.c.l.b16 %v2540
  %v2782 = vunpack.c.h.b16 %v2540
  %v2783 = vunpack.c.l.b16 %v2541
  %v2784 = vunpack.c.h.b16 %v2541
  %v2785 = vunpack.c.l.b16 %v2542
  %v2786 = vunpack.c.h.b16 %v2542
  %v2787 = vunpack.c.l.b16 %v2543
  %v2788 = vunpack.c.h.b16 %v2543
  %v2789 = vunpack.c.l.b16 %v2544
  %v2790 = vunpack.c.h.b16 %v2544
  %v2791 = vunpack.c.l.b16 %v2545
  %v2792 = vunpack.c.h.b16 %v2545
  %v2793 = vunpack.c.l.b16 %v2546
  %v2794 = vunpack.c.h.b16 %v2546
  %v2795 = vunpack.c.l.b16 %v2547
  %v2796 = vunpack.c.h.b16 %v2547
  %v2797 = vunpack.c.l.b16 %v2548
  %v2798 = vunpack.c.h.b16 %v2548
  %v2799 = vunpack.c.l.b16 %v2549
  %v2800 = vunpack.c.h.b16 %v2549
  %v2801 = vunpack.c.l.b16 %v2550
  %v2802 = vunpack.c.h.b16 %v2550
  %v2803 = vunpack.c.l.b16 %v2551
  %v2804 = vunpack.c.h.b16 %v2551
  %v2805 = vunpack.c.l.b16 %v2552
  %v2806 = vunpack.c.h.b16 %v2552
  %v2807 = vunpack.c.l.b16 %v2553
  %v2808 = vunpack.c.h.b16 %v2553
  %v2809 = vunpack.c.l.b16 %v2554
  %v2810 = vunpack.c.h.b16 %v2554
  %v2811 = vunpack.c.l.b16 %v2555
  %v2812 = vunpack.c.h.b16 %v2555
  %v2813 = vunpack.c.l.b16 %v2556
  %v2814 = vunpack.c.h.b16 %v2556
  %v2815 = vunpack.c.l.b16 %v2557
  %v2816 = vunpack.c.h.b16 %v2557
  %v2817 = vunpack.c.l.b16 %v2558
  %v2818 = vunpack.c.h.b16 %v2558
  %v2819 = vunpack.c.l.b16 %v2559
  %v2820 = vunpack.c.h.b16 %v2559
  %v2821 = vunpack.c.l.b16 %v2560
  %v2822 = vunpack.c.h.b16 %v2560
  %v2823 = vunpack.c.l.b16 %v2561
  %v2824 = vunpack.c.h.b16 %v2561
  %v2825 = vunpack.c.l.b16 %v2562
  %v2826 = vunpack.c.h.b16 %v2562
  %v2827 = vunpack.c.l.b16 %v2563
  %v2828 = vunpack.c.h.b16 %v2563
  %v2829 = vunpack.c.l.b16 %v2564
  %v2830 = vunpack.c.h.b16 %v2564
  %v2831 = vunpack.c.l.b16 %v2565
  %v2832 = vunpack.c.h.b16 %v2565
  %v2833 = vunpack.c.l.b16 %v2566
  %v2834 = vunpack.c.h.b16 %v2566
  %v2835 = vunpack.c.l.b16 %v2567
  %v2836 = vunpack.c.h.b16 %v2567
  %v2837 = vunpack.c.l.b16 %v2568
  %v2838 = vunpack.c.h.b16 %v2568
  %v2839 = vunpack.c.l.b16 %v2569
  %v2840 = vunpack.c.h.b16 %v2569
  %v2841 = vunpack.c.l.b16 %v2570
  %v2842 = vunpack.c.h.b16 %v2570
  %v2843 = vunpack.c.l.b16 %v2571
  %v2844 = vunpack.c.h.b16 %v2571
  %v2845 = vunpack.c.l.b16 %v2572
  %v2846 = vunpack.c.h.b16 %v2572
  %v2847 = vunpack.c.l.b16 %v2573
  %v2848 = vunpack.c.h.b16 %v2573
  %v2849 = vunpack.c.l.b16 %v2574
  %v2850 = vunpack.c.h.b16 %v2574
  %v2851 = vpack.c.b16 %v2739, %v2723
  %v2852 = vpack.c.b16 %v2740, %v2724
  %v2853 = vpack.c.b16 %v2741, %v2725
  %v2854 = vpack.c.b16 %v2742, %v2726
  %v2855 = vpack.c.b16 %v2743, %v2727
  %v2856 = vpack.c.b16 %v2744, %v2728
  %v2857 = vpack.c.b16 %v2745, %v2729
  %v2858 = vpack.c.b16 %v2746, %v2730
  %v2859 = vpack.c.b16 %v2747, %v2731
  %v2860 = vpack.c.b16 %v2748, %v2732
  %v2861 = vpack.c.b16 %v2749, %v2733
  %v2862 = vpack.c.b16 %v2750, %v2734
  %v2863 = vpack.c.b16 %v2751, %v2735
  %v2864 = vpack.c.b16 %v2752, %v2736
  %v2865 = vpack.c.b16 %v2753, %v2737
  %v2866 = vpack.c.b16 %v2754, %v2738
  %v2867 = vpack.c.b16 %v2771, %v2755
  %v2868 = vpack.c.b16 %v2772, %v2756
  %v2869 = vpack.c.b16 %v2773, %v2757
  %v2870 = vpack.c.b16 %v2774, %v2758
  %v2871 = vpack.c.b16 %v2775, %v2759
  %v2872 = vpack.c.b16 %v2776, %v2760
  %v2873 = vpack.c.b16 %v2777, %v2761
  %v2874 = vpack.c.b16 %v2778, %v2762
  %v2875 = vpack.c.b16 %v2779, %v2763
  %v2876 = vpack.c.b16 %v2780, %v2764
  %v2877 = vpack.c.b16 %v2781, %v2765
  %v2878 = vpack.c.b16 %v2782, %v2766
  %v2879 = vpack.c.b16 %v2783, %v2767
  %v2880 = vpack.c.b16 %v2784, %v2768
  %v2881 = vpack.c.b16 %v2785, %v2769
  %v2882 = vpack.c.b16 %v2786, %v2770
  %v2883 = vpack.c.b16 %v2803, %v2787
  %v2884 = vpack.c.b16 %v2804, %v2788
  %v2885 = vpack.c.b16 %v2805, %v2789
  %v2886 = vpack.c.b16 %v2806, %v2790
  %v2887 = vpack.c.b16 %v2807, %v2791
  %v2888 = vpack.c.b16 %v2808, %v2792
  %v2889 = vpack.c.b16 %v2809, %v2793
  %v2890 = vpack.c.b16 %v2810, %v2794
  %v2891 = vpack.c.b16 %v2811, %v2795
  %v2892 = vpack.c.b16 %v2812, %v2796
  %v2893 = vpack.c.b16 %v2813, %v2797
  %v2894 = vpack.c.b16 %v2814, %v2798
  %v2895 = vpack.c.b16 %v2815, %v2799
  %v2896 = vpack.c.b16 %v2816, %v2800
  %v2897 = vpack.c.b16 %v2817, %v2801
  %v2898 = vpack.c.b16 %v2818, %v2802
  %v2899 = vpack.c.b16 %v2835, %v2819
  %v2900 = vpack.c.b16 %v2836, %v2820
  %v2901 = vpack.c.b16 %v2837, %v2821
  %v2902 = vpack.c.b16 %v2838, %v2822
  %v2903 = vpack.c.b16 %v2839, %v2823
  %v2904 = vpack.c.b16 %v2840, %v2824
  %v2905 = vpack.c.b16 %v2841, %v2825
  %v2906 = vpack.c.b16 %v2842, %v2826
  %v2907 = vpack.c.b16 %v2843, %v2827
  %v2908 = vpack.c.b16 %v2844, %v2828
  %v2909 = vpack.c.b16 %v2845, %v2829
  %v2910 = vpack.c.b16 %v2846, %v2830
  %v2911 = vpack.c.b16 %v2847, %v2831
  %v2912 = vpack.c.b16 %v2848, %v2832
  %v2913 = vpack.c.b16 %v2849, %v2833
  %v2914 = vpack.c.b16 %v2850, %v2834
  %v2980 = vsel %vm250, %v2507, 0
  %v2983 = vsel %vm250, %v2508, 0
  %v2986 = vsel %vm250, %v2509, 0
  %v2989 = vsel %vm250, %v2510, 0
  %2991 = vmatprep.subr.bf16.mxu0 %v2852
  %2992 = vmatpush1.bf16.msra.mxu0 %v2851
  %2993 = vmatprep.subr.bf16.mxu0 %v2868
  %2994 = vmatpush1.bf16.msra.mxu0 %v2867
  %2995 = vmatprep.subr.bf16.mxu0 %v2884
  %2996 = vmatpush1.bf16.msra.mxu0 %v2883
  %2997 = vmatprep.subr.bf16.mxu0 %v2900
  %2998 = vmatpush1.bf16.msra.mxu0 %v2899
  %2999 = vmatprep.subr.bf16.mxu0 0
  %3000 = vmatpush1.bf16.msra.mxu0 0
  %3001 = vmatprep.subr.bf16.mxu0 0
  %3002 = vmatpush1.bf16.msra.mxu0 0
  %3003 = vmatprep.subr.bf16.mxu0 0
  %3004 = vmatpush1.bf16.msra.mxu0 0
  %3005 = vmatprep.subr.bf16.mxu0 0
  %3006 = vmatpush1.bf16.msra.mxu0 0
  %3007 = vmatprep.subr.bf16.mxu0 0
  %3008 = vmatpush1.bf16.msra.mxu0 0
  %3009 = vmatprep.subr.bf16.mxu0 0
  %3010 = vmatpush1.bf16.msra.mxu0 0
  %3011 = vmatprep.subr.bf16.mxu0 0
  %3012 = vmatpush1.bf16.msra.mxu0 0
  %3013 = vmatprep.subr.bf16.mxu0 0
  %3014 = vmatpush1.bf16.msra.mxu0 0
  %3015 = vmatprep.subr.bf16.mxu0 0
  %3016 = vmatpush1.bf16.msra.mxu0 0
  %3017 = vmatprep.subr.bf16.mxu0 0
  %3018 = vmatpush1.bf16.msra.mxu0 0
  %3019 = vmatprep.subr.bf16.mxu0 0
  %3020 = vmatpush1.bf16.msra.mxu0 0
  %3021 = vmatprep.subr.bf16.mxu0 0
  %3022 = vmatpush1.bf16.msra.mxu0 0
  %3023 = vmatprep.mubr.bf16.mxu0 0
  %3024 = vmatmul.mubr.bf16.gmra.mrb[0].mxu0 %v2980
  %v3025 = vpop.f32.mrb[0].mxu0
  %v3026 = vadd.f32 %v2582, %v3025
  %v3027 = vpop.f32.mrb[0].mxu0
  %v3028 = vadd.f32 %v2586, %v3027
  %v3029 = vpop.f32.mrb[0].mxu0
  %v3030 = vadd.f32 %v2582, %v3029
  %v3031 = vpop.f32.mrb[0].mxu0
  %v3032 = vadd.f32 %v2586, %v3031
  %3033 = vmatprep.mubr.bf16.mxu0 0
  %3034 = vmatmul.mubr.bf16.gmra.mrb[0].mxu0 %v2983
  %v3035 = vpop.f32.mrb[0].mxu0
  %v3036 = vadd.f32 %v2582, %v3035
  %v3037 = vpop.f32.mrb[0].mxu0
  %v3038 = vadd.f32 %v2586, %v3037
  %v3039 = vpop.f32.mrb[0].mxu0
  %v3040 = vadd.f32 %v2582, %v3039
  %v3041 = vpop.f32.mrb[0].mxu0
  %v3042 = vadd.f32 %v2586, %v3041
  %3043 = vmatprep.mubr.bf16.mxu0 0
  %3044 = vmatmul.mubr.bf16.gmra.mrb[0].mxu0 %v2986
  %v3045 = vpop.f32.mrb[0].mxu0
  %v3046 = vadd.f32 %v2582, %v3045
  %v3047 = vpop.f32.mrb[0].mxu0
  %v3048 = vadd.f32 %v2586, %v3047
  %v3049 = vpop.f32.mrb[0].mxu0
  %v3050 = vadd.f32 %v2582, %v3049
  %v3051 = vpop.f32.mrb[0].mxu0
  %v3052 = vadd.f32 %v2586, %v3051
  %3053 = vmatprep.mubr.bf16.mxu0 0
  %3054 = vmatmul.mubr.bf16.gmra.mrb[0].mxu0 %v2989
  %v3055 = vpop.f32.mrb[0].mxu0
  %v3056 = vadd.f32 %v2582, %v3055
  %v3057 = vpop.f32.mrb[0].mxu0
  %v3058 = vadd.f32 %v2586, %v3057
  %v3059 = vpop.f32.mrb[0].mxu0
  %v3060 = vadd.f32 %v2582, %v3059
  %v3061 = vpop.f32.mrb[0].mxu0
  %v3062 = vadd.f32 %v2586, %v3061
  %3063 = vdwg.mxu0
  %3064 = vmatprep.subr.bf16.mxu0 %v2854
  %3065 = vmatpush1.bf16.msra.mxu0 %v2853
  %3066 = vmatprep.subr.bf16.mxu0 %v2870
  %3067 = vmatpush1.bf16.msra.mxu0 %v2869
  %3068 = vmatprep.subr.bf16.mxu0 %v2886
  %3069 = vmatpush1.bf16.msra.mxu0 %v2885
  %3070 = vmatprep.subr.bf16.mxu0 %v2902
  %3071 = vmatpush1.bf16.msra.mxu0 %v2901
  %3072 = vmatprep.subr.bf16.mxu0 0
  %3073 = vmatpush1.bf16.msra.mxu0 0
  %3074 = vmatprep.subr.bf16.mxu0 0
  %3075 = vmatpush1.bf16.msra.mxu0 0
  %3076 = vmatprep.subr.bf16.mxu0 0
  %3077 = vmatpush1.bf16.msra.mxu0 0
  %3078 = vmatprep.subr.bf16.mxu0 0
  %3079 = vmatpush1.bf16.msra.mxu0 0
  %3080 = vmatprep.subr.bf16.mxu0 0
  %3081 = vmatpush1.bf16.msra.mxu0 0
  %3082 = vmatprep.subr.bf16.mxu0 0
  %3083 = vmatpush1.bf16.msra.mxu0 0
  %3084 = vmatprep.subr.bf16.mxu0 0
  %3085 = vmatpush1.bf16.msra.mxu0 0
  %3086 = vmatprep.subr.bf16.mxu0 0
  %3087 = vmatpush1.bf16.msra.mxu0 0
  %3088 = vmatprep.subr.bf16.mxu0 0
  %3089 = vmatpush1.bf16.msra.mxu0 0
  %3090 = vmatprep.subr.bf16.mxu0 0
  %3091 = vmatpush1.bf16.msra.mxu0 0
  %3092 = vmatprep.subr.bf16.mxu0 0
  %3093 = vmatpush1.bf16.msra.mxu0 0
  %3094 = vmatprep.subr.bf16.mxu0 0
  %3095 = vmatpush1.bf16.msra.mxu0 0
  %3096 = vmatprep.mubr.bf16.mxu0 0
  %3097 = vmatmul.mubr.bf16.gmra.mrb[0].mxu0 %v2980
  %v3098 = vpop.f32.mrb[0].mxu0
  %v3099 = vadd.f32 %v2590, %v3098
  %v3100 = vpop.f32.mrb[0].mxu0
  %v3101 = vadd.f32 %v2594, %v3100
  %v3102 = vpop.f32.mrb[0].mxu0
  %v3103 = vadd.f32 %v2590, %v3102
  %v3104 = vpop.f32.mrb[0].mxu0
  %v3105 = vadd.f32 %v2594, %v3104
  %3106 = vmatprep.mubr.bf16.mxu0 0
  %3107 = vmatmul.mubr.bf16.gmra.mrb[0].mxu0 %v2983
  %v3108 = vpop.f32.mrb[0].mxu0
  %v3109 = vadd.f32 %v2590, %v3108
  %v3110 = vpop.f32.mrb[0].mxu0
  %v3111 = vadd.f32 %v2594, %v3110
  %v3112 = vpop.f32.mrb[0].mxu0
  %v3113 = vadd.f32 %v2590, %v3112
  %v3114 = vpop.f32.mrb[0].mxu0
  %v3115 = vadd.f32 %v2594, %v3114
  %3116 = vmatprep.mubr.bf16.mxu0 0
  %3117 = vmatmul.mubr.bf16.gmra.mrb[0].mxu0 %v2986
  %v3118 = vpop.f32.mrb[0].mxu0
  %v3119 = vadd.f32 %v2590, %v3118
  %v3120 = vpop.f32.mrb[0].mxu0
  %v3121 = vadd.f32 %v2594, %v3120
  %v3122 = vpop.f32.mrb[0].mxu0
  %v3123 = vadd.f32 %v2590, %v3122
  %v3124 = vpop.f32.mrb[0].mxu0
  %v3125 = vadd.f32 %v2594, %v3124
  %3126 = vmatprep.mubr.bf16.mxu0 0
  %3127 = vmatmul.mubr.bf16.gmra.mrb[0].mxu0 %v2989
  %v3128 = vpop.f32.mrb[0].mxu0
  %v3129 = vadd.f32 %v2590, %v3128
  %v3130 = vpop.f32.mrb[0].mxu0
  %v3131 = vadd.f32 %v2594, %v3130
  %v3132 = vpop.f32.mrb[0].mxu0
  %v3133 = vadd.f32 %v2590, %v3132
  %v3134 = vpop.f32.mrb[0].mxu0
  %v3135 = vadd.f32 %v2594, %v3134
  %3136 = vdwg.mxu0
  %3137 = vmatprep.subr.bf16.mxu0 %v2856
  %3138 = vmatpush1.bf16.msra.mxu0 %v2855
  %3139 = vmatprep.subr.bf16.mxu0 %v2872
  %3140 = vmatpush1.bf16.msra.mxu0 %v2871
  %3141 = vmatprep.subr.bf16.mxu0 %v2888
  %3142 = vmatpush1.bf16.msra.mxu0 %v2887
  %3143 = vmatprep.subr.bf16.mxu0 %v2904
  %3144 = vmatpush1.bf16.msra.mxu0 %v2903
  %3145 = vmatprep.subr.bf16.mxu0 0
  %3146 = vmatpush1.bf16.msra.mxu0 0
  %3147 = vmatprep.subr.bf16.mxu0 0
  %3148 = vmatpush1.bf16.msra.mxu0 0
  %3149 = vmatprep.subr.bf16.mxu0 0
  %3150 = vmatpush1.bf16.msra.mxu0 0
  %3151 = vmatprep.subr.bf16.mxu0 0
  %3152 = vmatpush1.bf16.msra.mxu0 0
  %3153 = vmatprep.subr.bf16.mxu0 0
  %3154 = vmatpush1.bf16.msra.mxu0 0
  %3155 = vmatprep.subr.bf16.mxu0 0
  %3156 = vmatpush1.bf16.msra.mxu0 0
  %3157 = vmatprep.subr.bf16.mxu0 0
  %3158 = vmatpush1.bf16.msra.mxu0 0
  %3159 = vmatprep.subr.bf16.mxu0 0
  %3160 = vmatpush1.bf16.msra.mxu0 0
  %3161 = vmatprep.subr.bf16.mxu0 0
  %3162 = vmatpush1.bf16.msra.mxu0 0
  %3163 = vmatprep.subr.bf16.mxu0 0
  %3164 = vmatpush1.bf16.msra.mxu0 0
  %3165 = vmatprep.subr.bf16.mxu0 0
  %3166 = vmatpush1.bf16.msra.mxu0 0
  %3167 = vmatprep.subr.bf16.mxu0 0
  %3168 = vmatpush1.bf16.msra.mxu0 0
  %3169 = vmatprep.mubr.bf16.mxu0 0
  %3170 = vmatmul.mubr.bf16.gmra.mrb[0].mxu0 %v2980
  %v3171 = vpop.f32.mrb[0].mxu0
  %v3172 = vadd.f32 %v2598, %v3171
  %v3173 = vpop.f32.mrb[0].mxu0
  %v3174 = vadd.f32 %v2602, %v3173
  %v3175 = vpop.f32.mrb[0].mxu0
  %v3176 = vadd.f32 %v2598, %v3175
  %v3177 = vpop.f32.mrb[0].mxu0
  %v3178 = vadd.f32 %v2602, %v3177
  %3179 = vmatprep.mubr.bf16.mxu0 0
  %3180 = vmatmul.mubr.bf16.gmra.mrb[0].mxu0 %v2983
  %v3181 = vpop.f32.mrb[0].mxu0
  %v3182 = vadd.f32 %v2598, %v3181
  %v3183 = vpop.f32.mrb[0].mxu0
  %v3184 = vadd.f32 %v2602, %v3183
  %v3185 = vpop.f32.mrb[0].mxu0
  %v3186 = vadd.f32 %v2598, %v3185
  %v3187 = vpop.f32.mrb[0].mxu0
  %v3188 = vadd.f32 %v2602, %v3187
  %3189 = vmatprep.mubr.bf16.mxu0 0
  %3190 = vmatmul.mubr.bf16.gmra.mrb[0].mxu0 %v2986
  %v3191 = vpop.f32.mrb[0].mxu0
  %v3192 = vadd.f32 %v2598, %v3191
  %v3193 = vpop.f32.mrb[0].mxu0
  %v3194 = vadd.f32 %v2602, %v3193
  %v3195 = vpop.f32.mrb[0].mxu0
  %v3196 = vadd.f32 %v2598, %v3195
  %v3197 = vpop.f32.mrb[0].mxu0
  %v3198 = vadd.f32 %v2602, %v3197
  %3199 = vmatprep.mubr.bf16.mxu0 0
  %3200 = vmatmul.mubr.bf16.gmra.mrb[0].mxu0 %v2989
  %v3201 = vpop.f32.mrb[0].mxu0
  %v3202 = vadd.f32 %v2598, %v3201
  %v3203 = vpop.f32.mrb[0].mxu0
  %v3204 = vadd.f32 %v2602, %v3203
  %v3205 = vpop.f32.mrb[0].mxu0
  %v3206 = vadd.f32 %v2598, %v3205
  %v3207 = vpop.f32.mrb[0].mxu0
  %v3208 = vadd.f32 %v2602, %v3207
  %3209 = vdwg.mxu0
  %3210 = vmatprep.subr.bf16.mxu0 %v2858
  %3211 = vmatpush1.bf16.msra.mxu0 %v2857
  %3212 = vmatprep.subr.bf16.mxu0 %v2874
  %3213 = vmatpush1.bf16.msra.mxu0 %v2873
  %3214 = vmatprep.subr.bf16.mxu0 %v2890
  %3215 = vmatpush1.bf16.msra.mxu0 %v2889
  %3216 = vmatprep.subr.bf16.mxu0 %v2906
  %3217 = vmatpush1.bf16.msra.mxu0 %v2905
  %3218 = vmatprep.subr.bf16.mxu0 0
  %3219 = vmatpush1.bf16.msra.mxu0 0
  %3220 = vmatprep.subr.bf16.mxu0 0
  %3221 = vmatpush1.bf16.msra.mxu0 0
  %3222 = vmatprep.subr.bf16.mxu0 0
  %3223 = vmatpush1.bf16.msra.mxu0 0
  %3224 = vmatprep.subr.bf16.mxu0 0
  %3225 = vmatpush1.bf16.msra.mxu0 0
  %3226 = vmatprep.subr.bf16.mxu0 0
  %3227 = vmatpush1.bf16.msra.mxu0 0
  %3228 = vmatprep.subr.bf16.mxu0 0
  %3229 = vmatpush1.bf16.msra.mxu0 0
  %3230 = vmatprep.subr.bf16.mxu0 0
  %3231 = vmatpush1.bf16.msra.mxu0 0
  %3232 = vmatprep.subr.bf16.mxu0 0
  %3233 = vmatpush1.bf16.msra.mxu0 0
  %3234 = vmatprep.subr.bf16.mxu0 0
  %3235 = vmatpush1.bf16.msra.mxu0 0
  %3236 = vmatprep.subr.bf16.mxu0 0
  %3237 = vmatpush1.bf16.msra.mxu0 0
  %3238 = vmatprep.subr.bf16.mxu0 0
  %3239 = vmatpush1.bf16.msra.mxu0 0
  %3240 = vmatprep.subr.bf16.mxu0 0
  %3241 = vmatpush1.bf16.msra.mxu0 0
  %3242 = vmatprep.mubr.bf16.mxu0 0
  %3243 = vmatmul.mubr.bf16.gmra.mrb[0].mxu0 %v2980
  %v3244 = vpop.f32.mrb[0].mxu0
  %v3245 = vadd.f32 %v2606, %v3244
  %v3246 = vpop.f32.mrb[0].mxu0
  %v3247 = vadd.f32 %v2610, %v3246
  %v3248 = vpop.f32.mrb[0].mxu0
  %v3249 = vadd.f32 %v2606, %v3248
  %v3250 = vpop.f32.mrb[0].mxu0
  %v3251 = vadd.f32 %v2610, %v3250
  %3252 = vmatprep.mubr.bf16.mxu0 0
  %3253 = vmatmul.mubr.bf16.gmra.mrb[0].mxu0 %v2983
  %v3254 = vpop.f32.mrb[0].mxu0
  %v3255 = vadd.f32 %v2606, %v3254
  %v3256 = vpop.f32.mrb[0].mxu0
  %v3257 = vadd.f32 %v2610, %v3256
  %v3258 = vpop.f32.mrb[0].mxu0
  %v3259 = vadd.f32 %v2606, %v3258
  %v3260 = vpop.f32.mrb[0].mxu0
  %v3261 = vadd.f32 %v2610, %v3260
  %3262 = vmatprep.mubr.bf16.mxu0 0
  %3263 = vmatmul.mubr.bf16.gmra.mrb[0].mxu0 %v2986
  %v3264 = vpop.f32.mrb[0].mxu0
  %v3265 = vadd.f32 %v2606, %v3264
  %v3266 = vpop.f32.mrb[0].mxu0
  %v3267 = vadd.f32 %v2610, %v3266
  %v3268 = vpop.f32.mrb[0].mxu0
  %v3269 = vadd.f32 %v2606, %v3268
  %v3270 = vpop.f32.mrb[0].mxu0
  %v3271 = vadd.f32 %v2610, %v3270
  %3272 = vmatprep.mubr.bf16.mxu0 0
  %3273 = vmatmul.mubr.bf16.gmra.mrb[0].mxu0 %v2989
  %v3274 = vpop.f32.mrb[0].mxu0
  %v3275 = vadd.f32 %v2606, %v3274
  %v3276 = vpop.f32.mrb[0].mxu0
  %v3277 = vadd.f32 %v2610, %v3276
  %v3278 = vpop.f32.mrb[0].mxu0
  %v3279 = vadd.f32 %v2606, %v3278
  %v3280 = vpop.f32.mrb[0].mxu0
  %v3281 = vadd.f32 %v2610, %v3280
  %3282 = vdwg.mxu0
  %3283 = vmatprep.subr.bf16.mxu0 %v2860
  %3284 = vmatpush1.bf16.msra.mxu0 %v2859
  %3285 = vmatprep.subr.bf16.mxu0 %v2876
  %3286 = vmatpush1.bf16.msra.mxu0 %v2875
  %3287 = vmatprep.subr.bf16.mxu0 %v2892
  %3288 = vmatpush1.bf16.msra.mxu0 %v2891
  %3289 = vmatprep.subr.bf16.mxu0 %v2908
  %3290 = vmatpush1.bf16.msra.mxu0 %v2907
  %3291 = vmatprep.subr.bf16.mxu0 0
  %3292 = vmatpush1.bf16.msra.mxu0 0
  %3293 = vmatprep.subr.bf16.mxu0 0
  %3294 = vmatpush1.bf16.msra.mxu0 0
  %3295 = vmatprep.subr.bf16.mxu0 0
  %3296 = vmatpush1.bf16.msra.mxu0 0
  %3297 = vmatprep.subr.bf16.mxu0 0
  %3298 = vmatpush1.bf16.msra.mxu0 0
  %3299 = vmatprep.subr.bf16.mxu0 0
  %3300 = vmatpush1.bf16.msra.mxu0 0
  %3301 = vmatprep.subr.bf16.mxu0 0
  %3302 = vmatpush1.bf16.msra.mxu0 0
  %3303 = vmatprep.subr.bf16.mxu0 0
  %3304 = vmatpush1.bf16.msra.mxu0 0
  %3305 = vmatprep.subr.bf16.mxu0 0
  %3306 = vmatpush1.bf16.msra.mxu0 0
  %3307 = vmatprep.subr.bf16.mxu0 0
  %3308 = vmatpush1.bf16.msra.mxu0 0
  %3309 = vmatprep.subr.bf16.mxu0 0
  %3310 = vmatpush1.bf16.msra.mxu0 0
  %3311 = vmatprep.subr.bf16.mxu0 0
  %3312 = vmatpush1.bf16.msra.mxu0 0
  %3313 = vmatprep.subr.bf16.mxu0 0
  %3314 = vmatpush1.bf16.msra.mxu0 0
  %3315 = vmatprep.mubr.bf16.mxu0 0
  %3316 = vmatmul.mubr.bf16.gmra.mrb[0].mxu0 %v2980
  %v3317 = vpop.f32.mrb[0].mxu0
  %v3318 = vadd.f32 %v2614, %v3317
  %v3319 = vpop.f32.mrb[0].mxu0
  %v3320 = vadd.f32 %v2618, %v3319
  %v3321 = vpop.f32.mrb[0].mxu0
  %v3322 = vadd.f32 %v2614, %v3321
  %v3323 = vpop.f32.mrb[0].mxu0
  %v3324 = vadd.f32 %v2618, %v3323
  %3325 = vmatprep.mubr.bf16.mxu0 0
  %3326 = vmatmul.mubr.bf16.gmra.mrb[0].mxu0 %v2983
  %v3327 = vpop.f32.mrb[0].mxu0
  %v3328 = vadd.f32 %v2614, %v3327
  %v3329 = vpop.f32.mrb[0].mxu0
  %v3330 = vadd.f32 %v2618, %v3329
  %v3331 = vpop.f32.mrb[0].mxu0
  %v3332 = vadd.f32 %v2614, %v3331
  %v3333 = vpop.f32.mrb[0].mxu0
  %v3334 = vadd.f32 %v2618, %v3333
  %3335 = vmatprep.mubr.bf16.mxu0 0
  %3336 = vmatmul.mubr.bf16.gmra.mrb[0].mxu0 %v2986
  %v3337 = vpop.f32.mrb[0].mxu0
  %v3338 = vadd.f32 %v2614, %v3337
  %v3339 = vpop.f32.mrb[0].mxu0
  %v3340 = vadd.f32 %v2618, %v3339
  %v3341 = vpop.f32.mrb[0].mxu0
  %v3342 = vadd.f32 %v2614, %v3341
  %v3343 = vpop.f32.mrb[0].mxu0
  %v3344 = vadd.f32 %v2618, %v3343
  %3345 = vmatprep.mubr.bf16.mxu0 0
  %3346 = vmatmul.mubr.bf16.gmra.mrb[0].mxu0 %v2989
  %v3347 = vpop.f32.mrb[0].mxu0
  %v3348 = vadd.f32 %v2614, %v3347
  %v3349 = vpop.f32.mrb[0].mxu0
  %v3350 = vadd.f32 %v2618, %v3349
  %v3351 = vpop.f32.mrb[0].mxu0
  %v3352 = vadd.f32 %v2614, %v3351
  %v3353 = vpop.f32.mrb[0].mxu0
  %v3354 = vadd.f32 %v2618, %v3353
  %3355 = vdwg.mxu0
  %3356 = vmatprep.subr.bf16.mxu0 %v2862
  %3357 = vmatpush1.bf16.msra.mxu0 %v2861
  %3358 = vmatprep.subr.bf16.mxu0 %v2878
  %3359 = vmatpush1.bf16.msra.mxu0 %v2877
  %3360 = vmatprep.subr.bf16.mxu0 %v2894
  %3361 = vmatpush1.bf16.msra.mxu0 %v2893
  %3362 = vmatprep.subr.bf16.mxu0 %v2910
  %3363 = vmatpush1.bf16.msra.mxu0 %v2909
  %3364 = vmatprep.subr.bf16.mxu0 0
  %3365 = vmatpush1.bf16.msra.mxu0 0
  %3366 = vmatprep.subr.bf16.mxu0 0
  %3367 = vmatpush1.bf16.msra.mxu0 0
  %3368 = vmatprep.subr.bf16.mxu0 0
  %3369 = vmatpush1.bf16.msra.mxu0 0
  %3370 = vmatprep.subr.bf16.mxu0 0
  %3371 = vmatpush1.bf16.msra.mxu0 0
  %3372 = vmatprep.subr.bf16.mxu0 0
  %3373 = vmatpush1.bf16.msra.mxu0 0
  %3374 = vmatprep.subr.bf16.mxu0 0
  %3375 = vmatpush1.bf16.msra.mxu0 0
  %3376 = vmatprep.subr.bf16.mxu0 0
  %3377 = vmatpush1.bf16.msra.mxu0 0
  %3378 = vmatprep.subr.bf16.mxu0 0
  %3379 = vmatpush1.bf16.msra.mxu0 0
  %3380 = vmatprep.subr.bf16.mxu0 0
  %3381 = vmatpush1.bf16.msra.mxu0 0
  %3382 = vmatprep.subr.bf16.mxu0 0
  %3383 = vmatpush1.bf16.msra.mxu0 0
  %3384 = vmatprep.subr.bf16.mxu0 0
  %3385 = vmatpush1.bf16.msra.mxu0 0
  %3386 = vmatprep.subr.bf16.mxu0 0
  %3387 = vmatpush1.bf16.msra.mxu0 0
  %3388 = vmatprep.mubr.bf16.mxu0 0
  %3389 = vmatmul.mubr.bf16.gmra.mrb[0].mxu0 %v2980
  %v3390 = vpop.f32.mrb[0].mxu0
  %v3391 = vadd.f32 %v2622, %v3390
  %v3392 = vpop.f32.mrb[0].mxu0
  %v3393 = vadd.f32 %v2626, %v3392
  %v3394 = vpop.f32.mrb[0].mxu0
  %v3395 = vadd.f32 %v2622, %v3394
  %v3396 = vpop.f32.mrb[0].mxu0
  %v3397 = vadd.f32 %v2626, %v3396
  %3398 = vmatprep.mubr.bf16.mxu0 0
  %3399 = vmatmul.mubr.bf16.gmra.mrb[0].mxu0 %v2983
  %v3400 = vpop.f32.mrb[0].mxu0
  %v3401 = vadd.f32 %v2622, %v3400
  %v3402 = vpop.f32.mrb[0].mxu0
  %v3403 = vadd.f32 %v2626, %v3402
  %v3404 = vpop.f32.mrb[0].mxu0
  %v3405 = vadd.f32 %v2622, %v3404
  %v3406 = vpop.f32.mrb[0].mxu0
  %v3407 = vadd.f32 %v2626, %v3406
  %3408 = vmatprep.mubr.bf16.mxu0 0
  %3409 = vmatmul.mubr.bf16.gmra.mrb[0].mxu0 %v2986
  %v3410 = vpop.f32.mrb[0].mxu0
  %v3411 = vadd.f32 %v2622, %v3410
  %v3412 = vpop.f32.mrb[0].mxu0
  %v3413 = vadd.f32 %v2626, %v3412
  %v3414 = vpop.f32.mrb[0].mxu0
  %v3415 = vadd.f32 %v2622, %v3414
  %v3416 = vpop.f32.mrb[0].mxu0
  %v3417 = vadd.f32 %v2626, %v3416
  %3418 = vmatprep.mubr.bf16.mxu0 0
  %3419 = vmatmul.mubr.bf16.gmra.mrb[0].mxu0 %v2989
  %v3420 = vpop.f32.mrb[0].mxu0
  %v3421 = vadd.f32 %v2622, %v3420
  %v3422 = vpop.f32.mrb[0].mxu0
  %v3423 = vadd.f32 %v2626, %v3422
  %v3424 = vpop.f32.mrb[0].mxu0
  %v3425 = vadd.f32 %v2622, %v3424
  %v3426 = vpop.f32.mrb[0].mxu0
  %v3427 = vadd.f32 %v2626, %v3426
  %3428 = vdwg.mxu0
  %3429 = vmatprep.subr.bf16.mxu0 %v2864
  %3430 = vmatpush1.bf16.msra.mxu0 %v2863
  %3431 = vmatprep.subr.bf16.mxu0 %v2880
  %3432 = vmatpush1.bf16.msra.mxu0 %v2879
  %3433 = vmatprep.subr.bf16.mxu0 %v2896
  %3434 = vmatpush1.bf16.msra.mxu0 %v2895
  %3435 = vmatprep.subr.bf16.mxu0 %v2912
  %3436 = vmatpush1.bf16.msra.mxu0 %v2911
  %3437 = vmatprep.subr.bf16.mxu0 0
  %3438 = vmatpush1.bf16.msra.mxu0 0
  %3439 = vmatprep.subr.bf16.mxu0 0
  %3440 = vmatpush1.bf16.msra.mxu0 0
  %3441 = vmatprep.subr.bf16.mxu0 0
  %3442 = vmatpush1.bf16.msra.mxu0 0
  %3443 = vmatprep.subr.bf16.mxu0 0
  %3444 = vmatpush1.bf16.msra.mxu0 0
  %3445 = vmatprep.subr.bf16.mxu0 0
  %3446 = vmatpush1.bf16.msra.mxu0 0
  %3447 = vmatprep.subr.bf16.mxu0 0
  %3448 = vmatpush1.bf16.msra.mxu0 0
  %3449 = vmatprep.subr.bf16.mxu0 0
  %3450 = vmatpush1.bf16.msra.mxu0 0
  %3451 = vmatprep.subr.bf16.mxu0 0
  %3452 = vmatpush1.bf16.msra.mxu0 0
  %3453 = vmatprep.subr.bf16.mxu0 0
  %3454 = vmatpush1.bf16.msra.mxu0 0
  %3455 = vmatprep.subr.bf16.mxu0 0
  %3456 = vmatpush1.bf16.msra.mxu0 0
  %3457 = vmatprep.subr.bf16.mxu0 0
  %3458 = vmatpush1.bf16.msra.mxu0 0
  %3459 = vmatprep.subr.bf16.mxu0 0
  %3460 = vmatpush1.bf16.msra.mxu0 0
  %3461 = vmatprep.mubr.bf16.mxu0 0
  %3462 = vmatmul.mubr.bf16.gmra.mrb[0].mxu0 %v2980
  %v3463 = vpop.f32.mrb[0].mxu0
  %v3464 = vadd.f32 %v2630, %v3463
  %v3465 = vpop.f32.mrb[0].mxu0
  %v3466 = vadd.f32 %v2634, %v3465
  %v3467 = vpop.f32.mrb[0].mxu0
  %v3468 = vadd.f32 %v2630, %v3467
  %v3469 = vpop.f32.mrb[0].mxu0
  %v3470 = vadd.f32 %v2634, %v3469
  %3471 = vmatprep.mubr.bf16.mxu0 0
  %3472 = vmatmul.mubr.bf16.gmra.mrb[0].mxu0 %v2983
  %v3473 = vpop.f32.mrb[0].mxu0
  %v3474 = vadd.f32 %v2630, %v3473
  %v3475 = vpop.f32.mrb[0].mxu0
  %v3476 = vadd.f32 %v2634, %v3475
  %v3477 = vpop.f32.mrb[0].mxu0
  %v3478 = vadd.f32 %v2630, %v3477
  %v3479 = vpop.f32.mrb[0].mxu0
  %v3480 = vadd.f32 %v2634, %v3479
  %3481 = vmatprep.mubr.bf16.mxu0 0
  %3482 = vmatmul.mubr.bf16.gmra.mrb[0].mxu0 %v2986
  %v3483 = vpop.f32.mrb[0].mxu0
  %v3484 = vadd.f32 %v2630, %v3483
  %v3485 = vpop.f32.mrb[0].mxu0
  %v3486 = vadd.f32 %v2634, %v3485
  %v3487 = vpop.f32.mrb[0].mxu0
  %v3488 = vadd.f32 %v2630, %v3487
  %v3489 = vpop.f32.mrb[0].mxu0
  %v3490 = vadd.f32 %v2634, %v3489
  %3491 = vmatprep.mubr.bf16.mxu0 0
  %3492 = vmatmul.mubr.bf16.gmra.mrb[0].mxu0 %v2989
  %v3493 = vpop.f32.mrb[0].mxu0
  %v3494 = vadd.f32 %v2630, %v3493
  %v3495 = vpop.f32.mrb[0].mxu0
  %v3496 = vadd.f32 %v2634, %v3495
  %v3497 = vpop.f32.mrb[0].mxu0
  %v3498 = vadd.f32 %v2630, %v3497
  %v3499 = vpop.f32.mrb[0].mxu0
  %v3500 = vadd.f32 %v2634, %v3499
  %3501 = vdwg.mxu0
  %3502 = vmatprep.subr.bf16.mxu0 %v2866
  %3503 = vmatpush1.bf16.msra.mxu0 %v2865
  %3504 = vmatprep.subr.bf16.mxu0 %v2882
  %3505 = vmatpush1.bf16.msra.mxu0 %v2881
  %3506 = vmatprep.subr.bf16.mxu0 %v2898
  %3507 = vmatpush1.bf16.msra.mxu0 %v2897
  %3508 = vmatprep.subr.bf16.mxu0 %v2914
  %3509 = vmatpush1.bf16.msra.mxu0 %v2913
  %3510 = vmatprep.subr.bf16.mxu0 0
  %3511 = vmatpush1.bf16.msra.mxu0 0
  %3512 = vmatprep.subr.bf16.mxu0 0
  %3513 = vmatpush1.bf16.msra.mxu0 0
  %3514 = vmatprep.subr.bf16.mxu0 0
  %3515 = vmatpush1.bf16.msra.mxu0 0
  %3516 = vmatprep.subr.bf16.mxu0 0
  %3517 = vmatpush1.bf16.msra.mxu0 0
  %3518 = vmatprep.subr.bf16.mxu0 0
  %3519 = vmatpush1.bf16.msra.mxu0 0
  %3520 = vmatprep.subr.bf16.mxu0 0
  %3521 = vmatpush1.bf16.msra.mxu0 0
  %3522 = vmatprep.subr.bf16.mxu0 0
  %3523 = vmatpush1.bf16.msra.mxu0 0
  %3524 = vmatprep.subr.bf16.mxu0 0
  %3525 = vmatpush1.bf16.msra.mxu0 0
  %3526 = vmatprep.subr.bf16.mxu0 0
  %3527 = vmatpush1.bf16.msra.mxu0 0
  %3528 = vmatprep.subr.bf16.mxu0 0
  %3529 = vmatpush1.bf16.msra.mxu0 0
  %3530 = vmatprep.subr.bf16.mxu0 0
  %3531 = vmatpush1.bf16.msra.mxu0 0
  %3532 = vmatprep.subr.bf16.mxu0 0
  %3533 = vmatpush1.bf16.msra.mxu0 0
  %3534 = vmatprep.mubr.bf16.mxu0 0
  %3535 = vmatmul.mubr.bf16.gmra.mrb[0].mxu0 %v2980
  %v3536 = vpop.f32.mrb[0].mxu0
  %v3537 = vadd.f32 %v2638, %v3536
  %v3538 = vpop.f32.mrb[0].mxu0
  %v3539 = vadd.f32 %v2642, %v3538
  %v3540 = vpop.f32.mrb[0].mxu0
  %v3541 = vadd.f32 %v2638, %v3540
  %v3542 = vpop.f32.mrb[0].mxu0
  %v3543 = vadd.f32 %v2642, %v3542
  %3544 = vmatprep.mubr.bf16.mxu0 0
  %3545 = vmatmul.mubr.bf16.gmra.mrb[0].mxu0 %v2983
  %v3546 = vpop.f32.mrb[0].mxu0
  %v3547 = vadd.f32 %v2638, %v3546
  %v3548 = vpop.f32.mrb[0].mxu0
  %v3549 = vadd.f32 %v2642, %v3548
  %v3550 = vpop.f32.mrb[0].mxu0
  %v3551 = vadd.f32 %v2638, %v3550
  %v3552 = vpop.f32.mrb[0].mxu0
  %v3553 = vadd.f32 %v2642, %v3552
  %3554 = vmatprep.mubr.bf16.mxu0 0
  %3555 = vmatmul.mubr.bf16.gmra.mrb[0].mxu0 %v2986
  %v3556 = vpop.f32.mrb[0].mxu0
  %v3557 = vadd.f32 %v2638, %v3556
  %v3558 = vpop.f32.mrb[0].mxu0
  %v3559 = vadd.f32 %v2642, %v3558
  %v3560 = vpop.f32.mrb[0].mxu0
  %v3561 = vadd.f32 %v2638, %v3560
  %v3562 = vpop.f32.mrb[0].mxu0
  %v3563 = vadd.f32 %v2642, %v3562
  %3564 = vmatprep.mubr.bf16.mxu0 0
  %3565 = vmatmul.mubr.bf16.gmra.mrb[0].mxu0 %v2989
  %v3566 = vpop.f32.mrb[0].mxu0
  %v3567 = vadd.f32 %v2638, %v3566
  %v3568 = vpop.f32.mrb[0].mxu0
  %v3569 = vadd.f32 %v2642, %v3568
  %v3570 = vpop.f32.mrb[0].mxu0
  %v3571 = vadd.f32 %v2638, %v3570
  %v3572 = vpop.f32.mrb[0].mxu0
  %v3573 = vadd.f32 %v2642, %v3572
  %3574 = vdwg.mxu0
  %v3575 = vmax.f32 %v3026, 0.0
  %v3576 = vmax.f32 %v3028, 0.0
  %v3577 = vmax.f32 %v3099, 0.0
  %v3578 = vmax.f32 %v3101, 0.0
  %v3579 = vmax.f32 %v3172, 0.0
  %v3580 = vmax.f32 %v3174, 0.0
  %v3581 = vmax.f32 %v3245, 0.0
  %v3582 = vmax.f32 %v3247, 0.0
  %v3583 = vmax.f32 %v3318, 0.0
  %v3584 = vmax.f32 %v3320, 0.0
  %v3585 = vmax.f32 %v3391, 0.0
  %v3586 = vmax.f32 %v3393, 0.0
  %v3587 = vmax.f32 %v3464, 0.0
  %v3588 = vmax.f32 %v3466, 0.0
  %v3589 = vmax.f32 %v3537, 0.0
  %v3590 = vmax.f32 %v3539, 0.0
  %v3591 = vmax.f32 %v3030, 0.0
  %v3592 = vmax.f32 %v3032, 0.0
  %v3593 = vmax.f32 %v3103, 0.0
  %v3594 = vmax.f32 %v3105, 0.0
  %v3595 = vmax.f32 %v3176, 0.0
  %v3596 = vmax.f32 %v3178, 0.0
  %v3597 = vmax.f32 %v3249, 0.0
  %v3598 = vmax.f32 %v3251, 0.0
  %v3599 = vmax.f32 %v3322, 0.0
  %v3600 = vmax.f32 %v3324, 0.0
  %v3601 = vmax.f32 %v3395, 0.0
  %v3602 = vmax.f32 %v3397, 0.0
  %v3603 = vmax.f32 %v3468, 0.0
  %v3604 = vmax.f32 %v3470, 0.0
  %v3605 = vmax.f32 %v3541, 0.0
  %v3606 = vmax.f32 %v3543, 0.0
  %v3607 = vmax.f32 %v3036, 0.0
  %v3608 = vmax.f32 %v3038, 0.0
  %v3609 = vmax.f32 %v3109, 0.0
  %v3610 = vmax.f32 %v3111, 0.0
  %v3611 = vmax.f32 %v3182, 0.0
  %v3612 = vmax.f32 %v3184, 0.0
  %v3613 = vmax.f32 %v3255, 0.0
  %v3614 = vmax.f32 %v3257, 0.0
  %v3615 = vmax.f32 %v3328, 0.0
  %v3616 = vmax.f32 %v3330, 0.0
  %v3617 = vmax.f32 %v3401, 0.0
  %v3618 = vmax.f32 %v3403, 0.0
  %v3619 = vmax.f32 %v3474, 0.0
  %v3620 = vmax.f32 %v3476, 0.0
  %v3621 = vmax.f32 %v3547, 0.0
  %v3622 = vmax.f32 %v3549, 0.0
  %v3623 = vmax.f32 %v3040, 0.0
  %v3624 = vmax.f32 %v3042, 0.0
  %v3625 = vmax.f32 %v3113, 0.0
  %v3626 = vmax.f32 %v3115, 0.0
  %v3627 = vmax.f32 %v3186, 0.0
  %v3628 = vmax.f32 %v3188, 0.0
  %v3629 = vmax.f32 %v3259, 0.0
  %v3630 = vmax.f32 %v3261, 0.0
  %v3631 = vmax.f32 %v3332, 0.0
  %v3632 = vmax.f32 %v3334, 0.0
  %v3633 = vmax.f32 %v3405, 0.0
  %v3634 = vmax.f32 %v3407, 0.0
  %v3635 = vmax.f32 %v3478, 0.0
  %v3636 = vmax.f32 %v3480, 0.0
  %v3637 = vmax.f32 %v3551, 0.0
  %v3638 = vmax.f32 %v3553, 0.0
  %v3639 = vmax.f32 %v3046, 0.0
  %v3640 = vmax.f32 %v3048, 0.0
  %v3641 = vmax.f32 %v3119, 0.0
  %v3642 = vmax.f32 %v3121, 0.0
  %v3643 = vmax.f32 %v3192, 0.0
  %v3644 = vmax.f32 %v3194, 0.0
  %v3645 = vmax.f32 %v3265, 0.0
  %v3646 = vmax.f32 %v3267, 0.0
  %v3647 = vmax.f32 %v3338, 0.0
  %v3648 = vmax.f32 %v3340, 0.0
  %v3649 = vmax.f32 %v3411, 0.0
  %v3650 = vmax.f32 %v3413, 0.0
  %v3651 = vmax.f32 %v3484, 0.0
  %v3652 = vmax.f32 %v3486, 0.0
  %v3653 = vmax.f32 %v3557, 0.0
  %v3654 = vmax.f32 %v3559, 0.0
  %v3655 = vmax.f32 %v3050, 0.0
  %v3656 = vmax.f32 %v3052, 0.0
  %v3657 = vmax.f32 %v3123, 0.0
  %v3658 = vmax.f32 %v3125, 0.0
  %v3659 = vmax.f32 %v3196, 0.0
  %v3660 = vmax.f32 %v3198, 0.0
  %v3661 = vmax.f32 %v3269, 0.0
  %v3662 = vmax.f32 %v3271, 0.0
  %v3663 = vmax.f32 %v3342, 0.0
  %v3664 = vmax.f32 %v3344, 0.0
  %v3665 = vmax.f32 %v3415, 0.0
  %v3666 = vmax.f32 %v3417, 0.0
  %v3667 = vmax.f32 %v3488, 0.0
  %v3668 = vmax.f32 %v3490, 0.0
  %v3669 = vmax.f32 %v3561, 0.0
  %v3670 = vmax.f32 %v3563, 0.0
  %v3671 = vmax.f32 %v3056, 0.0
  %v3672 = vmax.f32 %v3058, 0.0
  %v3673 = vmax.f32 %v3129, 0.0
  %v3674 = vmax.f32 %v3131, 0.0
  %v3675 = vmax.f32 %v3202, 0.0
  %v3676 = vmax.f32 %v3204, 0.0
  %v3677 = vmax.f32 %v3275, 0.0
  %v3678 = vmax.f32 %v3277, 0.0
  %v3679 = vmax.f32 %v3348, 0.0
  %v3680 = vmax.f32 %v3350, 0.0
  %v3681 = vmax.f32 %v3421, 0.0
  %v3682 = vmax.f32 %v3423, 0.0
  %v3683 = vmax.f32 %v3494, 0.0
  %v3684 = vmax.f32 %v3496, 0.0
  %v3685 = vmax.f32 %v3567, 0.0
  %v3686 = vmax.f32 %v3569, 0.0
  %v3687 = vmax.f32 %v3060, 0.0
  %v3688 = vmax.f32 %v3062, 0.0
  %v3689 = vmax.f32 %v3133, 0.0
  %v3690 = vmax.f32 %v3135, 0.0
  %v3691 = vmax.f32 %v3206, 0.0
  %v3692 = vmax.f32 %v3208, 0.0
  %v3693 = vmax.f32 %v3279, 0.0
  %v3694 = vmax.f32 %v3281, 0.0
  %v3695 = vmax.f32 %v3352, 0.0
  %v3696 = vmax.f32 %v3354, 0.0
  %v3697 = vmax.f32 %v3425, 0.0
  %v3698 = vmax.f32 %v3427, 0.0
  %v3699 = vmax.f32 %v3498, 0.0
  %v3700 = vmax.f32 %v3500, 0.0
  %v3701 = vmax.f32 %v3571, 0.0
  %v3702 = vmax.f32 %v3573, 0.0
  %v3703 = vpack.c.bf16 %v3591, %v3575
  %v3704 = vpack.c.bf16 %v3592, %v3576
  %v3705 = vpack.c.bf16 %v3593, %v3577
  %v3706 = vpack.c.bf16 %v3594, %v3578
  %v3707 = vpack.c.bf16 %v3595, %v3579
  %v3708 = vpack.c.bf16 %v3596, %v3580
  %v3709 = vpack.c.bf16 %v3597, %v3581
  %v3710 = vpack.c.bf16 %v3598, %v3582
  %v3711 = vpack.c.bf16 %v3599, %v3583
  %v3712 = vpack.c.bf16 %v3600, %v3584
  %v3713 = vpack.c.bf16 %v3601, %v3585
  %v3714 = vpack.c.bf16 %v3602, %v3586
  %v3715 = vpack.c.bf16 %v3603, %v3587
  %v3716 = vpack.c.bf16 %v3604, %v3588
  %v3717 = vpack.c.bf16 %v3605, %v3589
  %v3718 = vpack.c.bf16 %v3606, %v3590
  %v3719 = vpack.c.bf16 %v3623, %v3607
  %v3720 = vpack.c.bf16 %v3624, %v3608
  %v3721 = vpack.c.bf16 %v3625, %v3609
  %v3722 = vpack.c.bf16 %v3626, %v3610
  %v3723 = vpack.c.bf16 %v3627, %v3611
  %v3724 = vpack.c.bf16 %v3628, %v3612
  %v3725 = vpack.c.bf16 %v3629, %v3613
  %v3726 = vpack.c.bf16 %v3630, %v3614
  %v3727 = vpack.c.bf16 %v3631, %v3615
  %v3728 = vpack.c.bf16 %v3632, %v3616
  %v3729 = vpack.c.bf16 %v3633, %v3617
  %v3730 = vpack.c.bf16 %v3634, %v3618
  %v3731 = vpack.c.bf16 %v3635, %v3619
  %v3732 = vpack.c.bf16 %v3636, %v3620
  %v3733 = vpack.c.bf16 %v3637, %v3621
  %v3734 = vpack.c.bf16 %v3638, %v3622
  %v3735 = vpack.c.bf16 %v3655, %v3639
  %v3736 = vpack.c.bf16 %v3656, %v3640
  %v3737 = vpack.c.bf16 %v3657, %v3641
  %v3738 = vpack.c.bf16 %v3658, %v3642
  %v3739 = vpack.c.bf16 %v3659, %v3643
  %v3740 = vpack.c.bf16 %v3660, %v3644
  %v3741 = vpack.c.bf16 %v3661, %v3645
  %v3742 = vpack.c.bf16 %v3662, %v3646
  %v3743 = vpack.c.bf16 %v3663, %v3647
  %v3744 = vpack.c.bf16 %v3664, %v3648
  %v3745 = vpack.c.bf16 %v3665, %v3649
  %v3746 = vpack.c.bf16 %v3666, %v3650
  %v3747 = vpack.c.bf16 %v3667, %v3651
  %v3748 = vpack.c.bf16 %v3668, %v3652
  %v3749 = vpack.c.bf16 %v3669, %v3653
  %v3750 = vpack.c.bf16 %v3670, %v3654
  %v3751 = vpack.c.bf16 %v3687, %v3671
  %v3752 = vpack.c.bf16 %v3688, %v3672
  %v3753 = vpack.c.bf16 %v3689, %v3673
  %v3754 = vpack.c.bf16 %v3690, %v3674
  %v3755 = vpack.c.bf16 %v3691, %v3675
  %v3756 = vpack.c.bf16 %v3692, %v3676
  %v3757 = vpack.c.bf16 %v3693, %v3677
  %v3758 = vpack.c.bf16 %v3694, %v3678
  %v3759 = vpack.c.bf16 %v3695, %v3679
  %v3760 = vpack.c.bf16 %v3696, %v3680
  %v3761 = vpack.c.bf16 %v3697, %v3681
  %v3762 = vpack.c.bf16 %v3698, %v3682
  %v3763 = vpack.c.bf16 %v3699, %v3683
  %v3764 = vpack.c.bf16 %v3700, %v3684
  %v3765 = vpack.c.bf16 %v3701, %v3685
  %v3766 = vpack.c.bf16 %v3702, %v3686
  %v3767 = vld [vmem:[%s12] sm:$0xf]
  %v3768 = vld [vmem:[%s12 + $0x4] sm:$0xf]
  %v3769 = vld [vmem:[%s12 + $0x8] sm:$0xf]
  %v3770 = vld [vmem:[%s12 + $0xc] sm:$0xf]
  %v3771 = vld [vmem:[%s12 + $0x10] sm:$0xf]
  %v3772 = vld [vmem:[%s12 + $0x14] sm:$0xf]
  %v3773 = vld [vmem:[%s12 + $0x18] sm:$0xf]
  %v3774 = vld [vmem:[%s12 + $0x1c] sm:$0xf]
  %v3775 = vld [vmem:[%s12 + $0x20] sm:$0xf]
  %v3776 = vld [vmem:[%s12 + $0x24] sm:$0xf]
  %v3777 = vld [vmem:[%s12 + $0x28] sm:$0xf]
  %v3778 = vld [vmem:[%s12 + $0x2c] sm:$0xf]
  %v3779 = vld [vmem:[%s12 + $0x30] sm:$0xf]
  %v3780 = vld [vmem:[%s12 + $0x34] sm:$0xf]
  %v3781 = vld [vmem:[%s12 + $0x38] sm:$0xf]
  %v3782 = vld [vmem:[%s12 + $0x3c] sm:$0xf]
  %v3783 = vld [vmem:[%s12 + $0x40] sm:$0xf]
  %v3784 = vld [vmem:[%s12 + $0x44] sm:$0xf]
  %v3785 = vld [vmem:[%s12 + $0x48] sm:$0xf]
  %v3786 = vld [vmem:[%s12 + $0x4c] sm:$0xf]
  %v3787 = vld [vmem:[%s12 + $0x50] sm:$0xf]
  %v3788 = vld [vmem:[%s12 + $0x54] sm:$0xf]
  %v3789 = vld [vmem:[%s12 + $0x58] sm:$0xf]
  %v3790 = vld [vmem:[%s12 + $0x5c] sm:$0xf]
  %v3791 = vld [vmem:[%s12 + $0x60] sm:$0xf]
  %v3792 = vld [vmem:[%s12 + $0x64] sm:$0xf]
  %v3793 = vld [vmem:[%s12 + $0x68] sm:$0xf]
  %v3794 = vld [vmem:[%s12 + $0x6c] sm:$0xf]
  %v3795 = vld [vmem:[%s12 + $0x70] sm:$0xf]
  %v3796 = vld [vmem:[%s12 + $0x74] sm:$0xf]
  %v3797 = vld [vmem:[%s12 + $0x78] sm:$0xf]
  %v3798 = vld [vmem:[%s12 + $0x7c] sm:$0xf]
  %v3799 = vld [vmem:[%s12 + $0x80] sm:$0xf]
  %v3800 = vld [vmem:[%s12 + $0x84] sm:$0xf]
  %v3801 = vld [vmem:[%s12 + $0x88] sm:$0xf]
  %v3802 = vld [vmem:[%s12 + $0x8c] sm:$0xf]
  %v3803 = vld [vmem:[%s12 + $0x90] sm:$0xf]
  %v3804 = vld [vmem:[%s12 + $0x94] sm:$0xf]
  %v3805 = vld [vmem:[%s12 + $0x98] sm:$0xf]
  %v3806 = vld [vmem:[%s12 + $0x9c] sm:$0xf]
  %v3807 = vld [vmem:[%s12 + $0xa0] sm:$0xf]
  %v3808 = vld [vmem:[%s12 + $0xa4] sm:$0xf]
  %v3809 = vld [vmem:[%s12 + $0xa8] sm:$0xf]
  %v3810 = vld [vmem:[%s12 + $0xac] sm:$0xf]
  %v3811 = vld [vmem:[%s12 + $0xb0] sm:$0xf]
  %v3812 = vld [vmem:[%s12 + $0xb4] sm:$0xf]
  %v3813 = vld [vmem:[%s12 + $0xb8] sm:$0xf]
  %v3814 = vld [vmem:[%s12 + $0xbc] sm:$0xf]
  %v3815 = vld [vmem:[%s12 + $0xc0] sm:$0xf]
  %v3816 = vld [vmem:[%s12 + $0xc4] sm:$0xf]
  %v3817 = vld [vmem:[%s12 + $0xc8] sm:$0xf]
  %v3818 = vld [vmem:[%s12 + $0xcc] sm:$0xf]
  %v3819 = vld [vmem:[%s12 + $0xd0] sm:$0xf]
  %v3820 = vld [vmem:[%s12 + $0xd4] sm:$0xf]
  %v3821 = vld [vmem:[%s12 + $0xd8] sm:$0xf]
  %v3822 = vld [vmem:[%s12 + $0xdc] sm:$0xf]
  %v3823 = vld [vmem:[%s12 + $0xe0] sm:$0xf]
  %v3824 = vld [vmem:[%s12 + $0xe4] sm:$0xf]
  %v3825 = vld [vmem:[%s12 + $0xe8] sm:$0xf]
  %v3826 = vld [vmem:[%s12 + $0xec] sm:$0xf]
  %v3827 = vld [vmem:[%s12 + $0xf0] sm:$0xf]
  %v3828 = vld [vmem:[%s12 + $0xf4] sm:$0xf]
  %v3829 = vld [vmem:[%s12 + $0xf8] sm:$0xf]
  %v3830 = vld [vmem:[%s12 + $0xfc] sm:$0xf]
  %v3831 = vld [vmem:[%s12 + $0x100] sm:$0xf]
  %v3832 = vld [vmem:[%s12 + $0x104] sm:$0xf]
  %v3833 = vld [vmem:[%s12 + $0x108] sm:$0xf]
  %v3834 = vld [vmem:[%s12 + $0x10c] sm:$0xf]
  %v3835 = vld [vmem:[%s12 + $0x110] sm:$0xf]
  %v3836 = vld [vmem:[%s12 + $0x114] sm:$0xf]
  %v3837 = vld [vmem:[%s12 + $0x118] sm:$0xf]
  %v3838 = vld [vmem:[%s12 + $0x11c] sm:$0xf]
  %v3839 = vld [vmem:[%s12 + $0x120] sm:$0xf]
  %v3840 = vld [vmem:[%s12 + $0x124] sm:$0xf]
  %v3841 = vld [vmem:[%s12 + $0x128] sm:$0xf]
  %v3842 = vld [vmem:[%s12 + $0x12c] sm:$0xf]
  %v3843 = vld [vmem:[%s12 + $0x130] sm:$0xf]
  %v3844 = vld [vmem:[%s12 + $0x134] sm:$0xf]
  %v3845 = vld [vmem:[%s12 + $0x138] sm:$0xf]
  %v3846 = vld [vmem:[%s12 + $0x13c] sm:$0xf]
  %v3847 = vld [vmem:[%s12 + $0x140] sm:$0xf]
  %v3848 = vld [vmem:[%s12 + $0x144] sm:$0xf]
  %v3849 = vld [vmem:[%s12 + $0x148] sm:$0xf]
  %v3850 = vld [vmem:[%s12 + $0x14c] sm:$0xf]
  %v3851 = vld [vmem:[%s12 + $0x150] sm:$0xf]
  %v3852 = vld [vmem:[%s12 + $0x154] sm:$0xf]
  %v3853 = vld [vmem:[%s12 + $0x158] sm:$0xf]
  %v3854 = vld [vmem:[%s12 + $0x15c] sm:$0xf]
  %v3855 = vld [vmem:[%s12 + $0x160] sm:$0xf]
  %v3856 = vld [vmem:[%s12 + $0x164] sm:$0xf]
  %v3857 = vld [vmem:[%s12 + $0x168] sm:$0xf]
  %v3858 = vld [vmem:[%s12 + $0x16c] sm:$0xf]
  %v3859 = vld [vmem:[%s12 + $0x170] sm:$0xf]
  %v3860 = vld [vmem:[%s12 + $0x174] sm:$0xf]
  %v3861 = vld [vmem:[%s12 + $0x178] sm:$0xf]
  %v3862 = vld [vmem:[%s12 + $0x17c] sm:$0xf]
  %v3863 = vld [vmem:[%s12 + $0x180] sm:$0xf]
  %v3864 = vld [vmem:[%s12 + $0x184] sm:$0xf]
  %v3865 = vld [vmem:[%s12 + $0x188] sm:$0xf]
  %v3866 = vld [vmem:[%s12 + $0x18c] sm:$0xf]
  %v3867 = vld [vmem:[%s12 + $0x190] sm:$0xf]
  %v3868 = vld [vmem:[%s12 + $0x194] sm:$0xf]
  %v3869 = vld [vmem:[%s12 + $0x198] sm:$0xf]
  %v3870 = vld [vmem:[%s12 + $0x19c] sm:$0xf]
  %v3871 = vld [vmem:[%s12 + $0x1a0] sm:$0xf]
  %v3872 = vld [vmem:[%s12 + $0x1a4] sm:$0xf]
  %v3873 = vld [vmem:[%s12 + $0x1a8] sm:$0xf]
  %v3874 = vld [vmem:[%s12 + $0x1ac] sm:$0xf]
  %v3875 = vld [vmem:[%s12 + $0x1b0] sm:$0xf]
  %v3876 = vld [vmem:[%s12 + $0x1b4] sm:$0xf]
  %v3877 = vld [vmem:[%s12 + $0x1b8] sm:$0xf]
  %v3878 = vld [vmem:[%s12 + $0x1bc] sm:$0xf]
  %v3879 = vld [vmem:[%s12 + $0x1c0] sm:$0xf]
  %v3880 = vld [vmem:[%s12 + $0x1c4] sm:$0xf]
  %v3881 = vld [vmem:[%s12 + $0x1c8] sm:$0xf]
  %v3882 = vld [vmem:[%s12 + $0x1cc] sm:$0xf]
  %v3883 = vld [vmem:[%s12 + $0x1d0] sm:$0xf]
  %v3884 = vld [vmem:[%s12 + $0x1d4] sm:$0xf]
  %v3885 = vld [vmem:[%s12 + $0x1d8] sm:$0xf]
  %v3886 = vld [vmem:[%s12 + $0x1dc] sm:$0xf]
  %v3887 = vld [vmem:[%s12 + $0x1e0] sm:$0xf]
  %v3888 = vld [vmem:[%s12 + $0x1e4] sm:$0xf]
  %v3889 = vld [vmem:[%s12 + $0x1e8] sm:$0xf]
  %v3890 = vld [vmem:[%s12 + $0x1ec] sm:$0xf]
  %v3891 = vld [vmem:[%s12 + $0x1f0] sm:$0xf]
  %v3892 = vld [vmem:[%s12 + $0x1f4] sm:$0xf]
  %v3893 = vld [vmem:[%s12 + $0x1f8] sm:$0xf]
  %v3894 = vld [vmem:[%s12 + $0x1fc] sm:$0xf]
  %v3895 = vld [vmem:[%s12 + $0x200] sm:$0xf]
  %v3896 = vld [vmem:[%s12 + $0x204] sm:$0xf]
  %v3897 = vld [vmem:[%s12 + $0x208] sm:$0xf]
  %v3898 = vld [vmem:[%s12 + $0x20c] sm:$0xf]
  %v3899 = vld [vmem:[%s12 + $0x210] sm:$0xf]
  %v3900 = vld [vmem:[%s12 + $0x214] sm:$0xf]
  %v3901 = vld [vmem:[%s12 + $0x218] sm:$0xf]
  %v3902 = vld [vmem:[%s12 + $0x21c] sm:$0xf]
  %v3903 = vld [vmem:[%s12 + $0x220] sm:$0xf]
  %v3904 = vld [vmem:[%s12 + $0x224] sm:$0xf]
  %v3905 = vld [vmem:[%s12 + $0x228] sm:$0xf]
  %v3906 = vld [vmem:[%s12 + $0x22c] sm:$0xf]
  %v3907 = vld [vmem:[%s12 + $0x230] sm:$0xf]
  %v3908 = vld [vmem:[%s12 + $0x234] sm:$0xf]
  %v3909 = vld [vmem:[%s12 + $0x238] sm:$0xf]
  %v3910 = vld [vmem:[%s12 + $0x23c] sm:$0xf]
  %v3911 = vld [vmem:[%s12 + $0x240] sm:$0xf]
  %v3912 = vld [vmem:[%s12 + $0x244] sm:$0xf]
  %v3913 = vld [vmem:[%s12 + $0x248] sm:$0xf]
  %v3914 = vld [vmem:[%s12 + $0x24c] sm:$0xf]
  %v3915 = vld [vmem:[%s12 + $0x250] sm:$0xf]
  %v3916 = vld [vmem:[%s12 + $0x254] sm:$0xf]
  %v3917 = vld [vmem:[%s12 + $0x258] sm:$0xf]
  %v3918 = vld [vmem:[%s12 + $0x25c] sm:$0xf]
  %v3919 = vld [vmem:[%s12 + $0x260] sm:$0xf]
  %v3920 = vld [vmem:[%s12 + $0x264] sm:$0xf]
  %v3921 = vld [vmem:[%s12 + $0x268] sm:$0xf]
  %v3922 = vld [vmem:[%s12 + $0x26c] sm:$0xf]
  %v3923 = vld [vmem:[%s12 + $0x270] sm:$0xf]
  %v3924 = vld [vmem:[%s12 + $0x274] sm:$0xf]
  %v3925 = vld [vmem:[%s12 + $0x278] sm:$0xf]
  %v3926 = vld [vmem:[%s12 + $0x27c] sm:$0xf]
  %v3927 = vld [vmem:[%s12 + $0x280] sm:$0xf]
  %v3928 = vld [vmem:[%s12 + $0x284] sm:$0xf]
  %v3929 = vld [vmem:[%s12 + $0x288] sm:$0xf]
  %v3930 = vld [vmem:[%s12 + $0x28c] sm:$0xf]
  %v3931 = vld [vmem:[%s12 + $0x290] sm:$0xf]
  %v3932 = vld [vmem:[%s12 + $0x294] sm:$0xf]
  %v3933 = vld [vmem:[%s12 + $0x298] sm:$0xf]
  %v3934 = vld [vmem:[%s12 + $0x29c] sm:$0xf]
  %v3935 = vld [vmem:[%s12 + $0x2a0] sm:$0xf]
  %v3936 = vld [vmem:[%s12 + $0x2a4] sm:$0xf]
  %v3937 = vld [vmem:[%s12 + $0x2a8] sm:$0xf]
  %v3938 = vld [vmem:[%s12 + $0x2ac] sm:$0xf]
  %v3939 = vld [vmem:[%s12 + $0x2b0] sm:$0xf]
  %v3940 = vld [vmem:[%s12 + $0x2b4] sm:$0xf]
  %v3941 = vld [vmem:[%s12 + $0x2b8] sm:$0xf]
  %v3942 = vld [vmem:[%s12 + $0x2bc] sm:$0xf]
  %v3943 = vld [vmem:[%s12 + $0x2c0] sm:$0xf]
  %v3944 = vld [vmem:[%s12 + $0x2c4] sm:$0xf]
  %v3945 = vld [vmem:[%s12 + $0x2c8] sm:$0xf]
  %v3946 = vld [vmem:[%s12 + $0x2cc] sm:$0xf]
  %v3947 = vld [vmem:[%s12 + $0x2d0] sm:$0xf]
  %v3948 = vld [vmem:[%s12 + $0x2d4] sm:$0xf]
  %v3949 = vld [vmem:[%s12 + $0x2d8] sm:$0xf]
  %v3950 = vld [vmem:[%s12 + $0x2dc] sm:$0xf]
  %v3951 = vld [vmem:[%s12 + $0x2e0] sm:$0xf]
  %v3952 = vld [vmem:[%s12 + $0x2e4] sm:$0xf]
  %v3953 = vld [vmem:[%s12 + $0x2e8] sm:$0xf]
  %v3954 = vld [vmem:[%s12 + $0x2ec] sm:$0xf]
  %v3955 = vld [vmem:[%s12 + $0x2f0] sm:$0xf]
  %v3956 = vld [vmem:[%s12 + $0x2f4] sm:$0xf]
  %v3957 = vld [vmem:[%s12 + $0x2f8] sm:$0xf]
  %v3958 = vld [vmem:[%s12 + $0x2fc] sm:$0xf]
  %v3959 = vld [vmem:[%s12 + $0x300] sm:$0xf]
  %v3960 = vld [vmem:[%s12 + $0x304] sm:$0xf]
  %v3961 = vld [vmem:[%s12 + $0x308] sm:$0xf]
  %v3962 = vld [vmem:[%s12 + $0x30c] sm:$0xf]
  %v3963 = vld [vmem:[%s12 + $0x310] sm:$0xf]
  %v3964 = vld [vmem:[%s12 + $0x314] sm:$0xf]
  %v3965 = vld [vmem:[%s12 + $0x318] sm:$0xf]
  %v3966 = vld [vmem:[%s12 + $0x31c] sm:$0xf]
  %v3967 = vld [vmem:[%s12 + $0x320] sm:$0xf]
  %v3968 = vld [vmem:[%s12 + $0x324] sm:$0xf]
  %v3969 = vld [vmem:[%s12 + $0x328] sm:$0xf]
  %v3970 = vld [vmem:[%s12 + $0x32c] sm:$0xf]
  %v3971 = vld [vmem:[%s12 + $0x330] sm:$0xf]
  %v3972 = vld [vmem:[%s12 + $0x334] sm:$0xf]
  %v3973 = vld [vmem:[%s12 + $0x338] sm:$0xf]
  %v3974 = vld [vmem:[%s12 + $0x33c] sm:$0xf]
  %v3975 = vld [vmem:[%s12 + $0x340] sm:$0xf]
  %v3976 = vld [vmem:[%s12 + $0x344] sm:$0xf]
  %v3977 = vld [vmem:[%s12 + $0x348] sm:$0xf]
  %v3978 = vld [vmem:[%s12 + $0x34c] sm:$0xf]
  %v3979 = vld [vmem:[%s12 + $0x350] sm:$0xf]
  %v3980 = vld [vmem:[%s12 + $0x354] sm:$0xf]
  %v3981 = vld [vmem:[%s12 + $0x358] sm:$0xf]
  %v3982 = vld [vmem:[%s12 + $0x35c] sm:$0xf]
  %v3983 = vld [vmem:[%s12 + $0x360] sm:$0xf]
  %v3984 = vld [vmem:[%s12 + $0x364] sm:$0xf]
  %v3985 = vld [vmem:[%s12 + $0x368] sm:$0xf]
  %v3986 = vld [vmem:[%s12 + $0x36c] sm:$0xf]
  %v3987 = vld [vmem:[%s12 + $0x370] sm:$0xf]
  %v3988 = vld [vmem:[%s12 + $0x374] sm:$0xf]
  %v3989 = vld [vmem:[%s12 + $0x378] sm:$0xf]
  %v3990 = vld [vmem:[%s12 + $0x37c] sm:$0xf]
  %v3991 = vld [vmem:[%s12 + $0x380] sm:$0xf]
  %v3992 = vld [vmem:[%s12 + $0x384] sm:$0xf]
  %v3993 = vld [vmem:[%s12 + $0x388] sm:$0xf]
  %v3994 = vld [vmem:[%s12 + $0x38c] sm:$0xf]
  %v3995 = vld [vmem:[%s12 + $0x390] sm:$0xf]
  %v3996 = vld [vmem:[%s12 + $0x394] sm:$0xf]
  %v3997 = vld [vmem:[%s12 + $0x398] sm:$0xf]
  %v3998 = vld [vmem:[%s12 + $0x39c] sm:$0xf]
  %v3999 = vld [vmem:[%s12 + $0x3a0] sm:$0xf]
  %v4000 = vld [vmem:[%s12 + $0x3a4] sm:$0xf]
  %v4001 = vld [vmem:[%s12 + $0x3a8] sm:$0xf]
  %v4002 = vld [vmem:[%s12 + $0x3ac] sm:$0xf]
  %v4003 = vld [vmem:[%s12 + $0x3b0] sm:$0xf]
  %v4004 = vld [vmem:[%s12 + $0x3b4] sm:$0xf]
  %v4005 = vld [vmem:[%s12 + $0x3b8] sm:$0xf]
  %v4006 = vld [vmem:[%s12 + $0x3bc] sm:$0xf]
  %v4007 = vld [vmem:[%s12 + $0x3c0] sm:$0xf]
  %v4008 = vld [vmem:[%s12 + $0x3c4] sm:$0xf]
  %v4009 = vld [vmem:[%s12 + $0x3c8] sm:$0xf]
  %v4010 = vld [vmem:[%s12 + $0x3cc] sm:$0xf]
  %v4011 = vld [vmem:[%s12 + $0x3d0] sm:$0xf]
  %v4012 = vld [vmem:[%s12 + $0x3d4] sm:$0xf]
  %v4013 = vld [vmem:[%s12 + $0x3d8] sm:$0xf]
  %v4014 = vld [vmem:[%s12 + $0x3dc] sm:$0xf]
  %v4015 = vld [vmem:[%s12 + $0x3e0] sm:$0xf]
  %v4016 = vld [vmem:[%s12 + $0x3e4] sm:$0xf]
  %v4017 = vld [vmem:[%s12 + $0x3e8] sm:$0xf]
  %v4018 = vld [vmem:[%s12 + $0x3ec] sm:$0xf]
  %v4019 = vld [vmem:[%s12 + $0x3f0] sm:$0xf]
  %v4020 = vld [vmem:[%s12 + $0x3f4] sm:$0xf]
  %v4021 = vld [vmem:[%s12 + $0x3f8] sm:$0xf]
  %v4022 = vld [vmem:[%s12 + $0x3fc] sm:$0xf]
  %v4023 = vld [vmem:[%s13] sm:$0x1]
  %v4025 = vlaneseq
  %v4026 = vshrl.u32 %v4025, 7
  %v4027 = vsub.s32 0, %v4026
  %v4028 = vrot.slane %v4023, %v4027
  %v4286 = vunpack.c.l.b16 %v3767
  %v4287 = vunpack.c.l.b16 %v3768
  %v4288 = vunpack.c.l.b16 %v3769
  %v4289 = vunpack.c.l.b16 %v3770
  %v4290 = vunpack.c.l.b16 %v3771
  %v4291 = vunpack.c.l.b16 %v3772
  %v4292 = vunpack.c.l.b16 %v3773
  %v4293 = vunpack.c.l.b16 %v3774
  %v4294 = vunpack.c.l.b16 %v3775
  %v4295 = vunpack.c.l.b16 %v3776
  %v4296 = vunpack.c.l.b16 %v3777
  %v4297 = vunpack.c.l.b16 %v3778
  %v4298 = vunpack.c.l.b16 %v3779
  %v4299 = vunpack.c.l.b16 %v3780
  %v4300 = vunpack.c.l.b16 %v3781
  %v4301 = vunpack.c.l.b16 %v3782
  %v4302 = vunpack.c.l.b16 %v3783
  %v4303 = vunpack.c.l.b16 %v3784
  %v4304 = vunpack.c.l.b16 %v3785
  %v4305 = vunpack.c.l.b16 %v3786
  %v4306 = vunpack.c.l.b16 %v3787
  %v4307 = vunpack.c.l.b16 %v3788
  %v4308 = vunpack.c.l.b16 %v3789
  %v4309 = vunpack.c.l.b16 %v3790
  %v4310 = vunpack.c.l.b16 %v3791
  %v4311 = vunpack.c.l.b16 %v3792
  %v4312 = vunpack.c.l.b16 %v3793
  %v4313 = vunpack.c.l.b16 %v3794
  %v4314 = vunpack.c.l.b16 %v3795
  %v4315 = vunpack.c.l.b16 %v3796
  %v4316 = vunpack.c.l.b16 %v3797
  %v4317 = vunpack.c.l.b16 %v3798
  %v4318 = vunpack.c.l.b16 %v3799
  %v4319 = vunpack.c.l.b16 %v3800
  %v4320 = vunpack.c.l.b16 %v3801
  %v4321 = vunpack.c.l.b16 %v3802
  %v4322 = vunpack.c.l.b16 %v3803
  %v4323 = vunpack.c.l.b16 %v3804
  %v4324 = vunpack.c.l.b16 %v3805
  %v4325 = vunpack.c.l.b16 %v3806
  %v4326 = vunpack.c.l.b16 %v3807
  %v4327 = vunpack.c.l.b16 %v3808
  %v4328 = vunpack.c.l.b16 %v3809
  %v4329 = vunpack.c.l.b16 %v3810
  %v4330 = vunpack.c.l.b16 %v3811
  %v4331 = vunpack.c.l.b16 %v3812
  %v4332 = vunpack.c.l.b16 %v3813
  %v4333 = vunpack.c.l.b16 %v3814
  %v4334 = vunpack.c.l.b16 %v3815
  %v4335 = vunpack.c.l.b16 %v3816
  %v4336 = vunpack.c.l.b16 %v3817
  %v4337 = vunpack.c.l.b16 %v3818
  %v4338 = vunpack.c.l.b16 %v3819
  %v4339 = vunpack.c.l.b16 %v3820
  %v4340 = vunpack.c.l.b16 %v3821
  %v4341 = vunpack.c.l.b16 %v3822
  %v4342 = vunpack.c.l.b16 %v3823
  %v4343 = vunpack.c.l.b16 %v3824
  %v4344 = vunpack.c.l.b16 %v3825
  %v4345 = vunpack.c.l.b16 %v3826
  %v4346 = vunpack.c.l.b16 %v3827
  %v4347 = vunpack.c.l.b16 %v3828
  %v4348 = vunpack.c.l.b16 %v3829
  %v4349 = vunpack.c.l.b16 %v3830
  %v4350 = vunpack.c.l.b16 %v3831
  %v4351 = vunpack.c.l.b16 %v3832
  %v4352 = vunpack.c.l.b16 %v3833
  %v4353 = vunpack.c.l.b16 %v3834
  %v4354 = vunpack.c.l.b16 %v3835
  %v4355 = vunpack.c.l.b16 %v3836
  %v4356 = vunpack.c.l.b16 %v3837
  %v4357 = vunpack.c.l.b16 %v3838
  %v4358 = vunpack.c.l.b16 %v3839
  %v4359 = vunpack.c.l.b16 %v3840
  %v4360 = vunpack.c.l.b16 %v3841
  %v4361 = vunpack.c.l.b16 %v3842
  %v4362 = vunpack.c.l.b16 %v3843
  %v4363 = vunpack.c.l.b16 %v3844
  %v4364 = vunpack.c.l.b16 %v3845
  %v4365 = vunpack.c.l.b16 %v3846
  %v4366 = vunpack.c.l.b16 %v3847
  %v4367 = vunpack.c.l.b16 %v3848
  %v4368 = vunpack.c.l.b16 %v3849
  %v4369 = vunpack.c.l.b16 %v3850
  %v4370 = vunpack.c.l.b16 %v3851
  %v4371 = vunpack.c.l.b16 %v3852
  %v4372 = vunpack.c.l.b16 %v3853
  %v4373 = vunpack.c.l.b16 %v3854
  %v4374 = vunpack.c.l.b16 %v3855
  %v4375 = vunpack.c.l.b16 %v3856
  %v4376 = vunpack.c.l.b16 %v3857
  %v4377 = vunpack.c.l.b16 %v3858
  %v4378 = vunpack.c.l.b16 %v3859
  %v4379 = vunpack.c.l.b16 %v3860
  %v4380 = vunpack.c.l.b16 %v3861
  %v4381 = vunpack.c.l.b16 %v3862
  %v4382 = vunpack.c.l.b16 %v3863
  %v4383 = vunpack.c.l.b16 %v3864
  %v4384 = vunpack.c.l.b16 %v3865
  %v4385 = vunpack.c.l.b16 %v3866
  %v4386 = vunpack.c.l.b16 %v3867
  %v4387 = vunpack.c.l.b16 %v3868
  %v4388 = vunpack.c.l.b16 %v3869
  %v4389 = vunpack.c.l.b16 %v3870
  %v4390 = vunpack.c.l.b16 %v3871
  %v4391 = vunpack.c.l.b16 %v3872
  %v4392 = vunpack.c.l.b16 %v3873
  %v4393 = vunpack.c.l.b16 %v3874
  %v4394 = vunpack.c.l.b16 %v3875
  %v4395 = vunpack.c.l.b16 %v3876
  %v4396 = vunpack.c.l.b16 %v3877
  %v4397 = vunpack.c.l.b16 %v3878
  %v4398 = vunpack.c.l.b16 %v3879
  %v4399 = vunpack.c.l.b16 %v3880
  %v4400 = vunpack.c.l.b16 %v3881
  %v4401 = vunpack.c.l.b16 %v3882
  %v4402 = vunpack.c.l.b16 %v3883
  %v4403 = vunpack.c.l.b16 %v3884
  %v4404 = vunpack.c.l.b16 %v3885
  %v4405 = vunpack.c.l.b16 %v3886
  %v4406 = vunpack.c.l.b16 %v3887
  %v4407 = vunpack.c.l.b16 %v3888
  %v4408 = vunpack.c.l.b16 %v3889
  %v4409 = vunpack.c.l.b16 %v3890
  %v4410 = vunpack.c.l.b16 %v3891
  %v4411 = vunpack.c.l.b16 %v3892
  %v4412 = vunpack.c.l.b16 %v3893
  %v4413 = vunpack.c.l.b16 %v3894
  %v4414 = vunpack.c.l.b16 %v3895
  %v4415 = vunpack.c.l.b16 %v3896
  %v4416 = vunpack.c.l.b16 %v3897
  %v4417 = vunpack.c.l.b16 %v3898
  %v4418 = vunpack.c.l.b16 %v3899
  %v4419 = vunpack.c.l.b16 %v3900
  %v4420 = vunpack.c.l.b16 %v3901
  %v4421 = vunpack.c.l.b16 %v3902
  %v4422 = vunpack.c.l.b16 %v3903
  %v4423 = vunpack.c.l.b16 %v3904
  %v4424 = vunpack.c.l.b16 %v3905
  %v4425 = vunpack.c.l.b16 %v3906
  %v4426 = vunpack.c.l.b16 %v3907
  %v4427 = vunpack.c.l.b16 %v3908
  %v4428 = vunpack.c.l.b16 %v3909
  %v4429 = vunpack.c.l.b16 %v3910
  %v4430 = vunpack.c.l.b16 %v3911
  %v4431 = vunpack.c.l.b16 %v3912
  %v4432 = vunpack.c.l.b16 %v3913
  %v4433 = vunpack.c.l.b16 %v3914
  %v4434 = vunpack.c.l.b16 %v3915
  %v4435 = vunpack.c.l.b16 %v3916
  %v4436 = vunpack.c.l.b16 %v3917
  %v4437 = vunpack.c.l.b16 %v3918
  %v4438 = vunpack.c.l.b16 %v3919
  %v4439 = vunpack.c.l.b16 %v3920
  %v4440 = vunpack.c.l.b16 %v3921
  %v4441 = vunpack.c.l.b16 %v3922
  %v4442 = vunpack.c.l.b16 %v3923
  %v4443 = vunpack.c.l.b16 %v3924
  %v4444 = vunpack.c.l.b16 %v3925
  %v4445 = vunpack.c.l.b16 %v3926
  %v4446 = vunpack.c.l.b16 %v3927
  %v4447 = vunpack.c.l.b16 %v3928
  %v4448 = vunpack.c.l.b16 %v3929
  %v4449 = vunpack.c.l.b16 %v3930
  %v4450 = vunpack.c.l.b16 %v3931
  %v4451 = vunpack.c.l.b16 %v3932
  %v4452 = vunpack.c.l.b16 %v3933
  %v4453 = vunpack.c.l.b16 %v3934
  %v4454 = vunpack.c.l.b16 %v3935
  %v4455 = vunpack.c.l.b16 %v3936
  %v4456 = vunpack.c.l.b16 %v3937
  %v4457 = vunpack.c.l.b16 %v3938
  %v4458 = vunpack.c.l.b16 %v3939
  %v4459 = vunpack.c.l.b16 %v3940
  %v4460 = vunpack.c.l.b16 %v3941
  %v4461 = vunpack.c.l.b16 %v3942
  %v4462 = vunpack.c.l.b16 %v3943
  %v4463 = vunpack.c.l.b16 %v3944
  %v4464 = vunpack.c.l.b16 %v3945
  %v4465 = vunpack.c.l.b16 %v3946
  %v4466 = vunpack.c.l.b16 %v3947
  %v4467 = vunpack.c.l.b16 %v3948
  %v4468 = vunpack.c.l.b16 %v3949
  %v4469 = vunpack.c.l.b16 %v3950
  %v4470 = vunpack.c.l.b16 %v3951
  %v4471 = vunpack.c.l.b16 %v3952
  %v4472 = vunpack.c.l.b16 %v3953
  %v4473 = vunpack.c.l.b16 %v3954
  %v4474 = vunpack.c.l.b16 %v3955
  %v4475 = vunpack.c.l.b16 %v3956
  %v4476 = vunpack.c.l.b16 %v3957
  %v4477 = vunpack.c.l.b16 %v3958
  %v4478 = vunpack.c.l.b16 %v3959
  %v4479 = vunpack.c.l.b16 %v3960
  %v4480 = vunpack.c.l.b16 %v3961
  %v4481 = vunpack.c.l.b16 %v3962
  %v4482 = vunpack.c.l.b16 %v3963
  %v4483 = vunpack.c.l.b16 %v3964
  %v4484 = vunpack.c.l.b16 %v3965
  %v4485 = vunpack.c.l.b16 %v3966
  %v4486 = vunpack.c.l.b16 %v3967
  %v4487 = vunpack.c.l.b16 %v3968
  %v4488 = vunpack.c.l.b16 %v3969
  %v4489 = vunpack.c.l.b16 %v3970
  %v4490 = vunpack.c.l.b16 %v3971
  %v4491 = vunpack.c.l.b16 %v3972
  %v4492 = vunpack.c.l.b16 %v3973
  %v4493 = vunpack.c.l.b16 %v3974
  %v4494 = vunpack.c.l.b16 %v3975
  %v4495 = vunpack.c.l.b16 %v3976
  %v4496 = vunpack.c.l.b16 %v3977
  %v4497 = vunpack.c.l.b16 %v3978
  %v4498 = vunpack.c.l.b16 %v3979
  %v4499 = vunpack.c.l.b16 %v3980
  %v4500 = vunpack.c.l.b16 %v3981
  %v4501 = vunpack.c.l.b16 %v3982
  %v4502 = vunpack.c.l.b16 %v3983
  %v4503 = vunpack.c.l.b16 %v3984
  %v4504 = vunpack.c.l.b16 %v3985
  %v4505 = vunpack.c.l.b16 %v3986
  %v4506 = vunpack.c.l.b16 %v3987
  %v4507 = vunpack.c.l.b16 %v3988
  %v4508 = vunpack.c.l.b16 %v3989
  %v4509 = vunpack.c.l.b16 %v3990
  %v4510 = vunpack.c.l.b16 %v3991
  %v4511 = vunpack.c.l.b16 %v3992
  %v4512 = vunpack.c.l.b16 %v3993
  %v4513 = vunpack.c.l.b16 %v3994
  %v4514 = vunpack.c.l.b16 %v3995
  %v4515 = vunpack.c.l.b16 %v3996
  %v4516 = vunpack.c.l.b16 %v3997
  %v4517 = vunpack.c.l.b16 %v3998
  %v4518 = vunpack.c.l.b16 %v3999
  %v4519 = vunpack.c.l.b16 %v4000
  %v4520 = vunpack.c.l.b16 %v4001
  %v4521 = vunpack.c.l.b16 %v4002
  %v4522 = vunpack.c.l.b16 %v4003
  %v4523 = vunpack.c.l.b16 %v4004
  %v4524 = vunpack.c.l.b16 %v4005
  %v4525 = vunpack.c.l.b16 %v4006
  %v4526 = vunpack.c.l.b16 %v4007
  %v4527 = vunpack.c.l.b16 %v4008
  %v4528 = vunpack.c.l.b16 %v4009
  %v4529 = vunpack.c.l.b16 %v4010
  %v4530 = vunpack.c.l.b16 %v4011
  %v4531 = vunpack.c.l.b16 %v4012
  %v4532 = vunpack.c.l.b16 %v4013
  %v4533 = vunpack.c.l.b16 %v4014
  %v4534 = vunpack.c.l.b16 %v4015
  %v4535 = vunpack.c.l.b16 %v4016
  %v4536 = vunpack.c.l.b16 %v4017
  %v4537 = vunpack.c.l.b16 %v4018
  %v4538 = vunpack.c.l.b16 %v4019
  %v4539 = vunpack.c.l.b16 %v4020
  %v4540 = vunpack.c.l.b16 %v4021
  %v4541 = vunpack.c.l.b16 %v4022
  %v4542 = vpack.c.b16 %v4287, %v4286
  %v4543 = vpack.c.b16 %v4289, %v4288
  %v4544 = vpack.c.b16 %v4291, %v4290
  %v4545 = vpack.c.b16 %v4293, %v4292
  %v4546 = vpack.c.b16 %v4295, %v4294
  %v4547 = vpack.c.b16 %v4297, %v4296
  %v4548 = vpack.c.b16 %v4299, %v4298
  %v4549 = vpack.c.b16 %v4301, %v4300
  %v4550 = vpack.c.b16 %v4303, %v4302
  %v4551 = vpack.c.b16 %v4305, %v4304
  %v4552 = vpack.c.b16 %v4307, %v4306
  %v4553 = vpack.c.b16 %v4309, %v4308
  %v4554 = vpack.c.b16 %v4311, %v4310
  %v4555 = vpack.c.b16 %v4313, %v4312
  %v4556 = vpack.c.b16 %v4315, %v4314
  %v4557 = vpack.c.b16 %v4317, %v4316
  %v4558 = vpack.c.b16 %v4319, %v4318
  %v4559 = vpack.c.b16 %v4321, %v4320
  %v4560 = vpack.c.b16 %v4323, %v4322
  %v4561 = vpack.c.b16 %v4325, %v4324
  %v4562 = vpack.c.b16 %v4327, %v4326
  %v4563 = vpack.c.b16 %v4329, %v4328
  %v4564 = vpack.c.b16 %v4331, %v4330
  %v4565 = vpack.c.b16 %v4333, %v4332
  %v4566 = vpack.c.b16 %v4335, %v4334
  %v4567 = vpack.c.b16 %v4337, %v4336
  %v4568 = vpack.c.b16 %v4339, %v4338
  %v4569 = vpack.c.b16 %v4341, %v4340
  %v4570 = vpack.c.b16 %v4343, %v4342
  %v4571 = vpack.c.b16 %v4345, %v4344
  %v4572 = vpack.c.b16 %v4347, %v4346
  %v4573 = vpack.c.b16 %v4349, %v4348
  %v4574 = vpack.c.b16 %v4351, %v4350
  %v4575 = vpack.c.b16 %v4353, %v4352
  %v4576 = vpack.c.b16 %v4355, %v4354
  %v4577 = vpack.c.b16 %v4357, %v4356
  %v4578 = vpack.c.b16 %v4359, %v4358
  %v4579 = vpack.c.b16 %v4361, %v4360
  %v4580 = vpack.c.b16 %v4363, %v4362
  %v4581 = vpack.c.b16 %v4365, %v4364
  %v4582 = vpack.c.b16 %v4367, %v4366
  %v4583 = vpack.c.b16 %v4369, %v4368
  %v4584 = vpack.c.b16 %v4371, %v4370
  %v4585 = vpack.c.b16 %v4373, %v4372
  %v4586 = vpack.c.b16 %v4375, %v4374
  %v4587 = vpack.c.b16 %v4377, %v4376
  %v4588 = vpack.c.b16 %v4379, %v4378
  %v4589 = vpack.c.b16 %v4381, %v4380
  %v4590 = vpack.c.b16 %v4383, %v4382
  %v4591 = vpack.c.b16 %v4385, %v4384
  %v4592 = vpack.c.b16 %v4387, %v4386
  %v4593 = vpack.c.b16 %v4389, %v4388
  %v4594 = vpack.c.b16 %v4391, %v4390
  %v4595 = vpack.c.b16 %v4393, %v4392
  %v4596 = vpack.c.b16 %v4395, %v4394
  %v4597 = vpack.c.b16 %v4397, %v4396
  %v4598 = vpack.c.b16 %v4399, %v4398
  %v4599 = vpack.c.b16 %v4401, %v4400
  %v4600 = vpack.c.b16 %v4403, %v4402
  %v4601 = vpack.c.b16 %v4405, %v4404
  %v4602 = vpack.c.b16 %v4407, %v4406
  %v4603 = vpack.c.b16 %v4409, %v4408
  %v4604 = vpack.c.b16 %v4411, %v4410
  %v4605 = vpack.c.b16 %v4413, %v4412
  %v4606 = vpack.c.b16 %v4415, %v4414
  %v4607 = vpack.c.b16 %v4417, %v4416
  %v4608 = vpack.c.b16 %v4419, %v4418
  %v4609 = vpack.c.b16 %v4421, %v4420
  %v4610 = vpack.c.b16 %v4423, %v4422
  %v4611 = vpack.c.b16 %v4425, %v4424
  %v4612 = vpack.c.b16 %v4427, %v4426
  %v4613 = vpack.c.b16 %v4429, %v4428
  %v4614 = vpack.c.b16 %v4431, %v4430
  %v4615 = vpack.c.b16 %v4433, %v4432
  %v4616 = vpack.c.b16 %v4435, %v4434
  %v4617 = vpack.c.b16 %v4437, %v4436
  %v4618 = vpack.c.b16 %v4439, %v4438
  %v4619 = vpack.c.b16 %v4441, %v4440
  %v4620 = vpack.c.b16 %v4443, %v4442
  %v4621 = vpack.c.b16 %v4445, %v4444
  %v4622 = vpack.c.b16 %v4447, %v4446
  %v4623 = vpack.c.b16 %v4449, %v4448
  %v4624 = vpack.c.b16 %v4451, %v4450
  %v4625 = vpack.c.b16 %v4453, %v4452
  %v4626 = vpack.c.b16 %v4455, %v4454
  %v4627 = vpack.c.b16 %v4457, %v4456
  %v4628 = vpack.c.b16 %v4459, %v4458
  %v4629 = vpack.c.b16 %v4461, %v4460
  %v4630 = vpack.c.b16 %v4463, %v4462
  %v4631 = vpack.c.b16 %v4465, %v4464
  %v4632 = vpack.c.b16 %v4467, %v4466
  %v4633 = vpack.c.b16 %v4469, %v4468
  %v4634 = vpack.c.b16 %v4471, %v4470
  %v4635 = vpack.c.b16 %v4473, %v4472
  %v4636 = vpack.c.b16 %v4475, %v4474
  %v4637 = vpack.c.b16 %v4477, %v4476
  %v4638 = vpack.c.b16 %v4479, %v4478
  %v4639 = vpack.c.b16 %v4481, %v4480
  %v4640 = vpack.c.b16 %v4483, %v4482
  %v4641 = vpack.c.b16 %v4485, %v4484
  %v4642 = vpack.c.b16 %v4487, %v4486
  %v4643 = vpack.c.b16 %v4489, %v4488
  %v4644 = vpack.c.b16 %v4491, %v4490
  %v4645 = vpack.c.b16 %v4493, %v4492
  %v4646 = vpack.c.b16 %v4495, %v4494
  %v4647 = vpack.c.b16 %v4497, %v4496
  %v4648 = vpack.c.b16 %v4499, %v4498
  %v4649 = vpack.c.b16 %v4501, %v4500
  %v4650 = vpack.c.b16 %v4503, %v4502
  %v4651 = vpack.c.b16 %v4505, %v4504
  %v4652 = vpack.c.b16 %v4507, %v4506
  %v4653 = vpack.c.b16 %v4509, %v4508
  %v4654 = vpack.c.b16 %v4511, %v4510
  %v4655 = vpack.c.b16 %v4513, %v4512
  %v4656 = vpack.c.b16 %v4515, %v4514
  %v4657 = vpack.c.b16 %v4517, %v4516
  %v4658 = vpack.c.b16 %v4519, %v4518
  %v4659 = vpack.c.b16 %v4521, %v4520
  %v4660 = vpack.c.b16 %v4523, %v4522
  %v4661 = vpack.c.b16 %v4525, %v4524
  %v4662 = vpack.c.b16 %v4527, %v4526
  %v4663 = vpack.c.b16 %v4529, %v4528
  %v4664 = vpack.c.b16 %v4531, %v4530
  %v4665 = vpack.c.b16 %v4533, %v4532
  %v4666 = vpack.c.b16 %v4535, %v4534
  %v4667 = vpack.c.b16 %v4537, %v4536
  %v4668 = vpack.c.b16 %v4539, %v4538
  %v4669 = vpack.c.b16 %v4541, %v4540
  %4798 = vmatprep.subr.bf16.mxu0 0
  %4799 = vmatpush1.bf16.msra.mxu0 %v4542
  %4800 = vmatprep.subr.bf16.mxu0 0
  %4801 = vmatpush1.bf16.msra.mxu0 %v4543
  %4802 = vmatprep.subr.bf16.mxu0 0
  %4803 = vmatpush1.bf16.msra.mxu0 %v4544
  %4804 = vmatprep.subr.bf16.mxu0 0
  %4805 = vmatpush1.bf16.msra.mxu0 %v4545
  %4806 = vmatprep.subr.bf16.mxu0 0
  %4807 = vmatpush1.bf16.msra.mxu0 %v4546
  %4808 = vmatprep.subr.bf16.mxu0 0
  %4809 = vmatpush1.bf16.msra.mxu0 %v4547
  %4810 = vmatprep.subr.bf16.mxu0 0
  %4811 = vmatpush1.bf16.msra.mxu0 %v4548
  %4812 = vmatprep.subr.bf16.mxu0 0
  %4813 = vmatpush1.bf16.msra.mxu0 %v4549
  %4814 = vmatprep.subr.bf16.mxu0 0
  %4815 = vmatpush1.bf16.msra.mxu0 %v4550
  %4816 = vmatprep.subr.bf16.mxu0 0
  %4817 = vmatpush1.bf16.msra.mxu0 %v4551
  %4818 = vmatprep.subr.bf16.mxu0 0
  %4819 = vmatpush1.bf16.msra.mxu0 %v4552
  %4820 = vmatprep.subr.bf16.mxu0 0
  %4821 = vmatpush1.bf16.msra.mxu0 %v4553
  %4822 = vmatprep.subr.bf16.mxu0 0
  %4823 = vmatpush1.bf16.msra.mxu0 %v4554
  %4824 = vmatprep.subr.bf16.mxu0 0
  %4825 = vmatpush1.bf16.msra.mxu0 %v4555
  %4826 = vmatprep.subr.bf16.mxu0 0
  %4827 = vmatpush1.bf16.msra.mxu0 %v4556
  %4828 = vmatprep.subr.bf16.mxu0 0
  %4829 = vmatpush1.bf16.msra.mxu0 %v4557
  %4830 = vmatprep.mubr.bf16.mxu0 %v3704
  %4831 = vmatmul.mubr.bf16.gmra.mrb[0].mxu0 %v3703
  %v4832 = vpop.f32.mrb[0].mxu0
  %v4833 = vadd.f32 %v4028, %v4832
  %v4834 = vpop.f32.mrb[0].mxu0
  %v4835 = vpop.f32.mrb[0].mxu0
  %v4836 = vadd.f32 %v4028, %v4835
  %v4837 = vpop.f32.mrb[0].mxu0
  %4838 = vmatprep.mubr.bf16.mxu0 %v3720
  %4839 = vmatmul.mubr.bf16.gmra.mrb[0].mxu0 %v3719
  %v4840 = vpop.f32.mrb[0].mxu0
  %v4841 = vadd.f32 %v4028, %v4840
  %v4842 = vpop.f32.mrb[0].mxu0
  %v4843 = vpop.f32.mrb[0].mxu0
  %v4844 = vadd.f32 %v4028, %v4843
  %v4845 = vpop.f32.mrb[0].mxu0
  %4846 = vmatprep.mubr.bf16.mxu0 %v3736
  %4847 = vmatmul.mubr.bf16.gmra.mrb[0].mxu0 %v3735
  %v4848 = vpop.f32.mrb[0].mxu0
  %v4849 = vadd.f32 %v4028, %v4848
  %v4850 = vpop.f32.mrb[0].mxu0
  %v4851 = vpop.f32.mrb[0].mxu0
  %v4852 = vadd.f32 %v4028, %v4851
  %v4853 = vpop.f32.mrb[0].mxu0
  %4854 = vmatprep.mubr.bf16.mxu0 %v3752
  %4855 = vmatmul.mubr.bf16.gmra.mrb[0].mxu0 %v3751
  %v4856 = vpop.f32.mrb[0].mxu0
  %v4857 = vadd.f32 %v4028, %v4856
  %v4858 = vpop.f32.mrb[0].mxu0
  %v4859 = vpop.f32.mrb[0].mxu0
  %v4860 = vadd.f32 %v4028, %v4859
  %v4861 = vpop.f32.mrb[0].mxu0
  %4862 = vdwg.mxu0
  %4863 = vmatprep.subr.bf16.mxu0 0
  %4864 = vmatpush1.bf16.msra.mxu0 %v4558
  %4865 = vmatprep.subr.bf16.mxu0 0
  %4866 = vmatpush1.bf16.msra.mxu0 %v4559
  %4867 = vmatprep.subr.bf16.mxu0 0
  %4868 = vmatpush1.bf16.msra.mxu0 %v4560
  %4869 = vmatprep.subr.bf16.mxu0 0
  %4870 = vmatpush1.bf16.msra.mxu0 %v4561
  %4871 = vmatprep.subr.bf16.mxu0 0
  %4872 = vmatpush1.bf16.msra.mxu0 %v4562
  %4873 = vmatprep.subr.bf16.mxu0 0
  %4874 = vmatpush1.bf16.msra.mxu0 %v4563
  %4875 = vmatprep.subr.bf16.mxu0 0
  %4876 = vmatpush1.bf16.msra.mxu0 %v4564
  %4877 = vmatprep.subr.bf16.mxu0 0
  %4878 = vmatpush1.bf16.msra.mxu0 %v4565
  %4879 = vmatprep.subr.bf16.mxu0 0
  %4880 = vmatpush1.bf16.msra.mxu0 %v4566
  %4881 = vmatprep.subr.bf16.mxu0 0
  %4882 = vmatpush1.bf16.msra.mxu0 %v4567
  %4883 = vmatprep.subr.bf16.mxu0 0
  %4884 = vmatpush1.bf16.msra.mxu0 %v4568
  %4885 = vmatprep.subr.bf16.mxu0 0
  %4886 = vmatpush1.bf16.msra.mxu0 %v4569
  %4887 = vmatprep.subr.bf16.mxu0 0
  %4888 = vmatpush1.bf16.msra.mxu0 %v4570
  %4889 = vmatprep.subr.bf16.mxu0 0
  %4890 = vmatpush1.bf16.msra.mxu0 %v4571
  %4891 = vmatprep.subr.bf16.mxu0 0
  %4892 = vmatpush1.bf16.msra.mxu0 %v4572
  %4893 = vmatprep.subr.bf16.mxu0 0
  %4894 = vmatpush1.bf16.msra.mxu0 %v4573
  %4895 = vmatprep.mubr.bf16.mxu0 %v3706
  %4896 = vmatmul.mubr.bf16.gmra.mrb[0].mxu0 %v3705
  %v4897 = vpop.f32.mrb[0].mxu0
  %v4898 = vadd.f32 %v4833, %v4897
  %v4899 = vpop.f32.mrb[0].mxu0
  %v4900 = vpop.f32.mrb[0].mxu0
  %v4901 = vadd.f32 %v4836, %v4900
  %v4902 = vpop.f32.mrb[0].mxu0
  %4903 = vmatprep.mubr.bf16.mxu0 %v3722
  %4904 = vmatmul.mubr.bf16.gmra.mrb[0].mxu0 %v3721
  %v4905 = vpop.f32.mrb[0].mxu0
  %v4906 = vadd.f32 %v4841, %v4905
  %v4907 = vpop.f32.mrb[0].mxu0
  %v4908 = vpop.f32.mrb[0].mxu0
  %v4909 = vadd.f32 %v4844, %v4908
  %v4910 = vpop.f32.mrb[0].mxu0
  %4911 = vmatprep.mubr.bf16.mxu0 %v3738
  %4912 = vmatmul.mubr.bf16.gmra.mrb[0].mxu0 %v3737
  %v4913 = vpop.f32.mrb[0].mxu0
  %v4914 = vadd.f32 %v4849, %v4913
  %v4915 = vpop.f32.mrb[0].mxu0
  %v4916 = vpop.f32.mrb[0].mxu0
  %v4917 = vadd.f32 %v4852, %v4916
  %v4918 = vpop.f32.mrb[0].mxu0
  %4919 = vmatprep.mubr.bf16.mxu0 %v3754
  %4920 = vmatmul.mubr.bf16.gmra.mrb[0].mxu0 %v3753
  %v4921 = vpop.f32.mrb[0].mxu0
  %v4922 = vadd.f32 %v4857, %v4921
  %v4923 = vpop.f32.mrb[0].mxu0
  %v4924 = vpop.f32.mrb[0].mxu0
  %v4925 = vadd.f32 %v4860, %v4924
  %v4926 = vpop.f32.mrb[0].mxu0
  %4927 = vdwg.mxu0
  %4928 = vmatprep.subr.bf16.mxu0 0
  %4929 = vmatpush1.bf16.msra.mxu0 %v4574
  %4930 = vmatprep.subr.bf16.mxu0 0
  %4931 = vmatpush1.bf16.msra.mxu0 %v4575
  %4932 = vmatprep.subr.bf16.mxu0 0
  %4933 = vmatpush1.bf16.msra.mxu0 %v4576
  %4934 = vmatprep.subr.bf16.mxu0 0
  %4935 = vmatpush1.bf16.msra.mxu0 %v4577
  %4936 = vmatprep.subr.bf16.mxu0 0
  %4937 = vmatpush1.bf16.msra.mxu0 %v4578
  %4938 = vmatprep.subr.bf16.mxu0 0
  %4939 = vmatpush1.bf16.msra.mxu0 %v4579
  %4940 = vmatprep.subr.bf16.mxu0 0
  %4941 = vmatpush1.bf16.msra.mxu0 %v4580
  %4942 = vmatprep.subr.bf16.mxu0 0
  %4943 = vmatpush1.bf16.msra.mxu0 %v4581
  %4944 = vmatprep.subr.bf16.mxu0 0
  %4945 = vmatpush1.bf16.msra.mxu0 %v4582
  %4946 = vmatprep.subr.bf16.mxu0 0
  %4947 = vmatpush1.bf16.msra.mxu0 %v4583
  %4948 = vmatprep.subr.bf16.mxu0 0
  %4949 = vmatpush1.bf16.msra.mxu0 %v4584
  %4950 = vmatprep.subr.bf16.mxu0 0
  %4951 = vmatpush1.bf16.msra.mxu0 %v4585
  %4952 = vmatprep.subr.bf16.mxu0 0
  %4953 = vmatpush1.bf16.msra.mxu0 %v4586
  %4954 = vmatprep.subr.bf16.mxu0 0
  %4955 = vmatpush1.bf16.msra.mxu0 %v4587
  %4956 = vmatprep.subr.bf16.mxu0 0
  %4957 = vmatpush1.bf16.msra.mxu0 %v4588
  %4958 = vmatprep.subr.bf16.mxu0 0
  %4959 = vmatpush1.bf16.msra.mxu0 %v4589
  %4960 = vmatprep.mubr.bf16.mxu0 %v3708
  %4961 = vmatmul.mubr.bf16.gmra.mrb[0].mxu0 %v3707
  %v4962 = vpop.f32.mrb[0].mxu0
  %v4963 = vadd.f32 %v4898, %v4962
  %v4964 = vpop.f32.mrb[0].mxu0
  %v4965 = vpop.f32.mrb[0].mxu0
  %v4966 = vadd.f32 %v4901, %v4965
  %v4967 = vpop.f32.mrb[0].mxu0
  %4968 = vmatprep.mubr.bf16.mxu0 %v3724
  %4969 = vmatmul.mubr.bf16.gmra.mrb[0].mxu0 %v3723
  %v4970 = vpop.f32.mrb[0].mxu0
  %v4971 = vadd.f32 %v4906, %v4970
  %v4972 = vpop.f32.mrb[0].mxu0
  %v4973 = vpop.f32.mrb[0].mxu0
  %v4974 = vadd.f32 %v4909, %v4973
  %v4975 = vpop.f32.mrb[0].mxu0
  %4976 = vmatprep.mubr.bf16.mxu0 %v3740
  %4977 = vmatmul.mubr.bf16.gmra.mrb[0].mxu0 %v3739
  %v4978 = vpop.f32.mrb[0].mxu0
  %v4979 = vadd.f32 %v4914, %v4978
  %v4980 = vpop.f32.mrb[0].mxu0
  %v4981 = vpop.f32.mrb[0].mxu0
  %v4982 = vadd.f32 %v4917, %v4981
  %v4983 = vpop.f32.mrb[0].mxu0
  %4984 = vmatprep.mubr.bf16.mxu0 %v3756
  %4985 = vmatmul.mubr.bf16.gmra.mrb[0].mxu0 %v3755
  %v4986 = vpop.f32.mrb[0].mxu0
  %v4987 = vadd.f32 %v4922, %v4986
  %v4988 = vpop.f32.mrb[0].mxu0
  %v4989 = vpop.f32.mrb[0].mxu0
  %v4990 = vadd.f32 %v4925, %v4989
  %v4991 = vpop.f32.mrb[0].mxu0
  %4992 = vdwg.mxu0
  %4993 = vmatprep.subr.bf16.mxu0 0
  %4994 = vmatpush1.bf16.msra.mxu0 %v4590
  %4995 = vmatprep.subr.bf16.mxu0 0
  %4996 = vmatpush1.bf16.msra.mxu0 %v4591
  %4997 = vmatprep.subr.bf16.mxu0 0
  %4998 = vmatpush1.bf16.msra.mxu0 %v4592
  %4999 = vmatprep.subr.bf16.mxu0 0
  %5000 = vmatpush1.bf16.msra.mxu0 %v4593
  %5001 = vmatprep.subr.bf16.mxu0 0
  %5002 = vmatpush1.bf16.msra.mxu0 %v4594
  %5003 = vmatprep.subr.bf16.mxu0 0
  %5004 = vmatpush1.bf16.msra.mxu0 %v4595
  %5005 = vmatprep.subr.bf16.mxu0 0
  %5006 = vmatpush1.bf16.msra.mxu0 %v4596
  %5007 = vmatprep.subr.bf16.mxu0 0
  %5008 = vmatpush1.bf16.msra.mxu0 %v4597
  %5009 = vmatprep.subr.bf16.mxu0 0
  %5010 = vmatpush1.bf16.msra.mxu0 %v4598
  %5011 = vmatprep.subr.bf16.mxu0 0
  %5012 = vmatpush1.bf16.msra.mxu0 %v4599
  %5013 = vmatprep.subr.bf16.mxu0 0
  %5014 = vmatpush1.bf16.msra.mxu0 %v4600
  %5015 = vmatprep.subr.bf16.mxu0 0
  %5016 = vmatpush1.bf16.msra.mxu0 %v4601
  %5017 = vmatprep.subr.bf16.mxu0 0
  %5018 = vmatpush1.bf16.msra.mxu0 %v4602
  %5019 = vmatprep.subr.bf16.mxu0 0
  %5020 = vmatpush1.bf16.msra.mxu0 %v4603
  %5021 = vmatprep.subr.bf16.mxu0 0
  %5022 = vmatpush1.bf16.msra.mxu0 %v4604
  %5023 = vmatprep.subr.bf16.mxu0 0
  %5024 = vmatpush1.bf16.msra.mxu0 %v4605
  %5025 = vmatprep.mubr.bf16.mxu0 %v3710
  %5026 = vmatmul.mubr.bf16.gmra.mrb[0].mxu0 %v3709
  %v5027 = vpop.f32.mrb[0].mxu0
  %v5028 = vadd.f32 %v4963, %v5027
  %v5029 = vpop.f32.mrb[0].mxu0
  %v5030 = vpop.f32.mrb[0].mxu0
  %v5031 = vadd.f32 %v4966, %v5030
  %v5032 = vpop.f32.mrb[0].mxu0
  %5033 = vmatprep.mubr.bf16.mxu0 %v3726
  %5034 = vmatmul.mubr.bf16.gmra.mrb[0].mxu0 %v3725
  %v5035 = vpop.f32.mrb[0].mxu0
  %v5036 = vadd.f32 %v4971, %v5035
  %v5037 = vpop.f32.mrb[0].mxu0
  %v5038 = vpop.f32.mrb[0].mxu0
  %v5039 = vadd.f32 %v4974, %v5038
  %v5040 = vpop.f32.mrb[0].mxu0
  %5041 = vmatprep.mubr.bf16.mxu0 %v3742
  %5042 = vmatmul.mubr.bf16.gmra.mrb[0].mxu0 %v3741
  %v5043 = vpop.f32.mrb[0].mxu0
  %v5044 = vadd.f32 %v4979, %v5043
  %v5045 = vpop.f32.mrb[0].mxu0
  %v5046 = vpop.f32.mrb[0].mxu0
  %v5047 = vadd.f32 %v4982, %v5046
  %v5048 = vpop.f32.mrb[0].mxu0
  %5049 = vmatprep.mubr.bf16.mxu0 %v3758
  %5050 = vmatmul.mubr.bf16.gmra.mrb[0].mxu0 %v3757
  %v5051 = vpop.f32.mrb[0].mxu0
  %v5052 = vadd.f32 %v4987, %v5051
  %v5053 = vpop.f32.mrb[0].mxu0
  %v5054 = vpop.f32.mrb[0].mxu0
  %v5055 = vadd.f32 %v4990, %v5054
  %v5056 = vpop.f32.mrb[0].mxu0
  %5057 = vdwg.mxu0
  %5058 = vmatprep.subr.bf16.mxu0 0
  %5059 = vmatpush1.bf16.msra.mxu0 %v4606
  %5060 = vmatprep.subr.bf16.mxu0 0
  %5061 = vmatpush1.bf16.msra.mxu0 %v4607
  %5062 = vmatprep.subr.bf16.mxu0 0
  %5063 = vmatpush1.bf16.msra.mxu0 %v4608
  %5064 = vmatprep.subr.bf16.mxu0 0
  %5065 = vmatpush1.bf16.msra.mxu0 %v4609
  %5066 = vmatprep.subr.bf16.mxu0 0
  %5067 = vmatpush1.bf16.msra.mxu0 %v4610
  %5068 = vmatprep.subr.bf16.mxu0 0
  %5069 = vmatpush1.bf16.msra.mxu0 %v4611
  %5070 = vmatprep.subr.bf16.mxu0 0
  %5071 = vmatpush1.bf16.msra.mxu0 %v4612
  %5072 = vmatprep.subr.bf16.mxu0 0
  %5073 = vmatpush1.bf16.msra.mxu0 %v4613
  %5074 = vmatprep.subr.bf16.mxu0 0
  %5075 = vmatpush1.bf16.msra.mxu0 %v4614
  %5076 = vmatprep.subr.bf16.mxu0 0
  %5077 = vmatpush1.bf16.msra.mxu0 %v4615
  %5078 = vmatprep.subr.bf16.mxu0 0
  %5079 = vmatpush1.bf16.msra.mxu0 %v4616
  %5080 = vmatprep.subr.bf16.mxu0 0
  %5081 = vmatpush1.bf16.msra.mxu0 %v4617
  %5082 = vmatprep.subr.bf16.mxu0 0
  %5083 = vmatpush1.bf16.msra.mxu0 %v4618
  %5084 = vmatprep.subr.bf16.mxu0 0
  %5085 = vmatpush1.bf16.msra.mxu0 %v4619
  %5086 = vmatprep.subr.bf16.mxu0 0
  %5087 = vmatpush1.bf16.msra.mxu0 %v4620
  %5088 = vmatprep.subr.bf16.mxu0 0
  %5089 = vmatpush1.bf16.msra.mxu0 %v4621
  %5090 = vmatprep.mubr.bf16.mxu0 %v3712
  %5091 = vmatmul.mubr.bf16.gmra.mrb[0].mxu0 %v3711
  %v5092 = vpop.f32.mrb[0].mxu0
  %v5093 = vadd.f32 %v5028, %v5092
  %v5094 = vpop.f32.mrb[0].mxu0
  %v5095 = vpop.f32.mrb[0].mxu0
  %v5096 = vadd.f32 %v5031, %v5095
  %v5097 = vpop.f32.mrb[0].mxu0
  %5098 = vmatprep.mubr.bf16.mxu0 %v3728
  %5099 = vmatmul.mubr.bf16.gmra.mrb[0].mxu0 %v3727
  %v5100 = vpop.f32.mrb[0].mxu0
  %v5101 = vadd.f32 %v5036, %v5100
  %v5102 = vpop.f32.mrb[0].mxu0
  %v5103 = vpop.f32.mrb[0].mxu0
  %v5104 = vadd.f32 %v5039, %v5103
  %v5105 = vpop.f32.mrb[0].mxu0
  %5106 = vmatprep.mubr.bf16.mxu0 %v3744
  %5107 = vmatmul.mubr.bf16.gmra.mrb[0].mxu0 %v3743
  %v5108 = vpop.f32.mrb[0].mxu0
  %v5109 = vadd.f32 %v5044, %v5108
  %v5110 = vpop.f32.mrb[0].mxu0
  %v5111 = vpop.f32.mrb[0].mxu0
  %v5112 = vadd.f32 %v5047, %v5111
  %v5113 = vpop.f32.mrb[0].mxu0
  %5114 = vmatprep.mubr.bf16.mxu0 %v3760
  %5115 = vmatmul.mubr.bf16.gmra.mrb[0].mxu0 %v3759
  %v5116 = vpop.f32.mrb[0].mxu0
  %v5117 = vadd.f32 %v5052, %v5116
  %v5118 = vpop.f32.mrb[0].mxu0
  %v5119 = vpop.f32.mrb[0].mxu0
  %v5120 = vadd.f32 %v5055, %v5119
  %v5121 = vpop.f32.mrb[0].mxu0
  %5122 = vdwg.mxu0
  %5123 = vmatprep.subr.bf16.mxu0 0
  %5124 = vmatpush1.bf16.msra.mxu0 %v4622
  %5125 = vmatprep.subr.bf16.mxu0 0
  %5126 = vmatpush1.bf16.msra.mxu0 %v4623
  %5127 = vmatprep.subr.bf16.mxu0 0
  %5128 = vmatpush1.bf16.msra.mxu0 %v4624
  %5129 = vmatprep.subr.bf16.mxu0 0
  %5130 = vmatpush1.bf16.msra.mxu0 %v4625
  %5131 = vmatprep.subr.bf16.mxu0 0
  %5132 = vmatpush1.bf16.msra.mxu0 %v4626
  %5133 = vmatprep.subr.bf16.mxu0 0
  %5134 = vmatpush1.bf16.msra.mxu0 %v4627
  %5135 = vmatprep.subr.bf16.mxu0 0
  %5136 = vmatpush1.bf16.msra.mxu0 %v4628
  %5137 = vmatprep.subr.bf16.mxu0 0
  %5138 = vmatpush1.bf16.msra.mxu0 %v4629
  %5139 = vmatprep.subr.bf16.mxu0 0
  %5140 = vmatpush1.bf16.msra.mxu0 %v4630
  %5141 = vmatprep.subr.bf16.mxu0 0
  %5142 = vmatpush1.bf16.msra.mxu0 %v4631
  %5143 = vmatprep.subr.bf16.mxu0 0
  %5144 = vmatpush1.bf16.msra.mxu0 %v4632
  %5145 = vmatprep.subr.bf16.mxu0 0
  %5146 = vmatpush1.bf16.msra.mxu0 %v4633
  %5147 = vmatprep.subr.bf16.mxu0 0
  %5148 = vmatpush1.bf16.msra.mxu0 %v4634
  %5149 = vmatprep.subr.bf16.mxu0 0
  %5150 = vmatpush1.bf16.msra.mxu0 %v4635
  %5151 = vmatprep.subr.bf16.mxu0 0
  %5152 = vmatpush1.bf16.msra.mxu0 %v4636
  %5153 = vmatprep.subr.bf16.mxu0 0
  %5154 = vmatpush1.bf16.msra.mxu0 %v4637
  %5155 = vmatprep.mubr.bf16.mxu0 %v3714
  %5156 = vmatmul.mubr.bf16.gmra.mrb[0].mxu0 %v3713
  %v5157 = vpop.f32.mrb[0].mxu0
  %v5158 = vadd.f32 %v5093, %v5157
  %v5159 = vpop.f32.mrb[0].mxu0
  %v5160 = vpop.f32.mrb[0].mxu0
  %v5161 = vadd.f32 %v5096, %v5160
  %v5162 = vpop.f32.mrb[0].mxu0
  %5163 = vmatprep.mubr.bf16.mxu0 %v3730
  %5164 = vmatmul.mubr.bf16.gmra.mrb[0].mxu0 %v3729
  %v5165 = vpop.f32.mrb[0].mxu0
  %v5166 = vadd.f32 %v5101, %v5165
  %v5167 = vpop.f32.mrb[0].mxu0
  %v5168 = vpop.f32.mrb[0].mxu0
  %v5169 = vadd.f32 %v5104, %v5168
  %v5170 = vpop.f32.mrb[0].mxu0
  %5171 = vmatprep.mubr.bf16.mxu0 %v3746
  %5172 = vmatmul.mubr.bf16.gmra.mrb[0].mxu0 %v3745
  %v5173 = vpop.f32.mrb[0].mxu0
  %v5174 = vadd.f32 %v5109, %v5173
  %v5175 = vpop.f32.mrb[0].mxu0
  %v5176 = vpop.f32.mrb[0].mxu0
  %v5177 = vadd.f32 %v5112, %v5176
  %v5178 = vpop.f32.mrb[0].mxu0
  %5179 = vmatprep.mubr.bf16.mxu0 %v3762
  %5180 = vmatmul.mubr.bf16.gmra.mrb[0].mxu0 %v3761
  %v5181 = vpop.f32.mrb[0].mxu0
  %v5182 = vadd.f32 %v5117, %v5181
  %v5183 = vpop.f32.mrb[0].mxu0
  %v5184 = vpop.f32.mrb[0].mxu0
  %v5185 = vadd.f32 %v5120, %v5184
  %v5186 = vpop.f32.mrb[0].mxu0
  %5187 = vdwg.mxu0
  %5188 = vmatprep.subr.bf16.mxu0 0
  %5189 = vmatpush1.bf16.msra.mxu0 %v4638
  %5190 = vmatprep.subr.bf16.mxu0 0
  %5191 = vmatpush1.bf16.msra.mxu0 %v4639
  %5192 = vmatprep.subr.bf16.mxu0 0
  %5193 = vmatpush1.bf16.msra.mxu0 %v4640
  %5194 = vmatprep.subr.bf16.mxu0 0
  %5195 = vmatpush1.bf16.msra.mxu0 %v4641
  %5196 = vmatprep.subr.bf16.mxu0 0
  %5197 = vmatpush1.bf16.msra.mxu0 %v4642
  %5198 = vmatprep.subr.bf16.mxu0 0
  %5199 = vmatpush1.bf16.msra.mxu0 %v4643
  %5200 = vmatprep.subr.bf16.mxu0 0
  %5201 = vmatpush1.bf16.msra.mxu0 %v4644
  %5202 = vmatprep.subr.bf16.mxu0 0
  %5203 = vmatpush1.bf16.msra.mxu0 %v4645
  %5204 = vmatprep.subr.bf16.mxu0 0
  %5205 = vmatpush1.bf16.msra.mxu0 %v4646
  %5206 = vmatprep.subr.bf16.mxu0 0
  %5207 = vmatpush1.bf16.msra.mxu0 %v4647
  %5208 = vmatprep.subr.bf16.mxu0 0
  %5209 = vmatpush1.bf16.msra.mxu0 %v4648
  %5210 = vmatprep.subr.bf16.mxu0 0
  %5211 = vmatpush1.bf16.msra.mxu0 %v4649
  %5212 = vmatprep.subr.bf16.mxu0 0
  %5213 = vmatpush1.bf16.msra.mxu0 %v4650
  %5214 = vmatprep.subr.bf16.mxu0 0
  %5215 = vmatpush1.bf16.msra.mxu0 %v4651
  %5216 = vmatprep.subr.bf16.mxu0 0
  %5217 = vmatpush1.bf16.msra.mxu0 %v4652
  %5218 = vmatprep.subr.bf16.mxu0 0
  %5219 = vmatpush1.bf16.msra.mxu0 %v4653
  %5220 = vmatprep.mubr.bf16.mxu0 %v3716
  %5221 = vmatmul.mubr.bf16.gmra.mrb[0].mxu0 %v3715
  %v5222 = vpop.f32.mrb[0].mxu0
  %v5223 = vadd.f32 %v5158, %v5222
  %v5224 = vpop.f32.mrb[0].mxu0
  %v5225 = vpop.f32.mrb[0].mxu0
  %v5226 = vadd.f32 %v5161, %v5225
  %v5227 = vpop.f32.mrb[0].mxu0
  %5228 = vmatprep.mubr.bf16.mxu0 %v3732
  %5229 = vmatmul.mubr.bf16.gmra.mrb[0].mxu0 %v3731
  %v5230 = vpop.f32.mrb[0].mxu0
  %v5231 = vadd.f32 %v5166, %v5230
  %v5232 = vpop.f32.mrb[0].mxu0
  %v5233 = vpop.f32.mrb[0].mxu0
  %v5234 = vadd.f32 %v5169, %v5233
  %v5235 = vpop.f32.mrb[0].mxu0
  %5236 = vmatprep.mubr.bf16.mxu0 %v3748
  %5237 = vmatmul.mubr.bf16.gmra.mrb[0].mxu0 %v3747
  %v5238 = vpop.f32.mrb[0].mxu0
  %v5239 = vadd.f32 %v5174, %v5238
  %v5240 = vpop.f32.mrb[0].mxu0
  %v5241 = vpop.f32.mrb[0].mxu0
  %v5242 = vadd.f32 %v5177, %v5241
  %v5243 = vpop.f32.mrb[0].mxu0
  %5244 = vmatprep.mubr.bf16.mxu0 %v3764
  %5245 = vmatmul.mubr.bf16.gmra.mrb[0].mxu0 %v3763
  %v5246 = vpop.f32.mrb[0].mxu0
  %v5247 = vadd.f32 %v5182, %v5246
  %v5248 = vpop.f32.mrb[0].mxu0
  %v5249 = vpop.f32.mrb[0].mxu0
  %v5250 = vadd.f32 %v5185, %v5249
  %v5251 = vpop.f32.mrb[0].mxu0
  %5252 = vdwg.mxu0
  %5253 = vmatprep.subr.bf16.mxu0 0
  %5254 = vmatpush1.bf16.msra.mxu0 %v4654
  %5255 = vmatprep.subr.bf16.mxu0 0
  %5256 = vmatpush1.bf16.msra.mxu0 %v4655
  %5257 = vmatprep.subr.bf16.mxu0 0
  %5258 = vmatpush1.bf16.msra.mxu0 %v4656
  %5259 = vmatprep.subr.bf16.mxu0 0
  %5260 = vmatpush1.bf16.msra.mxu0 %v4657
  %5261 = vmatprep.subr.bf16.mxu0 0
  %5262 = vmatpush1.bf16.msra.mxu0 %v4658
  %5263 = vmatprep.subr.bf16.mxu0 0
  %5264 = vmatpush1.bf16.msra.mxu0 %v4659
  %5265 = vmatprep.subr.bf16.mxu0 0
  %5266 = vmatpush1.bf16.msra.mxu0 %v4660
  %5267 = vmatprep.subr.bf16.mxu0 0
  %5268 = vmatpush1.bf16.msra.mxu0 %v4661
  %5269 = vmatprep.subr.bf16.mxu0 0
  %5270 = vmatpush1.bf16.msra.mxu0 %v4662
  %5271 = vmatprep.subr.bf16.mxu0 0
  %5272 = vmatpush1.bf16.msra.mxu0 %v4663
  %5273 = vmatprep.subr.bf16.mxu0 0
  %5274 = vmatpush1.bf16.msra.mxu0 %v4664
  %5275 = vmatprep.subr.bf16.mxu0 0
  %5276 = vmatpush1.bf16.msra.mxu0 %v4665
  %5277 = vmatprep.subr.bf16.mxu0 0
  %5278 = vmatpush1.bf16.msra.mxu0 %v4666
  %5279 = vmatprep.subr.bf16.mxu0 0
  %5280 = vmatpush1.bf16.msra.mxu0 %v4667
  %5281 = vmatprep.subr.bf16.mxu0 0
  %5282 = vmatpush1.bf16.msra.mxu0 %v4668
  %5283 = vmatprep.subr.bf16.mxu0 0
  %5284 = vmatpush1.bf16.msra.mxu0 %v4669
  %5285 = vmatprep.mubr.bf16.mxu0 %v3718
  %5286 = vmatmul.mubr.bf16.gmra.mrb[0].mxu0 %v3717
  %v5287 = vpop.f32.mrb[0].mxu0
  %v5288 = vadd.f32 %v5223, %v5287
  %v5289 = vpop.f32.mrb[0].mxu0
  %v5290 = vpop.f32.mrb[0].mxu0
  %v5291 = vadd.f32 %v5226, %v5290
  %v5292 = vpop.f32.mrb[0].mxu0
  %5293 = vmatprep.mubr.bf16.mxu0 %v3734
  %5294 = vmatmul.mubr.bf16.gmra.mrb[0].mxu0 %v3733
  %v5295 = vpop.f32.mrb[0].mxu0
  %v5296 = vadd.f32 %v5231, %v5295
  %v5297 = vpop.f32.mrb[0].mxu0
  %v5298 = vpop.f32.mrb[0].mxu0
  %v5299 = vadd.f32 %v5234, %v5298
  %v5300 = vpop.f32.mrb[0].mxu0
  %5301 = vmatprep.mubr.bf16.mxu0 %v3750
  %5302 = vmatmul.mubr.bf16.gmra.mrb[0].mxu0 %v3749
  %v5303 = vpop.f32.mrb[0].mxu0
  %v5304 = vadd.f32 %v5239, %v5303
  %v5305 = vpop.f32.mrb[0].mxu0
  %v5306 = vpop.f32.mrb[0].mxu0
  %v5307 = vadd.f32 %v5242, %v5306
  %v5308 = vpop.f32.mrb[0].mxu0
  %5309 = vmatprep.mubr.bf16.mxu0 %v3766
  %5310 = vmatmul.mubr.bf16.gmra.mrb[0].mxu0 %v3765
  %v5311 = vpop.f32.mrb[0].mxu0
  %v5312 = vadd.f32 %v5247, %v5311
  %v5313 = vpop.f32.mrb[0].mxu0
  %v5314 = vpop.f32.mrb[0].mxu0
  %v5315 = vadd.f32 %v5250, %v5314
  %v5316 = vpop.f32.mrb[0].mxu0
  %5317 = vdwg.mxu0
  %v5318 = vadd.f32 %v2499, %v5288
  %v5319 = vadd.f32 %v2500, %v5291
  %v5320 = vadd.f32 %v2501, %v5296
  %v5321 = vadd.f32 %v2502, %v5299
  %v5322 = vadd.f32 %v2503, %v5304
  %v5323 = vadd.f32 %v2504, %v5307
  %v5324 = vadd.f32 %v2505, %v5312
  %v5325 = vadd.f32 %v2506, %v5315
  %v5326 = vld [vmem:[%s16] sm:$0x1]
  %v5327 = vld [vmem:[%s17] sm:$0x1]
  %v5328 = vsel %vm250, %v5318, 0.0
  %5329 = vadd.xlane.f32.xlu0 %v5328
  %v5330 = vpop.xlane.xlu0 %5329
  %v5331 = vsel %vm250, %v5319, 0.0
  %5332 = vadd.xlane.f32.xlu0 %v5331
  %v5333 = vpop.xlane.xlu0 %5332
  %v5334 = vsel %vm250, %v5320, 0.0
  %5335 = vadd.xlane.f32.xlu0 %v5334
  %v5336 = vpop.xlane.xlu0 %5335
  %v5337 = vsel %vm250, %v5321, 0.0
  %5338 = vadd.xlane.f32.xlu0 %v5337
  %v5339 = vpop.xlane.xlu0 %5338
  %v5340 = vsel %vm250, %v5322, 0.0
  %5341 = vadd.xlane.f32.xlu0 %v5340
  %v5342 = vpop.xlane.xlu0 %5341
  %v5343 = vsel %vm250, %v5323, 0.0
  %5344 = vadd.xlane.f32.xlu0 %v5343
  %v5345 = vpop.xlane.xlu0 %5344
  %v5346 = vsel %vm250, %v5324, 0.0
  %5347 = vadd.xlane.f32.xlu0 %v5346
  %v5348 = vpop.xlane.xlu0 %5347
  %v5349 = vsel %vm250, %v5325, 0.0
  %5350 = vadd.xlane.f32.xlu0 %v5349
  %v5351 = vpop.xlane.xlu0 %5350
  %v5352 = vmul.f32 %v5330, %v2398
  %v5353 = vmul.f32 %v5333, %v2398
  %v5354 = vmul.f32 %v5336, %v2398
  %v5355 = vmul.f32 %v5339, %v2398
  %v5356 = vmul.f32 %v5342, %v2398
  %v5357 = vmul.f32 %v5345, %v2398
  %v5358 = vmul.f32 %v5348, %v2398
  %v5359 = vmul.f32 %v5351, %v2398
  %v5360 = vsub.f32 %v5318, %v5352
  %v5361 = vsub.f32 %v5319, %v5353
  %v5362 = vsub.f32 %v5320, %v5354
  %v5363 = vsub.f32 %v5321, %v5355
  %v5364 = vsub.f32 %v5322, %v5356
  %v5365 = vsub.f32 %v5323, %v5357
  %v5366 = vsub.f32 %v5324, %v5358
  %v5367 = vsub.f32 %v5325, %v5359
  %v5368 = vmul.f32 %v5360, %v5360
  %v5369 = vmul.f32 %v5361, %v5361
  %v5370 = vmul.f32 %v5362, %v5362
  %v5371 = vmul.f32 %v5363, %v5363
  %v5372 = vmul.f32 %v5364, %v5364
  %v5373 = vmul.f32 %v5365, %v5365
  %v5374 = vmul.f32 %v5366, %v5366
  %v5375 = vmul.f32 %v5367, %v5367
  %v5376 = vsel %vm250, %v5368, 0.0
  %5377 = vadd.xlane.f32.xlu0 %v5376
  %v5378 = vpop.xlane.xlu0 %5377
  %v5379 = vsel %vm250, %v5369, 0.0
  %5380 = vadd.xlane.f32.xlu0 %v5379
  %v5381 = vpop.xlane.xlu0 %5380
  %v5382 = vsel %vm250, %v5370, 0.0
  %5383 = vadd.xlane.f32.xlu0 %v5382
  %v5384 = vpop.xlane.xlu0 %5383
  %v5385 = vsel %vm250, %v5371, 0.0
  %5386 = vadd.xlane.f32.xlu0 %v5385
  %v5387 = vpop.xlane.xlu0 %5386
  %v5388 = vsel %vm250, %v5372, 0.0
  %5389 = vadd.xlane.f32.xlu0 %v5388
  %v5390 = vpop.xlane.xlu0 %5389
  %v5391 = vsel %vm250, %v5373, 0.0
  %5392 = vadd.xlane.f32.xlu0 %v5391
  %v5393 = vpop.xlane.xlu0 %5392
  %v5394 = vsel %vm250, %v5374, 0.0
  %5395 = vadd.xlane.f32.xlu0 %v5394
  %v5396 = vpop.xlane.xlu0 %5395
  %v5397 = vsel %vm250, %v5375, 0.0
  %5398 = vadd.xlane.f32.xlu0 %v5397
  %v5399 = vpop.xlane.xlu0 %5398
  %v5400 = vmul.f32 %v5378, %v2398
  %v5401 = vmul.f32 %v5381, %v2398
  %v5402 = vmul.f32 %v5384, %v2398
  %v5403 = vmul.f32 %v5387, %v2398
  %v5404 = vmul.f32 %v5390, %v2398
  %v5405 = vmul.f32 %v5393, %v2398
  %v5406 = vmul.f32 %v5396, %v2398
  %v5407 = vmul.f32 %v5399, %v2398
  %v5408 = vadd.f32 %v5400, 1e-05
  %v5409 = vadd.f32 %v5401, 1e-05
  %v5410 = vadd.f32 %v5402, 1e-05
  %v5411 = vadd.f32 %v5403, 1e-05
  %v5412 = vadd.f32 %v5404, 1e-05
  %v5413 = vadd.f32 %v5405, 1e-05
  %v5414 = vadd.f32 %v5406, 1e-05
  %v5415 = vadd.f32 %v5407, 1e-05
  %v5416 = vrsqrt.pop %v5408
  %v5417 = vrsqrt.pop %v5409
  %v5418 = vrsqrt.pop %v5410
  %v5419 = vrsqrt.pop %v5411
  %v5420 = vrsqrt.pop %v5412
  %v5421 = vrsqrt.pop %v5413
  %v5422 = vrsqrt.pop %v5414
  %v5423 = vrsqrt.pop %v5415
  %v5424 = vmul.f32 %v5360, %v5416
  %v5425 = vmul.f32 %v5361, %v5417
  %v5426 = vmul.f32 %v5362, %v5418
  %v5427 = vmul.f32 %v5363, %v5419
  %v5428 = vmul.f32 %v5364, %v5420
  %v5429 = vmul.f32 %v5365, %v5421
  %v5430 = vmul.f32 %v5366, %v5422
  %v5431 = vmul.f32 %v5367, %v5423
  %v5433 = vlaneseq
  %v5434 = vshrl.u32 %v5433, 7
  %v5435 = vsub.s32 0, %v5434
  %v5436 = vrot.slane %v5326, %v5435
  %v5438 = vmul.f32 %v5424, %v5436
  %v5439 = vmul.f32 %v5425, %v5436
  %v5440 = vmul.f32 %v5426, %v5436
  %v5441 = vmul.f32 %v5427, %v5436
  %v5442 = vmul.f32 %v5428, %v5436
  %v5443 = vmul.f32 %v5429, %v5436
  %v5444 = vmul.f32 %v5430, %v5436
  %v5445 = vmul.f32 %v5431, %v5436
  %v5447 = vlaneseq
  %v5448 = vshrl.u32 %v5447, 7
  %v5449 = vsub.s32 0, %v5448
  %v5450 = vrot.slane %v5327, %v5449
  %v5452 = vadd.f32 %v5438, %v5450
  %v5453 = vadd.f32 %v5439, %v5450
  %v5454 = vadd.f32 %v5440, %v5450
  %v5455 = vadd.f32 %v5441, %v5450
  %v5456 = vadd.f32 %v5442, %v5450
  %v5457 = vadd.f32 %v5443, %v5450
  %v5458 = vadd.f32 %v5444, %v5450
  %v5459 = vadd.f32 %v5445, %v5450
  %v5460 = vpack.c.bf16 %v5453, %v5452
  %v5461 = vpack.c.bf16 %v5455, %v5454
  %v5462 = vpack.c.bf16 %v5457, %v5456
  %v5463 = vpack.c.bf16 %v5459, %v5458
  %s5464 = scalar_lea.vmem %s6, 64
  %v5465 = vld [vmem:[%s5464] sm:$0xff]
  %v5466 = vld [vmem:[%s5464 + $0x8] sm:$0xff]
  %v5467 = vld [vmem:[%s5464 + $0x10] sm:$0xff]
  %v5468 = vld [vmem:[%s5464 + $0x18] sm:$0xff]
  %v5469 = vld [vmem:[%s5464 + $0x20] sm:$0xff]
  %v5470 = vld [vmem:[%s5464 + $0x28] sm:$0xff]
  %v5471 = vld [vmem:[%s5464 + $0x30] sm:$0xff]
  %v5472 = vld [vmem:[%s5464 + $0x38] sm:$0xff]
  %s5473 = scalar_lea.vmem %s7, 2
  %v5474 = vld [vmem:[%s5473] sm:$0x3]
  %v5476 = vlaneseq
  %v5477 = vshrl.u32 %v5476, 7
  %v5478 = vsub.s32 0, %v5477
  %v5479 = vrot.slane %v5474, %v5478
  %v5480 = vlaneseq
  %v5481 = vshrl.u32 %v5480, 7
  %v5482 = vsub.s32 1, %v5481
  %v5483 = vrot.slane %v5474, %v5482
  %v5494 = vunpack.c.l.b16 %v5465
  %v5495 = vunpack.c.h.b16 %v5465
  %v5496 = vunpack.c.l.b16 %v5466
  %v5497 = vunpack.c.h.b16 %v5466
  %v5498 = vunpack.c.l.b16 %v5467
  %v5499 = vunpack.c.h.b16 %v5467
  %v5500 = vunpack.c.l.b16 %v5468
  %v5501 = vunpack.c.h.b16 %v5468
  %v5502 = vunpack.c.l.b16 %v5469
  %v5503 = vunpack.c.h.b16 %v5469
  %v5504 = vunpack.c.l.b16 %v5470
  %v5505 = vunpack.c.h.b16 %v5470
  %v5506 = vunpack.c.l.b16 %v5471
  %v5507 = vunpack.c.h.b16 %v5471
  %v5508 = vunpack.c.l.b16 %v5472
  %v5509 = vunpack.c.h.b16 %v5472
  %v5510 = vpack.c.b16 %v5496, %v5494
  %v5511 = vpack.c.b16 %v5497, %v5495
  %v5512 = vpack.c.b16 %v5500, %v5498
  %v5513 = vpack.c.b16 %v5501, %v5499
  %v5514 = vpack.c.b16 %v5504, %v5502
  %v5515 = vpack.c.b16 %v5505, %v5503
  %v5516 = vpack.c.b16 %v5508, %v5506
  %v5517 = vpack.c.b16 %v5509, %v5507
  %v5527 = vsel %vm250, %v5460, 0
  %v5530 = vsel %vm250, %v5461, 0
  %v5533 = vsel %vm250, %v5462, 0
  %v5536 = vsel %vm250, %v5463, 0
  %5538 = vmatprep.subr.bf16.mxu0 %v5511
  %5539 = vmatpush1.bf16.msra.mxu0 %v5510
  %5540 = vmatprep.subr.bf16.mxu0 %v5513
  %5541 = vmatpush1.bf16.msra.mxu0 %v5512
  %5542 = vmatprep.subr.bf16.mxu0 %v5515
  %5543 = vmatpush1.bf16.msra.mxu0 %v5514
  %5544 = vmatprep.subr.bf16.mxu0 %v5517
  %5545 = vmatpush1.bf16.msra.mxu0 %v5516
  %5546 = vmatprep.subr.bf16.mxu0 0
  %5547 = vmatpush1.bf16.msra.mxu0 0
  %5548 = vmatprep.subr.bf16.mxu0 0
  %5549 = vmatpush1.bf16.msra.mxu0 0
  %5550 = vmatprep.subr.bf16.mxu0 0
  %5551 = vmatpush1.bf16.msra.mxu0 0
  %5552 = vmatprep.subr.bf16.mxu0 0
  %5553 = vmatpush1.bf16.msra.mxu0 0
  %5554 = vmatprep.subr.bf16.mxu0 0
  %5555 = vmatpush1.bf16.msra.mxu0 0
  %5556 = vmatprep.subr.bf16.mxu0 0
  %5557 = vmatpush1.bf16.msra.mxu0 0
  %5558 = vmatprep.subr.bf16.mxu0 0
  %5559 = vmatpush1.bf16.msra.mxu0 0
  %5560 = vmatprep.subr.bf16.mxu0 0
  %5561 = vmatpush1.bf16.msra.mxu0 0
  %5562 = vmatprep.subr.bf16.mxu0 0
  %5563 = vmatpush1.bf16.msra.mxu0 0
  %5564 = vmatprep.subr.bf16.mxu0 0
  %5565 = vmatpush1.bf16.msra.mxu0 0
  %5566 = vmatprep.subr.bf16.mxu0 0
  %5567 = vmatpush1.bf16.msra.mxu0 0
  %5568 = vmatprep.subr.bf16.mxu0 0
  %5569 = vmatpush1.bf16.msra.mxu0 0
  %5570 = vmatprep.mubr.bf16.mxu0 0
  %5571 = vmatmul.mubr.bf16.gmra.mrb[0].mxu0 %v5527
  %v5572 = vpop.f32.mrb[0].mxu0
  %v5573 = vadd.f32 %v5479, %v5572
  %v5574 = vpop.f32.mrb[0].mxu0
  %v5575 = vadd.f32 %v5483, %v5574
  %v5576 = vpop.f32.mrb[0].mxu0
  %v5577 = vadd.f32 %v5479, %v5576
  %v5578 = vpop.f32.mrb[0].mxu0
  %v5579 = vadd.f32 %v5483, %v5578
  %5580 = vmatprep.mubr.bf16.mxu0 0
  %5581 = vmatmul.mubr.bf16.gmra.mrb[0].mxu0 %v5530
  %v5582 = vpop.f32.mrb[0].mxu0
  %v5583 = vadd.f32 %v5479, %v5582
  %v5584 = vpop.f32.mrb[0].mxu0
  %v5585 = vadd.f32 %v5483, %v5584
  %v5586 = vpop.f32.mrb[0].mxu0
  %v5587 = vadd.f32 %v5479, %v5586
  %v5588 = vpop.f32.mrb[0].mxu0
  %v5589 = vadd.f32 %v5483, %v5588
  %5590 = vmatprep.mubr.bf16.mxu0 0
  %5591 = vmatmul.mubr.bf16.gmra.mrb[0].mxu0 %v5533
  %v5592 = vpop.f32.mrb[0].mxu0
  %v5593 = vadd.f32 %v5479, %v5592
  %v5594 = vpop.f32.mrb[0].mxu0
  %v5595 = vadd.f32 %v5483, %v5594
  %v5596 = vpop.f32.mrb[0].mxu0
  %v5597 = vadd.f32 %v5479, %v5596
  %v5598 = vpop.f32.mrb[0].mxu0
  %v5599 = vadd.f32 %v5483, %v5598
  %5600 = vmatprep.mubr.bf16.mxu0 0
  %5601 = vmatmul.mubr.bf16.gmra.mrb[0].mxu0 %v5536
  %v5602 = vpop.f32.mrb[0].mxu0
  %v5603 = vadd.f32 %v5479, %v5602
  %v5604 = vpop.f32.mrb[0].mxu0
  %v5605 = vadd.f32 %v5483, %v5604
  %v5606 = vpop.f32.mrb[0].mxu0
  %v5607 = vadd.f32 %v5479, %v5606
  %v5608 = vpop.f32.mrb[0].mxu0
  %v5609 = vadd.f32 %v5483, %v5608
  %5610 = vdwg.mxu0
  %v5611 = vmul.f32 %v5573, 0.25
  %v5612 = vmul.f32 %v5577, 0.25
  %v5613 = vmul.f32 %v5583, 0.25
  %v5614 = vmul.f32 %v5587, 0.25
  %v5615 = vmul.f32 %v5593, 0.25
  %v5616 = vmul.f32 %v5597, 0.25
  %v5617 = vmul.f32 %v5603, 0.25
  %v5618 = vmul.f32 %v5607, 0.25
  %s5619 = scalar_lea.vmem %s9, 1
  %v5620 = vld [vmem:[%s5619] sm:$0x1]
  %5629 = vrot.lane.b32.xlu0 %v5573, 64
  %v5630 = vpop.permute.xlu0 %5629
  %5631 = vrot.lane.b32.xlu0 %v5577, 64
  %v5632 = vpop.permute.xlu0 %5631
  %5633 = vrot.lane.b32.xlu0 %v5583, 64
  %v5634 = vpop.permute.xlu0 %5633
  %5635 = vrot.lane.b32.xlu0 %v5587, 64
  %v5636 = vpop.permute.xlu0 %5635
  %5637 = vrot.lane.b32.xlu0 %v5593, 64
  %v5638 = vpop.permute.xlu0 %5637
  %5639 = vrot.lane.b32.xlu0 %v5597, 64
  %v5640 = vpop.permute.xlu0 %5639
  %5641 = vrot.lane.b32.xlu0 %v5603, 64
  %v5642 = vpop.permute.xlu0 %5641
  %5643 = vrot.lane.b32.xlu0 %v5607, 64
  %v5644 = vpop.permute.xlu0 %5643
  %v5646 = vsel %vm369, %v5611, 0
  %v5649 = vsel %vm369, %v5612, 0
  %v5652 = vsel %vm369, %v5613, 0
  %v5655 = vsel %vm369, %v5614, 0
  %v5658 = vsel %vm369, %v5615, 0
  %v5661 = vsel %vm369, %v5616, 0
  %v5664 = vsel %vm369, %v5617, 0
  %v5667 = vsel %vm369, %v5618, 0
  %v5669 = vsel %vm369, %v5630, 0
  %v5671 = vsel %vm369, %v5632, 0
  %v5673 = vsel %vm369, %v5634, 0
  %v5675 = vsel %vm369, %v5636, 0
  %v5677 = vsel %vm369, %v5638, 0
  %v5679 = vsel %vm369, %v5640, 0
  %v5681 = vsel %vm369, %v5642, 0
  %v5683 = vsel %vm369, %v5644, 0
  %5685 = vmatprep.subr.mxu0 0.0
  %5686 = vmatpush1.xpose.msra.mxu0 %v5669
  %5687 = vmatprep.subr.mxu0 0.0
  %5688 = vmatpush1.xpose.msra.mxu0 %v5671
  %5689 = vmatprep.subr.mxu0 0.0
  %5690 = vmatpush1.xpose.msra.mxu0 %v5673
  %5691 = vmatprep.subr.mxu0 0.0
  %5692 = vmatpush1.xpose.msra.mxu0 %v5675
  %5693 = vmatprep.subr.mxu0 0.0
  %5694 = vmatpush1.xpose.msra.mxu0 %v5677
  %5695 = vmatprep.subr.mxu0 0.0
  %5696 = vmatpush1.xpose.msra.mxu0 %v5679
  %5697 = vmatprep.subr.mxu0 0.0
  %5698 = vmatpush1.xpose.msra.mxu0 %v5681
  %5699 = vmatprep.subr.mxu0 0.0
  %5700 = vmatpush1.xpose.msra.mxu0 %v5683
  %5701 = vmatprep.subr.mxu0 0.0
  %5702 = vmatpush1.xpose.msra.mxu0 0.0
  %5703 = vmatprep.subr.mxu0 0.0
  %5704 = vmatpush1.xpose.msra.mxu0 0.0
  %5705 = vmatprep.subr.mxu0 0.0
  %5706 = vmatpush1.xpose.msra.mxu0 0.0
  %5707 = vmatprep.subr.mxu0 0.0
  %5708 = vmatpush1.xpose.msra.mxu0 0.0
  %5709 = vmatprep.subr.mxu0 0.0
  %5710 = vmatpush1.xpose.msra.mxu0 0.0
  %5711 = vmatprep.subr.mxu0 0.0
  %5712 = vmatpush1.xpose.msra.mxu0 0.0
  %5713 = vmatprep.subr.mxu0 0.0
  %5714 = vmatpush1.xpose.msra.mxu0 0.0
  %5715 = vmatprep.subr.mxu0 0.0
  %5716 = vmatpush1.xpose.msra.mxu0 0.0
  %5717 = vmatprep.subr.mxu0 0.0
  %5718 = vmatpush1.xpose.msra.mxu0 0.0
  %5719 = vmatprep.subr.mxu0 0.0
  %5720 = vmatpush1.xpose.msra.mxu0 0.0
  %5721 = vmatprep.subr.mxu0 0.0
  %5722 = vmatpush1.xpose.msra.mxu0 0.0
  %5723 = vmatprep.subr.mxu0 0.0
  %5724 = vmatpush1.xpose.msra.mxu0 0.0
  %5725 = vmatprep.subr.mxu0 0.0
  %5726 = vmatpush1.xpose.msra.mxu0 0.0
  %5727 = vmatprep.subr.mxu0 0.0
  %5728 = vmatpush1.xpose.msra.mxu0 0.0
  %5729 = vmatprep.subr.mxu0 0.0
  %5730 = vmatpush1.xpose.msra.mxu0 0.0
  %5731 = vmatprep.subr.mxu0 0.0
  %5732 = vmatpush1.xpose.msra.mxu0 0.0
  %5733 = vmatprep.subr.mxu0 0.0
  %5734 = vmatpush1.xpose.msra.mxu0 0.0
  %5735 = vmatprep.subr.mxu0 0.0
  %5736 = vmatpush1.xpose.msra.mxu0 0.0
  %5737 = vmatprep.subr.mxu0 0.0
  %5738 = vmatpush1.xpose.msra.mxu0 0.0
  %5739 = vmatprep.subr.mxu0 0.0
  %5740 = vmatpush1.xpose.msra.mxu0 0.0
  %5741 = vmatprep.subr.mxu0 0.0
  %5742 = vmatpush1.xpose.msra.mxu0 0.0
  %5743 = vmatprep.subr.mxu0 0.0
  %5744 = vmatpush1.xpose.msra.mxu0 0.0
  %5745 = vmatprep.subr.mxu0 0.0
  %5746 = vmatpush1.xpose.msra.mxu0 0.0
  %5747 = vmatprep.subr.mxu0 0.0
  %5748 = vmatpush1.xpose.msra.mxu0 0.0
  %5749 = vmatprep.mubr.f32.mxu0 0.0
  %5750 = vmatmul.mubr.f32.gmra.mrb[0].mxu0 %v5646
  %v5751 = vpop.f32.mrb[0].mxu0
  %v5752 = vadd.f32 %v178, %v5751
  %v5753 = vpop.f32.mrb[0].mxu0
  %5754 = vmatprep.mubr.f32.mxu0 0.0
  %5755 = vmatmul.mubr.f32.gmra.mrb[0].mxu0 %v5649
  %v5756 = vpop.f32.mrb[0].mxu0
  %v5757 = vadd.f32 %v179, %v5756
  %v5758 = vpop.f32.mrb[0].mxu0
  %5759 = vmatprep.mubr.f32.mxu0 0.0
  %5760 = vmatmul.mubr.f32.gmra.mrb[0].mxu0 %v5652
  %v5761 = vpop.f32.mrb[0].mxu0
  %v5762 = vadd.f32 %v180, %v5761
  %v5763 = vpop.f32.mrb[0].mxu0
  %5764 = vmatprep.mubr.f32.mxu0 0.0
  %5765 = vmatmul.mubr.f32.gmra.mrb[0].mxu0 %v5655
  %v5766 = vpop.f32.mrb[0].mxu0
  %v5767 = vadd.f32 %v181, %v5766
  %v5768 = vpop.f32.mrb[0].mxu0
  %5769 = vmatprep.mubr.f32.mxu0 0.0
  %5770 = vmatmul.mubr.f32.gmra.mrb[0].mxu0 %v5658
  %v5771 = vpop.f32.mrb[0].mxu0
  %v5772 = vadd.f32 %v182, %v5771
  %v5773 = vpop.f32.mrb[0].mxu0
  %5774 = vmatprep.mubr.f32.mxu0 0.0
  %5775 = vmatmul.mubr.f32.gmra.mrb[0].mxu0 %v5661
  %v5776 = vpop.f32.mrb[0].mxu0
  %v5777 = vadd.f32 %v183, %v5776
  %v5778 = vpop.f32.mrb[0].mxu0
  %5779 = vmatprep.mubr.f32.mxu0 0.0
  %5780 = vmatmul.mubr.f32.gmra.mrb[0].mxu0 %v5664
  %v5781 = vpop.f32.mrb[0].mxu0
  %v5782 = vadd.f32 %v184, %v5781
  %v5783 = vpop.f32.mrb[0].mxu0
  %5784 = vmatprep.mubr.f32.mxu0 0.0
  %5785 = vmatmul.mubr.f32.gmra.mrb[0].mxu0 %v5667
  %v5786 = vpop.f32.mrb[0].mxu0
  %v5787 = vadd.f32 %v185, %v5786
  %v5788 = vpop.f32.mrb[0].mxu0
  %5789 = vdwg.mxu0
  %v5790 = vsel %vm250, %v5752, -inf
  %5791 = vmax.xlane.f32.xlu0 %v5790
  %v5792 = vpop.xlane.xlu0 %5791
  %v5793 = vsel %vm250, %v5757, -inf
  %5794 = vmax.xlane.f32.xlu0 %v5793
  %v5795 = vpop.xlane.xlu0 %5794
  %v5796 = vsel %vm250, %v5762, -inf
  %5797 = vmax.xlane.f32.xlu0 %v5796
  %v5798 = vpop.xlane.xlu0 %5797
  %v5799 = vsel %vm250, %v5767, -inf
  %5800 = vmax.xlane.f32.xlu0 %v5799
  %v5801 = vpop.xlane.xlu0 %5800
  %v5802 = vsel %vm250, %v5772, -inf
  %5803 = vmax.xlane.f32.xlu0 %v5802
  %v5804 = vpop.xlane.xlu0 %5803
  %v5805 = vsel %vm250, %v5777, -inf
  %5806 = vmax.xlane.f32.xlu0 %v5805
  %v5807 = vpop.xlane.xlu0 %5806
  %v5808 = vsel %vm250, %v5782, -inf
  %5809 = vmax.xlane.f32.xlu0 %v5808
  %v5810 = vpop.xlane.xlu0 %5809
  %v5811 = vsel %vm250, %v5787, -inf
  %5812 = vmax.xlane.f32.xlu0 %v5811
  %v5813 = vpop.xlane.xlu0 %5812
  %v5814 = vsub.f32 %v5752, %v5792
  %v5815 = vsub.f32 %v5757, %v5795
  %v5816 = vsub.f32 %v5762, %v5798
  %v5817 = vsub.f32 %v5767, %v5801
  %v5818 = vsub.f32 %v5772, %v5804
  %v5819 = vsub.f32 %v5777, %v5807
  %v5820 = vsub.f32 %v5782, %v5810
  %v5821 = vsub.f32 %v5787, %v5813
  %v5822 = vmul.f32 %v5814, 1.442695
  %v5823 = vpow.pop %v5822
  %v5824 = vmul.f32 %v5815, 1.442695
  %v5825 = vpow.pop %v5824
  %v5826 = vmul.f32 %v5816, 1.442695
  %v5827 = vpow.pop %v5826
  %v5828 = vmul.f32 %v5817, 1.442695
  %v5829 = vpow.pop %v5828
  %v5830 = vmul.f32 %v5818, 1.442695
  %v5831 = vpow.pop %v5830
  %v5832 = vmul.f32 %v5819, 1.442695
  %v5833 = vpow.pop %v5832
  %v5834 = vmul.f32 %v5820, 1.442695
  %v5835 = vpow.pop %v5834
  %v5836 = vmul.f32 %v5821, 1.442695
  %v5837 = vpow.pop %v5836
  %v5838 = vsel %vm250, %v5823, 0.0
  %5839 = vadd.xlane.f32.xlu0 %v5838
  %v5840 = vpop.xlane.xlu0 %5839
  %v5841 = vsel %vm250, %v5825, 0.0
  %5842 = vadd.xlane.f32.xlu0 %v5841
  %v5843 = vpop.xlane.xlu0 %5842
  %v5844 = vsel %vm250, %v5827, 0.0
  %5845 = vadd.xlane.f32.xlu0 %v5844
  %v5846 = vpop.xlane.xlu0 %5845
  %v5847 = vsel %vm250, %v5829, 0.0
  %5848 = vadd.xlane.f32.xlu0 %v5847
  %v5849 = vpop.xlane.xlu0 %5848
  %v5850 = vsel %vm250, %v5831, 0.0
  %5851 = vadd.xlane.f32.xlu0 %v5850
  %v5852 = vpop.xlane.xlu0 %5851
  %v5853 = vsel %vm250, %v5833, 0.0
  %5854 = vadd.xlane.f32.xlu0 %v5853
  %v5855 = vpop.xlane.xlu0 %5854
  %v5856 = vsel %vm250, %v5835, 0.0
  %5857 = vadd.xlane.f32.xlu0 %v5856
  %v5858 = vpop.xlane.xlu0 %5857
  %v5859 = vsel %vm250, %v5837, 0.0
  %5860 = vadd.xlane.f32.xlu0 %v5859
  %v5861 = vpop.xlane.xlu0 %5860
  %v5862 = vrcp.pop %v5840
  %v5863 = vrcp.pop %v5843
  %v5864 = vrcp.pop %v5846
  %v5865 = vrcp.pop %v5849
  %v5866 = vrcp.pop %v5852
  %v5867 = vrcp.pop %v5855
  %v5868 = vrcp.pop %v5858
  %v5869 = vrcp.pop %v5861
  %v5870 = vmul.f32 %v5823, %v5862
  %v5871 = vmul.f32 %v5825, %v5863
  %v5872 = vmul.f32 %v5827, %v5864
  %v5873 = vmul.f32 %v5829, %v5865
  %v5874 = vmul.f32 %v5831, %v5866
  %v5875 = vmul.f32 %v5833, %v5867
  %v5876 = vmul.f32 %v5835, %v5868
  %v5877 = vmul.f32 %v5837, %v5869
  %v5879 = vsel %vm250, %v5870, 0
  %v5882 = vsel %vm250, %v5871, 0
  %v5885 = vsel %vm250, %v5872, 0
  %v5888 = vsel %vm250, %v5873, 0
  %v5891 = vsel %vm250, %v5874, 0
  %v5894 = vsel %vm250, %v5875, 0
  %v5897 = vsel %vm250, %v5876, 0
  %v5900 = vsel %vm250, %v5877, 0
  %5902 = vmatprep.subr.mxu0 0.0
  %5903 = vmatpush1.msra.mxu0 %v5575
  %5904 = vmatprep.subr.mxu0 0.0
  %5905 = vmatpush1.msra.mxu0 %v5579
  %5906 = vmatprep.subr.mxu0 0.0
  %5907 = vmatpush1.msra.mxu0 %v5585
  %5908 = vmatprep.subr.mxu0 0.0
  %5909 = vmatpush1.msra.mxu0 %v5589
  %5910 = vmatprep.subr.mxu0 0.0
  %5911 = vmatpush1.msra.mxu0 %v5595
  %5912 = vmatprep.subr.mxu0 0.0
  %5913 = vmatpush1.msra.mxu0 %v5599
  %5914 = vmatprep.subr.mxu0 0.0
  %5915 = vmatpush1.msra.mxu0 %v5605
  %5916 = vmatprep.subr.mxu0 0.0
  %5917 = vmatpush1.msra.mxu0 %v5609
  %5918 = vmatprep.subr.mxu0 0.0
  %5919 = vmatpush1.msra.mxu0 0.0
  %5920 = vmatprep.subr.mxu0 0.0
  %5921 = vmatpush1.msra.mxu0 0.0
  %5922 = vmatprep.subr.mxu0 0.0
  %5923 = vmatpush1.msra.mxu0 0.0
  %5924 = vmatprep.subr.mxu0 0.0
  %5925 = vmatpush1.msra.mxu0 0.0
  %5926 = vmatprep.subr.mxu0 0.0
  %5927 = vmatpush1.msra.mxu0 0.0
  %5928 = vmatprep.subr.mxu0 0.0
  %5929 = vmatpush1.msra.mxu0 0.0
  %5930 = vmatprep.subr.mxu0 0.0
  %5931 = vmatpush1.msra.mxu0 0.0
  %5932 = vmatprep.subr.mxu0 0.0
  %5933 = vmatpush1.msra.mxu0 0.0
  %5934 = vmatprep.subr.mxu0 0.0
  %5935 = vmatpush1.msra.mxu0 0.0
  %5936 = vmatprep.subr.mxu0 0.0
  %5937 = vmatpush1.msra.mxu0 0.0
  %5938 = vmatprep.subr.mxu0 0.0
  %5939 = vmatpush1.msra.mxu0 0.0
  %5940 = vmatprep.subr.mxu0 0.0
  %5941 = vmatpush1.msra.mxu0 0.0
  %5942 = vmatprep.subr.mxu0 0.0
  %5943 = vmatpush1.msra.mxu0 0.0
  %5944 = vmatprep.subr.mxu0 0.0
  %5945 = vmatpush1.msra.mxu0 0.0
  %5946 = vmatprep.subr.mxu0 0.0
  %5947 = vmatpush1.msra.mxu0 0.0
  %5948 = vmatprep.subr.mxu0 0.0
  %5949 = vmatpush1.msra.mxu0 0.0
  %5950 = vmatprep.subr.mxu0 0.0
  %5951 = vmatpush1.msra.mxu0 0.0
  %5952 = vmatprep.subr.mxu0 0.0
  %5953 = vmatpush1.msra.mxu0 0.0
  %5954 = vmatprep.subr.mxu0 0.0
  %5955 = vmatpush1.msra.mxu0 0.0
  %5956 = vmatprep.subr.mxu0 0.0
  %5957 = vmatpush1.msra.mxu0 0.0
  %5958 = vmatprep.subr.mxu0 0.0
  %5959 = vmatpush1.msra.mxu0 0.0
  %5960 = vmatprep.subr.mxu0 0.0
  %5961 = vmatpush1.msra.mxu0 0.0
  %5962 = vmatprep.subr.mxu0 0.0
  %5963 = vmatpush1.msra.mxu0 0.0
  %5964 = vmatprep.subr.mxu0 0.0
  %5965 = vmatpush1.msra.mxu0 0.0
  %5966 = vmatprep.mubr.f32.mxu0 0.0
  %5967 = vmatmul.mubr.f32.gmra.mrb[0].mxu0 %v5879
  %v5968 = vpop.f32.mrb[0].mxu0
  %v5969 = vadd.f32 0.0, %v5968
  %v5970 = vpop.f32.mrb[0].mxu0
  %5971 = vmatprep.mubr.f32.mxu0 0.0
  %5972 = vmatmul.mubr.f32.gmra.mrb[0].mxu0 %v5882
  %v5973 = vpop.f32.mrb[0].mxu0
  %v5974 = vadd.f32 0.0, %v5973
  %v5975 = vpop.f32.mrb[0].mxu0
  %5976 = vmatprep.mubr.f32.mxu0 0.0
  %5977 = vmatmul.mubr.f32.gmra.mrb[0].mxu0 %v5885
  %v5978 = vpop.f32.mrb[0].mxu0
  %v5979 = vadd.f32 0.0, %v5978
  %v5980 = vpop.f32.mrb[0].mxu0
  %5981 = vmatprep.mubr.f32.mxu0 0.0
  %5982 = vmatmul.mubr.f32.gmra.mrb[0].mxu0 %v5888
  %v5983 = vpop.f32.mrb[0].mxu0
  %v5984 = vadd.f32 0.0, %v5983
  %v5985 = vpop.f32.mrb[0].mxu0
  %5986 = vmatprep.mubr.f32.mxu0 0.0
  %5987 = vmatmul.mubr.f32.gmra.mrb[0].mxu0 %v5891
  %v5988 = vpop.f32.mrb[0].mxu0
  %v5989 = vadd.f32 0.0, %v5988
  %v5990 = vpop.f32.mrb[0].mxu0
  %5991 = vmatprep.mubr.f32.mxu0 0.0
  %5992 = vmatmul.mubr.f32.gmra.mrb[0].mxu0 %v5894
  %v5993 = vpop.f32.mrb[0].mxu0
  %v5994 = vadd.f32 0.0, %v5993
  %v5995 = vpop.f32.mrb[0].mxu0
  %5996 = vmatprep.mubr.f32.mxu0 0.0
  %5997 = vmatmul.mubr.f32.gmra.mrb[0].mxu0 %v5897
  %v5998 = vpop.f32.mrb[0].mxu0
  %v5999 = vadd.f32 0.0, %v5998
  %v6000 = vpop.f32.mrb[0].mxu0
  %6001 = vmatprep.mubr.f32.mxu0 0.0
  %6002 = vmatmul.mubr.f32.gmra.mrb[0].mxu0 %v5900
  %v6003 = vpop.f32.mrb[0].mxu0
  %v6004 = vadd.f32 0.0, %v6003
  %v6005 = vpop.f32.mrb[0].mxu0
  %6006 = vdwg.mxu0
  %v6007 = vpack.c.bf16 %v5974, %v5969
  %v6008 = vpack.c.bf16 %v5984, %v5979
  %v6009 = vpack.c.bf16 %v5994, %v5989
  %v6010 = vpack.c.bf16 %v6004, %v5999
  %s6011 = scalar_lea.vmem %s8, 32
  %v6012 = vld [vmem:[%s6011] sm:$0xf]
  %v6013 = vld [vmem:[%s6011 + $0x4] sm:$0xf]
  %v6016 = vunpack.c.l.b16 %v6012
  %v6017 = vunpack.c.l.b16 %v6013
  %v6018 = vpack.c.b16 %v6017, %v6016
  %v6021 = vsel %vm369, %v6007, 0
  %v6024 = vsel %vm369, %v6008, 0
  %v6027 = vsel %vm369, %v6009, 0
  %v6030 = vsel %vm369, %v6010, 0
  %6032 = vmatprep.subr.bf16.mxu0 0
  %6033 = vmatpush1.bf16.msra.mxu0 %v6018
  %6034 = vmatprep.subr.bf16.mxu0 0
  %6035 = vmatpush1.bf16.msra.mxu0 0
  %6036 = vmatprep.subr.bf16.mxu0 0
  %6037 = vmatpush1.bf16.msra.mxu0 0
  %6038 = vmatprep.subr.bf16.mxu0 0
  %6039 = vmatpush1.bf16.msra.mxu0 0
  %6040 = vmatprep.subr.bf16.mxu0 0
  %6041 = vmatpush1.bf16.msra.mxu0 0
  %6042 = vmatprep.subr.bf16.mxu0 0
  %6043 = vmatpush1.bf16.msra.mxu0 0
  %6044 = vmatprep.subr.bf16.mxu0 0
  %6045 = vmatpush1.bf16.msra.mxu0 0
  %6046 = vmatprep.subr.bf16.mxu0 0
  %6047 = vmatpush1.bf16.msra.mxu0 0
  %6048 = vmatprep.subr.bf16.mxu0 0
  %6049 = vmatpush1.bf16.msra.mxu0 0
  %6050 = vmatprep.subr.bf16.mxu0 0
  %6051 = vmatpush1.bf16.msra.mxu0 0
  %6052 = vmatprep.subr.bf16.mxu0 0
  %6053 = vmatpush1.bf16.msra.mxu0 0
  %6054 = vmatprep.subr.bf16.mxu0 0
  %6055 = vmatpush1.bf16.msra.mxu0 0
  %6056 = vmatprep.subr.bf16.mxu0 0
  %6057 = vmatpush1.bf16.msra.mxu0 0
  %6058 = vmatprep.subr.bf16.mxu0 0
  %6059 = vmatpush1.bf16.msra.mxu0 0
  %6060 = vmatprep.subr.bf16.mxu0 0
  %6061 = vmatpush1.bf16.msra.mxu0 0
  %6062 = vmatprep.subr.bf16.mxu0 0
  %6063 = vmatpush1.bf16.msra.mxu0 0
  %6064 = vmatprep.mubr.bf16.mxu0 0
  %6065 = vmatmul.mubr.bf16.gmra.mrb[0].mxu0 %v6021
  %v6066 = vpop.f32.mrb[0].mxu0
  %v6067 = vadd.f32 0.0, %v6066
  %v6068 = vpop.f32.mrb[0].mxu0
  %v6069 = vpop.f32.mrb[0].mxu0
  %v6070 = vadd.f32 0.0, %v6069
  %v6071 = vpop.f32.mrb[0].mxu0
  %6072 = vmatprep.mubr.bf16.mxu0 0
  %6073 = vmatmul.mubr.bf16.gmra.mrb[0].mxu0 %v6024
  %v6074 = vpop.f32.mrb[0].mxu0
  %v6075 = vadd.f32 0.0, %v6074
  %v6076 = vpop.f32.mrb[0].mxu0
  %v6077 = vpop.f32.mrb[0].mxu0
  %v6078 = vadd.f32 0.0, %v6077
  %v6079 = vpop.f32.mrb[0].mxu0
  %6080 = vmatprep.mubr.bf16.mxu0 0
  %6081 = vmatmul.mubr.bf16.gmra.mrb[0].mxu0 %v6027
  %v6082 = vpop.f32.mrb[0].mxu0
  %v6083 = vadd.f32 0.0, %v6082
  %v6084 = vpop.f32.mrb[0].mxu0
  %v6085 = vpop.f32.mrb[0].mxu0
  %v6086 = vadd.f32 0.0, %v6085
  %v6087 = vpop.f32.mrb[0].mxu0
  %6088 = vmatprep.mubr.bf16.mxu0 0
  %6089 = vmatmul.mubr.bf16.gmra.mrb[0].mxu0 %v6030
  %v6090 = vpop.f32.mrb[0].mxu0
  %v6091 = vadd.f32 0.0, %v6090
  %v6092 = vpop.f32.mrb[0].mxu0
  %v6093 = vpop.f32.mrb[0].mxu0
  %v6094 = vadd.f32 0.0, %v6093
  %v6095 = vpop.f32.mrb[0].mxu0
  %6096 = vdwg.mxu0
  %v6098 = vlaneseq
  %v6099 = vshrl.u32 %v6098, 7
  %v6100 = vsub.s32 0, %v6099
  %v6101 = vrot.slane %v5620, %v6100
  %v6103 = vadd.f32 %v6101, %v6067
  %v6104 = vadd.f32 %v6101, %v6070
  %v6105 = vadd.f32 %v6101, %v6075
  %v6106 = vadd.f32 %v6101, %v6078
  %v6107 = vadd.f32 %v6101, %v6083
  %v6108 = vadd.f32 %v6101, %v6086
  %v6109 = vadd.f32 %v6101, %v6091
  %v6110 = vadd.f32 %v6101, %v6094
  %6111 = vrot.lane.b32.xlu0 %v5611, 112
  %v6112 = vpop.permute.xlu0 %6111
  %6113 = vrot.lane.b32.xlu0 %v5612, 112
  %v6114 = vpop.permute.xlu0 %6113
  %6115 = vrot.lane.b32.xlu0 %v5613, 112
  %v6116 = vpop.permute.xlu0 %6115
  %6117 = vrot.lane.b32.xlu0 %v5614, 112
  %v6118 = vpop.permute.xlu0 %6117
  %6119 = vrot.lane.b32.xlu0 %v5615, 112
  %v6120 = vpop.permute.xlu0 %6119
  %6121 = vrot.lane.b32.xlu0 %v5616, 112
  %v6122 = vpop.permute.xlu0 %6121
  %6123 = vrot.lane.b32.xlu0 %v5617, 112
  %v6124 = vpop.permute.xlu0 %6123
  %6125 = vrot.lane.b32.xlu0 %v5618, 112
  %v6126 = vpop.permute.xlu0 %6125
  %6127 = vrot.lane.b32.xlu0 %v5573, 48
  %v6128 = vpop.permute.xlu0 %6127
  %6129 = vrot.lane.b32.xlu0 %v5577, 48
  %v6130 = vpop.permute.xlu0 %6129
  %6131 = vrot.lane.b32.xlu0 %v5583, 48
  %v6132 = vpop.permute.xlu0 %6131
  %6133 = vrot.lane.b32.xlu0 %v5587, 48
  %v6134 = vpop.permute.xlu0 %6133
  %6135 = vrot.lane.b32.xlu0 %v5593, 48
  %v6136 = vpop.permute.xlu0 %6135
  %6137 = vrot.lane.b32.xlu0 %v5597, 48
  %v6138 = vpop.permute.xlu0 %6137
  %6139 = vrot.lane.b32.xlu0 %v5603, 48
  %v6140 = vpop.permute.xlu0 %6139
  %6141 = vrot.lane.b32.xlu0 %v5607, 48
  %v6142 = vpop.permute.xlu0 %6141
  %v6143 = vsel %vm369, %v6112, 0
  %v6145 = vsel %vm369, %v6114, 0
  %v6147 = vsel %vm369, %v6116, 0
  %v6149 = vsel %vm369, %v6118, 0
  %v6151 = vsel %vm369, %v6120, 0
  %v6153 = vsel %vm369, %v6122, 0
  %v6155 = vsel %vm369, %v6124, 0
  %v6157 = vsel %vm369, %v6126, 0
  %v6159 = vsel %vm369, %v6128, 0
  %v6161 = vsel %vm369, %v6130, 0
  %v6163 = vsel %vm369, %v6132, 0
  %v6165 = vsel %vm369, %v6134, 0
  %v6167 = vsel %vm369, %v6136, 0
  %v6169 = vsel %vm369, %v6138, 0
  %v6171 = vsel %vm369, %v6140, 0
  %v6173 = vsel %vm369, %v6142, 0
  %6175 = vmatprep.subr.mxu0 0.0
  %6176 = vmatpush1.xpose.msra.mxu0 %v6159
  %6177 = vmatprep.subr.mxu0 0.0
  %6178 = vmatpush1.xpose.msra.mxu0 %v6161
  %6179 = vmatprep.subr.mxu0 0.0
  %6180 = vmatpush1.xpose.msra.mxu0 %v6163
  %6181 = vmatprep.subr.mxu0 0.0
  %6182 = vmatpush1.xpose.msra.mxu0 %v6165
  %6183 = vmatprep.subr.mxu0 0.0
  %6184 = vmatpush1.xpose.msra.mxu0 %v6167
  %6185 = vmatprep.subr.mxu0 0.0
  %6186 = vmatpush1.xpose.msra.mxu0 %v6169
  %6187 = vmatprep.subr.mxu0 0.0
  %6188 = vmatpush1.xpose.msra.mxu0 %v6171
  %6189 = vmatprep.subr.mxu0 0.0
  %6190 = vmatpush1.xpose.msra.mxu0 %v6173
  %6191 = vmatprep.subr.mxu0 0.0
  %6192 = vmatpush1.xpose.msra.mxu0 0.0
  %6193 = vmatprep.subr.mxu0 0.0
  %6194 = vmatpush1.xpose.msra.mxu0 0.0
  %6195 = vmatprep.subr.mxu0 0.0
  %6196 = vmatpush1.xpose.msra.mxu0 0.0
  %6197 = vmatprep.subr.mxu0 0.0
  %6198 = vmatpush1.xpose.msra.mxu0 0.0
  %6199 = vmatprep.subr.mxu0 0.0
  %6200 = vmatpush1.xpose.msra.mxu0 0.0
  %6201 = vmatprep.subr.mxu0 0.0
  %6202 = vmatpush1.xpose.msra.mxu0 0.0
  %6203 = vmatprep.subr.mxu0 0.0
  %6204 = vmatpush1.xpose.msra.mxu0 0.0
  %6205 = vmatprep.subr.mxu0 0.0
  %6206 = vmatpush1.xpose.msra.mxu0 0.0
  %6207 = vmatprep.subr.mxu0 0.0
  %6208 = vmatpush1.xpose.msra.mxu0 0.0
  %6209 = vmatprep.subr.mxu0 0.0
  %6210 = vmatpush1.xpose.msra.mxu0 0.0
  %6211 = vmatprep.subr.mxu0 0.0
  %6212 = vmatpush1.xpose.msra.mxu0 0.0
  %6213 = vmatprep.subr.mxu0 0.0
  %6214 = vmatpush1.xpose.msra.mxu0 0.0
  %6215 = vmatprep.subr.mxu0 0.0
  %6216 = vmatpush1.xpose.msra.mxu0 0.0
  %6217 = vmatprep.subr.mxu0 0.0
  %6218 = vmatpush1.xpose.msra.mxu0 0.0
  %6219 = vmatprep.subr.mxu0 0.0
  %6220 = vmatpush1.xpose.msra.mxu0 0.0
  %6221 = vmatprep.subr.mxu0 0.0
  %6222 = vmatpush1.xpose.msra.mxu0 0.0
  %6223 = vmatprep.subr.mxu0 0.0
  %6224 = vmatpush1.xpose.msra.mxu0 0.0
  %6225 = vmatprep.subr.mxu0 0.0
  %6226 = vmatpush1.xpose.msra.mxu0 0.0
  %6227 = vmatprep.subr.mxu0 0.0
  %6228 = vmatpush1.xpose.msra.mxu0 0.0
  %6229 = vmatprep.subr.mxu0 0.0
  %6230 = vmatpush1.xpose.msra.mxu0 0.0
  %6231 = vmatprep.subr.mxu0 0.0
  %6232 = vmatpush1.xpose.msra.mxu0 0.0
  %6233 = vmatprep.subr.mxu0 0.0
  %6234 = vmatpush1.xpose.msra.mxu0 0.0
  %6235 = vmatprep.subr.mxu0 0.0
  %6236 = vmatpush1.xpose.msra.mxu0 0.0
  %6237 = vmatprep.subr.mxu0 0.0
  %6238 = vmatpush1.xpose.msra.mxu0 0.0
  %6239 = vmatprep.mubr.f32.mxu0 0.0
  %6240 = vmatmul.mubr.f32.gmra.mrb[0].mxu0 %v6143
  %v6241 = vpop.f32.mrb[0].mxu0
  %v6242 = vadd.f32 %v178, %v6241
  %v6243 = vpop.f32.mrb[0].mxu0
  %6244 = vmatprep.mubr.f32.mxu0 0.0
  %6245 = vmatmul.mubr.f32.gmra.mrb[0].mxu0 %v6145
  %v6246 = vpop.f32.mrb[0].mxu0
  %v6247 = vadd.f32 %v179, %v6246
  %v6248 = vpop.f32.mrb[0].mxu0
  %6249 = vmatprep.mubr.f32.mxu0 0.0
  %6250 = vmatmul.mubr.f32.gmra.mrb[0].mxu0 %v6147
  %v6251 = vpop.f32.mrb[0].mxu0
  %v6252 = vadd.f32 %v180, %v6251
  %v6253 = vpop.f32.mrb[0].mxu0
  %6254 = vmatprep.mubr.f32.mxu0 0.0
  %6255 = vmatmul.mubr.f32.gmra.mrb[0].mxu0 %v6149
  %v6256 = vpop.f32.mrb[0].mxu0
  %v6257 = vadd.f32 %v181, %v6256
  %v6258 = vpop.f32.mrb[0].mxu0
  %6259 = vmatprep.mubr.f32.mxu0 0.0
  %6260 = vmatmul.mubr.f32.gmra.mrb[0].mxu0 %v6151
  %v6261 = vpop.f32.mrb[0].mxu0
  %v6262 = vadd.f32 %v182, %v6261
  %v6263 = vpop.f32.mrb[0].mxu0
  %6264 = vmatprep.mubr.f32.mxu0 0.0
  %6265 = vmatmul.mubr.f32.gmra.mrb[0].mxu0 %v6153
  %v6266 = vpop.f32.mrb[0].mxu0
  %v6267 = vadd.f32 %v183, %v6266
  %v6268 = vpop.f32.mrb[0].mxu0
  %6269 = vmatprep.mubr.f32.mxu0 0.0
  %6270 = vmatmul.mubr.f32.gmra.mrb[0].mxu0 %v6155
  %v6271 = vpop.f32.mrb[0].mxu0
  %v6272 = vadd.f32 %v184, %v6271
  %v6273 = vpop.f32.mrb[0].mxu0
  %6274 = vmatprep.mubr.f32.mxu0 0.0
  %6275 = vmatmul.mubr.f32.gmra.mrb[0].mxu0 %v6157
  %v6276 = vpop.f32.mrb[0].mxu0
  %v6277 = vadd.f32 %v185, %v6276
  %v6278 = vpop.f32.mrb[0].mxu0
  %6279 = vdwg.mxu0
  %v6280 = vsel %vm250, %v6242, -inf
  %6281 = vmax.xlane.f32.xlu0 %v6280
  %v6282 = vpop.xlane.xlu0 %6281
  %v6283 = vsel %vm250, %v6247, -inf
  %6284 = vmax.xlane.f32.xlu0 %v6283
  %v6285 = vpop.xlane.xlu0 %6284
  %v6286 = vsel %vm250, %v6252, -inf
  %6287 = vmax.xlane.f32.xlu0 %v6286
  %v6288 = vpop.xlane.xlu0 %6287
  %v6289 = vsel %vm250, %v6257, -inf
  %6290 = vmax.xlane.f32.xlu0 %v6289
  %v6291 = vpop.xlane.xlu0 %6290
  %v6292 = vsel %vm250, %v6262, -inf
  %6293 = vmax.xlane.f32.xlu0 %v6292
  %v6294 = vpop.xlane.xlu0 %6293
  %v6295 = vsel %vm250, %v6267, -inf
  %6296 = vmax.xlane.f32.xlu0 %v6295
  %v6297 = vpop.xlane.xlu0 %6296
  %v6298 = vsel %vm250, %v6272, -inf
  %6299 = vmax.xlane.f32.xlu0 %v6298
  %v6300 = vpop.xlane.xlu0 %6299
  %v6301 = vsel %vm250, %v6277, -inf
  %6302 = vmax.xlane.f32.xlu0 %v6301
  %v6303 = vpop.xlane.xlu0 %6302
  %v6304 = vsub.f32 %v6242, %v6282
  %v6305 = vsub.f32 %v6247, %v6285
  %v6306 = vsub.f32 %v6252, %v6288
  %v6307 = vsub.f32 %v6257, %v6291
  %v6308 = vsub.f32 %v6262, %v6294
  %v6309 = vsub.f32 %v6267, %v6297
  %v6310 = vsub.f32 %v6272, %v6300
  %v6311 = vsub.f32 %v6277, %v6303
  %v6312 = vmul.f32 %v6304, 1.442695
  %v6313 = vpow.pop %v6312
  %v6314 = vmul.f32 %v6305, 1.442695
  %v6315 = vpow.pop %v6314
  %v6316 = vmul.f32 %v6306, 1.442695
  %v6317 = vpow.pop %v6316
  %v6318 = vmul.f32 %v6307, 1.442695
  %v6319 = vpow.pop %v6318
  %v6320 = vmul.f32 %v6308, 1.442695
  %v6321 = vpow.pop %v6320
  %v6322 = vmul.f32 %v6309, 1.442695
  %v6323 = vpow.pop %v6322
  %v6324 = vmul.f32 %v6310, 1.442695
  %v6325 = vpow.pop %v6324
  %v6326 = vmul.f32 %v6311, 1.442695
  %v6327 = vpow.pop %v6326
  %v6328 = vsel %vm250, %v6313, 0.0
  %6329 = vadd.xlane.f32.xlu0 %v6328
  %v6330 = vpop.xlane.xlu0 %6329
  %v6331 = vsel %vm250, %v6315, 0.0
  %6332 = vadd.xlane.f32.xlu0 %v6331
  %v6333 = vpop.xlane.xlu0 %6332
  %v6334 = vsel %vm250, %v6317, 0.0
  %6335 = vadd.xlane.f32.xlu0 %v6334
  %v6336 = vpop.xlane.xlu0 %6335
  %v6337 = vsel %vm250, %v6319, 0.0
  %6338 = vadd.xlane.f32.xlu0 %v6337
  %v6339 = vpop.xlane.xlu0 %6338
  %v6340 = vsel %vm250, %v6321, 0.0
  %6341 = vadd.xlane.f32.xlu0 %v6340
  %v6342 = vpop.xlane.xlu0 %6341
  %v6343 = vsel %vm250, %v6323, 0.0
  %6344 = vadd.xlane.f32.xlu0 %v6343
  %v6345 = vpop.xlane.xlu0 %6344
  %v6346 = vsel %vm250, %v6325, 0.0
  %6347 = vadd.xlane.f32.xlu0 %v6346
  %v6348 = vpop.xlane.xlu0 %6347
  %v6349 = vsel %vm250, %v6327, 0.0
  %6350 = vadd.xlane.f32.xlu0 %v6349
  %v6351 = vpop.xlane.xlu0 %6350
  %v6352 = vrcp.pop %v6330
  %v6353 = vrcp.pop %v6333
  %v6354 = vrcp.pop %v6336
  %v6355 = vrcp.pop %v6339
  %v6356 = vrcp.pop %v6342
  %v6357 = vrcp.pop %v6345
  %v6358 = vrcp.pop %v6348
  %v6359 = vrcp.pop %v6351
  %v6360 = vmul.f32 %v6313, %v6352
  %v6361 = vmul.f32 %v6315, %v6353
  %v6362 = vmul.f32 %v6317, %v6354
  %v6363 = vmul.f32 %v6319, %v6355
  %v6364 = vmul.f32 %v6321, %v6356
  %v6365 = vmul.f32 %v6323, %v6357
  %v6366 = vmul.f32 %v6325, %v6358
  %v6367 = vmul.f32 %v6327, %v6359
  %6376 = vrot.lane.b32.xlu0 %v5575, 112
  %v6377 = vpop.permute.xlu0 %6376
  %6378 = vrot.lane.b32.xlu0 %v5579, 112
  %v6379 = vpop.permute.xlu0 %6378
  %6380 = vrot.lane.b32.xlu0 %v5585, 112
  %v6381 = vpop.permute.xlu0 %6380
  %6382 = vrot.lane.b32.xlu0 %v5589, 112
  %v6383 = vpop.permute.xlu0 %6382
  %6384 = vrot.lane.b32.xlu0 %v5595, 112
  %v6385 = vpop.permute.xlu0 %6384
  %6386 = vrot.lane.b32.xlu0 %v5599, 112
  %v6387 = vpop.permute.xlu0 %6386
  %6388 = vrot.lane.b32.xlu0 %v5605, 112
  %v6389 = vpop.permute.xlu0 %6388
  %6390 = vrot.lane.b32.xlu0 %v5609, 112
  %v6391 = vpop.permute.xlu0 %6390
  %v6401 = vsel %vm250, %v6360, 0
  %v6404 = vsel %vm250, %v6361, 0
  %v6407 = vsel %vm250, %v6362, 0
  %v6410 = vsel %vm250, %v6363, 0
  %v6413 = vsel %vm250, %v6364, 0
  %v6416 = vsel %vm250, %v6365, 0
  %v6419 = vsel %vm250, %v6366, 0
  %v6422 = vsel %vm250, %v6367, 0
  %6424 = vmatprep.subr.mxu0 0.0
  %6425 = vmatpush1.msra.mxu0 %v6377
  %6426 = vmatprep.subr.mxu0 0.0
  %6427 = vmatpush1.msra.mxu0 %v6379
  %6428 = vmatprep.subr.mxu0 0.0
  %6429 = vmatpush1.msra.mxu0 %v6381
  %6430 = vmatprep.subr.mxu0 0.0
  %6431 = vmatpush1.msra.mxu0 %v6383
  %6432 = vmatprep.subr.mxu0 0.0
  %6433 = vmatpush1.msra.mxu0 %v6385
  %6434 = vmatprep.subr.mxu0 0.0
  %6435 = vmatpush1.msra.mxu0 %v6387
  %6436 = vmatprep.subr.mxu0 0.0
  %6437 = vmatpush1.msra.mxu0 %v6389
  %6438 = vmatprep.subr.mxu0 0.0
  %6439 = vmatpush1.msra.mxu0 %v6391
  %6440 = vmatprep.subr.mxu0 0.0
  %6441 = vmatpush1.msra.mxu0 0.0
  %6442 = vmatprep.subr.mxu0 0.0
  %6443 = vmatpush1.msra.mxu0 0.0
  %6444 = vmatprep.subr.mxu0 0.0
  %6445 = vmatpush1.msra.mxu0 0.0
  %6446 = vmatprep.subr.mxu0 0.0
  %6447 = vmatpush1.msra.mxu0 0.0
  %6448 = vmatprep.subr.mxu0 0.0
  %6449 = vmatpush1.msra.mxu0 0.0
  %6450 = vmatprep.subr.mxu0 0.0
  %6451 = vmatpush1.msra.mxu0 0.0
  %6452 = vmatprep.subr.mxu0 0.0
  %6453 = vmatpush1.msra.mxu0 0.0
  %6454 = vmatprep.subr.mxu0 0.0
  %6455 = vmatpush1.msra.mxu0 0.0
  %6456 = vmatprep.subr.mxu0 0.0
  %6457 = vmatpush1.msra.mxu0 0.0
  %6458 = vmatprep.subr.mxu0 0.0
  %6459 = vmatpush1.msra.mxu0 0.0
  %6460 = vmatprep.subr.mxu0 0.0
  %6461 = vmatpush1.msra.mxu0 0.0
  %6462 = vmatprep.subr.mxu0 0.0
  %6463 = vmatpush1.msra.mxu0 0.0
  %6464 = vmatprep.subr.mxu0 0.0
  %6465 = vmatpush1.msra.mxu0 0.0
  %6466 = vmatprep.subr.mxu0 0.0
  %6467 = vmatpush1.msra.mxu0 0.0
  %6468 = vmatprep.subr.mxu0 0.0
  %6469 = vmatpush1.msra.mxu0 0.0
  %6470 = vmatprep.subr.mxu0 0.0
  %6471 = vmatpush1.msra.mxu0 0.0
  %6472 = vmatprep.subr.mxu0 0.0
  %6473 = vmatpush1.msra.mxu0 0.0
  %6474 = vmatprep.subr.mxu0 0.0
  %6475 = vmatpush1.msra.mxu0 0.0
  %6476 = vmatprep.subr.mxu0 0.0
  %6477 = vmatpush1.msra.mxu0 0.0
  %6478 = vmatprep.subr.mxu0 0.0
  %6479 = vmatpush1.msra.mxu0 0.0
  %6480 = vmatprep.subr.mxu0 0.0
  %6481 = vmatpush1.msra.mxu0 0.0
  %6482 = vmatprep.subr.mxu0 0.0
  %6483 = vmatpush1.msra.mxu0 0.0
  %6484 = vmatprep.subr.mxu0 0.0
  %6485 = vmatpush1.msra.mxu0 0.0
  %6486 = vmatprep.subr.mxu0 0.0
  %6487 = vmatpush1.msra.mxu0 0.0
  %6488 = vmatprep.mubr.f32.mxu0 0.0
  %6489 = vmatmul.mubr.f32.gmra.mrb[0].mxu0 %v6401
  %v6490 = vpop.f32.mrb[0].mxu0
  %v6491 = vadd.f32 0.0, %v6490
  %v6492 = vpop.f32.mrb[0].mxu0
  %6493 = vmatprep.mubr.f32.mxu0 0.0
  %6494 = vmatmul.mubr.f32.gmra.mrb[0].mxu0 %v6404
  %v6495 = vpop.f32.mrb[0].mxu0
  %v6496 = vadd.f32 0.0, %v6495
  %v6497 = vpop.f32.mrb[0].mxu0
  %6498 = vmatprep.mubr.f32.mxu0 0.0
  %6499 = vmatmul.mubr.f32.gmra.mrb[0].mxu0 %v6407
  %v6500 = vpop.f32.mrb[0].mxu0
  %v6501 = vadd.f32 0.0, %v6500
  %v6502 = vpop.f32.mrb[0].mxu0
  %6503 = vmatprep.mubr.f32.mxu0 0.0
  %6504 = vmatmul.mubr.f32.gmra.mrb[0].mxu0 %v6410
  %v6505 = vpop.f32.mrb[0].mxu0
  %v6506 = vadd.f32 0.0, %v6505
  %v6507 = vpop.f32.mrb[0].mxu0
  %6508 = vmatprep.mubr.f32.mxu0 0.0
  %6509 = vmatmul.mubr.f32.gmra.mrb[0].mxu0 %v6413
  %v6510 = vpop.f32.mrb[0].mxu0
  %v6511 = vadd.f32 0.0, %v6510
  %v6512 = vpop.f32.mrb[0].mxu0
  %6513 = vmatprep.mubr.f32.mxu0 0.0
  %6514 = vmatmul.mubr.f32.gmra.mrb[0].mxu0 %v6416
  %v6515 = vpop.f32.mrb[0].mxu0
  %v6516 = vadd.f32 0.0, %v6515
  %v6517 = vpop.f32.mrb[0].mxu0
  %6518 = vmatprep.mubr.f32.mxu0 0.0
  %6519 = vmatmul.mubr.f32.gmra.mrb[0].mxu0 %v6419
  %v6520 = vpop.f32.mrb[0].mxu0
  %v6521 = vadd.f32 0.0, %v6520
  %v6522 = vpop.f32.mrb[0].mxu0
  %6523 = vmatprep.mubr.f32.mxu0 0.0
  %6524 = vmatmul.mubr.f32.gmra.mrb[0].mxu0 %v6422
  %v6525 = vpop.f32.mrb[0].mxu0
  %v6526 = vadd.f32 0.0, %v6525
  %v6527 = vpop.f32.mrb[0].mxu0
  %6528 = vdwg.mxu0
  %v6529 = vpack.c.bf16 %v6496, %v6491
  %v6530 = vpack.c.bf16 %v6506, %v6501
  %v6531 = vpack.c.bf16 %v6516, %v6511
  %v6532 = vpack.c.bf16 %v6526, %v6521
  %v6533 = vld [vmem:[%s6011 + $0x8] sm:$0xf]
  %v6534 = vld [vmem:[%s6011 + $0xc] sm:$0xf]
  %v6537 = vunpack.c.l.b16 %v6533
  %v6538 = vunpack.c.l.b16 %v6534
  %v6539 = vpack.c.b16 %v6538, %v6537
  %v6542 = vsel %vm369, %v6529, 0
  %v6545 = vsel %vm369, %v6530, 0
  %v6548 = vsel %vm369, %v6531, 0
  %v6551 = vsel %vm369, %v6532, 0
  %6553 = vmatprep.subr.bf16.mxu0 0
  %6554 = vmatpush1.bf16.msra.mxu0 %v6539
  %6555 = vmatprep.subr.bf16.mxu0 0
  %6556 = vmatpush1.bf16.msra.mxu0 0
  %6557 = vmatprep.subr.bf16.mxu0 0
  %6558 = vmatpush1.bf16.msra.mxu0 0
  %6559 = vmatprep.subr.bf16.mxu0 0
  %6560 = vmatpush1.bf16.msra.mxu0 0
  %6561 = vmatprep.subr.bf16.mxu0 0
  %6562 = vmatpush1.bf16.msra.mxu0 0
  %6563 = vmatprep.subr.bf16.mxu0 0
  %6564 = vmatpush1.bf16.msra.mxu0 0
  %6565 = vmatprep.subr.bf16.mxu0 0
  %6566 = vmatpush1.bf16.msra.mxu0 0
  %6567 = vmatprep.subr.bf16.mxu0 0
  %6568 = vmatpush1.bf16.msra.mxu0 0
  %6569 = vmatprep.subr.bf16.mxu0 0
  %6570 = vmatpush1.bf16.msra.mxu0 0
  %6571 = vmatprep.subr.bf16.mxu0 0
  %6572 = vmatpush1.bf16.msra.mxu0 0
  %6573 = vmatprep.subr.bf16.mxu0 0
  %6574 = vmatpush1.bf16.msra.mxu0 0
  %6575 = vmatprep.subr.bf16.mxu0 0
  %6576 = vmatpush1.bf16.msra.mxu0 0
  %6577 = vmatprep.subr.bf16.mxu0 0
  %6578 = vmatpush1.bf16.msra.mxu0 0
  %6579 = vmatprep.subr.bf16.mxu0 0
  %6580 = vmatpush1.bf16.msra.mxu0 0
  %6581 = vmatprep.subr.bf16.mxu0 0
  %6582 = vmatpush1.bf16.msra.mxu0 0
  %6583 = vmatprep.subr.bf16.mxu0 0
  %6584 = vmatpush1.bf16.msra.mxu0 0
  %6585 = vmatprep.mubr.bf16.mxu0 0
  %6586 = vmatmul.mubr.bf16.gmra.mrb[0].mxu0 %v6542
  %v6587 = vpop.f32.mrb[0].mxu0
  %v6588 = vadd.f32 0.0, %v6587
  %v6589 = vpop.f32.mrb[0].mxu0
  %v6590 = vpop.f32.mrb[0].mxu0
  %v6591 = vadd.f32 0.0, %v6590
  %v6592 = vpop.f32.mrb[0].mxu0
  %6593 = vmatprep.mubr.bf16.mxu0 0
  %6594 = vmatmul.mubr.bf16.gmra.mrb[0].mxu0 %v6545
  %v6595 = vpop.f32.mrb[0].mxu0
  %v6596 = vadd.f32 0.0, %v6595
  %v6597 = vpop.f32.mrb[0].mxu0
  %v6598 = vpop.f32.mrb[0].mxu0
  %v6599 = vadd.f32 0.0, %v6598
  %v6600 = vpop.f32.mrb[0].mxu0
  %6601 = vmatprep.mubr.bf16.mxu0 0
  %6602 = vmatmul.mubr.bf16.gmra.mrb[0].mxu0 %v6548
  %v6603 = vpop.f32.mrb[0].mxu0
  %v6604 = vadd.f32 0.0, %v6603
  %v6605 = vpop.f32.mrb[0].mxu0
  %v6606 = vpop.f32.mrb[0].mxu0
  %v6607 = vadd.f32 0.0, %v6606
  %v6608 = vpop.f32.mrb[0].mxu0
  %6609 = vmatprep.mubr.bf16.mxu0 0
  %6610 = vmatmul.mubr.bf16.gmra.mrb[0].mxu0 %v6551
  %v6611 = vpop.f32.mrb[0].mxu0
  %v6612 = vadd.f32 0.0, %v6611
  %v6613 = vpop.f32.mrb[0].mxu0
  %v6614 = vpop.f32.mrb[0].mxu0
  %v6615 = vadd.f32 0.0, %v6614
  %v6616 = vpop.f32.mrb[0].mxu0
  %6617 = vdwg.mxu0
  %v6618 = vadd.f32 %v6103, %v6588
  %v6619 = vadd.f32 %v6104, %v6591
  %v6620 = vadd.f32 %v6105, %v6596
  %v6621 = vadd.f32 %v6106, %v6599
  %v6622 = vadd.f32 %v6107, %v6604
  %v6623 = vadd.f32 %v6108, %v6607
  %v6624 = vadd.f32 %v6109, %v6612
  %v6625 = vadd.f32 %v6110, %v6615
  %6626 = vrot.lane.b32.xlu0 %v5611, 96
  %v6627 = vpop.permute.xlu0 %6626
  %6628 = vrot.lane.b32.xlu0 %v5612, 96
  %v6629 = vpop.permute.xlu0 %6628
  %6630 = vrot.lane.b32.xlu0 %v5613, 96
  %v6631 = vpop.permute.xlu0 %6630
  %6632 = vrot.lane.b32.xlu0 %v5614, 96
  %v6633 = vpop.permute.xlu0 %6632
  %6634 = vrot.lane.b32.xlu0 %v5615, 96
  %v6635 = vpop.permute.xlu0 %6634
  %6636 = vrot.lane.b32.xlu0 %v5616, 96
  %v6637 = vpop.permute.xlu0 %6636
  %6638 = vrot.lane.b32.xlu0 %v5617, 96
  %v6639 = vpop.permute.xlu0 %6638
  %6640 = vrot.lane.b32.xlu0 %v5618, 96
  %v6641 = vpop.permute.xlu0 %6640
  %6642 = vrot.lane.b32.xlu0 %v5573, 32
  %v6643 = vpop.permute.xlu0 %6642
  %6644 = vrot.lane.b32.xlu0 %v5577, 32
  %v6645 = vpop.permute.xlu0 %6644
  %6646 = vrot.lane.b32.xlu0 %v5583, 32
  %v6647 = vpop.permute.xlu0 %6646
  %6648 = vrot.lane.b32.xlu0 %v5587, 32
  %v6649 = vpop.permute.xlu0 %6648
  %6650 = vrot.lane.b32.xlu0 %v5593, 32
  %v6651 = vpop.permute.xlu0 %6650
  %6652 = vrot.lane.b32.xlu0 %v5597, 32
  %v6653 = vpop.permute.xlu0 %6652
  %6654 = vrot.lane.b32.xlu0 %v5603, 32
  %v6655 = vpop.permute.xlu0 %6654
  %6656 = vrot.lane.b32.xlu0 %v5607, 32
  %v6657 = vpop.permute.xlu0 %6656
  %v6658 = vsel %vm369, %v6627, 0
  %v6660 = vsel %vm369, %v6629, 0
  %v6662 = vsel %vm369, %v6631, 0
  %v6664 = vsel %vm369, %v6633, 0
  %v6666 = vsel %vm369, %v6635, 0
  %v6668 = vsel %vm369, %v6637, 0
  %v6670 = vsel %vm369, %v6639, 0
  %v6672 = vsel %vm369, %v6641, 0
  %v6674 = vsel %vm369, %v6643, 0
  %v6676 = vsel %vm369, %v6645, 0
  %v6678 = vsel %vm369, %v6647, 0
  %v6680 = vsel %vm369, %v6649, 0
  %v6682 = vsel %vm369, %v6651, 0
  %v6684 = vsel %vm369, %v6653, 0
  %v6686 = vsel %vm369, %v6655, 0
  %v6688 = vsel %vm369, %v6657, 0
  %6690 = vmatprep.subr.mxu0 0.0
  %6691 = vmatpush1.xpose.msra.mxu0 %v6674
  %6692 = vmatprep.subr.mxu0 0.0
  %6693 = vmatpush1.xpose.msra.mxu0 %v6676
  %6694 = vmatprep.subr.mxu0 0.0
  %6695 = vmatpush1.xpose.msra.mxu0 %v6678
  %6696 = vmatprep.subr.mxu0 0.0
  %6697 = vmatpush1.xpose.msra.mxu0 %v6680
  %6698 = vmatprep.subr.mxu0 0.0
  %6699 = vmatpush1.xpose.msra.mxu0 %v6682
  %6700 = vmatprep.subr.mxu0 0.0
  %6701 = vmatpush1.xpose.msra.mxu0 %v6684
  %6702 = vmatprep.subr.mxu0 0.0
  %6703 = vmatpush1.xpose.msra.mxu0 %v6686
  %6704 = vmatprep.subr.mxu0 0.0
  %6705 = vmatpush1.xpose.msra.mxu0 %v6688
  %6706 = vmatprep.subr.mxu0 0.0
  %6707 = vmatpush1.xpose.msra.mxu0 0.0
  %6708 = vmatprep.subr.mxu0 0.0
  %6709 = vmatpush1.xpose.msra.mxu0 0.0
  %6710 = vmatprep.subr.mxu0 0.0
  %6711 = vmatpush1.xpose.msra.mxu0 0.0
  %6712 = vmatprep.subr.mxu0 0.0
  %6713 = vmatpush1.xpose.msra.mxu0 0.0
  %6714 = vmatprep.subr.mxu0 0.0
  %6715 = vmatpush1.xpose.msra.mxu0 0.0
  %6716 = vmatprep.subr.mxu0 0.0
  %6717 = vmatpush1.xpose.msra.mxu0 0.0
  %6718 = vmatprep.subr.mxu0 0.0
  %6719 = vmatpush1.xpose.msra.mxu0 0.0
  %6720 = vmatprep.subr.mxu0 0.0
  %6721 = vmatpush1.xpose.msra.mxu0 0.0
  %6722 = vmatprep.subr.mxu0 0.0
  %6723 = vmatpush1.xpose.msra.mxu0 0.0
  %6724 = vmatprep.subr.mxu0 0.0
  %6725 = vmatpush1.xpose.msra.mxu0 0.0
  %6726 = vmatprep.subr.mxu0 0.0
  %6727 = vmatpush1.xpose.msra.mxu0 0.0
  %6728 = vmatprep.subr.mxu0 0.0
  %6729 = vmatpush1.xpose.msra.mxu0 0.0
  %6730 = vmatprep.subr.mxu0 0.0
  %6731 = vmatpush1.xpose.msra.mxu0 0.0
  %6732 = vmatprep.subr.mxu0 0.0
  %6733 = vmatpush1.xpose.msra.mxu0 0.0
  %6734 = vmatprep.subr.mxu0 0.0
  %6735 = vmatpush1.xpose.msra.mxu0 0.0
  %6736 = vmatprep.subr.mxu0 0.0
  %6737 = vmatpush1.xpose.msra.mxu0 0.0
  %6738 = vmatprep.subr.mxu0 0.0
  %6739 = vmatpush1.xpose.msra.mxu0 0.0
  %6740 = vmatprep.subr.mxu0 0.0
  %6741 = vmatpush1.xpose.msra.mxu0 0.0
  %6742 = vmatprep.subr.mxu0 0.0
  %6743 = vmatpush1.xpose.msra.mxu0 0.0
  %6744 = vmatprep.subr.mxu0 0.0
  %6745 = vmatpush1.xpose.msra.mxu0 0.0
  %6746 = vmatprep.subr.mxu0 0.0
  %6747 = vmatpush1.xpose.msra.mxu0 0.0
  %6748 = vmatprep.subr.mxu0 0.0
  %6749 = vmatpush1.xpose.msra.mxu0 0.0
  %6750 = vmatprep.subr.mxu0 0.0
  %6751 = vmatpush1.xpose.msra.mxu0 0.0
  %6752 = vmatprep.subr.mxu0 0.0
  %6753 = vmatpush1.xpose.msra.mxu0 0.0
  %6754 = vmatprep.mubr.f32.mxu0 0.0
  %6755 = vmatmul.mubr.f32.gmra.mrb[0].mxu0 %v6658
  %v6756 = vpop.f32.mrb[0].mxu0
  %v6757 = vadd.f32 %v178, %v6756
  %v6758 = vpop.f32.mrb[0].mxu0
  %6759 = vmatprep.mubr.f32.mxu0 0.0
  %6760 = vmatmul.mubr.f32.gmra.mrb[0].mxu0 %v6660
  %v6761 = vpop.f32.mrb[0].mxu0
  %v6762 = vadd.f32 %v179, %v6761
  %v6763 = vpop.f32.mrb[0].mxu0
  %6764 = vmatprep.mubr.f32.mxu0 0.0
  %6765 = vmatmul.mubr.f32.gmra.mrb[0].mxu0 %v6662
  %v6766 = vpop.f32.mrb[0].mxu0
  %v6767 = vadd.f32 %v180, %v6766
  %v6768 = vpop.f32.mrb[0].mxu0
  %6769 = vmatprep.mubr.f32.mxu0 0.0
  %6770 = vmatmul.mubr.f32.gmra.mrb[0].mxu0 %v6664
  %v6771 = vpop.f32.mrb[0].mxu0
  %v6772 = vadd.f32 %v181, %v6771
  %v6773 = vpop.f32.mrb[0].mxu0
  %6774 = vmatprep.mubr.f32.mxu0 0.0
  %6775 = vmatmul.mubr.f32.gmra.mrb[0].mxu0 %v6666
  %v6776 = vpop.f32.mrb[0].mxu0
  %v6777 = vadd.f32 %v182, %v6776
  %v6778 = vpop.f32.mrb[0].mxu0
  %6779 = vmatprep.mubr.f32.mxu0 0.0
  %6780 = vmatmul.mubr.f32.gmra.mrb[0].mxu0 %v6668
  %v6781 = vpop.f32.mrb[0].mxu0
  %v6782 = vadd.f32 %v183, %v6781
  %v6783 = vpop.f32.mrb[0].mxu0
  %6784 = vmatprep.mubr.f32.mxu0 0.0
  %6785 = vmatmul.mubr.f32.gmra.mrb[0].mxu0 %v6670
  %v6786 = vpop.f32.mrb[0].mxu0
  %v6787 = vadd.f32 %v184, %v6786
  %v6788 = vpop.f32.mrb[0].mxu0
  %6789 = vmatprep.mubr.f32.mxu0 0.0
  %6790 = vmatmul.mubr.f32.gmra.mrb[0].mxu0 %v6672
  %v6791 = vpop.f32.mrb[0].mxu0
  %v6792 = vadd.f32 %v185, %v6791
  %v6793 = vpop.f32.mrb[0].mxu0
  %6794 = vdwg.mxu0
  %v6795 = vsel %vm250, %v6757, -inf
  %6796 = vmax.xlane.f32.xlu0 %v6795
  %v6797 = vpop.xlane.xlu0 %6796
  %v6798 = vsel %vm250, %v6762, -inf
  %6799 = vmax.xlane.f32.xlu0 %v6798
  %v6800 = vpop.xlane.xlu0 %6799
  %v6801 = vsel %vm250, %v6767, -inf
  %6802 = vmax.xlane.f32.xlu0 %v6801
  %v6803 = vpop.xlane.xlu0 %6802
  %v6804 = vsel %vm250, %v6772, -inf
  %6805 = vmax.xlane.f32.xlu0 %v6804
  %v6806 = vpop.xlane.xlu0 %6805
  %v6807 = vsel %vm250, %v6777, -inf
  %6808 = vmax.xlane.f32.xlu0 %v6807
  %v6809 = vpop.xlane.xlu0 %6808
  %v6810 = vsel %vm250, %v6782, -inf
  %6811 = vmax.xlane.f32.xlu0 %v6810
  %v6812 = vpop.xlane.xlu0 %6811
  %v6813 = vsel %vm250, %v6787, -inf
  %6814 = vmax.xlane.f32.xlu0 %v6813
  %v6815 = vpop.xlane.xlu0 %6814
  %v6816 = vsel %vm250, %v6792, -inf
  %6817 = vmax.xlane.f32.xlu0 %v6816
  %v6818 = vpop.xlane.xlu0 %6817
  %v6819 = vsub.f32 %v6757, %v6797
  %v6820 = vsub.f32 %v6762, %v6800
  %v6821 = vsub.f32 %v6767, %v6803
  %v6822 = vsub.f32 %v6772, %v6806
  %v6823 = vsub.f32 %v6777, %v6809
  %v6824 = vsub.f32 %v6782, %v6812
  %v6825 = vsub.f32 %v6787, %v6815
  %v6826 = vsub.f32 %v6792, %v6818
  %v6827 = vmul.f32 %v6819, 1.442695
  %v6828 = vpow.pop %v6827
  %v6829 = vmul.f32 %v6820, 1.442695
  %v6830 = vpow.pop %v6829
  %v6831 = vmul.f32 %v6821, 1.442695
  %v6832 = vpow.pop %v6831
  %v6833 = vmul.f32 %v6822, 1.442695
  %v6834 = vpow.pop %v6833
  %v6835 = vmul.f32 %v6823, 1.442695
  %v6836 = vpow.pop %v6835
  %v6837 = vmul.f32 %v6824, 1.442695
  %v6838 = vpow.pop %v6837
  %v6839 = vmul.f32 %v6825, 1.442695
  %v6840 = vpow.pop %v6839
  %v6841 = vmul.f32 %v6826, 1.442695
  %v6842 = vpow.pop %v6841
  %v6843 = vsel %vm250, %v6828, 0.0
  %6844 = vadd.xlane.f32.xlu0 %v6843
  %v6845 = vpop.xlane.xlu0 %6844
  %v6846 = vsel %vm250, %v6830, 0.0
  %6847 = vadd.xlane.f32.xlu0 %v6846
  %v6848 = vpop.xlane.xlu0 %6847
  %v6849 = vsel %vm250, %v6832, 0.0
  %6850 = vadd.xlane.f32.xlu0 %v6849
  %v6851 = vpop.xlane.xlu0 %6850
  %v6852 = vsel %vm250, %v6834, 0.0
  %6853 = vadd.xlane.f32.xlu0 %v6852
  %v6854 = vpop.xlane.xlu0 %6853
  %v6855 = vsel %vm250, %v6836, 0.0
  %6856 = vadd.xlane.f32.xlu0 %v6855
  %v6857 = vpop.xlane.xlu0 %6856
  %v6858 = vsel %vm250, %v6838, 0.0
  %6859 = vadd.xlane.f32.xlu0 %v6858
  %v6860 = vpop.xlane.xlu0 %6859
  %v6861 = vsel %vm250, %v6840, 0.0
  %6862 = vadd.xlane.f32.xlu0 %v6861
  %v6863 = vpop.xlane.xlu0 %6862
  %v6864 = vsel %vm250, %v6842, 0.0
  %6865 = vadd.xlane.f32.xlu0 %v6864
  %v6866 = vpop.xlane.xlu0 %6865
  %v6867 = vrcp.pop %v6845
  %v6868 = vrcp.pop %v6848
  %v6869 = vrcp.pop %v6851
  %v6870 = vrcp.pop %v6854
  %v6871 = vrcp.pop %v6857
  %v6872 = vrcp.pop %v6860
  %v6873 = vrcp.pop %v6863
  %v6874 = vrcp.pop %v6866
  %v6875 = vmul.f32 %v6828, %v6867
  %v6876 = vmul.f32 %v6830, %v6868
  %v6877 = vmul.f32 %v6832, %v6869
  %v6878 = vmul.f32 %v6834, %v6870
  %v6879 = vmul.f32 %v6836, %v6871
  %v6880 = vmul.f32 %v6838, %v6872
  %v6881 = vmul.f32 %v6840, %v6873
  %v6882 = vmul.f32 %v6842, %v6874
  %6883 = vrot.lane.b32.xlu0 %v5575, 96
  %v6884 = vpop.permute.xlu0 %6883
  %6885 = vrot.lane.b32.xlu0 %v5579, 96
  %v6886 = vpop.permute.xlu0 %6885
  %6887 = vrot.lane.b32.xlu0 %v5585, 96
  %v6888 = vpop.permute.xlu0 %6887
  %6889 = vrot.lane.b32.xlu0 %v5589, 96
  %v6890 = vpop.permute.xlu0 %6889
  %6891 = vrot.lane.b32.xlu0 %v5595, 96
  %v6892 = vpop.permute.xlu0 %6891
  %6893 = vrot.lane.b32.xlu0 %v5599, 96
  %v6894 = vpop.permute.xlu0 %6893
  %6895 = vrot.lane.b32.xlu0 %v5605, 96
  %v6896 = vpop.permute.xlu0 %6895
  %6897 = vrot.lane.b32.xlu0 %v5609, 96
  %v6898 = vpop.permute.xlu0 %6897
  %v6908 = vsel %vm250, %v6875, 0
  %v6911 = vsel %vm250, %v6876, 0
  %v6914 = vsel %vm250, %v6877, 0
  %v6917 = vsel %vm250, %v6878, 0
  %v6920 = vsel %vm250, %v6879, 0
  %v6923 = vsel %vm250, %v6880, 0
  %v6926 = vsel %vm250, %v6881, 0
  %v6929 = vsel %vm250, %v6882, 0
  %6931 = vmatprep.subr.mxu0 0.0
  %6932 = vmatpush1.msra.mxu0 %v6884
  %6933 = vmatprep.subr.mxu0 0.0
  %6934 = vmatpush1.msra.mxu0 %v6886
  %6935 = vmatprep.subr.mxu0 0.0
  %6936 = vmatpush1.msra.mxu0 %v6888
  %6937 = vmatprep.subr.mxu0 0.0
  %6938 = vmatpush1.msra.mxu0 %v6890
  %6939 = vmatprep.subr.mxu0 0.0
  %6940 = vmatpush1.msra.mxu0 %v6892
  %6941 = vmatprep.subr.mxu0 0.0
  %6942 = vmatpush1.msra.mxu0 %v6894
  %6943 = vmatprep.subr.mxu0 0.0
  %6944 = vmatpush1.msra.mxu0 %v6896
  %6945 = vmatprep.subr.mxu0 0.0
  %6946 = vmatpush1.msra.mxu0 %v6898
  %6947 = vmatprep.subr.mxu0 0.0
  %6948 = vmatpush1.msra.mxu0 0.0
  %6949 = vmatprep.subr.mxu0 0.0
  %6950 = vmatpush1.msra.mxu0 0.0
  %6951 = vmatprep.subr.mxu0 0.0
  %6952 = vmatpush1.msra.mxu0 0.0
  %6953 = vmatprep.subr.mxu0 0.0
  %6954 = vmatpush1.msra.mxu0 0.0
  %6955 = vmatprep.subr.mxu0 0.0
  %6956 = vmatpush1.msra.mxu0 0.0
  %6957 = vmatprep.subr.mxu0 0.0
  %6958 = vmatpush1.msra.mxu0 0.0
  %6959 = vmatprep.subr.mxu0 0.0
  %6960 = vmatpush1.msra.mxu0 0.0
  %6961 = vmatprep.subr.mxu0 0.0
  %6962 = vmatpush1.msra.mxu0 0.0
  %6963 = vmatprep.subr.mxu0 0.0
  %6964 = vmatpush1.msra.mxu0 0.0
  %6965 = vmatprep.subr.mxu0 0.0
  %6966 = vmatpush1.msra.mxu0 0.0
  %6967 = vmatprep.subr.mxu0 0.0
  %6968 = vmatpush1.msra.mxu0 0.0
  %6969 = vmatprep.subr.mxu0 0.0
  %6970 = vmatpush1.msra.mxu0 0.0
  %6971 = vmatprep.subr.mxu0 0.0
  %6972 = vmatpush1.msra.mxu0 0.0
  %6973 = vmatprep.subr.mxu0 0.0
  %6974 = vmatpush1.msra.mxu0 0.0
  %6975 = vmatprep.subr.mxu0 0.0
  %6976 = vmatpush1.msra.mxu0 0.0
  %6977 = vmatprep.subr.mxu0 0.0
  %6978 = vmatpush1.msra.mxu0 0.0
  %6979 = vmatprep.subr.mxu0 0.0
  %6980 = vmatpush1.msra.mxu0 0.0
  %6981 = vmatprep.subr.mxu0 0.0
  %6982 = vmatpush1.msra.mxu0 0.0
  %6983 = vmatprep.subr.mxu0 0.0
  %6984 = vmatpush1.msra.mxu0 0.0
  %6985 = vmatprep.subr.mxu0 0.0
  %6986 = vmatpush1.msra.mxu0 0.0
  %6987 = vmatprep.subr.mxu0 0.0
  %6988 = vmatpush1.msra.mxu0 0.0
  %6989 = vmatprep.subr.mxu0 0.0
  %6990 = vmatpush1.msra.mxu0 0.0
  %6991 = vmatprep.subr.mxu0 0.0
  %6992 = vmatpush1.msra.mxu0 0.0
  %6993 = vmatprep.subr.mxu0 0.0
  %6994 = vmatpush1.msra.mxu0 0.0
  %6995 = vmatprep.mubr.f32.mxu0 0.0
  %6996 = vmatmul.mubr.f32.gmra.mrb[0].mxu0 %v6908
  %v6997 = vpop.f32.mrb[0].mxu0
  %v6998 = vadd.f32 0.0, %v6997
  %v6999 = vpop.f32.mrb[0].mxu0
  %7000 = vmatprep.mubr.f32.mxu0 0.0
  %7001 = vmatmul.mubr.f32.gmra.mrb[0].mxu0 %v6911
  %v7002 = vpop.f32.mrb[0].mxu0
  %v7003 = vadd.f32 0.0, %v7002
  %v7004 = vpop.f32.mrb[0].mxu0
  %7005 = vmatprep.mubr.f32.mxu0 0.0
  %7006 = vmatmul.mubr.f32.gmra.mrb[0].mxu0 %v6914
  %v7007 = vpop.f32.mrb[0].mxu0
  %v7008 = vadd.f32 0.0, %v7007
  %v7009 = vpop.f32.mrb[0].mxu0
  %7010 = vmatprep.mubr.f32.mxu0 0.0
  %7011 = vmatmul.mubr.f32.gmra.mrb[0].mxu0 %v6917
  %v7012 = vpop.f32.mrb[0].mxu0
  %v7013 = vadd.f32 0.0, %v7012
  %v7014 = vpop.f32.mrb[0].mxu0
  %7015 = vmatprep.mubr.f32.mxu0 0.0
  %7016 = vmatmul.mubr.f32.gmra.mrb[0].mxu0 %v6920
  %v7017 = vpop.f32.mrb[0].mxu0
  %v7018 = vadd.f32 0.0, %v7017
  %v7019 = vpop.f32.mrb[0].mxu0
  %7020 = vmatprep.mubr.f32.mxu0 0.0
  %7021 = vmatmul.mubr.f32.gmra.mrb[0].mxu0 %v6923
  %v7022 = vpop.f32.mrb[0].mxu0
  %v7023 = vadd.f32 0.0, %v7022
  %v7024 = vpop.f32.mrb[0].mxu0
  %7025 = vmatprep.mubr.f32.mxu0 0.0
  %7026 = vmatmul.mubr.f32.gmra.mrb[0].mxu0 %v6926
  %v7027 = vpop.f32.mrb[0].mxu0
  %v7028 = vadd.f32 0.0, %v7027
  %v7029 = vpop.f32.mrb[0].mxu0
  %7030 = vmatprep.mubr.f32.mxu0 0.0
  %7031 = vmatmul.mubr.f32.gmra.mrb[0].mxu0 %v6929
  %v7032 = vpop.f32.mrb[0].mxu0
  %v7033 = vadd.f32 0.0, %v7032
  %v7034 = vpop.f32.mrb[0].mxu0
  %7035 = vdwg.mxu0
  %v7036 = vpack.c.bf16 %v7003, %v6998
  %v7037 = vpack.c.bf16 %v7013, %v7008
  %v7038 = vpack.c.bf16 %v7023, %v7018
  %v7039 = vpack.c.bf16 %v7033, %v7028
  %v7040 = vld [vmem:[%s6011 + $0x10] sm:$0xf]
  %v7041 = vld [vmem:[%s6011 + $0x14] sm:$0xf]
  %v7044 = vunpack.c.l.b16 %v7040
  %v7045 = vunpack.c.l.b16 %v7041
  %v7046 = vpack.c.b16 %v7045, %v7044
  %v7049 = vsel %vm369, %v7036, 0
  %v7052 = vsel %vm369, %v7037, 0
  %v7055 = vsel %vm369, %v7038, 0
  %v7058 = vsel %vm369, %v7039, 0
  %7060 = vmatprep.subr.bf16.mxu0 0
  %7061 = vmatpush1.bf16.msra.mxu0 %v7046
  %7062 = vmatprep.subr.bf16.mxu0 0
  %7063 = vmatpush1.bf16.msra.mxu0 0
  %7064 = vmatprep.subr.bf16.mxu0 0
  %7065 = vmatpush1.bf16.msra.mxu0 0
  %7066 = vmatprep.subr.bf16.mxu0 0
  %7067 = vmatpush1.bf16.msra.mxu0 0
  %7068 = vmatprep.subr.bf16.mxu0 0
  %7069 = vmatpush1.bf16.msra.mxu0 0
  %7070 = vmatprep.subr.bf16.mxu0 0
  %7071 = vmatpush1.bf16.msra.mxu0 0
  %7072 = vmatprep.subr.bf16.mxu0 0
  %7073 = vmatpush1.bf16.msra.mxu0 0
  %7074 = vmatprep.subr.bf16.mxu0 0
  %7075 = vmatpush1.bf16.msra.mxu0 0
  %7076 = vmatprep.subr.bf16.mxu0 0
  %7077 = vmatpush1.bf16.msra.mxu0 0
  %7078 = vmatprep.subr.bf16.mxu0 0
  %7079 = vmatpush1.bf16.msra.mxu0 0
  %7080 = vmatprep.subr.bf16.mxu0 0
  %7081 = vmatpush1.bf16.msra.mxu0 0
  %7082 = vmatprep.subr.bf16.mxu0 0
  %7083 = vmatpush1.bf16.msra.mxu0 0
  %7084 = vmatprep.subr.bf16.mxu0 0
  %7085 = vmatpush1.bf16.msra.mxu0 0
  %7086 = vmatprep.subr.bf16.mxu0 0
  %7087 = vmatpush1.bf16.msra.mxu0 0
  %7088 = vmatprep.subr.bf16.mxu0 0
  %7089 = vmatpush1.bf16.msra.mxu0 0
  %7090 = vmatprep.subr.bf16.mxu0 0
  %7091 = vmatpush1.bf16.msra.mxu0 0
  %7092 = vmatprep.mubr.bf16.mxu0 0
  %7093 = vmatmul.mubr.bf16.gmra.mrb[0].mxu0 %v7049
  %v7094 = vpop.f32.mrb[0].mxu0
  %v7095 = vadd.f32 0.0, %v7094
  %v7096 = vpop.f32.mrb[0].mxu0
  %v7097 = vpop.f32.mrb[0].mxu0
  %v7098 = vadd.f32 0.0, %v7097
  %v7099 = vpop.f32.mrb[0].mxu0
  %7100 = vmatprep.mubr.bf16.mxu0 0
  %7101 = vmatmul.mubr.bf16.gmra.mrb[0].mxu0 %v7052
  %v7102 = vpop.f32.mrb[0].mxu0
  %v7103 = vadd.f32 0.0, %v7102
  %v7104 = vpop.f32.mrb[0].mxu0
  %v7105 = vpop.f32.mrb[0].mxu0
  %v7106 = vadd.f32 0.0, %v7105
  %v7107 = vpop.f32.mrb[0].mxu0
  %7108 = vmatprep.mubr.bf16.mxu0 0
  %7109 = vmatmul.mubr.bf16.gmra.mrb[0].mxu0 %v7055
  %v7110 = vpop.f32.mrb[0].mxu0
  %v7111 = vadd.f32 0.0, %v7110
  %v7112 = vpop.f32.mrb[0].mxu0
  %v7113 = vpop.f32.mrb[0].mxu0
  %v7114 = vadd.f32 0.0, %v7113
  %v7115 = vpop.f32.mrb[0].mxu0
  %7116 = vmatprep.mubr.bf16.mxu0 0
  %7117 = vmatmul.mubr.bf16.gmra.mrb[0].mxu0 %v7058
  %v7118 = vpop.f32.mrb[0].mxu0
  %v7119 = vadd.f32 0.0, %v7118
  %v7120 = vpop.f32.mrb[0].mxu0
  %v7121 = vpop.f32.mrb[0].mxu0
  %v7122 = vadd.f32 0.0, %v7121
  %v7123 = vpop.f32.mrb[0].mxu0
  %7124 = vdwg.mxu0
  %v7125 = vadd.f32 %v6618, %v7095
  %v7126 = vadd.f32 %v6619, %v7098
  %v7127 = vadd.f32 %v6620, %v7103
  %v7128 = vadd.f32 %v6621, %v7106
  %v7129 = vadd.f32 %v6622, %v7111
  %v7130 = vadd.f32 %v6623, %v7114
  %v7131 = vadd.f32 %v6624, %v7119
  %v7132 = vadd.f32 %v6625, %v7122
  %7133 = vrot.lane.b32.xlu0 %v5611, 80
  %v7134 = vpop.permute.xlu0 %7133
  %7135 = vrot.lane.b32.xlu0 %v5612, 80
  %v7136 = vpop.permute.xlu0 %7135
  %7137 = vrot.lane.b32.xlu0 %v5613, 80
  %v7138 = vpop.permute.xlu0 %7137
  %7139 = vrot.lane.b32.xlu0 %v5614, 80
  %v7140 = vpop.permute.xlu0 %7139
  %7141 = vrot.lane.b32.xlu0 %v5615, 80
  %v7142 = vpop.permute.xlu0 %7141
  %7143 = vrot.lane.b32.xlu0 %v5616, 80
  %v7144 = vpop.permute.xlu0 %7143
  %7145 = vrot.lane.b32.xlu0 %v5617, 80
  %v7146 = vpop.permute.xlu0 %7145
  %7147 = vrot.lane.b32.xlu0 %v5618, 80
  %v7148 = vpop.permute.xlu0 %7147
  %7149 = vrot.lane.b32.xlu0 %v5573, 16
  %v7150 = vpop.permute.xlu0 %7149
  %7151 = vrot.lane.b32.xlu0 %v5577, 16
  %v7152 = vpop.permute.xlu0 %7151
  %7153 = vrot.lane.b32.xlu0 %v5583, 16
  %v7154 = vpop.permute.xlu0 %7153
  %7155 = vrot.lane.b32.xlu0 %v5587, 16
  %v7156 = vpop.permute.xlu0 %7155
  %7157 = vrot.lane.b32.xlu0 %v5593, 16
  %v7158 = vpop.permute.xlu0 %7157
  %7159 = vrot.lane.b32.xlu0 %v5597, 16
  %v7160 = vpop.permute.xlu0 %7159
  %7161 = vrot.lane.b32.xlu0 %v5603, 16
  %v7162 = vpop.permute.xlu0 %7161
  %7163 = vrot.lane.b32.xlu0 %v5607, 16
  %v7164 = vpop.permute.xlu0 %7163
  %v7165 = vsel %vm369, %v7134, 0
  %v7167 = vsel %vm369, %v7136, 0
  %v7169 = vsel %vm369, %v7138, 0
  %v7171 = vsel %vm369, %v7140, 0
  %v7173 = vsel %vm369, %v7142, 0
  %v7175 = vsel %vm369, %v7144, 0
  %v7177 = vsel %vm369, %v7146, 0
  %v7179 = vsel %vm369, %v7148, 0
  %v7181 = vsel %vm369, %v7150, 0
  %v7183 = vsel %vm369, %v7152, 0
  %v7185 = vsel %vm369, %v7154, 0
  %v7187 = vsel %vm369, %v7156, 0
  %v7189 = vsel %vm369, %v7158, 0
  %v7191 = vsel %vm369, %v7160, 0
  %v7193 = vsel %vm369, %v7162, 0
  %v7195 = vsel %vm369, %v7164, 0
  %7197 = vmatprep.subr.mxu0 0.0
  %7198 = vmatpush1.xpose.msra.mxu0 %v7181
  %7199 = vmatprep.subr.mxu0 0.0
  %7200 = vmatpush1.xpose.msra.mxu0 %v7183
  %7201 = vmatprep.subr.mxu0 0.0
  %7202 = vmatpush1.xpose.msra.mxu0 %v7185
  %7203 = vmatprep.subr.mxu0 0.0
  %7204 = vmatpush1.xpose.msra.mxu0 %v7187
  %7205 = vmatprep.subr.mxu0 0.0
  %7206 = vmatpush1.xpose.msra.mxu0 %v7189
  %7207 = vmatprep.subr.mxu0 0.0
  %7208 = vmatpush1.xpose.msra.mxu0 %v7191
  %7209 = vmatprep.subr.mxu0 0.0
  %7210 = vmatpush1.xpose.msra.mxu0 %v7193
  %7211 = vmatprep.subr.mxu0 0.0
  %7212 = vmatpush1.xpose.msra.mxu0 %v7195
  %7213 = vmatprep.subr.mxu0 0.0
  %7214 = vmatpush1.xpose.msra.mxu0 0.0
  %7215 = vmatprep.subr.mxu0 0.0
  %7216 = vmatpush1.xpose.msra.mxu0 0.0
  %7217 = vmatprep.subr.mxu0 0.0
  %7218 = vmatpush1.xpose.msra.mxu0 0.0
  %7219 = vmatprep.subr.mxu0 0.0
  %7220 = vmatpush1.xpose.msra.mxu0 0.0
  %7221 = vmatprep.subr.mxu0 0.0
  %7222 = vmatpush1.xpose.msra.mxu0 0.0
  %7223 = vmatprep.subr.mxu0 0.0
  %7224 = vmatpush1.xpose.msra.mxu0 0.0
  %7225 = vmatprep.subr.mxu0 0.0
  %7226 = vmatpush1.xpose.msra.mxu0 0.0
  %7227 = vmatprep.subr.mxu0 0.0
  %7228 = vmatpush1.xpose.msra.mxu0 0.0
  %7229 = vmatprep.subr.mxu0 0.0
  %7230 = vmatpush1.xpose.msra.mxu0 0.0
  %7231 = vmatprep.subr.mxu0 0.0
  %7232 = vmatpush1.xpose.msra.mxu0 0.0
  %7233 = vmatprep.subr.mxu0 0.0
  %7234 = vmatpush1.xpose.msra.mxu0 0.0
  %7235 = vmatprep.subr.mxu0 0.0
  %7236 = vmatpush1.xpose.msra.mxu0 0.0
  %7237 = vmatprep.subr.mxu0 0.0
  %7238 = vmatpush1.xpose.msra.mxu0 0.0
  %7239 = vmatprep.subr.mxu0 0.0
  %7240 = vmatpush1.xpose.msra.mxu0 0.0
  %7241 = vmatprep.subr.mxu0 0.0
  %7242 = vmatpush1.xpose.msra.mxu0 0.0
  %7243 = vmatprep.subr.mxu0 0.0
  %7244 = vmatpush1.xpose.msra.mxu0 0.0
  %7245 = vmatprep.subr.mxu0 0.0
  %7246 = vmatpush1.xpose.msra.mxu0 0.0
  %7247 = vmatprep.subr.mxu0 0.0
  %7248 = vmatpush1.xpose.msra.mxu0 0.0
  %7249 = vmatprep.subr.mxu0 0.0
  %7250 = vmatpush1.xpose.msra.mxu0 0.0
  %7251 = vmatprep.subr.mxu0 0.0
  %7252 = vmatpush1.xpose.msra.mxu0 0.0
  %7253 = vmatprep.subr.mxu0 0.0
  %7254 = vmatpush1.xpose.msra.mxu0 0.0
  %7255 = vmatprep.subr.mxu0 0.0
  %7256 = vmatpush1.xpose.msra.mxu0 0.0
  %7257 = vmatprep.subr.mxu0 0.0
  %7258 = vmatpush1.xpose.msra.mxu0 0.0
  %7259 = vmatprep.subr.mxu0 0.0
  %7260 = vmatpush1.xpose.msra.mxu0 0.0
  %7261 = vmatprep.mubr.f32.mxu0 0.0
  %7262 = vmatmul.mubr.f32.gmra.mrb[0].mxu0 %v7165
  %v7263 = vpop.f32.mrb[0].mxu0
  %v7264 = vadd.f32 %v178, %v7263
  %v7265 = vpop.f32.mrb[0].mxu0
  %7266 = vmatprep.mubr.f32.mxu0 0.0
  %7267 = vmatmul.mubr.f32.gmra.mrb[0].mxu0 %v7167
  %v7268 = vpop.f32.mrb[0].mxu0
  %v7269 = vadd.f32 %v179, %v7268
  %v7270 = vpop.f32.mrb[0].mxu0
  %7271 = vmatprep.mubr.f32.mxu0 0.0
  %7272 = vmatmul.mubr.f32.gmra.mrb[0].mxu0 %v7169
  %v7273 = vpop.f32.mrb[0].mxu0
  %v7274 = vadd.f32 %v180, %v7273
  %v7275 = vpop.f32.mrb[0].mxu0
  %7276 = vmatprep.mubr.f32.mxu0 0.0
  %7277 = vmatmul.mubr.f32.gmra.mrb[0].mxu0 %v7171
  %v7278 = vpop.f32.mrb[0].mxu0
  %v7279 = vadd.f32 %v181, %v7278
  %v7280 = vpop.f32.mrb[0].mxu0
  %7281 = vmatprep.mubr.f32.mxu0 0.0
  %7282 = vmatmul.mubr.f32.gmra.mrb[0].mxu0 %v7173
  %v7283 = vpop.f32.mrb[0].mxu0
  %v7284 = vadd.f32 %v182, %v7283
  %v7285 = vpop.f32.mrb[0].mxu0
  %7286 = vmatprep.mubr.f32.mxu0 0.0
  %7287 = vmatmul.mubr.f32.gmra.mrb[0].mxu0 %v7175
  %v7288 = vpop.f32.mrb[0].mxu0
  %v7289 = vadd.f32 %v183, %v7288
  %v7290 = vpop.f32.mrb[0].mxu0
  %7291 = vmatprep.mubr.f32.mxu0 0.0
  %7292 = vmatmul.mubr.f32.gmra.mrb[0].mxu0 %v7177
  %v7293 = vpop.f32.mrb[0].mxu0
  %v7294 = vadd.f32 %v184, %v7293
  %v7295 = vpop.f32.mrb[0].mxu0
  %7296 = vmatprep.mubr.f32.mxu0 0.0
  %7297 = vmatmul.mubr.f32.gmra.mrb[0].mxu0 %v7179
  %v7298 = vpop.f32.mrb[0].mxu0
  %v7299 = vadd.f32 %v185, %v7298
  %v7300 = vpop.f32.mrb[0].mxu0
  %7301 = vdwg.mxu0
  %v7302 = vsel %vm250, %v7264, -inf
  %7303 = vmax.xlane.f32.xlu0 %v7302
  %v7304 = vpop.xlane.xlu0 %7303
  %v7305 = vsel %vm250, %v7269, -inf
  %7306 = vmax.xlane.f32.xlu0 %v7305
  %v7307 = vpop.xlane.xlu0 %7306
  %v7308 = vsel %vm250, %v7274, -inf
  %7309 = vmax.xlane.f32.xlu0 %v7308
  %v7310 = vpop.xlane.xlu0 %7309
  %v7311 = vsel %vm250, %v7279, -inf
  %7312 = vmax.xlane.f32.xlu0 %v7311
  %v7313 = vpop.xlane.xlu0 %7312
  %v7314 = vsel %vm250, %v7284, -inf
  %7315 = vmax.xlane.f32.xlu0 %v7314
  %v7316 = vpop.xlane.xlu0 %7315
  %v7317 = vsel %vm250, %v7289, -inf
  %7318 = vmax.xlane.f32.xlu0 %v7317
  %v7319 = vpop.xlane.xlu0 %7318
  %v7320 = vsel %vm250, %v7294, -inf
  %7321 = vmax.xlane.f32.xlu0 %v7320
  %v7322 = vpop.xlane.xlu0 %7321
  %v7323 = vsel %vm250, %v7299, -inf
  %7324 = vmax.xlane.f32.xlu0 %v7323
  %v7325 = vpop.xlane.xlu0 %7324
  %v7326 = vsub.f32 %v7264, %v7304
  %v7327 = vsub.f32 %v7269, %v7307
  %v7328 = vsub.f32 %v7274, %v7310
  %v7329 = vsub.f32 %v7279, %v7313
  %v7330 = vsub.f32 %v7284, %v7316
  %v7331 = vsub.f32 %v7289, %v7319
  %v7332 = vsub.f32 %v7294, %v7322
  %v7333 = vsub.f32 %v7299, %v7325
  %v7334 = vmul.f32 %v7326, 1.442695
  %v7335 = vpow.pop %v7334
  %v7336 = vmul.f32 %v7327, 1.442695
  %v7337 = vpow.pop %v7336
  %v7338 = vmul.f32 %v7328, 1.442695
  %v7339 = vpow.pop %v7338
  %v7340 = vmul.f32 %v7329, 1.442695
  %v7341 = vpow.pop %v7340
  %v7342 = vmul.f32 %v7330, 1.442695
  %v7343 = vpow.pop %v7342
  %v7344 = vmul.f32 %v7331, 1.442695
  %v7345 = vpow.pop %v7344
  %v7346 = vmul.f32 %v7332, 1.442695
  %v7347 = vpow.pop %v7346
  %v7348 = vmul.f32 %v7333, 1.442695
  %v7349 = vpow.pop %v7348
  %v7350 = vsel %vm250, %v7335, 0.0
  %7351 = vadd.xlane.f32.xlu0 %v7350
  %v7352 = vpop.xlane.xlu0 %7351
  %v7353 = vsel %vm250, %v7337, 0.0
  %7354 = vadd.xlane.f32.xlu0 %v7353
  %v7355 = vpop.xlane.xlu0 %7354
  %v7356 = vsel %vm250, %v7339, 0.0
  %7357 = vadd.xlane.f32.xlu0 %v7356
  %v7358 = vpop.xlane.xlu0 %7357
  %v7359 = vsel %vm250, %v7341, 0.0
  %7360 = vadd.xlane.f32.xlu0 %v7359
  %v7361 = vpop.xlane.xlu0 %7360
  %v7362 = vsel %vm250, %v7343, 0.0
  %7363 = vadd.xlane.f32.xlu0 %v7362
  %v7364 = vpop.xlane.xlu0 %7363
  %v7365 = vsel %vm250, %v7345, 0.0
  %7366 = vadd.xlane.f32.xlu0 %v7365
  %v7367 = vpop.xlane.xlu0 %7366
  %v7368 = vsel %vm250, %v7347, 0.0
  %7369 = vadd.xlane.f32.xlu0 %v7368
  %v7370 = vpop.xlane.xlu0 %7369
  %v7371 = vsel %vm250, %v7349, 0.0
  %7372 = vadd.xlane.f32.xlu0 %v7371
  %v7373 = vpop.xlane.xlu0 %7372
  %v7374 = vrcp.pop %v7352
  %v7375 = vrcp.pop %v7355
  %v7376 = vrcp.pop %v7358
  %v7377 = vrcp.pop %v7361
  %v7378 = vrcp.pop %v7364
  %v7379 = vrcp.pop %v7367
  %v7380 = vrcp.pop %v7370
  %v7381 = vrcp.pop %v7373
  %v7382 = vmul.f32 %v7335, %v7374
  %v7383 = vmul.f32 %v7337, %v7375
  %v7384 = vmul.f32 %v7339, %v7376
  %v7385 = vmul.f32 %v7341, %v7377
  %v7386 = vmul.f32 %v7343, %v7378
  %v7387 = vmul.f32 %v7345, %v7379
  %v7388 = vmul.f32 %v7347, %v7380
  %v7389 = vmul.f32 %v7349, %v7381
  %7390 = vrot.lane.b32.xlu0 %v5575, 80
  %v7391 = vpop.permute.xlu0 %7390
  %7392 = vrot.lane.b32.xlu0 %v5579, 80
  %v7393 = vpop.permute.xlu0 %7392
  %7394 = vrot.lane.b32.xlu0 %v5585, 80
  %v7395 = vpop.permute.xlu0 %7394
  %7396 = vrot.lane.b32.xlu0 %v5589, 80
  %v7397 = vpop.permute.xlu0 %7396
  %7398 = vrot.lane.b32.xlu0 %v5595, 80
  %v7399 = vpop.permute.xlu0 %7398
  %7400 = vrot.lane.b32.xlu0 %v5599, 80
  %v7401 = vpop.permute.xlu0 %7400
  %7402 = vrot.lane.b32.xlu0 %v5605, 80
  %v7403 = vpop.permute.xlu0 %7402
  %7404 = vrot.lane.b32.xlu0 %v5609, 80
  %v7405 = vpop.permute.xlu0 %7404
  %v7415 = vsel %vm250, %v7382, 0
  %v7418 = vsel %vm250, %v7383, 0
  %v7421 = vsel %vm250, %v7384, 0
  %v7424 = vsel %vm250, %v7385, 0
  %v7427 = vsel %vm250, %v7386, 0
  %v7430 = vsel %vm250, %v7387, 0
  %v7433 = vsel %vm250, %v7388, 0
  %v7436 = vsel %vm250, %v7389, 0
  %7438 = vmatprep.subr.mxu0 0.0
  %7439 = vmatpush1.msra.mxu0 %v7391
  %7440 = vmatprep.subr.mxu0 0.0
  %7441 = vmatpush1.msra.mxu0 %v7393
  %7442 = vmatprep.subr.mxu0 0.0
  %7443 = vmatpush1.msra.mxu0 %v7395
  %7444 = vmatprep.subr.mxu0 0.0
  %7445 = vmatpush1.msra.mxu0 %v7397
  %7446 = vmatprep.subr.mxu0 0.0
  %7447 = vmatpush1.msra.mxu0 %v7399
  %7448 = vmatprep.subr.mxu0 0.0
  %7449 = vmatpush1.msra.mxu0 %v7401
  %7450 = vmatprep.subr.mxu0 0.0
  %7451 = vmatpush1.msra.mxu0 %v7403
  %7452 = vmatprep.subr.mxu0 0.0
  %7453 = vmatpush1.msra.mxu0 %v7405
  %7454 = vmatprep.subr.mxu0 0.0
  %7455 = vmatpush1.msra.mxu0 0.0
  %7456 = vmatprep.subr.mxu0 0.0
  %7457 = vmatpush1.msra.mxu0 0.0
  %7458 = vmatprep.subr.mxu0 0.0
  %7459 = vmatpush1.msra.mxu0 0.0
  %7460 = vmatprep.subr.mxu0 0.0
  %7461 = vmatpush1.msra.mxu0 0.0
  %7462 = vmatprep.subr.mxu0 0.0
  %7463 = vmatpush1.msra.mxu0 0.0
  %7464 = vmatprep.subr.mxu0 0.0
  %7465 = vmatpush1.msra.mxu0 0.0
  %7466 = vmatprep.subr.mxu0 0.0
  %7467 = vmatpush1.msra.mxu0 0.0
  %7468 = vmatprep.subr.mxu0 0.0
  %7469 = vmatpush1.msra.mxu0 0.0
  %7470 = vmatprep.subr.mxu0 0.0
  %7471 = vmatpush1.msra.mxu0 0.0
  %7472 = vmatprep.subr.mxu0 0.0
  %7473 = vmatpush1.msra.mxu0 0.0
  %7474 = vmatprep.subr.mxu0 0.0
  %7475 = vmatpush1.msra.mxu0 0.0
  %7476 = vmatprep.subr.mxu0 0.0
  %7477 = vmatpush1.msra.mxu0 0.0
  %7478 = vmatprep.subr.mxu0 0.0
  %7479 = vmatpush1.msra.mxu0 0.0
  %7480 = vmatprep.subr.mxu0 0.0
  %7481 = vmatpush1.msra.mxu0 0.0
  %7482 = vmatprep.subr.mxu0 0.0
  %7483 = vmatpush1.msra.mxu0 0.0
  %7484 = vmatprep.subr.mxu0 0.0
  %7485 = vmatpush1.msra.mxu0 0.0
  %7486 = vmatprep.subr.mxu0 0.0
  %7487 = vmatpush1.msra.mxu0 0.0
  %7488 = vmatprep.subr.mxu0 0.0
  %7489 = vmatpush1.msra.mxu0 0.0
  %7490 = vmatprep.subr.mxu0 0.0
  %7491 = vmatpush1.msra.mxu0 0.0
  %7492 = vmatprep.subr.mxu0 0.0
  %7493 = vmatpush1.msra.mxu0 0.0
  %7494 = vmatprep.subr.mxu0 0.0
  %7495 = vmatpush1.msra.mxu0 0.0
  %7496 = vmatprep.subr.mxu0 0.0
  %7497 = vmatpush1.msra.mxu0 0.0
  %7498 = vmatprep.subr.mxu0 0.0
  %7499 = vmatpush1.msra.mxu0 0.0
  %7500 = vmatprep.subr.mxu0 0.0
  %7501 = vmatpush1.msra.mxu0 0.0
  %7502 = vmatprep.mubr.f32.mxu0 0.0
  %7503 = vmatmul.mubr.f32.gmra.mrb[0].mxu0 %v7415
  %v7504 = vpop.f32.mrb[0].mxu0
  %v7505 = vadd.f32 0.0, %v7504
  %v7506 = vpop.f32.mrb[0].mxu0
  %7507 = vmatprep.mubr.f32.mxu0 0.0
  %7508 = vmatmul.mubr.f32.gmra.mrb[0].mxu0 %v7418
  %v7509 = vpop.f32.mrb[0].mxu0
  %v7510 = vadd.f32 0.0, %v7509
  %v7511 = vpop.f32.mrb[0].mxu0
  %7512 = vmatprep.mubr.f32.mxu0 0.0
  %7513 = vmatmul.mubr.f32.gmra.mrb[0].mxu0 %v7421
  %v7514 = vpop.f32.mrb[0].mxu0
  %v7515 = vadd.f32 0.0, %v7514
  %v7516 = vpop.f32.mrb[0].mxu0
  %7517 = vmatprep.mubr.f32.mxu0 0.0
  %7518 = vmatmul.mubr.f32.gmra.mrb[0].mxu0 %v7424
  %v7519 = vpop.f32.mrb[0].mxu0
  %v7520 = vadd.f32 0.0, %v7519
  %v7521 = vpop.f32.mrb[0].mxu0
  %7522 = vmatprep.mubr.f32.mxu0 0.0
  %7523 = vmatmul.mubr.f32.gmra.mrb[0].mxu0 %v7427
  %v7524 = vpop.f32.mrb[0].mxu0
  %v7525 = vadd.f32 0.0, %v7524
  %v7526 = vpop.f32.mrb[0].mxu0
  %7527 = vmatprep.mubr.f32.mxu0 0.0
  %7528 = vmatmul.mubr.f32.gmra.mrb[0].mxu0 %v7430
  %v7529 = vpop.f32.mrb[0].mxu0
  %v7530 = vadd.f32 0.0, %v7529
  %v7531 = vpop.f32.mrb[0].mxu0
  %7532 = vmatprep.mubr.f32.mxu0 0.0
  %7533 = vmatmul.mubr.f32.gmra.mrb[0].mxu0 %v7433
  %v7534 = vpop.f32.mrb[0].mxu0
  %v7535 = vadd.f32 0.0, %v7534
  %v7536 = vpop.f32.mrb[0].mxu0
  %7537 = vmatprep.mubr.f32.mxu0 0.0
  %7538 = vmatmul.mubr.f32.gmra.mrb[0].mxu0 %v7436
  %v7539 = vpop.f32.mrb[0].mxu0
  %v7540 = vadd.f32 0.0, %v7539
  %v7541 = vpop.f32.mrb[0].mxu0
  %7542 = vdwg.mxu0
  %v7543 = vpack.c.bf16 %v7510, %v7505
  %v7544 = vpack.c.bf16 %v7520, %v7515
  %v7545 = vpack.c.bf16 %v7530, %v7525
  %v7546 = vpack.c.bf16 %v7540, %v7535
  %v7547 = vld [vmem:[%s6011 + $0x18] sm:$0xf]
  %v7548 = vld [vmem:[%s6011 + $0x1c] sm:$0xf]
  %v7551 = vunpack.c.l.b16 %v7547
  %v7552 = vunpack.c.l.b16 %v7548
  %v7553 = vpack.c.b16 %v7552, %v7551
  %v7556 = vsel %vm369, %v7543, 0
  %v7559 = vsel %vm369, %v7544, 0
  %v7562 = vsel %vm369, %v7545, 0
  %v7565 = vsel %vm369, %v7546, 0
  %7567 = vmatprep.subr.bf16.mxu0 0
  %7568 = vmatpush1.bf16.msra.mxu0 %v7553
  %7569 = vmatprep.subr.bf16.mxu0 0
  %7570 = vmatpush1.bf16.msra.mxu0 0
  %7571 = vmatprep.subr.bf16.mxu0 0
  %7572 = vmatpush1.bf16.msra.mxu0 0
  %7573 = vmatprep.subr.bf16.mxu0 0
  %7574 = vmatpush1.bf16.msra.mxu0 0
  %7575 = vmatprep.subr.bf16.mxu0 0
  %7576 = vmatpush1.bf16.msra.mxu0 0
  %7577 = vmatprep.subr.bf16.mxu0 0
  %7578 = vmatpush1.bf16.msra.mxu0 0
  %7579 = vmatprep.subr.bf16.mxu0 0
  %7580 = vmatpush1.bf16.msra.mxu0 0
  %7581 = vmatprep.subr.bf16.mxu0 0
  %7582 = vmatpush1.bf16.msra.mxu0 0
  %7583 = vmatprep.subr.bf16.mxu0 0
  %7584 = vmatpush1.bf16.msra.mxu0 0
  %7585 = vmatprep.subr.bf16.mxu0 0
  %7586 = vmatpush1.bf16.msra.mxu0 0
  %7587 = vmatprep.subr.bf16.mxu0 0
  %7588 = vmatpush1.bf16.msra.mxu0 0
  %7589 = vmatprep.subr.bf16.mxu0 0
  %7590 = vmatpush1.bf16.msra.mxu0 0
  %7591 = vmatprep.subr.bf16.mxu0 0
  %7592 = vmatpush1.bf16.msra.mxu0 0
  %7593 = vmatprep.subr.bf16.mxu0 0
  %7594 = vmatpush1.bf16.msra.mxu0 0
  %7595 = vmatprep.subr.bf16.mxu0 0
  %7596 = vmatpush1.bf16.msra.mxu0 0
  %7597 = vmatprep.subr.bf16.mxu0 0
  %7598 = vmatpush1.bf16.msra.mxu0 0
  %7599 = vmatprep.mubr.bf16.mxu0 0
  %7600 = vmatmul.mubr.bf16.gmra.mrb[0].mxu0 %v7556
  %v7601 = vpop.f32.mrb[0].mxu0
  %v7602 = vadd.f32 0.0, %v7601
  %v7603 = vpop.f32.mrb[0].mxu0
  %v7604 = vpop.f32.mrb[0].mxu0
  %v7605 = vadd.f32 0.0, %v7604
  %v7606 = vpop.f32.mrb[0].mxu0
  %7607 = vmatprep.mubr.bf16.mxu0 0
  %7608 = vmatmul.mubr.bf16.gmra.mrb[0].mxu0 %v7559
  %v7609 = vpop.f32.mrb[0].mxu0
  %v7610 = vadd.f32 0.0, %v7609
  %v7611 = vpop.f32.mrb[0].mxu0
  %v7612 = vpop.f32.mrb[0].mxu0
  %v7613 = vadd.f32 0.0, %v7612
  %v7614 = vpop.f32.mrb[0].mxu0
  %7615 = vmatprep.mubr.bf16.mxu0 0
  %7616 = vmatmul.mubr.bf16.gmra.mrb[0].mxu0 %v7562
  %v7617 = vpop.f32.mrb[0].mxu0
  %v7618 = vadd.f32 0.0, %v7617
  %v7619 = vpop.f32.mrb[0].mxu0
  %v7620 = vpop.f32.mrb[0].mxu0
  %v7621 = vadd.f32 0.0, %v7620
  %v7622 = vpop.f32.mrb[0].mxu0
  %7623 = vmatprep.mubr.bf16.mxu0 0
  %7624 = vmatmul.mubr.bf16.gmra.mrb[0].mxu0 %v7565
  %v7625 = vpop.f32.mrb[0].mxu0
  %v7626 = vadd.f32 0.0, %v7625
  %v7627 = vpop.f32.mrb[0].mxu0
  %v7628 = vpop.f32.mrb[0].mxu0
  %v7629 = vadd.f32 0.0, %v7628
  %v7630 = vpop.f32.mrb[0].mxu0
  %7631 = vdwg.mxu0
  %v7632 = vadd.f32 %v7125, %v7602
  %v7633 = vadd.f32 %v7126, %v7605
  %v7634 = vadd.f32 %v7127, %v7610
  %v7635 = vadd.f32 %v7128, %v7613
  %v7636 = vadd.f32 %v7129, %v7618
  %v7637 = vadd.f32 %v7130, %v7621
  %v7638 = vadd.f32 %v7131, %v7626
  %v7639 = vadd.f32 %v7132, %v7629
  %v7640 = vadd.f32 %v5452, %v7632
  %v7641 = vadd.f32 %v5453, %v7633
  %v7642 = vadd.f32 %v5454, %v7634
  %v7643 = vadd.f32 %v5455, %v7635
  %v7644 = vadd.f32 %v5456, %v7636
  %v7645 = vadd.f32 %v5457, %v7637
  %v7646 = vadd.f32 %v5458, %v7638
  %v7647 = vadd.f32 %v5459, %v7639
  %s7648 = scalar_lea.vmem %s14, 1
  %v7649 = vld [vmem:[%s7648] sm:$0x1]
  %s7650 = scalar_lea.vmem %s15, 1
  %v7651 = vld [vmem:[%s7650] sm:$0x1]
  %v7652 = vsel %vm250, %v7640, 0.0
  %7653 = vadd.xlane.f32.xlu0 %v7652
  %v7654 = vpop.xlane.xlu0 %7653
  %v7655 = vsel %vm250, %v7641, 0.0
  %7656 = vadd.xlane.f32.xlu0 %v7655
  %v7657 = vpop.xlane.xlu0 %7656
  %v7658 = vsel %vm250, %v7642, 0.0
  %7659 = vadd.xlane.f32.xlu0 %v7658
  %v7660 = vpop.xlane.xlu0 %7659
  %v7661 = vsel %vm250, %v7643, 0.0
  %7662 = vadd.xlane.f32.xlu0 %v7661
  %v7663 = vpop.xlane.xlu0 %7662
  %v7664 = vsel %vm250, %v7644, 0.0
  %7665 = vadd.xlane.f32.xlu0 %v7664
  %v7666 = vpop.xlane.xlu0 %7665
  %v7667 = vsel %vm250, %v7645, 0.0
  %7668 = vadd.xlane.f32.xlu0 %v7667
  %v7669 = vpop.xlane.xlu0 %7668
  %v7670 = vsel %vm250, %v7646, 0.0
  %7671 = vadd.xlane.f32.xlu0 %v7670
  %v7672 = vpop.xlane.xlu0 %7671
  %v7673 = vsel %vm250, %v7647, 0.0
  %7674 = vadd.xlane.f32.xlu0 %v7673
  %v7675 = vpop.xlane.xlu0 %7674
  %v7676 = vmul.f32 %v7654, %v2398
  %v7677 = vmul.f32 %v7657, %v2398
  %v7678 = vmul.f32 %v7660, %v2398
  %v7679 = vmul.f32 %v7663, %v2398
  %v7680 = vmul.f32 %v7666, %v2398
  %v7681 = vmul.f32 %v7669, %v2398
  %v7682 = vmul.f32 %v7672, %v2398
  %v7683 = vmul.f32 %v7675, %v2398
  %v7684 = vsub.f32 %v7640, %v7676
  %v7685 = vsub.f32 %v7641, %v7677
  %v7686 = vsub.f32 %v7642, %v7678
  %v7687 = vsub.f32 %v7643, %v7679
  %v7688 = vsub.f32 %v7644, %v7680
  %v7689 = vsub.f32 %v7645, %v7681
  %v7690 = vsub.f32 %v7646, %v7682
  %v7691 = vsub.f32 %v7647, %v7683
  %v7692 = vmul.f32 %v7684, %v7684
  %v7693 = vmul.f32 %v7685, %v7685
  %v7694 = vmul.f32 %v7686, %v7686
  %v7695 = vmul.f32 %v7687, %v7687
  %v7696 = vmul.f32 %v7688, %v7688
  %v7697 = vmul.f32 %v7689, %v7689
  %v7698 = vmul.f32 %v7690, %v7690
  %v7699 = vmul.f32 %v7691, %v7691
  %v7700 = vsel %vm250, %v7692, 0.0
  %7701 = vadd.xlane.f32.xlu0 %v7700
  %v7702 = vpop.xlane.xlu0 %7701
  %v7703 = vsel %vm250, %v7693, 0.0
  %7704 = vadd.xlane.f32.xlu0 %v7703
  %v7705 = vpop.xlane.xlu0 %7704
  %v7706 = vsel %vm250, %v7694, 0.0
  %7707 = vadd.xlane.f32.xlu0 %v7706
  %v7708 = vpop.xlane.xlu0 %7707
  %v7709 = vsel %vm250, %v7695, 0.0
  %7710 = vadd.xlane.f32.xlu0 %v7709
  %v7711 = vpop.xlane.xlu0 %7710
  %v7712 = vsel %vm250, %v7696, 0.0
  %7713 = vadd.xlane.f32.xlu0 %v7712
  %v7714 = vpop.xlane.xlu0 %7713
  %v7715 = vsel %vm250, %v7697, 0.0
  %7716 = vadd.xlane.f32.xlu0 %v7715
  %v7717 = vpop.xlane.xlu0 %7716
  %v7718 = vsel %vm250, %v7698, 0.0
  %7719 = vadd.xlane.f32.xlu0 %v7718
  %v7720 = vpop.xlane.xlu0 %7719
  %v7721 = vsel %vm250, %v7699, 0.0
  %7722 = vadd.xlane.f32.xlu0 %v7721
  %v7723 = vpop.xlane.xlu0 %7722
  %v7724 = vmul.f32 %v7702, %v2398
  %v7725 = vmul.f32 %v7705, %v2398
  %v7726 = vmul.f32 %v7708, %v2398
  %v7727 = vmul.f32 %v7711, %v2398
  %v7728 = vmul.f32 %v7714, %v2398
  %v7729 = vmul.f32 %v7717, %v2398
  %v7730 = vmul.f32 %v7720, %v2398
  %v7731 = vmul.f32 %v7723, %v2398
  %v7732 = vadd.f32 %v7724, 1e-05
  %v7733 = vadd.f32 %v7725, 1e-05
  %v7734 = vadd.f32 %v7726, 1e-05
  %v7735 = vadd.f32 %v7727, 1e-05
  %v7736 = vadd.f32 %v7728, 1e-05
  %v7737 = vadd.f32 %v7729, 1e-05
  %v7738 = vadd.f32 %v7730, 1e-05
  %v7739 = vadd.f32 %v7731, 1e-05
  %v7740 = vrsqrt.pop %v7732
  %v7741 = vrsqrt.pop %v7733
  %v7742 = vrsqrt.pop %v7734
  %v7743 = vrsqrt.pop %v7735
  %v7744 = vrsqrt.pop %v7736
  %v7745 = vrsqrt.pop %v7737
  %v7746 = vrsqrt.pop %v7738
  %v7747 = vrsqrt.pop %v7739
  %v7748 = vmul.f32 %v7684, %v7740
  %v7749 = vmul.f32 %v7685, %v7741
  %v7750 = vmul.f32 %v7686, %v7742
  %v7751 = vmul.f32 %v7687, %v7743
  %v7752 = vmul.f32 %v7688, %v7744
  %v7753 = vmul.f32 %v7689, %v7745
  %v7754 = vmul.f32 %v7690, %v7746
  %v7755 = vmul.f32 %v7691, %v7747
  %v7757 = vlaneseq
  %v7758 = vshrl.u32 %v7757, 7
  %v7759 = vsub.s32 0, %v7758
  %v7760 = vrot.slane %v7649, %v7759
  %v7762 = vmul.f32 %v7748, %v7760
  %v7763 = vmul.f32 %v7749, %v7760
  %v7764 = vmul.f32 %v7750, %v7760
  %v7765 = vmul.f32 %v7751, %v7760
  %v7766 = vmul.f32 %v7752, %v7760
  %v7767 = vmul.f32 %v7753, %v7760
  %v7768 = vmul.f32 %v7754, %v7760
  %v7769 = vmul.f32 %v7755, %v7760
  %v7771 = vlaneseq
  %v7772 = vshrl.u32 %v7771, 7
  %v7773 = vsub.s32 0, %v7772
  %v7774 = vrot.slane %v7651, %v7773
  %v7776 = vadd.f32 %v7762, %v7774
  %v7777 = vadd.f32 %v7763, %v7774
  %v7778 = vadd.f32 %v7764, %v7774
  %v7779 = vadd.f32 %v7765, %v7774
  %v7780 = vadd.f32 %v7766, %v7774
  %v7781 = vadd.f32 %v7767, %v7774
  %v7782 = vadd.f32 %v7768, %v7774
  %v7783 = vadd.f32 %v7769, %v7774
  %v7784 = vpack.c.bf16 %v7777, %v7776
  %v7785 = vpack.c.bf16 %v7779, %v7778
  %v7786 = vpack.c.bf16 %v7781, %v7780
  %v7787 = vpack.c.bf16 %v7783, %v7782
  %s7788 = scalar_lea.vmem %s10, 512
  %v7789 = vld [vmem:[%s7788] sm:$0xff]
  %v7790 = vld [vmem:[%s7788 + $0x8] sm:$0xff]
  %v7791 = vld [vmem:[%s7788 + $0x10] sm:$0xff]
  %v7792 = vld [vmem:[%s7788 + $0x18] sm:$0xff]
  %v7793 = vld [vmem:[%s7788 + $0x20] sm:$0xff]
  %v7794 = vld [vmem:[%s7788 + $0x28] sm:$0xff]
  %v7795 = vld [vmem:[%s7788 + $0x30] sm:$0xff]
  %v7796 = vld [vmem:[%s7788 + $0x38] sm:$0xff]
  %v7797 = vld [vmem:[%s7788 + $0x40] sm:$0xff]
  %v7798 = vld [vmem:[%s7788 + $0x48] sm:$0xff]
  %v7799 = vld [vmem:[%s7788 + $0x50] sm:$0xff]
  %v7800 = vld [vmem:[%s7788 + $0x58] sm:$0xff]
  %v7801 = vld [vmem:[%s7788 + $0x60] sm:$0xff]
  %v7802 = vld [vmem:[%s7788 + $0x68] sm:$0xff]
  %v7803 = vld [vmem:[%s7788 + $0x70] sm:$0xff]
  %v7804 = vld [vmem:[%s7788 + $0x78] sm:$0xff]
  %v7805 = vld [vmem:[%s7788 + $0x80] sm:$0xff]
  %v7806 = vld [vmem:[%s7788 + $0x88] sm:$0xff]
  %v7807 = vld [vmem:[%s7788 + $0x90] sm:$0xff]
  %v7808 = vld [vmem:[%s7788 + $0x98] sm:$0xff]
  %v7809 = vld [vmem:[%s7788 + $0xa0] sm:$0xff]
  %v7810 = vld [vmem:[%s7788 + $0xa8] sm:$0xff]
  %v7811 = vld [vmem:[%s7788 + $0xb0] sm:$0xff]
  %v7812 = vld [vmem:[%s7788 + $0xb8] sm:$0xff]
  %v7813 = vld [vmem:[%s7788 + $0xc0] sm:$0xff]
  %v7814 = vld [vmem:[%s7788 + $0xc8] sm:$0xff]
  %v7815 = vld [vmem:[%s7788 + $0xd0] sm:$0xff]
  %v7816 = vld [vmem:[%s7788 + $0xd8] sm:$0xff]
  %v7817 = vld [vmem:[%s7788 + $0xe0] sm:$0xff]
  %v7818 = vld [vmem:[%s7788 + $0xe8] sm:$0xff]
  %v7819 = vld [vmem:[%s7788 + $0xf0] sm:$0xff]
  %v7820 = vld [vmem:[%s7788 + $0xf8] sm:$0xff]
  %v7821 = vld [vmem:[%s7788 + $0x100] sm:$0xff]
  %v7822 = vld [vmem:[%s7788 + $0x108] sm:$0xff]
  %v7823 = vld [vmem:[%s7788 + $0x110] sm:$0xff]
  %v7824 = vld [vmem:[%s7788 + $0x118] sm:$0xff]
  %v7825 = vld [vmem:[%s7788 + $0x120] sm:$0xff]
  %v7826 = vld [vmem:[%s7788 + $0x128] sm:$0xff]
  %v7827 = vld [vmem:[%s7788 + $0x130] sm:$0xff]
  %v7828 = vld [vmem:[%s7788 + $0x138] sm:$0xff]
  %v7829 = vld [vmem:[%s7788 + $0x140] sm:$0xff]
  %v7830 = vld [vmem:[%s7788 + $0x148] sm:$0xff]
  %v7831 = vld [vmem:[%s7788 + $0x150] sm:$0xff]
  %v7832 = vld [vmem:[%s7788 + $0x158] sm:$0xff]
  %v7833 = vld [vmem:[%s7788 + $0x160] sm:$0xff]
  %v7834 = vld [vmem:[%s7788 + $0x168] sm:$0xff]
  %v7835 = vld [vmem:[%s7788 + $0x170] sm:$0xff]
  %v7836 = vld [vmem:[%s7788 + $0x178] sm:$0xff]
  %v7837 = vld [vmem:[%s7788 + $0x180] sm:$0xff]
  %v7838 = vld [vmem:[%s7788 + $0x188] sm:$0xff]
  %v7839 = vld [vmem:[%s7788 + $0x190] sm:$0xff]
  %v7840 = vld [vmem:[%s7788 + $0x198] sm:$0xff]
  %v7841 = vld [vmem:[%s7788 + $0x1a0] sm:$0xff]
  %v7842 = vld [vmem:[%s7788 + $0x1a8] sm:$0xff]
  %v7843 = vld [vmem:[%s7788 + $0x1b0] sm:$0xff]
  %v7844 = vld [vmem:[%s7788 + $0x1b8] sm:$0xff]
  %v7845 = vld [vmem:[%s7788 + $0x1c0] sm:$0xff]
  %v7846 = vld [vmem:[%s7788 + $0x1c8] sm:$0xff]
  %v7847 = vld [vmem:[%s7788 + $0x1d0] sm:$0xff]
  %v7848 = vld [vmem:[%s7788 + $0x1d8] sm:$0xff]
  %v7849 = vld [vmem:[%s7788 + $0x1e0] sm:$0xff]
  %v7850 = vld [vmem:[%s7788 + $0x1e8] sm:$0xff]
  %v7851 = vld [vmem:[%s7788 + $0x1f0] sm:$0xff]
  %v7852 = vld [vmem:[%s7788 + $0x1f8] sm:$0xff]
  %s7853 = scalar_lea.vmem %s11, 16
  %v7854 = vld [vmem:[%s7853] sm:$0xff]
  %v7855 = vld [vmem:[%s7853 + $0x8] sm:$0xff]
  %v7858 = vlaneseq
  %v7859 = vshrl.u32 %v7858, 7
  %v7860 = vsub.s32 0, %v7859
  %v7861 = vrot.slane %v7854, %v7860
  %v7862 = vlaneseq
  %v7863 = vshrl.u32 %v7862, 7
  %v7864 = vsub.s32 1, %v7863
  %v7865 = vrot.slane %v7854, %v7864
  %v7866 = vlaneseq
  %v7867 = vshrl.u32 %v7866, 7
  %v7868 = vsub.s32 2, %v7867
  %v7869 = vrot.slane %v7854, %v7868
  %v7870 = vlaneseq
  %v7871 = vshrl.u32 %v7870, 7
  %v7872 = vsub.s32 3, %v7871
  %v7873 = vrot.slane %v7854, %v7872
  %v7874 = vlaneseq
  %v7875 = vshrl.u32 %v7874, 7
  %v7876 = vsub.s32 4, %v7875
  %v7877 = vrot.slane %v7854, %v7876
  %v7878 = vlaneseq
  %v7879 = vshrl.u32 %v7878, 7
  %v7880 = vsub.s32 5, %v7879
  %v7881 = vrot.slane %v7854, %v7880
  %v7882 = vlaneseq
  %v7883 = vshrl.u32 %v7882, 7
  %v7884 = vsub.s32 6, %v7883
  %v7885 = vrot.slane %v7854, %v7884
  %v7886 = vlaneseq
  %v7887 = vshrl.u32 %v7886, 7
  %v7888 = vsub.s32 7, %v7887
  %v7889 = vrot.slane %v7854, %v7888
  %v7890 = vlaneseq
  %v7891 = vshrl.u32 %v7890, 7
  %v7892 = vsub.s32 0, %v7891
  %v7893 = vrot.slane %v7855, %v7892
  %v7894 = vlaneseq
  %v7895 = vshrl.u32 %v7894, 7
  %v7896 = vsub.s32 1, %v7895
  %v7897 = vrot.slane %v7855, %v7896
  %v7898 = vlaneseq
  %v7899 = vshrl.u32 %v7898, 7
  %v7900 = vsub.s32 2, %v7899
  %v7901 = vrot.slane %v7855, %v7900
  %v7902 = vlaneseq
  %v7903 = vshrl.u32 %v7902, 7
  %v7904 = vsub.s32 3, %v7903
  %v7905 = vrot.slane %v7855, %v7904
  %v7906 = vlaneseq
  %v7907 = vshrl.u32 %v7906, 7
  %v7908 = vsub.s32 4, %v7907
  %v7909 = vrot.slane %v7855, %v7908
  %v7910 = vlaneseq
  %v7911 = vshrl.u32 %v7910, 7
  %v7912 = vsub.s32 5, %v7911
  %v7913 = vrot.slane %v7855, %v7912
  %v7914 = vlaneseq
  %v7915 = vshrl.u32 %v7914, 7
  %v7916 = vsub.s32 6, %v7915
  %v7917 = vrot.slane %v7855, %v7916
  %v7918 = vlaneseq
  %v7919 = vshrl.u32 %v7918, 7
  %v7920 = vsub.s32 7, %v7919
  %v7921 = vrot.slane %v7855, %v7920
  %v8002 = vunpack.c.l.b16 %v7789
  %v8003 = vunpack.c.h.b16 %v7789
  %v8004 = vunpack.c.l.b16 %v7790
  %v8005 = vunpack.c.h.b16 %v7790
  %v8006 = vunpack.c.l.b16 %v7791
  %v8007 = vunpack.c.h.b16 %v7791
  %v8008 = vunpack.c.l.b16 %v7792
  %v8009 = vunpack.c.h.b16 %v7792
  %v8010 = vunpack.c.l.b16 %v7793
  %v8011 = vunpack.c.h.b16 %v7793
  %v8012 = vunpack.c.l.b16 %v7794
  %v8013 = vunpack.c.h.b16 %v7794
  %v8014 = vunpack.c.l.b16 %v7795
  %v8015 = vunpack.c.h.b16 %v7795
  %v8016 = vunpack.c.l.b16 %v7796
  %v8017 = vunpack.c.h.b16 %v7796
  %v8018 = vunpack.c.l.b16 %v7797
  %v8019 = vunpack.c.h.b16 %v7797
  %v8020 = vunpack.c.l.b16 %v7798
  %v8021 = vunpack.c.h.b16 %v7798
  %v8022 = vunpack.c.l.b16 %v7799
  %v8023 = vunpack.c.h.b16 %v7799
  %v8024 = vunpack.c.l.b16 %v7800
  %v8025 = vunpack.c.h.b16 %v7800
  %v8026 = vunpack.c.l.b16 %v7801
  %v8027 = vunpack.c.h.b16 %v7801
  %v8028 = vunpack.c.l.b16 %v7802
  %v8029 = vunpack.c.h.b16 %v7802
  %v8030 = vunpack.c.l.b16 %v7803
  %v8031 = vunpack.c.h.b16 %v7803
  %v8032 = vunpack.c.l.b16 %v7804
  %v8033 = vunpack.c.h.b16 %v7804
  %v8034 = vunpack.c.l.b16 %v7805
  %v8035 = vunpack.c.h.b16 %v7805
  %v8036 = vunpack.c.l.b16 %v7806
  %v8037 = vunpack.c.h.b16 %v7806
  %v8038 = vunpack.c.l.b16 %v7807
  %v8039 = vunpack.c.h.b16 %v7807
  %v8040 = vunpack.c.l.b16 %v7808
  %v8041 = vunpack.c.h.b16 %v7808
  %v8042 = vunpack.c.l.b16 %v7809
  %v8043 = vunpack.c.h.b16 %v7809
  %v8044 = vunpack.c.l.b16 %v7810
  %v8045 = vunpack.c.h.b16 %v7810
  %v8046 = vunpack.c.l.b16 %v7811
  %v8047 = vunpack.c.h.b16 %v7811
  %v8048 = vunpack.c.l.b16 %v7812
  %v8049 = vunpack.c.h.b16 %v7812
  %v8050 = vunpack.c.l.b16 %v7813
  %v8051 = vunpack.c.h.b16 %v7813
  %v8052 = vunpack.c.l.b16 %v7814
  %v8053 = vunpack.c.h.b16 %v7814
  %v8054 = vunpack.c.l.b16 %v7815
  %v8055 = vunpack.c.h.b16 %v7815
  %v8056 = vunpack.c.l.b16 %v7816
  %v8057 = vunpack.c.h.b16 %v7816
  %v8058 = vunpack.c.l.b16 %v7817
  %v8059 = vunpack.c.h.b16 %v7817
  %v8060 = vunpack.c.l.b16 %v7818
  %v8061 = vunpack.c.h.b16 %v7818
  %v8062 = vunpack.c.l.b16 %v7819
  %v8063 = vunpack.c.h.b16 %v7819
  %v8064 = vunpack.c.l.b16 %v7820
  %v8065 = vunpack.c.h.b16 %v7820
  %v8066 = vunpack.c.l.b16 %v7821
  %v8067 = vunpack.c.h.b16 %v7821
  %v8068 = vunpack.c.l.b16 %v7822
  %v8069 = vunpack.c.h.b16 %v7822
  %v8070 = vunpack.c.l.b16 %v7823
  %v8071 = vunpack.c.h.b16 %v7823
  %v8072 = vunpack.c.l.b16 %v7824
  %v8073 = vunpack.c.h.b16 %v7824
  %v8074 = vunpack.c.l.b16 %v7825
  %v8075 = vunpack.c.h.b16 %v7825
  %v8076 = vunpack.c.l.b16 %v7826
  %v8077 = vunpack.c.h.b16 %v7826
  %v8078 = vunpack.c.l.b16 %v7827
  %v8079 = vunpack.c.h.b16 %v7827
  %v8080 = vunpack.c.l.b16 %v7828
  %v8081 = vunpack.c.h.b16 %v7828
  %v8082 = vunpack.c.l.b16 %v7829
  %v8083 = vunpack.c.h.b16 %v7829
  %v8084 = vunpack.c.l.b16 %v7830
  %v8085 = vunpack.c.h.b16 %v7830
  %v8086 = vunpack.c.l.b16 %v7831
  %v8087 = vunpack.c.h.b16 %v7831
  %v8088 = vunpack.c.l.b16 %v7832
  %v8089 = vunpack.c.h.b16 %v7832
  %v8090 = vunpack.c.l.b16 %v7833
  %v8091 = vunpack.c.h.b16 %v7833
  %v8092 = vunpack.c.l.b16 %v7834
  %v8093 = vunpack.c.h.b16 %v7834
  %v8094 = vunpack.c.l.b16 %v7835
  %v8095 = vunpack.c.h.b16 %v7835
  %v8096 = vunpack.c.l.b16 %v7836
  %v8097 = vunpack.c.h.b16 %v7836
  %v8098 = vunpack.c.l.b16 %v7837
  %v8099 = vunpack.c.h.b16 %v7837
  %v8100 = vunpack.c.l.b16 %v7838
  %v8101 = vunpack.c.h.b16 %v7838
  %v8102 = vunpack.c.l.b16 %v7839
  %v8103 = vunpack.c.h.b16 %v7839
  %v8104 = vunpack.c.l.b16 %v7840
  %v8105 = vunpack.c.h.b16 %v7840
  %v8106 = vunpack.c.l.b16 %v7841
  %v8107 = vunpack.c.h.b16 %v7841
  %v8108 = vunpack.c.l.b16 %v7842
  %v8109 = vunpack.c.h.b16 %v7842
  %v8110 = vunpack.c.l.b16 %v7843
  %v8111 = vunpack.c.h.b16 %v7843
  %v8112 = vunpack.c.l.b16 %v7844
  %v8113 = vunpack.c.h.b16 %v7844
  %v8114 = vunpack.c.l.b16 %v7845
  %v8115 = vunpack.c.h.b16 %v7845
  %v8116 = vunpack.c.l.b16 %v7846
  %v8117 = vunpack.c.h.b16 %v7846
  %v8118 = vunpack.c.l.b16 %v7847
  %v8119 = vunpack.c.h.b16 %v7847
  %v8120 = vunpack.c.l.b16 %v7848
  %v8121 = vunpack.c.h.b16 %v7848
  %v8122 = vunpack.c.l.b16 %v7849
  %v8123 = vunpack.c.h.b16 %v7849
  %v8124 = vunpack.c.l.b16 %v7850
  %v8125 = vunpack.c.h.b16 %v7850
  %v8126 = vunpack.c.l.b16 %v7851
  %v8127 = vunpack.c.h.b16 %v7851
  %v8128 = vunpack.c.l.b16 %v7852
  %v8129 = vunpack.c.h.b16 %v7852
  %v8130 = vpack.c.b16 %v8018, %v8002
  %v8131 = vpack.c.b16 %v8019, %v8003
  %v8132 = vpack.c.b16 %v8020, %v8004
  %v8133 = vpack.c.b16 %v8021, %v8005
  %v8134 = vpack.c.b16 %v8022, %v8006
  %v8135 = vpack.c.b16 %v8023, %v8007
  %v8136 = vpack.c.b16 %v8024, %v8008
  %v8137 = vpack.c.b16 %v8025, %v8009
  %v8138 = vpack.c.b16 %v8026, %v8010
  %v8139 = vpack.c.b16 %v8027, %v8011
  %v8140 = vpack.c.b16 %v8028, %v8012
  %v8141 = vpack.c.b16 %v8029, %v8013
  %v8142 = vpack.c.b16 %v8030, %v8014
  %v8143 = vpack.c.b16 %v8031, %v8015
  %v8144 = vpack.c.b16 %v8032, %v8016
  %v8145 = vpack.c.b16 %v8033, %v8017
  %v8146 = vpack.c.b16 %v8050, %v8034
  %v8147 = vpack.c.b16 %v8051, %v8035
  %v8148 = vpack.c.b16 %v8052, %v8036
  %v8149 = vpack.c.b16 %v8053, %v8037
  %v8150 = vpack.c.b16 %v8054, %v8038
  %v8151 = vpack.c.b16 %v8055, %v8039
  %v8152 = vpack.c.b16 %v8056, %v8040
  %v8153 = vpack.c.b16 %v8057, %v8041
  %v8154 = vpack.c.b16 %v8058, %v8042
  %v8155 = vpack.c.b16 %v8059, %v8043
  %v8156 = vpack.c.b16 %v8060, %v8044
  %v8157 = vpack.c.b16 %v8061, %v8045
  %v8158 = vpack.c.b16 %v8062, %v8046
  %v8159 = vpack.c.b16 %v8063, %v8047
  %v8160 = vpack.c.b16 %v8064, %v8048
  %v8161 = vpack.c.b16 %v8065, %v8049
  %v8162 = vpack.c.b16 %v8082, %v8066
  %v8163 = vpack.c.b16 %v8083, %v8067
  %v8164 = vpack.c.b16 %v8084, %v8068
  %v8165 = vpack.c.b16 %v8085, %v8069
  %v8166 = vpack.c.b16 %v8086, %v8070
  %v8167 = vpack.c.b16 %v8087, %v8071
  %v8168 = vpack.c.b16 %v8088, %v8072
  %v8169 = vpack.c.b16 %v8089, %v8073
  %v8170 = vpack.c.b16 %v8090, %v8074
  %v8171 = vpack.c.b16 %v8091, %v8075
  %v8172 = vpack.c.b16 %v8092, %v8076
  %v8173 = vpack.c.b16 %v8093, %v8077
  %v8174 = vpack.c.b16 %v8094, %v8078
  %v8175 = vpack.c.b16 %v8095, %v8079
  %v8176 = vpack.c.b16 %v8096, %v8080
  %v8177 = vpack.c.b16 %v8097, %v8081
  %v8178 = vpack.c.b16 %v8114, %v8098
  %v8179 = vpack.c.b16 %v8115, %v8099
  %v8180 = vpack.c.b16 %v8116, %v8100
  %v8181 = vpack.c.b16 %v8117, %v8101
  %v8182 = vpack.c.b16 %v8118, %v8102
  %v8183 = vpack.c.b16 %v8119, %v8103
  %v8184 = vpack.c.b16 %v8120, %v8104
  %v8185 = vpack.c.b16 %v8121, %v8105
  %v8186 = vpack.c.b16 %v8122, %v8106
  %v8187 = vpack.c.b16 %v8123, %v8107
  %v8188 = vpack.c.b16 %v8124, %v8108
  %v8189 = vpack.c.b16 %v8125, %v8109
  %v8190 = vpack.c.b16 %v8126, %v8110
  %v8191 = vpack.c.b16 %v8127, %v8111
  %v8192 = vpack.c.b16 %v8128, %v8112
  %v8193 = vpack.c.b16 %v8129, %v8113
  %v8259 = vsel %vm250, %v7784, 0
  %v8262 = vsel %vm250, %v7785, 0
  %v8265 = vsel %vm250, %v7786, 0
  %v8268 = vsel %vm250, %v7787, 0
  %8270 = vmatprep.subr.bf16.mxu0 %v8131
  %8271 = vmatpush1.bf16.msra.mxu0 %v8130
  %8272 = vmatprep.subr.bf16.mxu0 %v8147
  %8273 = vmatpush1.bf16.msra.mxu0 %v8146
  %8274 = vmatprep.subr.bf16.mxu0 %v8163
  %8275 = vmatpush1.bf16.msra.mxu0 %v8162
  %8276 = vmatprep.subr.bf16.mxu0 %v8179
  %8277 = vmatpush1.bf16.msra.mxu0 %v8178
  %8278 = vmatprep.subr.bf16.mxu0 0
  %8279 = vmatpush1.bf16.msra.mxu0 0
  %8280 = vmatprep.subr.bf16.mxu0 0
  %8281 = vmatpush1.bf16.msra.mxu0 0
  %8282 = vmatprep.subr.bf16.mxu0 0
  %8283 = vmatpush1.bf16.msra.mxu0 0
  %8284 = vmatprep.subr.bf16.mxu0 0
  %8285 = vmatpush1.bf16.msra.mxu0 0
  %8286 = vmatprep.subr.bf16.mxu0 0
  %8287 = vmatpush1.bf16.msra.mxu0 0
  %8288 = vmatprep.subr.bf16.mxu0 0
  %8289 = vmatpush1.bf16.msra.mxu0 0
  %8290 = vmatprep.subr.bf16.mxu0 0
  %8291 = vmatpush1.bf16.msra.mxu0 0
  %8292 = vmatprep.subr.bf16.mxu0 0
  %8293 = vmatpush1.bf16.msra.mxu0 0
  %8294 = vmatprep.subr.bf16.mxu0 0
  %8295 = vmatpush1.bf16.msra.mxu0 0
  %8296 = vmatprep.subr.bf16.mxu0 0
  %8297 = vmatpush1.bf16.msra.mxu0 0
  %8298 = vmatprep.subr.bf16.mxu0 0
  %8299 = vmatpush1.bf16.msra.mxu0 0
  %8300 = vmatprep.subr.bf16.mxu0 0
  %8301 = vmatpush1.bf16.msra.mxu0 0
  %8302 = vmatprep.mubr.bf16.mxu0 0
  %8303 = vmatmul.mubr.bf16.gmra.mrb[0].mxu0 %v8259
  %v8304 = vpop.f32.mrb[0].mxu0
  %v8305 = vadd.f32 %v7861, %v8304
  %v8306 = vpop.f32.mrb[0].mxu0
  %v8307 = vadd.f32 %v7865, %v8306
  %v8308 = vpop.f32.mrb[0].mxu0
  %v8309 = vadd.f32 %v7861, %v8308
  %v8310 = vpop.f32.mrb[0].mxu0
  %v8311 = vadd.f32 %v7865, %v8310
  %8312 = vmatprep.mubr.bf16.mxu0 0
  %8313 = vmatmul.mubr.bf16.gmra.mrb[0].mxu0 %v8262
  %v8314 = vpop.f32.mrb[0].mxu0
  %v8315 = vadd.f32 %v7861, %v8314
  %v8316 = vpop.f32.mrb[0].mxu0
  %v8317 = vadd.f32 %v7865, %v8316
  %v8318 = vpop.f32.mrb[0].mxu0
  %v8319 = vadd.f32 %v7861, %v8318
  %v8320 = vpop.f32.mrb[0].mxu0
  %v8321 = vadd.f32 %v7865, %v8320
  %8322 = vmatprep.mubr.bf16.mxu0 0
  %8323 = vmatmul.mubr.bf16.gmra.mrb[0].mxu0 %v8265
  %v8324 = vpop.f32.mrb[0].mxu0
  %v8325 = vadd.f32 %v7861, %v8324
  %v8326 = vpop.f32.mrb[0].mxu0
  %v8327 = vadd.f32 %v7865, %v8326
  %v8328 = vpop.f32.mrb[0].mxu0
  %v8329 = vadd.f32 %v7861, %v8328
  %v8330 = vpop.f32.mrb[0].mxu0
  %v8331 = vadd.f32 %v7865, %v8330
  %8332 = vmatprep.mubr.bf16.mxu0 0
  %8333 = vmatmul.mubr.bf16.gmra.mrb[0].mxu0 %v8268
  %v8334 = vpop.f32.mrb[0].mxu0
  %v8335 = vadd.f32 %v7861, %v8334
  %v8336 = vpop.f32.mrb[0].mxu0
  %v8337 = vadd.f32 %v7865, %v8336
  %v8338 = vpop.f32.mrb[0].mxu0
  %v8339 = vadd.f32 %v7861, %v8338
  %v8340 = vpop.f32.mrb[0].mxu0
  %v8341 = vadd.f32 %v7865, %v8340
  %8342 = vdwg.mxu0
  %8343 = vmatprep.subr.bf16.mxu0 %v8133
  %8344 = vmatpush1.bf16.msra.mxu0 %v8132
  %8345 = vmatprep.subr.bf16.mxu0 %v8149
  %8346 = vmatpush1.bf16.msra.mxu0 %v8148
  %8347 = vmatprep.subr.bf16.mxu0 %v8165
  %8348 = vmatpush1.bf16.msra.mxu0 %v8164
  %8349 = vmatprep.subr.bf16.mxu0 %v8181
  %8350 = vmatpush1.bf16.msra.mxu0 %v8180
  %8351 = vmatprep.subr.bf16.mxu0 0
  %8352 = vmatpush1.bf16.msra.mxu0 0
  %8353 = vmatprep.subr.bf16.mxu0 0
  %8354 = vmatpush1.bf16.msra.mxu0 0
  %8355 = vmatprep.subr.bf16.mxu0 0
  %8356 = vmatpush1.bf16.msra.mxu0 0
  %8357 = vmatprep.subr.bf16.mxu0 0
  %8358 = vmatpush1.bf16.msra.mxu0 0
  %8359 = vmatprep.subr.bf16.mxu0 0
  %8360 = vmatpush1.bf16.msra.mxu0 0
  %8361 = vmatprep.subr.bf16.mxu0 0
  %8362 = vmatpush1.bf16.msra.mxu0 0
  %8363 = vmatprep.subr.bf16.mxu0 0
  %8364 = vmatpush1.bf16.msra.mxu0 0
  %8365 = vmatprep.subr.bf16.mxu0 0
  %8366 = vmatpush1.bf16.msra.mxu0 0
  %8367 = vmatprep.subr.bf16.mxu0 0
  %8368 = vmatpush1.bf16.msra.mxu0 0
  %8369 = vmatprep.subr.bf16.mxu0 0
  %8370 = vmatpush1.bf16.msra.mxu0 0
  %8371 = vmatprep.subr.bf16.mxu0 0
  %8372 = vmatpush1.bf16.msra.mxu0 0
  %8373 = vmatprep.subr.bf16.mxu0 0
  %8374 = vmatpush1.bf16.msra.mxu0 0
  %8375 = vmatprep.mubr.bf16.mxu0 0
  %8376 = vmatmul.mubr.bf16.gmra.mrb[0].mxu0 %v8259
  %v8377 = vpop.f32.mrb[0].mxu0
  %v8378 = vadd.f32 %v7869, %v8377
  %v8379 = vpop.f32.mrb[0].mxu0
  %v8380 = vadd.f32 %v7873, %v8379
  %v8381 = vpop.f32.mrb[0].mxu0
  %v8382 = vadd.f32 %v7869, %v8381
  %v8383 = vpop.f32.mrb[0].mxu0
  %v8384 = vadd.f32 %v7873, %v8383
  %8385 = vmatprep.mubr.bf16.mxu0 0
  %8386 = vmatmul.mubr.bf16.gmra.mrb[0].mxu0 %v8262
  %v8387 = vpop.f32.mrb[0].mxu0
  %v8388 = vadd.f32 %v7869, %v8387
  %v8389 = vpop.f32.mrb[0].mxu0
  %v8390 = vadd.f32 %v7873, %v8389
  %v8391 = vpop.f32.mrb[0].mxu0
  %v8392 = vadd.f32 %v7869, %v8391
  %v8393 = vpop.f32.mrb[0].mxu0
  %v8394 = vadd.f32 %v7873, %v8393
  %8395 = vmatprep.mubr.bf16.mxu0 0
  %8396 = vmatmul.mubr.bf16.gmra.mrb[0].mxu0 %v8265
  %v8397 = vpop.f32.mrb[0].mxu0
  %v8398 = vadd.f32 %v7869, %v8397
  %v8399 = vpop.f32.mrb[0].mxu0
  %v8400 = vadd.f32 %v7873, %v8399
  %v8401 = vpop.f32.mrb[0].mxu0
  %v8402 = vadd.f32 %v7869, %v8401
  %v8403 = vpop.f32.mrb[0].mxu0
  %v8404 = vadd.f32 %v7873, %v8403
  %8405 = vmatprep.mubr.bf16.mxu0 0
  %8406 = vmatmul.mubr.bf16.gmra.mrb[0].mxu0 %v8268
  %v8407 = vpop.f32.mrb[0].mxu0
  %v8408 = vadd.f32 %v7869, %v8407
  %v8409 = vpop.f32.mrb[0].mxu0
  %v8410 = vadd.f32 %v7873, %v8409
  %v8411 = vpop.f32.mrb[0].mxu0
  %v8412 = vadd.f32 %v7869, %v8411
  %v8413 = vpop.f32.mrb[0].mxu0
  %v8414 = vadd.f32 %v7873, %v8413
  %8415 = vdwg.mxu0
  %8416 = vmatprep.subr.bf16.mxu0 %v8135
  %8417 = vmatpush1.bf16.msra.mxu0 %v8134
  %8418 = vmatprep.subr.bf16.mxu0 %v8151
  %8419 = vmatpush1.bf16.msra.mxu0 %v8150
  %8420 = vmatprep.subr.bf16.mxu0 %v8167
  %8421 = vmatpush1.bf16.msra.mxu0 %v8166
  %8422 = vmatprep.subr.bf16.mxu0 %v8183
  %8423 = vmatpush1.bf16.msra.mxu0 %v8182
  %8424 = vmatprep.subr.bf16.mxu0 0
  %8425 = vmatpush1.bf16.msra.mxu0 0
  %8426 = vmatprep.subr.bf16.mxu0 0
  %8427 = vmatpush1.bf16.msra.mxu0 0
  %8428 = vmatprep.subr.bf16.mxu0 0
  %8429 = vmatpush1.bf16.msra.mxu0 0
  %8430 = vmatprep.subr.bf16.mxu0 0
  %8431 = vmatpush1.bf16.msra.mxu0 0
  %8432 = vmatprep.subr.bf16.mxu0 0
  %8433 = vmatpush1.bf16.msra.mxu0 0
  %8434 = vmatprep.subr.bf16.mxu0 0
  %8435 = vmatpush1.bf16.msra.mxu0 0
  %8436 = vmatprep.subr.bf16.mxu0 0
  %8437 = vmatpush1.bf16.msra.mxu0 0
  %8438 = vmatprep.subr.bf16.mxu0 0
  %8439 = vmatpush1.bf16.msra.mxu0 0
  %8440 = vmatprep.subr.bf16.mxu0 0
  %8441 = vmatpush1.bf16.msra.mxu0 0
  %8442 = vmatprep.subr.bf16.mxu0 0
  %8443 = vmatpush1.bf16.msra.mxu0 0
  %8444 = vmatprep.subr.bf16.mxu0 0
  %8445 = vmatpush1.bf16.msra.mxu0 0
  %8446 = vmatprep.subr.bf16.mxu0 0
  %8447 = vmatpush1.bf16.msra.mxu0 0
  %8448 = vmatprep.mubr.bf16.mxu0 0
  %8449 = vmatmul.mubr.bf16.gmra.mrb[0].mxu0 %v8259
  %v8450 = vpop.f32.mrb[0].mxu0
  %v8451 = vadd.f32 %v7877, %v8450
  %v8452 = vpop.f32.mrb[0].mxu0
  %v8453 = vadd.f32 %v7881, %v8452
  %v8454 = vpop.f32.mrb[0].mxu0
  %v8455 = vadd.f32 %v7877, %v8454
  %v8456 = vpop.f32.mrb[0].mxu0
  %v8457 = vadd.f32 %v7881, %v8456
  %8458 = vmatprep.mubr.bf16.mxu0 0
  %8459 = vmatmul.mubr.bf16.gmra.mrb[0].mxu0 %v8262
  %v8460 = vpop.f32.mrb[0].mxu0
  %v8461 = vadd.f32 %v7877, %v8460
  %v8462 = vpop.f32.mrb[0].mxu0
  %v8463 = vadd.f32 %v7881, %v8462
  %v8464 = vpop.f32.mrb[0].mxu0
  %v8465 = vadd.f32 %v7877, %v8464
  %v8466 = vpop.f32.mrb[0].mxu0
  %v8467 = vadd.f32 %v7881, %v8466
  %8468 = vmatprep.mubr.bf16.mxu0 0
  %8469 = vmatmul.mubr.bf16.gmra.mrb[0].mxu0 %v8265
  %v8470 = vpop.f32.mrb[0].mxu0
  %v8471 = vadd.f32 %v7877, %v8470
  %v8472 = vpop.f32.mrb[0].mxu0
  %v8473 = vadd.f32 %v7881, %v8472
  %v8474 = vpop.f32.mrb[0].mxu0
  %v8475 = vadd.f32 %v7877, %v8474
  %v8476 = vpop.f32.mrb[0].mxu0
  %v8477 = vadd.f32 %v7881, %v8476
  %8478 = vmatprep.mubr.bf16.mxu0 0
  %8479 = vmatmul.mubr.bf16.gmra.mrb[0].mxu0 %v8268
  %v8480 = vpop.f32.mrb[0].mxu0
  %v8481 = vadd.f32 %v7877, %v8480
  %v8482 = vpop.f32.mrb[0].mxu0
  %v8483 = vadd.f32 %v7881, %v8482
  %v8484 = vpop.f32.mrb[0].mxu0
  %v8485 = vadd.f32 %v7877, %v8484
  %v8486 = vpop.f32.mrb[0].mxu0
  %v8487 = vadd.f32 %v7881, %v8486
  %8488 = vdwg.mxu0
  %8489 = vmatprep.subr.bf16.mxu0 %v8137
  %8490 = vmatpush1.bf16.msra.mxu0 %v8136
  %8491 = vmatprep.subr.bf16.mxu0 %v8153
  %8492 = vmatpush1.bf16.msra.mxu0 %v8152
  %8493 = vmatprep.subr.bf16.mxu0 %v8169
  %8494 = vmatpush1.bf16.msra.mxu0 %v8168
  %8495 = vmatprep.subr.bf16.mxu0 %v8185
  %8496 = vmatpush1.bf16.msra.mxu0 %v8184
  %8497 = vmatprep.subr.bf16.mxu0 0
  %8498 = vmatpush1.bf16.msra.mxu0 0
  %8499 = vmatprep.subr.bf16.mxu0 0
  %8500 = vmatpush1.bf16.msra.mxu0 0
  %8501 = vmatprep.subr.bf16.mxu0 0
  %8502 = vmatpush1.bf16.msra.mxu0 0
  %8503 = vmatprep.subr.bf16.mxu0 0
  %8504 = vmatpush1.bf16.msra.mxu0 0
  %8505 = vmatprep.subr.bf16.mxu0 0
  %8506 = vmatpush1.bf16.msra.mxu0 0
  %8507 = vmatprep.subr.bf16.mxu0 0
  %8508 = vmatpush1.bf16.msra.mxu0 0
  %8509 = vmatprep.subr.bf16.mxu0 0
  %8510 = vmatpush1.bf16.msra.mxu0 0
  %8511 = vmatprep.subr.bf16.mxu0 0
  %8512 = vmatpush1.bf16.msra.mxu0 0
  %8513 = vmatprep.subr.bf16.mxu0 0
  %8514 = vmatpush1.bf16.msra.mxu0 0
  %8515 = vmatprep.subr.bf16.mxu0 0
  %8516 = vmatpush1.bf16.msra.mxu0 0
  %8517 = vmatprep.subr.bf16.mxu0 0
  %8518 = vmatpush1.bf16.msra.mxu0 0
  %8519 = vmatprep.subr.bf16.mxu0 0
  %8520 = vmatpush1.bf16.msra.mxu0 0
  %8521 = vmatprep.mubr.bf16.mxu0 0
  %8522 = vmatmul.mubr.bf16.gmra.mrb[0].mxu0 %v8259
  %v8523 = vpop.f32.mrb[0].mxu0
  %v8524 = vadd.f32 %v7885, %v8523
  %v8525 = vpop.f32.mrb[0].mxu0
  %v8526 = vadd.f32 %v7889, %v8525
  %v8527 = vpop.f32.mrb[0].mxu0
  %v8528 = vadd.f32 %v7885, %v8527
  %v8529 = vpop.f32.mrb[0].mxu0
  %v8530 = vadd.f32 %v7889, %v8529
  %8531 = vmatprep.mubr.bf16.mxu0 0
  %8532 = vmatmul.mubr.bf16.gmra.mrb[0].mxu0 %v8262
  %v8533 = vpop.f32.mrb[0].mxu0
  %v8534 = vadd.f32 %v7885, %v8533
  %v8535 = vpop.f32.mrb[0].mxu0
  %v8536 = vadd.f32 %v7889, %v8535
  %v8537 = vpop.f32.mrb[0].mxu0
  %v8538 = vadd.f32 %v7885, %v8537
  %v8539 = vpop.f32.mrb[0].mxu0
  %v8540 = vadd.f32 %v7889, %v8539
  %8541 = vmatprep.mubr.bf16.mxu0 0
  %8542 = vmatmul.mubr.bf16.gmra.mrb[0].mxu0 %v8265
  %v8543 = vpop.f32.mrb[0].mxu0
  %v8544 = vadd.f32 %v7885, %v8543
  %v8545 = vpop.f32.mrb[0].mxu0
  %v8546 = vadd.f32 %v7889, %v8545
  %v8547 = vpop.f32.mrb[0].mxu0
  %v8548 = vadd.f32 %v7885, %v8547
  %v8549 = vpop.f32.mrb[0].mxu0
  %v8550 = vadd.f32 %v7889, %v8549
  %8551 = vmatprep.mubr.bf16.mxu0 0
  %8552 = vmatmul.mubr.bf16.gmra.mrb[0].mxu0 %v8268
  %v8553 = vpop.f32.mrb[0].mxu0
  %v8554 = vadd.f32 %v7885, %v8553
  %v8555 = vpop.f32.mrb[0].mxu0
  %v8556 = vadd.f32 %v7889, %v8555
  %v8557 = vpop.f32.mrb[0].mxu0
  %v8558 = vadd.f32 %v7885, %v8557
  %v8559 = vpop.f32.mrb[0].mxu0
  %v8560 = vadd.f32 %v7889, %v8559
  %8561 = vdwg.mxu0
  %8562 = vmatprep.subr.bf16.mxu0 %v8139
  %8563 = vmatpush1.bf16.msra.mxu0 %v8138
  %8564 = vmatprep.subr.bf16.mxu0 %v8155
  %8565 = vmatpush1.bf16.msra.mxu0 %v8154
  %8566 = vmatprep.subr.bf16.mxu0 %v8171
  %8567 = vmatpush1.bf16.msra.mxu0 %v8170
  %8568 = vmatprep.subr.bf16.mxu0 %v8187
  %8569 = vmatpush1.bf16.msra.mxu0 %v8186
  %8570 = vmatprep.subr.bf16.mxu0 0
  %8571 = vmatpush1.bf16.msra.mxu0 0
  %8572 = vmatprep.subr.bf16.mxu0 0
  %8573 = vmatpush1.bf16.msra.mxu0 0
  %8574 = vmatprep.subr.bf16.mxu0 0
  %8575 = vmatpush1.bf16.msra.mxu0 0
  %8576 = vmatprep.subr.bf16.mxu0 0
  %8577 = vmatpush1.bf16.msra.mxu0 0
  %8578 = vmatprep.subr.bf16.mxu0 0
  %8579 = vmatpush1.bf16.msra.mxu0 0
  %8580 = vmatprep.subr.bf16.mxu0 0
  %8581 = vmatpush1.bf16.msra.mxu0 0
  %8582 = vmatprep.subr.bf16.mxu0 0
  %8583 = vmatpush1.bf16.msra.mxu0 0
  %8584 = vmatprep.subr.bf16.mxu0 0
  %8585 = vmatpush1.bf16.msra.mxu0 0
  %8586 = vmatprep.subr.bf16.mxu0 0
  %8587 = vmatpush1.bf16.msra.mxu0 0
  %8588 = vmatprep.subr.bf16.mxu0 0
  %8589 = vmatpush1.bf16.msra.mxu0 0
  %8590 = vmatprep.subr.bf16.mxu0 0
  %8591 = vmatpush1.bf16.msra.mxu0 0
  %8592 = vmatprep.subr.bf16.mxu0 0
  %8593 = vmatpush1.bf16.msra.mxu0 0
  %8594 = vmatprep.mubr.bf16.mxu0 0
  %8595 = vmatmul.mubr.bf16.gmra.mrb[0].mxu0 %v8259
  %v8596 = vpop.f32.mrb[0].mxu0
  %v8597 = vadd.f32 %v7893, %v8596
  %v8598 = vpop.f32.mrb[0].mxu0
  %v8599 = vadd.f32 %v7897, %v8598
  %v8600 = vpop.f32.mrb[0].mxu0
  %v8601 = vadd.f32 %v7893, %v8600
  %v8602 = vpop.f32.mrb[0].mxu0
  %v8603 = vadd.f32 %v7897, %v8602
  %8604 = vmatprep.mubr.bf16.mxu0 0
  %8605 = vmatmul.mubr.bf16.gmra.mrb[0].mxu0 %v8262
  %v8606 = vpop.f32.mrb[0].mxu0
  %v8607 = vadd.f32 %v7893, %v8606
  %v8608 = vpop.f32.mrb[0].mxu0
  %v8609 = vadd.f32 %v7897, %v8608
  %v8610 = vpop.f32.mrb[0].mxu0
  %v8611 = vadd.f32 %v7893, %v8610
  %v8612 = vpop.f32.mrb[0].mxu0
  %v8613 = vadd.f32 %v7897, %v8612
  %8614 = vmatprep.mubr.bf16.mxu0 0
  %8615 = vmatmul.mubr.bf16.gmra.mrb[0].mxu0 %v8265
  %v8616 = vpop.f32.mrb[0].mxu0
  %v8617 = vadd.f32 %v7893, %v8616
  %v8618 = vpop.f32.mrb[0].mxu0
  %v8619 = vadd.f32 %v7897, %v8618
  %v8620 = vpop.f32.mrb[0].mxu0
  %v8621 = vadd.f32 %v7893, %v8620
  %v8622 = vpop.f32.mrb[0].mxu0
  %v8623 = vadd.f32 %v7897, %v8622
  %8624 = vmatprep.mubr.bf16.mxu0 0
  %8625 = vmatmul.mubr.bf16.gmra.mrb[0].mxu0 %v8268
  %v8626 = vpop.f32.mrb[0].mxu0
  %v8627 = vadd.f32 %v7893, %v8626
  %v8628 = vpop.f32.mrb[0].mxu0
  %v8629 = vadd.f32 %v7897, %v8628
  %v8630 = vpop.f32.mrb[0].mxu0
  %v8631 = vadd.f32 %v7893, %v8630
  %v8632 = vpop.f32.mrb[0].mxu0
  %v8633 = vadd.f32 %v7897, %v8632
  %8634 = vdwg.mxu0
  %8635 = vmatprep.subr.bf16.mxu0 %v8141
  %8636 = vmatpush1.bf16.msra.mxu0 %v8140
  %8637 = vmatprep.subr.bf16.mxu0 %v8157
  %8638 = vmatpush1.bf16.msra.mxu0 %v8156
  %8639 = vmatprep.subr.bf16.mxu0 %v8173
  %8640 = vmatpush1.bf16.msra.mxu0 %v8172
  %8641 = vmatprep.subr.bf16.mxu0 %v8189
  %8642 = vmatpush1.bf16.msra.mxu0 %v8188
  %8643 = vmatprep.subr.bf16.mxu0 0
  %8644 = vmatpush1.bf16.msra.mxu0 0
  %8645 = vmatprep.subr.bf16.mxu0 0
  %8646 = vmatpush1.bf16.msra.mxu0 0
  %8647 = vmatprep.subr.bf16.mxu0 0
  %8648 = vmatpush1.bf16.msra.mxu0 0
  %8649 = vmatprep.subr.bf16.mxu0 0
  %8650 = vmatpush1.bf16.msra.mxu0 0
  %8651 = vmatprep.subr.bf16.mxu0 0
  %8652 = vmatpush1.bf16.msra.mxu0 0
  %8653 = vmatprep.subr.bf16.mxu0 0
  %8654 = vmatpush1.bf16.msra.mxu0 0
  %8655 = vmatprep.subr.bf16.mxu0 0
  %8656 = vmatpush1.bf16.msra.mxu0 0
  %8657 = vmatprep.subr.bf16.mxu0 0
  %8658 = vmatpush1.bf16.msra.mxu0 0
  %8659 = vmatprep.subr.bf16.mxu0 0
  %8660 = vmatpush1.bf16.msra.mxu0 0
  %8661 = vmatprep.subr.bf16.mxu0 0
  %8662 = vmatpush1.bf16.msra.mxu0 0
  %8663 = vmatprep.subr.bf16.mxu0 0
  %8664 = vmatpush1.bf16.msra.mxu0 0
  %8665 = vmatprep.subr.bf16.mxu0 0
  %8666 = vmatpush1.bf16.msra.mxu0 0
  %8667 = vmatprep.mubr.bf16.mxu0 0
  %8668 = vmatmul.mubr.bf16.gmra.mrb[0].mxu0 %v8259
  %v8669 = vpop.f32.mrb[0].mxu0
  %v8670 = vadd.f32 %v7901, %v8669
  %v8671 = vpop.f32.mrb[0].mxu0
  %v8672 = vadd.f32 %v7905, %v8671
  %v8673 = vpop.f32.mrb[0].mxu0
  %v8674 = vadd.f32 %v7901, %v8673
  %v8675 = vpop.f32.mrb[0].mxu0
  %v8676 = vadd.f32 %v7905, %v8675
  %8677 = vmatprep.mubr.bf16.mxu0 0
  %8678 = vmatmul.mubr.bf16.gmra.mrb[0].mxu0 %v8262
  %v8679 = vpop.f32.mrb[0].mxu0
  %v8680 = vadd.f32 %v7901, %v8679
  %v8681 = vpop.f32.mrb[0].mxu0
  %v8682 = vadd.f32 %v7905, %v8681
  %v8683 = vpop.f32.mrb[0].mxu0
  %v8684 = vadd.f32 %v7901, %v8683
  %v8685 = vpop.f32.mrb[0].mxu0
  %v8686 = vadd.f32 %v7905, %v8685
  %8687 = vmatprep.mubr.bf16.mxu0 0
  %8688 = vmatmul.mubr.bf16.gmra.mrb[0].mxu0 %v8265
  %v8689 = vpop.f32.mrb[0].mxu0
  %v8690 = vadd.f32 %v7901, %v8689
  %v8691 = vpop.f32.mrb[0].mxu0
  %v8692 = vadd.f32 %v7905, %v8691
  %v8693 = vpop.f32.mrb[0].mxu0
  %v8694 = vadd.f32 %v7901, %v8693
  %v8695 = vpop.f32.mrb[0].mxu0
  %v8696 = vadd.f32 %v7905, %v8695
  %8697 = vmatprep.mubr.bf16.mxu0 0
  %8698 = vmatmul.mubr.bf16.gmra.mrb[0].mxu0 %v8268
  %v8699 = vpop.f32.mrb[0].mxu0
  %v8700 = vadd.f32 %v7901, %v8699
  %v8701 = vpop.f32.mrb[0].mxu0
  %v8702 = vadd.f32 %v7905, %v8701
  %v8703 = vpop.f32.mrb[0].mxu0
  %v8704 = vadd.f32 %v7901, %v8703
  %v8705 = vpop.f32.mrb[0].mxu0
  %v8706 = vadd.f32 %v7905, %v8705
  %8707 = vdwg.mxu0
  %8708 = vmatprep.subr.bf16.mxu0 %v8143
  %8709 = vmatpush1.bf16.msra.mxu0 %v8142
  %8710 = vmatprep.subr.bf16.mxu0 %v8159
  %8711 = vmatpush1.bf16.msra.mxu0 %v8158
  %8712 = vmatprep.subr.bf16.mxu0 %v8175
  %8713 = vmatpush1.bf16.msra.mxu0 %v8174
  %8714 = vmatprep.subr.bf16.mxu0 %v8191
  %8715 = vmatpush1.bf16.msra.mxu0 %v8190
  %8716 = vmatprep.subr.bf16.mxu0 0
  %8717 = vmatpush1.bf16.msra.mxu0 0
  %8718 = vmatprep.subr.bf16.mxu0 0
  %8719 = vmatpush1.bf16.msra.mxu0 0
  %8720 = vmatprep.subr.bf16.mxu0 0
  %8721 = vmatpush1.bf16.msra.mxu0 0
  %8722 = vmatprep.subr.bf16.mxu0 0
  %8723 = vmatpush1.bf16.msra.mxu0 0
  %8724 = vmatprep.subr.bf16.mxu0 0
  %8725 = vmatpush1.bf16.msra.mxu0 0
  %8726 = vmatprep.subr.bf16.mxu0 0
  %8727 = vmatpush1.bf16.msra.mxu0 0
  %8728 = vmatprep.subr.bf16.mxu0 0
  %8729 = vmatpush1.bf16.msra.mxu0 0
  %8730 = vmatprep.subr.bf16.mxu0 0
  %8731 = vmatpush1.bf16.msra.mxu0 0
  %8732 = vmatprep.subr.bf16.mxu0 0
  %8733 = vmatpush1.bf16.msra.mxu0 0
  %8734 = vmatprep.subr.bf16.mxu0 0
  %8735 = vmatpush1.bf16.msra.mxu0 0
  %8736 = vmatprep.subr.bf16.mxu0 0
  %8737 = vmatpush1.bf16.msra.mxu0 0
  %8738 = vmatprep.subr.bf16.mxu0 0
  %8739 = vmatpush1.bf16.msra.mxu0 0
  %8740 = vmatprep.mubr.bf16.mxu0 0
  %8741 = vmatmul.mubr.bf16.gmra.mrb[0].mxu0 %v8259
  %v8742 = vpop.f32.mrb[0].mxu0
  %v8743 = vadd.f32 %v7909, %v8742
  %v8744 = vpop.f32.mrb[0].mxu0
  %v8745 = vadd.f32 %v7913, %v8744
  %v8746 = vpop.f32.mrb[0].mxu0
  %v8747 = vadd.f32 %v7909, %v8746
  %v8748 = vpop.f32.mrb[0].mxu0
  %v8749 = vadd.f32 %v7913, %v8748
  %8750 = vmatprep.mubr.bf16.mxu0 0
  %8751 = vmatmul.mubr.bf16.gmra.mrb[0].mxu0 %v8262
  %v8752 = vpop.f32.mrb[0].mxu0
  %v8753 = vadd.f32 %v7909, %v8752
  %v8754 = vpop.f32.mrb[0].mxu0
  %v8755 = vadd.f32 %v7913, %v8754
  %v8756 = vpop.f32.mrb[0].mxu0
  %v8757 = vadd.f32 %v7909, %v8756
  %v8758 = vpop.f32.mrb[0].mxu0
  %v8759 = vadd.f32 %v7913, %v8758
  %8760 = vmatprep.mubr.bf16.mxu0 0
  %8761 = vmatmul.mubr.bf16.gmra.mrb[0].mxu0 %v8265
  %v8762 = vpop.f32.mrb[0].mxu0
  %v8763 = vadd.f32 %v7909, %v8762
  %v8764 = vpop.f32.mrb[0].mxu0
  %v8765 = vadd.f32 %v7913, %v8764
  %v8766 = vpop.f32.mrb[0].mxu0
  %v8767 = vadd.f32 %v7909, %v8766
  %v8768 = vpop.f32.mrb[0].mxu0
  %v8769 = vadd.f32 %v7913, %v8768
  %8770 = vmatprep.mubr.bf16.mxu0 0
  %8771 = vmatmul.mubr.bf16.gmra.mrb[0].mxu0 %v8268
  %v8772 = vpop.f32.mrb[0].mxu0
  %v8773 = vadd.f32 %v7909, %v8772
  %v8774 = vpop.f32.mrb[0].mxu0
  %v8775 = vadd.f32 %v7913, %v8774
  %v8776 = vpop.f32.mrb[0].mxu0
  %v8777 = vadd.f32 %v7909, %v8776
  %v8778 = vpop.f32.mrb[0].mxu0
  %v8779 = vadd.f32 %v7913, %v8778
  %8780 = vdwg.mxu0
  %8781 = vmatprep.subr.bf16.mxu0 %v8145
  %8782 = vmatpush1.bf16.msra.mxu0 %v8144
  %8783 = vmatprep.subr.bf16.mxu0 %v8161
  %8784 = vmatpush1.bf16.msra.mxu0 %v8160
  %8785 = vmatprep.subr.bf16.mxu0 %v8177
  %8786 = vmatpush1.bf16.msra.mxu0 %v8176
  %8787 = vmatprep.subr.bf16.mxu0 %v8193
  %8788 = vmatpush1.bf16.msra.mxu0 %v8192
  %8789 = vmatprep.subr.bf16.mxu0 0
  %8790 = vmatpush1.bf16.msra.mxu0 0
  %8791 = vmatprep.subr.bf16.mxu0 0
  %8792 = vmatpush1.bf16.msra.mxu0 0
  %8793 = vmatprep.subr.bf16.mxu0 0
  %8794 = vmatpush1.bf16.msra.mxu0 0
  %8795 = vmatprep.subr.bf16.mxu0 0
  %8796 = vmatpush1.bf16.msra.mxu0 0
  %8797 = vmatprep.subr.bf16.mxu0 0
  %8798 = vmatpush1.bf16.msra.mxu0 0
  %8799 = vmatprep.subr.bf16.mxu0 0
  %8800 = vmatpush1.bf16.msra.mxu0 0
  %8801 = vmatprep.subr.bf16.mxu0 0
  %8802 = vmatpush1.bf16.msra.mxu0 0
  %8803 = vmatprep.subr.bf16.mxu0 0
  %8804 = vmatpush1.bf16.msra.mxu0 0
  %8805 = vmatprep.subr.bf16.mxu0 0
  %8806 = vmatpush1.bf16.msra.mxu0 0
  %8807 = vmatprep.subr.bf16.mxu0 0
  %8808 = vmatpush1.bf16.msra.mxu0 0
  %8809 = vmatprep.subr.bf16.mxu0 0
  %8810 = vmatpush1.bf16.msra.mxu0 0
  %8811 = vmatprep.subr.bf16.mxu0 0
  %8812 = vmatpush1.bf16.msra.mxu0 0
  %8813 = vmatprep.mubr.bf16.mxu0 0
  %8814 = vmatmul.mubr.bf16.gmra.mrb[0].mxu0 %v8259
  %v8815 = vpop.f32.mrb[0].mxu0
  %v8816 = vadd.f32 %v7917, %v8815
  %v8817 = vpop.f32.mrb[0].mxu0
  %v8818 = vadd.f32 %v7921, %v8817
  %v8819 = vpop.f32.mrb[0].mxu0
  %v8820 = vadd.f32 %v7917, %v8819
  %v8821 = vpop.f32.mrb[0].mxu0
  %v8822 = vadd.f32 %v7921, %v8821
  %8823 = vmatprep.mubr.bf16.mxu0 0
  %8824 = vmatmul.mubr.bf16.gmra.mrb[0].mxu0 %v8262
  %v8825 = vpop.f32.mrb[0].mxu0
  %v8826 = vadd.f32 %v7917, %v8825
  %v8827 = vpop.f32.mrb[0].mxu0
  %v8828 = vadd.f32 %v7921, %v8827
  %v8829 = vpop.f32.mrb[0].mxu0
  %v8830 = vadd.f32 %v7917, %v8829
  %v8831 = vpop.f32.mrb[0].mxu0
  %v8832 = vadd.f32 %v7921, %v8831
  %8833 = vmatprep.mubr.bf16.mxu0 0
  %8834 = vmatmul.mubr.bf16.gmra.mrb[0].mxu0 %v8265
  %v8835 = vpop.f32.mrb[0].mxu0
  %v8836 = vadd.f32 %v7917, %v8835
  %v8837 = vpop.f32.mrb[0].mxu0
  %v8838 = vadd.f32 %v7921, %v8837
  %v8839 = vpop.f32.mrb[0].mxu0
  %v8840 = vadd.f32 %v7917, %v8839
  %v8841 = vpop.f32.mrb[0].mxu0
  %v8842 = vadd.f32 %v7921, %v8841
  %8843 = vmatprep.mubr.bf16.mxu0 0
  %8844 = vmatmul.mubr.bf16.gmra.mrb[0].mxu0 %v8268
  %v8845 = vpop.f32.mrb[0].mxu0
  %v8846 = vadd.f32 %v7917, %v8845
  %v8847 = vpop.f32.mrb[0].mxu0
  %v8848 = vadd.f32 %v7921, %v8847
  %v8849 = vpop.f32.mrb[0].mxu0
  %v8850 = vadd.f32 %v7917, %v8849
  %v8851 = vpop.f32.mrb[0].mxu0
  %v8852 = vadd.f32 %v7921, %v8851
  %8853 = vdwg.mxu0
  %v8854 = vmax.f32 %v8305, 0.0
  %v8855 = vmax.f32 %v8307, 0.0
  %v8856 = vmax.f32 %v8378, 0.0
  %v8857 = vmax.f32 %v8380, 0.0
  %v8858 = vmax.f32 %v8451, 0.0
  %v8859 = vmax.f32 %v8453, 0.0
  %v8860 = vmax.f32 %v8524, 0.0
  %v8861 = vmax.f32 %v8526, 0.0
  %v8862 = vmax.f32 %v8597, 0.0
  %v8863 = vmax.f32 %v8599, 0.0
  %v8864 = vmax.f32 %v8670, 0.0
  %v8865 = vmax.f32 %v8672, 0.0
  %v8866 = vmax.f32 %v8743, 0.0
  %v8867 = vmax.f32 %v8745, 0.0
  %v8868 = vmax.f32 %v8816, 0.0
  %v8869 = vmax.f32 %v8818, 0.0
  %v8870 = vmax.f32 %v8309, 0.0
  %v8871 = vmax.f32 %v8311, 0.0
  %v8872 = vmax.f32 %v8382, 0.0
  %v8873 = vmax.f32 %v8384, 0.0
  %v8874 = vmax.f32 %v8455, 0.0
  %v8875 = vmax.f32 %v8457, 0.0
  %v8876 = vmax.f32 %v8528, 0.0
  %v8877 = vmax.f32 %v8530, 0.0
  %v8878 = vmax.f32 %v8601, 0.0
  %v8879 = vmax.f32 %v8603, 0.0
  %v8880 = vmax.f32 %v8674, 0.0
  %v8881 = vmax.f32 %v8676, 0.0
  %v8882 = vmax.f32 %v8747, 0.0
  %v8883 = vmax.f32 %v8749, 0.0
  %v8884 = vmax.f32 %v8820, 0.0
  %v8885 = vmax.f32 %v8822, 0.0
  %v8886 = vmax.f32 %v8315, 0.0
  %v8887 = vmax.f32 %v8317, 0.0
  %v8888 = vmax.f32 %v8388, 0.0
  %v8889 = vmax.f32 %v8390, 0.0
  %v8890 = vmax.f32 %v8461, 0.0
  %v8891 = vmax.f32 %v8463, 0.0
  %v8892 = vmax.f32 %v8534, 0.0
  %v8893 = vmax.f32 %v8536, 0.0
  %v8894 = vmax.f32 %v8607, 0.0
  %v8895 = vmax.f32 %v8609, 0.0
  %v8896 = vmax.f32 %v8680, 0.0
  %v8897 = vmax.f32 %v8682, 0.0
  %v8898 = vmax.f32 %v8753, 0.0
  %v8899 = vmax.f32 %v8755, 0.0
  %v8900 = vmax.f32 %v8826, 0.0
  %v8901 = vmax.f32 %v8828, 0.0
  %v8902 = vmax.f32 %v8319, 0.0
  %v8903 = vmax.f32 %v8321, 0.0
  %v8904 = vmax.f32 %v8392, 0.0
  %v8905 = vmax.f32 %v8394, 0.0
  %v8906 = vmax.f32 %v8465, 0.0
  %v8907 = vmax.f32 %v8467, 0.0
  %v8908 = vmax.f32 %v8538, 0.0
  %v8909 = vmax.f32 %v8540, 0.0
  %v8910 = vmax.f32 %v8611, 0.0
  %v8911 = vmax.f32 %v8613, 0.0
  %v8912 = vmax.f32 %v8684, 0.0
  %v8913 = vmax.f32 %v8686, 0.0
  %v8914 = vmax.f32 %v8757, 0.0
  %v8915 = vmax.f32 %v8759, 0.0
  %v8916 = vmax.f32 %v8830, 0.0
  %v8917 = vmax.f32 %v8832, 0.0
  %v8918 = vmax.f32 %v8325, 0.0
  %v8919 = vmax.f32 %v8327, 0.0
  %v8920 = vmax.f32 %v8398, 0.0
  %v8921 = vmax.f32 %v8400, 0.0
  %v8922 = vmax.f32 %v8471, 0.0
  %v8923 = vmax.f32 %v8473, 0.0
  %v8924 = vmax.f32 %v8544, 0.0
  %v8925 = vmax.f32 %v8546, 0.0
  %v8926 = vmax.f32 %v8617, 0.0
  %v8927 = vmax.f32 %v8619, 0.0
  %v8928 = vmax.f32 %v8690, 0.0
  %v8929 = vmax.f32 %v8692, 0.0
  %v8930 = vmax.f32 %v8763, 0.0
  %v8931 = vmax.f32 %v8765, 0.0
  %v8932 = vmax.f32 %v8836, 0.0
  %v8933 = vmax.f32 %v8838, 0.0
  %v8934 = vmax.f32 %v8329, 0.0
  %v8935 = vmax.f32 %v8331, 0.0
  %v8936 = vmax.f32 %v8402, 0.0
  %v8937 = vmax.f32 %v8404, 0.0
  %v8938 = vmax.f32 %v8475, 0.0
  %v8939 = vmax.f32 %v8477, 0.0
  %v8940 = vmax.f32 %v8548, 0.0
  %v8941 = vmax.f32 %v8550, 0.0
  %v8942 = vmax.f32 %v8621, 0.0
  %v8943 = vmax.f32 %v8623, 0.0
  %v8944 = vmax.f32 %v8694, 0.0
  %v8945 = vmax.f32 %v8696, 0.0
  %v8946 = vmax.f32 %v8767, 0.0
  %v8947 = vmax.f32 %v8769, 0.0
  %v8948 = vmax.f32 %v8840, 0.0
  %v8949 = vmax.f32 %v8842, 0.0
  %v8950 = vmax.f32 %v8335, 0.0
  %v8951 = vmax.f32 %v8337, 0.0
  %v8952 = vmax.f32 %v8408, 0.0
  %v8953 = vmax.f32 %v8410, 0.0
  %v8954 = vmax.f32 %v8481, 0.0
  %v8955 = vmax.f32 %v8483, 0.0
  %v8956 = vmax.f32 %v8554, 0.0
  %v8957 = vmax.f32 %v8556, 0.0
  %v8958 = vmax.f32 %v8627, 0.0
  %v8959 = vmax.f32 %v8629, 0.0
  %v8960 = vmax.f32 %v8700, 0.0
  %v8961 = vmax.f32 %v8702, 0.0
  %v8962 = vmax.f32 %v8773, 0.0
  %v8963 = vmax.f32 %v8775, 0.0
  %v8964 = vmax.f32 %v8846, 0.0
  %v8965 = vmax.f32 %v8848, 0.0
  %v8966 = vmax.f32 %v8339, 0.0
  %v8967 = vmax.f32 %v8341, 0.0
  %v8968 = vmax.f32 %v8412, 0.0
  %v8969 = vmax.f32 %v8414, 0.0
  %v8970 = vmax.f32 %v8485, 0.0
  %v8971 = vmax.f32 %v8487, 0.0
  %v8972 = vmax.f32 %v8558, 0.0
  %v8973 = vmax.f32 %v8560, 0.0
  %v8974 = vmax.f32 %v8631, 0.0
  %v8975 = vmax.f32 %v8633, 0.0
  %v8976 = vmax.f32 %v8704, 0.0
  %v8977 = vmax.f32 %v8706, 0.0
  %v8978 = vmax.f32 %v8777, 0.0
  %v8979 = vmax.f32 %v8779, 0.0
  %v8980 = vmax.f32 %v8850, 0.0
  %v8981 = vmax.f32 %v8852, 0.0
  %v8982 = vpack.c.bf16 %v8870, %v8854
  %v8983 = vpack.c.bf16 %v8871, %v8855
  %v8984 = vpack.c.bf16 %v8872, %v8856
  %v8985 = vpack.c.bf16 %v8873, %v8857
  %v8986 = vpack.c.bf16 %v8874, %v8858
  %v8987 = vpack.c.bf16 %v8875, %v8859
  %v8988 = vpack.c.bf16 %v8876, %v8860
  %v8989 = vpack.c.bf16 %v8877, %v8861
  %v8990 = vpack.c.bf16 %v8878, %v8862
  %v8991 = vpack.c.bf16 %v8879, %v8863
  %v8992 = vpack.c.bf16 %v8880, %v8864
  %v8993 = vpack.c.bf16 %v8881, %v8865
  %v8994 = vpack.c.bf16 %v8882, %v8866
  %v8995 = vpack.c.bf16 %v8883, %v8867
  %v8996 = vpack.c.bf16 %v8884, %v8868
  %v8997 = vpack.c.bf16 %v8885, %v8869
  %v8998 = vpack.c.bf16 %v8902, %v8886
  %v8999 = vpack.c.bf16 %v8903, %v8887
  %v9000 = vpack.c.bf16 %v8904, %v8888
  %v9001 = vpack.c.bf16 %v8905, %v8889
  %v9002 = vpack.c.bf16 %v8906, %v8890
  %v9003 = vpack.c.bf16 %v8907, %v8891
  %v9004 = vpack.c.bf16 %v8908, %v8892
  %v9005 = vpack.c.bf16 %v8909, %v8893
  %v9006 = vpack.c.bf16 %v8910, %v8894
  %v9007 = vpack.c.bf16 %v8911, %v8895
  %v9008 = vpack.c.bf16 %v8912, %v8896
  %v9009 = vpack.c.bf16 %v8913, %v8897
  %v9010 = vpack.c.bf16 %v8914, %v8898
  %v9011 = vpack.c.bf16 %v8915, %v8899
  %v9012 = vpack.c.bf16 %v8916, %v8900
  %v9013 = vpack.c.bf16 %v8917, %v8901
  %v9014 = vpack.c.bf16 %v8934, %v8918
  %v9015 = vpack.c.bf16 %v8935, %v8919
  %v9016 = vpack.c.bf16 %v8936, %v8920
  %v9017 = vpack.c.bf16 %v8937, %v8921
  %v9018 = vpack.c.bf16 %v8938, %v8922
  %v9019 = vpack.c.bf16 %v8939, %v8923
  %v9020 = vpack.c.bf16 %v8940, %v8924
  %v9021 = vpack.c.bf16 %v8941, %v8925
  %v9022 = vpack.c.bf16 %v8942, %v8926
  %v9023 = vpack.c.bf16 %v8943, %v8927
  %v9024 = vpack.c.bf16 %v8944, %v8928
  %v9025 = vpack.c.bf16 %v8945, %v8929
  %v9026 = vpack.c.bf16 %v8946, %v8930
  %v9027 = vpack.c.bf16 %v8947, %v8931
  %v9028 = vpack.c.bf16 %v8948, %v8932
  %v9029 = vpack.c.bf16 %v8949, %v8933
  %v9030 = vpack.c.bf16 %v8966, %v8950
  %v9031 = vpack.c.bf16 %v8967, %v8951
  %v9032 = vpack.c.bf16 %v8968, %v8952
  %v9033 = vpack.c.bf16 %v8969, %v8953
  %v9034 = vpack.c.bf16 %v8970, %v8954
  %v9035 = vpack.c.bf16 %v8971, %v8955
  %v9036 = vpack.c.bf16 %v8972, %v8956
  %v9037 = vpack.c.bf16 %v8973, %v8957
  %v9038 = vpack.c.bf16 %v8974, %v8958
  %v9039 = vpack.c.bf16 %v8975, %v8959
  %v9040 = vpack.c.bf16 %v8976, %v8960
  %v9041 = vpack.c.bf16 %v8977, %v8961
  %v9042 = vpack.c.bf16 %v8978, %v8962
  %v9043 = vpack.c.bf16 %v8979, %v8963
  %v9044 = vpack.c.bf16 %v8980, %v8964
  %v9045 = vpack.c.bf16 %v8981, %v8965
  %s9046 = scalar_lea.vmem %s12, 1024
  %v9047 = vld [vmem:[%s9046] sm:$0xf]
  %v9048 = vld [vmem:[%s9046 + $0x4] sm:$0xf]
  %v9049 = vld [vmem:[%s9046 + $0x8] sm:$0xf]
  %v9050 = vld [vmem:[%s9046 + $0xc] sm:$0xf]
  %v9051 = vld [vmem:[%s9046 + $0x10] sm:$0xf]
  %v9052 = vld [vmem:[%s9046 + $0x14] sm:$0xf]
  %v9053 = vld [vmem:[%s9046 + $0x18] sm:$0xf]
  %v9054 = vld [vmem:[%s9046 + $0x1c] sm:$0xf]
  %v9055 = vld [vmem:[%s9046 + $0x20] sm:$0xf]
  %v9056 = vld [vmem:[%s9046 + $0x24] sm:$0xf]
  %v9057 = vld [vmem:[%s9046 + $0x28] sm:$0xf]
  %v9058 = vld [vmem:[%s9046 + $0x2c] sm:$0xf]
  %v9059 = vld [vmem:[%s9046 + $0x30] sm:$0xf]
  %v9060 = vld [vmem:[%s9046 + $0x34] sm:$0xf]
  %v9061 = vld [vmem:[%s9046 + $0x38] sm:$0xf]
  %v9062 = vld [vmem:[%s9046 + $0x3c] sm:$0xf]
  %v9063 = vld [vmem:[%s9046 + $0x40] sm:$0xf]
  %v9064 = vld [vmem:[%s9046 + $0x44] sm:$0xf]
  %v9065 = vld [vmem:[%s9046 + $0x48] sm:$0xf]
  %v9066 = vld [vmem:[%s9046 + $0x4c] sm:$0xf]
  %v9067 = vld [vmem:[%s9046 + $0x50] sm:$0xf]
  %v9068 = vld [vmem:[%s9046 + $0x54] sm:$0xf]
  %v9069 = vld [vmem:[%s9046 + $0x58] sm:$0xf]
  %v9070 = vld [vmem:[%s9046 + $0x5c] sm:$0xf]
  %v9071 = vld [vmem:[%s9046 + $0x60] sm:$0xf]
  %v9072 = vld [vmem:[%s9046 + $0x64] sm:$0xf]
  %v9073 = vld [vmem:[%s9046 + $0x68] sm:$0xf]
  %v9074 = vld [vmem:[%s9046 + $0x6c] sm:$0xf]
  %v9075 = vld [vmem:[%s9046 + $0x70] sm:$0xf]
  %v9076 = vld [vmem:[%s9046 + $0x74] sm:$0xf]
  %v9077 = vld [vmem:[%s9046 + $0x78] sm:$0xf]
  %v9078 = vld [vmem:[%s9046 + $0x7c] sm:$0xf]
  %v9079 = vld [vmem:[%s9046 + $0x80] sm:$0xf]
  %v9080 = vld [vmem:[%s9046 + $0x84] sm:$0xf]
  %v9081 = vld [vmem:[%s9046 + $0x88] sm:$0xf]
  %v9082 = vld [vmem:[%s9046 + $0x8c] sm:$0xf]
  %v9083 = vld [vmem:[%s9046 + $0x90] sm:$0xf]
  %v9084 = vld [vmem:[%s9046 + $0x94] sm:$0xf]
  %v9085 = vld [vmem:[%s9046 + $0x98] sm:$0xf]
  %v9086 = vld [vmem:[%s9046 + $0x9c] sm:$0xf]
  %v9087 = vld [vmem:[%s9046 + $0xa0] sm:$0xf]
  %v9088 = vld [vmem:[%s9046 + $0xa4] sm:$0xf]
  %v9089 = vld [vmem:[%s9046 + $0xa8] sm:$0xf]
  %v9090 = vld [vmem:[%s9046 + $0xac] sm:$0xf]
  %v9091 = vld [vmem:[%s9046 + $0xb0] sm:$0xf]
  %v9092 = vld [vmem:[%s9046 + $0xb4] sm:$0xf]
  %v9093 = vld [vmem:[%s9046 + $0xb8] sm:$0xf]
  %v9094 = vld [vmem:[%s9046 + $0xbc] sm:$0xf]
  %v9095 = vld [vmem:[%s9046 + $0xc0] sm:$0xf]
  %v9096 = vld [vmem:[%s9046 + $0xc4] sm:$0xf]
  %v9097 = vld [vmem:[%s9046 + $0xc8] sm:$0xf]
  %v9098 = vld [vmem:[%s9046 + $0xcc] sm:$0xf]
  %v9099 = vld [vmem:[%s9046 + $0xd0] sm:$0xf]
  %v9100 = vld [vmem:[%s9046 + $0xd4] sm:$0xf]
  %v9101 = vld [vmem:[%s9046 + $0xd8] sm:$0xf]
  %v9102 = vld [vmem:[%s9046 + $0xdc] sm:$0xf]
  %v9103 = vld [vmem:[%s9046 + $0xe0] sm:$0xf]
  %v9104 = vld [vmem:[%s9046 + $0xe4] sm:$0xf]
  %v9105 = vld [vmem:[%s9046 + $0xe8] sm:$0xf]
  %v9106 = vld [vmem:[%s9046 + $0xec] sm:$0xf]
  %v9107 = vld [vmem:[%s9046 + $0xf0] sm:$0xf]
  %v9108 = vld [vmem:[%s9046 + $0xf4] sm:$0xf]
  %v9109 = vld [vmem:[%s9046 + $0xf8] sm:$0xf]
  %v9110 = vld [vmem:[%s9046 + $0xfc] sm:$0xf]
  %v9111 = vld [vmem:[%s9046 + $0x100] sm:$0xf]
  %v9112 = vld [vmem:[%s9046 + $0x104] sm:$0xf]
  %v9113 = vld [vmem:[%s9046 + $0x108] sm:$0xf]
  %v9114 = vld [vmem:[%s9046 + $0x10c] sm:$0xf]
  %v9115 = vld [vmem:[%s9046 + $0x110] sm:$0xf]
  %v9116 = vld [vmem:[%s9046 + $0x114] sm:$0xf]
  %v9117 = vld [vmem:[%s9046 + $0x118] sm:$0xf]
  %v9118 = vld [vmem:[%s9046 + $0x11c] sm:$0xf]
  %v9119 = vld [vmem:[%s9046 + $0x120] sm:$0xf]
  %v9120 = vld [vmem:[%s9046 + $0x124] sm:$0xf]
  %v9121 = vld [vmem:[%s9046 + $0x128] sm:$0xf]
  %v9122 = vld [vmem:[%s9046 + $0x12c] sm:$0xf]
  %v9123 = vld [vmem:[%s9046 + $0x130] sm:$0xf]
  %v9124 = vld [vmem:[%s9046 + $0x134] sm:$0xf]
  %v9125 = vld [vmem:[%s9046 + $0x138] sm:$0xf]
  %v9126 = vld [vmem:[%s9046 + $0x13c] sm:$0xf]
  %v9127 = vld [vmem:[%s9046 + $0x140] sm:$0xf]
  %v9128 = vld [vmem:[%s9046 + $0x144] sm:$0xf]
  %v9129 = vld [vmem:[%s9046 + $0x148] sm:$0xf]
  %v9130 = vld [vmem:[%s9046 + $0x14c] sm:$0xf]
  %v9131 = vld [vmem:[%s9046 + $0x150] sm:$0xf]
  %v9132 = vld [vmem:[%s9046 + $0x154] sm:$0xf]
  %v9133 = vld [vmem:[%s9046 + $0x158] sm:$0xf]
  %v9134 = vld [vmem:[%s9046 + $0x15c] sm:$0xf]
  %v9135 = vld [vmem:[%s9046 + $0x160] sm:$0xf]
  %v9136 = vld [vmem:[%s9046 + $0x164] sm:$0xf]
  %v9137 = vld [vmem:[%s9046 + $0x168] sm:$0xf]
  %v9138 = vld [vmem:[%s9046 + $0x16c] sm:$0xf]
  %v9139 = vld [vmem:[%s9046 + $0x170] sm:$0xf]
  %v9140 = vld [vmem:[%s9046 + $0x174] sm:$0xf]
  %v9141 = vld [vmem:[%s9046 + $0x178] sm:$0xf]
  %v9142 = vld [vmem:[%s9046 + $0x17c] sm:$0xf]
  %v9143 = vld [vmem:[%s9046 + $0x180] sm:$0xf]
  %v9144 = vld [vmem:[%s9046 + $0x184] sm:$0xf]
  %v9145 = vld [vmem:[%s9046 + $0x188] sm:$0xf]
  %v9146 = vld [vmem:[%s9046 + $0x18c] sm:$0xf]
  %v9147 = vld [vmem:[%s9046 + $0x190] sm:$0xf]
  %v9148 = vld [vmem:[%s9046 + $0x194] sm:$0xf]
  %v9149 = vld [vmem:[%s9046 + $0x198] sm:$0xf]
  %v9150 = vld [vmem:[%s9046 + $0x19c] sm:$0xf]
  %v9151 = vld [vmem:[%s9046 + $0x1a0] sm:$0xf]
  %v9152 = vld [vmem:[%s9046 + $0x1a4] sm:$0xf]
  %v9153 = vld [vmem:[%s9046 + $0x1a8] sm:$0xf]
  %v9154 = vld [vmem:[%s9046 + $0x1ac] sm:$0xf]
  %v9155 = vld [vmem:[%s9046 + $0x1b0] sm:$0xf]
  %v9156 = vld [vmem:[%s9046 + $0x1b4] sm:$0xf]
  %v9157 = vld [vmem:[%s9046 + $0x1b8] sm:$0xf]
  %v9158 = vld [vmem:[%s9046 + $0x1bc] sm:$0xf]
  %v9159 = vld [vmem:[%s9046 + $0x1c0] sm:$0xf]
  %v9160 = vld [vmem:[%s9046 + $0x1c4] sm:$0xf]
  %v9161 = vld [vmem:[%s9046 + $0x1c8] sm:$0xf]
  %v9162 = vld [vmem:[%s9046 + $0x1cc] sm:$0xf]
  %v9163 = vld [vmem:[%s9046 + $0x1d0] sm:$0xf]
  %v9164 = vld [vmem:[%s9046 + $0x1d4] sm:$0xf]
  %v9165 = vld [vmem:[%s9046 + $0x1d8] sm:$0xf]
  %v9166 = vld [vmem:[%s9046 + $0x1dc] sm:$0xf]
  %v9167 = vld [vmem:[%s9046 + $0x1e0] sm:$0xf]
  %v9168 = vld [vmem:[%s9046 + $0x1e4] sm:$0xf]
  %v9169 = vld [vmem:[%s9046 + $0x1e8] sm:$0xf]
  %v9170 = vld [vmem:[%s9046 + $0x1ec] sm:$0xf]
  %v9171 = vld [vmem:[%s9046 + $0x1f0] sm:$0xf]
  %v9172 = vld [vmem:[%s9046 + $0x1f4] sm:$0xf]
  %v9173 = vld [vmem:[%s9046 + $0x1f8] sm:$0xf]
  %v9174 = vld [vmem:[%s9046 + $0x1fc] sm:$0xf]
  %v9175 = vld [vmem:[%s9046 + $0x200] sm:$0xf]
  %v9176 = vld [vmem:[%s9046 + $0x204] sm:$0xf]
  %v9177 = vld [vmem:[%s9046 + $0x208] sm:$0xf]
  %v9178 = vld [vmem:[%s9046 + $0x20c] sm:$0xf]
  %v9179 = vld [vmem:[%s9046 + $0x210] sm:$0xf]
  %v9180 = vld [vmem:[%s9046 + $0x214] sm:$0xf]
  %v9181 = vld [vmem:[%s9046 + $0x218] sm:$0xf]
  %v9182 = vld [vmem:[%s9046 + $0x21c] sm:$0xf]
  %v9183 = vld [vmem:[%s9046 + $0x220] sm:$0xf]
  %v9184 = vld [vmem:[%s9046 + $0x224] sm:$0xf]
  %v9185 = vld [vmem:[%s9046 + $0x228] sm:$0xf]
  %v9186 = vld [vmem:[%s9046 + $0x22c] sm:$0xf]
  %v9187 = vld [vmem:[%s9046 + $0x230] sm:$0xf]
  %v9188 = vld [vmem:[%s9046 + $0x234] sm:$0xf]
  %v9189 = vld [vmem:[%s9046 + $0x238] sm:$0xf]
  %v9190 = vld [vmem:[%s9046 + $0x23c] sm:$0xf]
  %v9191 = vld [vmem:[%s9046 + $0x240] sm:$0xf]
  %v9192 = vld [vmem:[%s9046 + $0x244] sm:$0xf]
  %v9193 = vld [vmem:[%s9046 + $0x248] sm:$0xf]
  %v9194 = vld [vmem:[%s9046 + $0x24c] sm:$0xf]
  %v9195 = vld [vmem:[%s9046 + $0x250] sm:$0xf]
  %v9196 = vld [vmem:[%s9046 + $0x254] sm:$0xf]
  %v9197 = vld [vmem:[%s9046 + $0x258] sm:$0xf]
  %v9198 = vld [vmem:[%s9046 + $0x25c] sm:$0xf]
  %v9199 = vld [vmem:[%s9046 + $0x260] sm:$0xf]
  %v9200 = vld [vmem:[%s9046 + $0x264] sm:$0xf]
  %v9201 = vld [vmem:[%s9046 + $0x268] sm:$0xf]
  %v9202 = vld [vmem:[%s9046 + $0x26c] sm:$0xf]
  %v9203 = vld [vmem:[%s9046 + $0x270] sm:$0xf]
  %v9204 = vld [vmem:[%s9046 + $0x274] sm:$0xf]
  %v9205 = vld [vmem:[%s9046 + $0x278] sm:$0xf]
  %v9206 = vld [vmem:[%s9046 + $0x27c] sm:$0xf]
  %v9207 = vld [vmem:[%s9046 + $0x280] sm:$0xf]
  %v9208 = vld [vmem:[%s9046 + $0x284] sm:$0xf]
  %v9209 = vld [vmem:[%s9046 + $0x288] sm:$0xf]
  %v9210 = vld [vmem:[%s9046 + $0x28c] sm:$0xf]
  %v9211 = vld [vmem:[%s9046 + $0x290] sm:$0xf]
  %v9212 = vld [vmem:[%s9046 + $0x294] sm:$0xf]
  %v9213 = vld [vmem:[%s9046 + $0x298] sm:$0xf]
  %v9214 = vld [vmem:[%s9046 + $0x29c] sm:$0xf]
  %v9215 = vld [vmem:[%s9046 + $0x2a0] sm:$0xf]
  %v9216 = vld [vmem:[%s9046 + $0x2a4] sm:$0xf]
  %v9217 = vld [vmem:[%s9046 + $0x2a8] sm:$0xf]
  %v9218 = vld [vmem:[%s9046 + $0x2ac] sm:$0xf]
  %v9219 = vld [vmem:[%s9046 + $0x2b0] sm:$0xf]
  %v9220 = vld [vmem:[%s9046 + $0x2b4] sm:$0xf]
  %v9221 = vld [vmem:[%s9046 + $0x2b8] sm:$0xf]
  %v9222 = vld [vmem:[%s9046 + $0x2bc] sm:$0xf]
  %v9223 = vld [vmem:[%s9046 + $0x2c0] sm:$0xf]
  %v9224 = vld [vmem:[%s9046 + $0x2c4] sm:$0xf]
  %v9225 = vld [vmem:[%s9046 + $0x2c8] sm:$0xf]
  %v9226 = vld [vmem:[%s9046 + $0x2cc] sm:$0xf]
  %v9227 = vld [vmem:[%s9046 + $0x2d0] sm:$0xf]
  %v9228 = vld [vmem:[%s9046 + $0x2d4] sm:$0xf]
  %v9229 = vld [vmem:[%s9046 + $0x2d8] sm:$0xf]
  %v9230 = vld [vmem:[%s9046 + $0x2dc] sm:$0xf]
  %v9231 = vld [vmem:[%s9046 + $0x2e0] sm:$0xf]
  %v9232 = vld [vmem:[%s9046 + $0x2e4] sm:$0xf]
  %v9233 = vld [vmem:[%s9046 + $0x2e8] sm:$0xf]
  %v9234 = vld [vmem:[%s9046 + $0x2ec] sm:$0xf]
  %v9235 = vld [vmem:[%s9046 + $0x2f0] sm:$0xf]
  %v9236 = vld [vmem:[%s9046 + $0x2f4] sm:$0xf]
  %v9237 = vld [vmem:[%s9046 + $0x2f8] sm:$0xf]
  %v9238 = vld [vmem:[%s9046 + $0x2fc] sm:$0xf]
  %v9239 = vld [vmem:[%s9046 + $0x300] sm:$0xf]
  %v9240 = vld [vmem:[%s9046 + $0x304] sm:$0xf]
  %v9241 = vld [vmem:[%s9046 + $0x308] sm:$0xf]
  %v9242 = vld [vmem:[%s9046 + $0x30c] sm:$0xf]
  %v9243 = vld [vmem:[%s9046 + $0x310] sm:$0xf]
  %v9244 = vld [vmem:[%s9046 + $0x314] sm:$0xf]
  %v9245 = vld [vmem:[%s9046 + $0x318] sm:$0xf]
  %v9246 = vld [vmem:[%s9046 + $0x31c] sm:$0xf]
  %v9247 = vld [vmem:[%s9046 + $0x320] sm:$0xf]
  %v9248 = vld [vmem:[%s9046 + $0x324] sm:$0xf]
  %v9249 = vld [vmem:[%s9046 + $0x328] sm:$0xf]
  %v9250 = vld [vmem:[%s9046 + $0x32c] sm:$0xf]
  %v9251 = vld [vmem:[%s9046 + $0x330] sm:$0xf]
  %v9252 = vld [vmem:[%s9046 + $0x334] sm:$0xf]
  %v9253 = vld [vmem:[%s9046 + $0x338] sm:$0xf]
  %v9254 = vld [vmem:[%s9046 + $0x33c] sm:$0xf]
  %v9255 = vld [vmem:[%s9046 + $0x340] sm:$0xf]
  %v9256 = vld [vmem:[%s9046 + $0x344] sm:$0xf]
  %v9257 = vld [vmem:[%s9046 + $0x348] sm:$0xf]
  %v9258 = vld [vmem:[%s9046 + $0x34c] sm:$0xf]
  %v9259 = vld [vmem:[%s9046 + $0x350] sm:$0xf]
  %v9260 = vld [vmem:[%s9046 + $0x354] sm:$0xf]
  %v9261 = vld [vmem:[%s9046 + $0x358] sm:$0xf]
  %v9262 = vld [vmem:[%s9046 + $0x35c] sm:$0xf]
  %v9263 = vld [vmem:[%s9046 + $0x360] sm:$0xf]
  %v9264 = vld [vmem:[%s9046 + $0x364] sm:$0xf]
  %v9265 = vld [vmem:[%s9046 + $0x368] sm:$0xf]
  %v9266 = vld [vmem:[%s9046 + $0x36c] sm:$0xf]
  %v9267 = vld [vmem:[%s9046 + $0x370] sm:$0xf]
  %v9268 = vld [vmem:[%s9046 + $0x374] sm:$0xf]
  %v9269 = vld [vmem:[%s9046 + $0x378] sm:$0xf]
  %v9270 = vld [vmem:[%s9046 + $0x37c] sm:$0xf]
  %v9271 = vld [vmem:[%s9046 + $0x380] sm:$0xf]
  %v9272 = vld [vmem:[%s9046 + $0x384] sm:$0xf]
  %v9273 = vld [vmem:[%s9046 + $0x388] sm:$0xf]
  %v9274 = vld [vmem:[%s9046 + $0x38c] sm:$0xf]
  %v9275 = vld [vmem:[%s9046 + $0x390] sm:$0xf]
  %v9276 = vld [vmem:[%s9046 + $0x394] sm:$0xf]
  %v9277 = vld [vmem:[%s9046 + $0x398] sm:$0xf]
  %v9278 = vld [vmem:[%s9046 + $0x39c] sm:$0xf]
  %v9279 = vld [vmem:[%s9046 + $0x3a0] sm:$0xf]
  %v9280 = vld [vmem:[%s9046 + $0x3a4] sm:$0xf]
  %v9281 = vld [vmem:[%s9046 + $0x3a8] sm:$0xf]
  %v9282 = vld [vmem:[%s9046 + $0x3ac] sm:$0xf]
  %v9283 = vld [vmem:[%s9046 + $0x3b0] sm:$0xf]
  %v9284 = vld [vmem:[%s9046 + $0x3b4] sm:$0xf]
  %v9285 = vld [vmem:[%s9046 + $0x3b8] sm:$0xf]
  %v9286 = vld [vmem:[%s9046 + $0x3bc] sm:$0xf]
  %v9287 = vld [vmem:[%s9046 + $0x3c0] sm:$0xf]
  %v9288 = vld [vmem:[%s9046 + $0x3c4] sm:$0xf]
  %v9289 = vld [vmem:[%s9046 + $0x3c8] sm:$0xf]
  %v9290 = vld [vmem:[%s9046 + $0x3cc] sm:$0xf]
  %v9291 = vld [vmem:[%s9046 + $0x3d0] sm:$0xf]
  %v9292 = vld [vmem:[%s9046 + $0x3d4] sm:$0xf]
  %v9293 = vld [vmem:[%s9046 + $0x3d8] sm:$0xf]
  %v9294 = vld [vmem:[%s9046 + $0x3dc] sm:$0xf]
  %v9295 = vld [vmem:[%s9046 + $0x3e0] sm:$0xf]
  %v9296 = vld [vmem:[%s9046 + $0x3e4] sm:$0xf]
  %v9297 = vld [vmem:[%s9046 + $0x3e8] sm:$0xf]
  %v9298 = vld [vmem:[%s9046 + $0x3ec] sm:$0xf]
  %v9299 = vld [vmem:[%s9046 + $0x3f0] sm:$0xf]
  %v9300 = vld [vmem:[%s9046 + $0x3f4] sm:$0xf]
  %v9301 = vld [vmem:[%s9046 + $0x3f8] sm:$0xf]
  %v9302 = vld [vmem:[%s9046 + $0x3fc] sm:$0xf]
  %s9303 = scalar_lea.vmem %s13, 1
  %v9304 = vld [vmem:[%s9303] sm:$0x1]
  %v9306 = vlaneseq
  %v9307 = vshrl.u32 %v9306, 7
  %v9308 = vsub.s32 0, %v9307
  %v9309 = vrot.slane %v9304, %v9308
  %v9567 = vunpack.c.l.b16 %v9047
  %v9568 = vunpack.c.l.b16 %v9048
  %v9569 = vunpack.c.l.b16 %v9049
  %v9570 = vunpack.c.l.b16 %v9050
  %v9571 = vunpack.c.l.b16 %v9051
  %v9572 = vunpack.c.l.b16 %v9052
  %v9573 = vunpack.c.l.b16 %v9053
  %v9574 = vunpack.c.l.b16 %v9054
  %v9575 = vunpack.c.l.b16 %v9055
  %v9576 = vunpack.c.l.b16 %v9056
  %v9577 = vunpack.c.l.b16 %v9057
  %v9578 = vunpack.c.l.b16 %v9058
  %v9579 = vunpack.c.l.b16 %v9059
  %v9580 = vunpack.c.l.b16 %v9060
  %v9581 = vunpack.c.l.b16 %v9061
  %v9582 = vunpack.c.l.b16 %v9062
  %v9583 = vunpack.c.l.b16 %v9063
  %v9584 = vunpack.c.l.b16 %v9064
  %v9585 = vunpack.c.l.b16 %v9065
  %v9586 = vunpack.c.l.b16 %v9066
  %v9587 = vunpack.c.l.b16 %v9067
  %v9588 = vunpack.c.l.b16 %v9068
  %v9589 = vunpack.c.l.b16 %v9069
  %v9590 = vunpack.c.l.b16 %v9070
  %v9591 = vunpack.c.l.b16 %v9071
  %v9592 = vunpack.c.l.b16 %v9072
  %v9593 = vunpack.c.l.b16 %v9073
  %v9594 = vunpack.c.l.b16 %v9074
  %v9595 = vunpack.c.l.b16 %v9075
  %v9596 = vunpack.c.l.b16 %v9076
  %v9597 = vunpack.c.l.b16 %v9077
  %v9598 = vunpack.c.l.b16 %v9078
  %v9599 = vunpack.c.l.b16 %v9079
  %v9600 = vunpack.c.l.b16 %v9080
  %v9601 = vunpack.c.l.b16 %v9081
  %v9602 = vunpack.c.l.b16 %v9082
  %v9603 = vunpack.c.l.b16 %v9083
  %v9604 = vunpack.c.l.b16 %v9084
  %v9605 = vunpack.c.l.b16 %v9085
  %v9606 = vunpack.c.l.b16 %v9086
  %v9607 = vunpack.c.l.b16 %v9087
  %v9608 = vunpack.c.l.b16 %v9088
  %v9609 = vunpack.c.l.b16 %v9089
  %v9610 = vunpack.c.l.b16 %v9090
  %v9611 = vunpack.c.l.b16 %v9091
  %v9612 = vunpack.c.l.b16 %v9092
  %v9613 = vunpack.c.l.b16 %v9093
  %v9614 = vunpack.c.l.b16 %v9094
  %v9615 = vunpack.c.l.b16 %v9095
  %v9616 = vunpack.c.l.b16 %v9096
  %v9617 = vunpack.c.l.b16 %v9097
  %v9618 = vunpack.c.l.b16 %v9098
  %v9619 = vunpack.c.l.b16 %v9099
  %v9620 = vunpack.c.l.b16 %v9100
  %v9621 = vunpack.c.l.b16 %v9101
  %v9622 = vunpack.c.l.b16 %v9102
  %v9623 = vunpack.c.l.b16 %v9103
  %v9624 = vunpack.c.l.b16 %v9104
  %v9625 = vunpack.c.l.b16 %v9105
  %v9626 = vunpack.c.l.b16 %v9106
  %v9627 = vunpack.c.l.b16 %v9107
  %v9628 = vunpack.c.l.b16 %v9108
  %v9629 = vunpack.c.l.b16 %v9109
  %v9630 = vunpack.c.l.b16 %v9110
  %v9631 = vunpack.c.l.b16 %v9111
  %v9632 = vunpack.c.l.b16 %v9112
  %v9633 = vunpack.c.l.b16 %v9113
  %v9634 = vunpack.c.l.b16 %v9114
  %v9635 = vunpack.c.l.b16 %v9115
  %v9636 = vunpack.c.l.b16 %v9116
  %v9637 = vunpack.c.l.b16 %v9117
  %v9638 = vunpack.c.l.b16 %v9118
  %v9639 = vunpack.c.l.b16 %v9119
  %v9640 = vunpack.c.l.b16 %v9120
  %v9641 = vunpack.c.l.b16 %v9121
  %v9642 = vunpack.c.l.b16 %v9122
  %v9643 = vunpack.c.l.b16 %v9123
  %v9644 = vunpack.c.l.b16 %v9124
  %v9645 = vunpack.c.l.b16 %v9125
  %v9646 = vunpack.c.l.b16 %v9126
  %v9647 = vunpack.c.l.b16 %v9127
  %v9648 = vunpack.c.l.b16 %v9128
  %v9649 = vunpack.c.l.b16 %v9129
  %v9650 = vunpack.c.l.b16 %v9130
  %v9651 = vunpack.c.l.b16 %v9131
  %v9652 = vunpack.c.l.b16 %v9132
  %v9653 = vunpack.c.l.b16 %v9133
  %v9654 = vunpack.c.l.b16 %v9134
  %v9655 = vunpack.c.l.b16 %v9135
  %v9656 = vunpack.c.l.b16 %v9136
  %v9657 = vunpack.c.l.b16 %v9137
  %v9658 = vunpack.c.l.b16 %v9138
  %v9659 = vunpack.c.l.b16 %v9139
  %v9660 = vunpack.c.l.b16 %v9140
  %v9661 = vunpack.c.l.b16 %v9141
  %v9662 = vunpack.c.l.b16 %v9142
  %v9663 = vunpack.c.l.b16 %v9143
  %v9664 = vunpack.c.l.b16 %v9144
  %v9665 = vunpack.c.l.b16 %v9145
  %v9666 = vunpack.c.l.b16 %v9146
  %v9667 = vunpack.c.l.b16 %v9147
  %v9668 = vunpack.c.l.b16 %v9148
  %v9669 = vunpack.c.l.b16 %v9149
  %v9670 = vunpack.c.l.b16 %v9150
  %v9671 = vunpack.c.l.b16 %v9151
  %v9672 = vunpack.c.l.b16 %v9152
  %v9673 = vunpack.c.l.b16 %v9153
  %v9674 = vunpack.c.l.b16 %v9154
  %v9675 = vunpack.c.l.b16 %v9155
  %v9676 = vunpack.c.l.b16 %v9156
  %v9677 = vunpack.c.l.b16 %v9157
  %v9678 = vunpack.c.l.b16 %v9158
  %v9679 = vunpack.c.l.b16 %v9159
  %v9680 = vunpack.c.l.b16 %v9160
  %v9681 = vunpack.c.l.b16 %v9161
  %v9682 = vunpack.c.l.b16 %v9162
  %v9683 = vunpack.c.l.b16 %v9163
  %v9684 = vunpack.c.l.b16 %v9164
  %v9685 = vunpack.c.l.b16 %v9165
  %v9686 = vunpack.c.l.b16 %v9166
  %v9687 = vunpack.c.l.b16 %v9167
  %v9688 = vunpack.c.l.b16 %v9168
  %v9689 = vunpack.c.l.b16 %v9169
  %v9690 = vunpack.c.l.b16 %v9170
  %v9691 = vunpack.c.l.b16 %v9171
  %v9692 = vunpack.c.l.b16 %v9172
  %v9693 = vunpack.c.l.b16 %v9173
  %v9694 = vunpack.c.l.b16 %v9174
  %v9695 = vunpack.c.l.b16 %v9175
  %v9696 = vunpack.c.l.b16 %v9176
  %v9697 = vunpack.c.l.b16 %v9177
  %v9698 = vunpack.c.l.b16 %v9178
  %v9699 = vunpack.c.l.b16 %v9179
  %v9700 = vunpack.c.l.b16 %v9180
  %v9701 = vunpack.c.l.b16 %v9181
  %v9702 = vunpack.c.l.b16 %v9182
  %v9703 = vunpack.c.l.b16 %v9183
  %v9704 = vunpack.c.l.b16 %v9184
  %v9705 = vunpack.c.l.b16 %v9185
  %v9706 = vunpack.c.l.b16 %v9186
  %v9707 = vunpack.c.l.b16 %v9187
  %v9708 = vunpack.c.l.b16 %v9188
  %v9709 = vunpack.c.l.b16 %v9189
  %v9710 = vunpack.c.l.b16 %v9190
  %v9711 = vunpack.c.l.b16 %v9191
  %v9712 = vunpack.c.l.b16 %v9192
  %v9713 = vunpack.c.l.b16 %v9193
  %v9714 = vunpack.c.l.b16 %v9194
  %v9715 = vunpack.c.l.b16 %v9195
  %v9716 = vunpack.c.l.b16 %v9196
  %v9717 = vunpack.c.l.b16 %v9197
  %v9718 = vunpack.c.l.b16 %v9198
  %v9719 = vunpack.c.l.b16 %v9199
  %v9720 = vunpack.c.l.b16 %v9200
  %v9721 = vunpack.c.l.b16 %v9201
  %v9722 = vunpack.c.l.b16 %v9202
  %v9723 = vunpack.c.l.b16 %v9203
  %v9724 = vunpack.c.l.b16 %v9204
  %v9725 = vunpack.c.l.b16 %v9205
  %v9726 = vunpack.c.l.b16 %v9206
  %v9727 = vunpack.c.l.b16 %v9207
  %v9728 = vunpack.c.l.b16 %v9208
  %v9729 = vunpack.c.l.b16 %v9209
  %v9730 = vunpack.c.l.b16 %v9210
  %v9731 = vunpack.c.l.b16 %v9211
  %v9732 = vunpack.c.l.b16 %v9212
  %v9733 = vunpack.c.l.b16 %v9213
  %v9734 = vunpack.c.l.b16 %v9214
  %v9735 = vunpack.c.l.b16 %v9215
  %v9736 = vunpack.c.l.b16 %v9216
  %v9737 = vunpack.c.l.b16 %v9217
  %v9738 = vunpack.c.l.b16 %v9218
  %v9739 = vunpack.c.l.b16 %v9219
  %v9740 = vunpack.c.l.b16 %v9220
  %v9741 = vunpack.c.l.b16 %v9221
  %v9742 = vunpack.c.l.b16 %v9222
  %v9743 = vunpack.c.l.b16 %v9223
  %v9744 = vunpack.c.l.b16 %v9224
  %v9745 = vunpack.c.l.b16 %v9225
  %v9746 = vunpack.c.l.b16 %v9226
  %v9747 = vunpack.c.l.b16 %v9227
  %v9748 = vunpack.c.l.b16 %v9228
  %v9749 = vunpack.c.l.b16 %v9229
  %v9750 = vunpack.c.l.b16 %v9230
  %v9751 = vunpack.c.l.b16 %v9231
  %v9752 = vunpack.c.l.b16 %v9232
  %v9753 = vunpack.c.l.b16 %v9233
  %v9754 = vunpack.c.l.b16 %v9234
  %v9755 = vunpack.c.l.b16 %v9235
  %v9756 = vunpack.c.l.b16 %v9236
  %v9757 = vunpack.c.l.b16 %v9237
  %v9758 = vunpack.c.l.b16 %v9238
  %v9759 = vunpack.c.l.b16 %v9239
  %v9760 = vunpack.c.l.b16 %v9240
  %v9761 = vunpack.c.l.b16 %v9241
  %v9762 = vunpack.c.l.b16 %v9242
  %v9763 = vunpack.c.l.b16 %v9243
  %v9764 = vunpack.c.l.b16 %v9244
  %v9765 = vunpack.c.l.b16 %v9245
  %v9766 = vunpack.c.l.b16 %v9246
  %v9767 = vunpack.c.l.b16 %v9247
  %v9768 = vunpack.c.l.b16 %v9248
  %v9769 = vunpack.c.l.b16 %v9249
  %v9770 = vunpack.c.l.b16 %v9250
  %v9771 = vunpack.c.l.b16 %v9251
  %v9772 = vunpack.c.l.b16 %v9252
  %v9773 = vunpack.c.l.b16 %v9253
  %v9774 = vunpack.c.l.b16 %v9254
  %v9775 = vunpack.c.l.b16 %v9255
  %v9776 = vunpack.c.l.b16 %v9256
  %v9777 = vunpack.c.l.b16 %v9257
  %v9778 = vunpack.c.l.b16 %v9258
  %v9779 = vunpack.c.l.b16 %v9259
  %v9780 = vunpack.c.l.b16 %v9260
  %v9781 = vunpack.c.l.b16 %v9261
  %v9782 = vunpack.c.l.b16 %v9262
  %v9783 = vunpack.c.l.b16 %v9263
  %v9784 = vunpack.c.l.b16 %v9264
  %v9785 = vunpack.c.l.b16 %v9265
  %v9786 = vunpack.c.l.b16 %v9266
  %v9787 = vunpack.c.l.b16 %v9267
  %v9788 = vunpack.c.l.b16 %v9268
  %v9789 = vunpack.c.l.b16 %v9269
  %v9790 = vunpack.c.l.b16 %v9270
  %v9791 = vunpack.c.l.b16 %v9271
  %v9792 = vunpack.c.l.b16 %v9272
  %v9793 = vunpack.c.l.b16 %v9273
  %v9794 = vunpack.c.l.b16 %v9274
  %v9795 = vunpack.c.l.b16 %v9275
  %v9796 = vunpack.c.l.b16 %v9276
  %v9797 = vunpack.c.l.b16 %v9277
  %v9798 = vunpack.c.l.b16 %v9278
  %v9799 = vunpack.c.l.b16 %v9279
  %v9800 = vunpack.c.l.b16 %v9280
  %v9801 = vunpack.c.l.b16 %v9281
  %v9802 = vunpack.c.l.b16 %v9282
  %v9803 = vunpack.c.l.b16 %v9283
  %v9804 = vunpack.c.l.b16 %v9284
  %v9805 = vunpack.c.l.b16 %v9285
  %v9806 = vunpack.c.l.b16 %v9286
  %v9807 = vunpack.c.l.b16 %v9287
  %v9808 = vunpack.c.l.b16 %v9288
  %v9809 = vunpack.c.l.b16 %v9289
  %v9810 = vunpack.c.l.b16 %v9290
  %v9811 = vunpack.c.l.b16 %v9291
  %v9812 = vunpack.c.l.b16 %v9292
  %v9813 = vunpack.c.l.b16 %v9293
  %v9814 = vunpack.c.l.b16 %v9294
  %v9815 = vunpack.c.l.b16 %v9295
  %v9816 = vunpack.c.l.b16 %v9296
  %v9817 = vunpack.c.l.b16 %v9297
  %v9818 = vunpack.c.l.b16 %v9298
  %v9819 = vunpack.c.l.b16 %v9299
  %v9820 = vunpack.c.l.b16 %v9300
  %v9821 = vunpack.c.l.b16 %v9301
  %v9822 = vunpack.c.l.b16 %v9302
  %v9823 = vpack.c.b16 %v9568, %v9567
  %v9824 = vpack.c.b16 %v9570, %v9569
  %v9825 = vpack.c.b16 %v9572, %v9571
  %v9826 = vpack.c.b16 %v9574, %v9573
  %v9827 = vpack.c.b16 %v9576, %v9575
  %v9828 = vpack.c.b16 %v9578, %v9577
  %v9829 = vpack.c.b16 %v9580, %v9579
  %v9830 = vpack.c.b16 %v9582, %v9581
  %v9831 = vpack.c.b16 %v9584, %v9583
  %v9832 = vpack.c.b16 %v9586, %v9585
  %v9833 = vpack.c.b16 %v9588, %v9587
  %v9834 = vpack.c.b16 %v9590, %v9589
  %v9835 = vpack.c.b16 %v9592, %v9591
  %v9836 = vpack.c.b16 %v9594, %v9593
  %v9837 = vpack.c.b16 %v9596, %v9595
  %v9838 = vpack.c.b16 %v9598, %v9597
  %v9839 = vpack.c.b16 %v9600, %v9599
  %v9840 = vpack.c.b16 %v9602, %v9601
  %v9841 = vpack.c.b16 %v9604, %v9603
  %v9842 = vpack.c.b16 %v9606, %v9605
  %v9843 = vpack.c.b16 %v9608, %v9607
  %v9844 = vpack.c.b16 %v9610, %v9609
  %v9845 = vpack.c.b16 %v9612, %v9611
  %v9846 = vpack.c.b16 %v9614, %v9613
  %v9847 = vpack.c.b16 %v9616, %v9615
  %v9848 = vpack.c.b16 %v9618, %v9617
  %v9849 = vpack.c.b16 %v9620, %v9619
  %v9850 = vpack.c.b16 %v9622, %v9621
  %v9851 = vpack.c.b16 %v9624, %v9623
  %v9852 = vpack.c.b16 %v9626, %v9625
  %v9853 = vpack.c.b16 %v9628, %v9627
  %v9854 = vpack.c.b16 %v9630, %v9629
  %v9855 = vpack.c.b16 %v9632, %v9631
  %v9856 = vpack.c.b16 %v9634, %v9633
  %v9857 = vpack.c.b16 %v9636, %v9635
  %v9858 = vpack.c.b16 %v9638, %v9637
  %v9859 = vpack.c.b16 %v9640, %v9639
  %v9860 = vpack.c.b16 %v9642, %v9641
  %v9861 = vpack.c.b16 %v9644, %v9643
  %v9862 = vpack.c.b16 %v9646, %v9645
  %v9863 = vpack.c.b16 %v9648, %v9647
  %v9864 = vpack.c.b16 %v9650, %v9649
  %v9865 = vpack.c.b16 %v9652, %v9651
  %v9866 = vpack.c.b16 %v9654, %v9653
  %v9867 = vpack.c.b16 %v9656, %v9655
  %v9868 = vpack.c.b16 %v9658, %v9657
  %v9869 = vpack.c.b16 %v9660, %v9659
  %v9870 = vpack.c.b16 %v9662, %v9661
  %v9871 = vpack.c.b16 %v9664, %v9663
  %v9872 = vpack.c.b16 %v9666, %v9665
  %v9873 = vpack.c.b16 %v9668, %v9667
  %v9874 = vpack.c.b16 %v9670, %v9669
  %v9875 = vpack.c.b16 %v9672, %v9671
  %v9876 = vpack.c.b16 %v9674, %v9673
  %v9877 = vpack.c.b16 %v9676, %v9675
  %v9878 = vpack.c.b16 %v9678, %v9677
  %v9879 = vpack.c.b16 %v9680, %v9679
  %v9880 = vpack.c.b16 %v9682, %v9681
  %v9881 = vpack.c.b16 %v9684, %v9683
  %v9882 = vpack.c.b16 %v9686, %v9685
  %v9883 = vpack.c.b16 %v9688, %v9687
  %v9884 = vpack.c.b16 %v9690, %v9689
  %v9885 = vpack.c.b16 %v9692, %v9691
  %v9886 = vpack.c.b16 %v9694, %v9693
  %v9887 = vpack.c.b16 %v9696, %v9695
  %v9888 = vpack.c.b16 %v9698, %v9697
  %v9889 = vpack.c.b16 %v9700, %v9699
  %v9890 = vpack.c.b16 %v9702, %v9701
  %v9891 = vpack.c.b16 %v9704, %v9703
  %v9892 = vpack.c.b16 %v9706, %v9705
  %v9893 = vpack.c.b16 %v9708, %v9707
  %v9894 = vpack.c.b16 %v9710, %v9709
  %v9895 = vpack.c.b16 %v9712, %v9711
  %v9896 = vpack.c.b16 %v9714, %v9713
  %v9897 = vpack.c.b16 %v9716, %v9715
  %v9898 = vpack.c.b16 %v9718, %v9717
  %v9899 = vpack.c.b16 %v9720, %v9719
  %v9900 = vpack.c.b16 %v9722, %v9721
  %v9901 = vpack.c.b16 %v9724, %v9723
  %v9902 = vpack.c.b16 %v9726, %v9725
  %v9903 = vpack.c.b16 %v9728, %v9727
  %v9904 = vpack.c.b16 %v9730, %v9729
  %v9905 = vpack.c.b16 %v9732, %v9731
  %v9906 = vpack.c.b16 %v9734, %v9733
  %v9907 = vpack.c.b16 %v9736, %v9735
  %v9908 = vpack.c.b16 %v9738, %v9737
  %v9909 = vpack.c.b16 %v9740, %v9739
  %v9910 = vpack.c.b16 %v9742, %v9741
  %v9911 = vpack.c.b16 %v9744, %v9743
  %v9912 = vpack.c.b16 %v9746, %v9745
  %v9913 = vpack.c.b16 %v9748, %v9747
  %v9914 = vpack.c.b16 %v9750, %v9749
  %v9915 = vpack.c.b16 %v9752, %v9751
  %v9916 = vpack.c.b16 %v9754, %v9753
  %v9917 = vpack.c.b16 %v9756, %v9755
  %v9918 = vpack.c.b16 %v9758, %v9757
  %v9919 = vpack.c.b16 %v9760, %v9759
  %v9920 = vpack.c.b16 %v9762, %v9761
  %v9921 = vpack.c.b16 %v9764, %v9763
  %v9922 = vpack.c.b16 %v9766, %v9765
  %v9923 = vpack.c.b16 %v9768, %v9767
  %v9924 = vpack.c.b16 %v9770, %v9769
  %v9925 = vpack.c.b16 %v9772, %v9771
  %v9926 = vpack.c.b16 %v9774, %v9773
  %v9927 = vpack.c.b16 %v9776, %v9775
  %v9928 = vpack.c.b16 %v9778, %v9777
  %v9929 = vpack.c.b16 %v9780, %v9779
  %v9930 = vpack.c.b16 %v9782, %v9781
  %v9931 = vpack.c.b16 %v9784, %v9783
  %v9932 = vpack.c.b16 %v9786, %v9785
  %v9933 = vpack.c.b16 %v9788, %v9787
  %v9934 = vpack.c.b16 %v9790, %v9789
  %v9935 = vpack.c.b16 %v9792, %v9791
  %v9936 = vpack.c.b16 %v9794, %v9793
  %v9937 = vpack.c.b16 %v9796, %v9795
  %v9938 = vpack.c.b16 %v9798, %v9797
  %v9939 = vpack.c.b16 %v9800, %v9799
  %v9940 = vpack.c.b16 %v9802, %v9801
  %v9941 = vpack.c.b16 %v9804, %v9803
  %v9942 = vpack.c.b16 %v9806, %v9805
  %v9943 = vpack.c.b16 %v9808, %v9807
  %v9944 = vpack.c.b16 %v9810, %v9809
  %v9945 = vpack.c.b16 %v9812, %v9811
  %v9946 = vpack.c.b16 %v9814, %v9813
  %v9947 = vpack.c.b16 %v9816, %v9815
  %v9948 = vpack.c.b16 %v9818, %v9817
  %v9949 = vpack.c.b16 %v9820, %v9819
  %v9950 = vpack.c.b16 %v9822, %v9821
  %10079 = vmatprep.subr.bf16.mxu0 0
  %10080 = vmatpush1.bf16.msra.mxu0 %v9823
  %10081 = vmatprep.subr.bf16.mxu0 0
  %10082 = vmatpush1.bf16.msra.mxu0 %v9824
  %10083 = vmatprep.subr.bf16.mxu0 0
  %10084 = vmatpush1.bf16.msra.mxu0 %v9825
  %10085 = vmatprep.subr.bf16.mxu0 0
  %10086 = vmatpush1.bf16.msra.mxu0 %v9826
  %10087 = vmatprep.subr.bf16.mxu0 0
  %10088 = vmatpush1.bf16.msra.mxu0 %v9827
  %10089 = vmatprep.subr.bf16.mxu0 0
  %10090 = vmatpush1.bf16.msra.mxu0 %v9828
  %10091 = vmatprep.subr.bf16.mxu0 0
  %10092 = vmatpush1.bf16.msra.mxu0 %v9829
  %10093 = vmatprep.subr.bf16.mxu0 0
  %10094 = vmatpush1.bf16.msra.mxu0 %v9830
  %10095 = vmatprep.subr.bf16.mxu0 0
  %10096 = vmatpush1.bf16.msra.mxu0 %v9831
  %10097 = vmatprep.subr.bf16.mxu0 0
  %10098 = vmatpush1.bf16.msra.mxu0 %v9832
  %10099 = vmatprep.subr.bf16.mxu0 0
  %10100 = vmatpush1.bf16.msra.mxu0 %v9833
  %10101 = vmatprep.subr.bf16.mxu0 0
  %10102 = vmatpush1.bf16.msra.mxu0 %v9834
  %10103 = vmatprep.subr.bf16.mxu0 0
  %10104 = vmatpush1.bf16.msra.mxu0 %v9835
  %10105 = vmatprep.subr.bf16.mxu0 0
  %10106 = vmatpush1.bf16.msra.mxu0 %v9836
  %10107 = vmatprep.subr.bf16.mxu0 0
  %10108 = vmatpush1.bf16.msra.mxu0 %v9837
  %10109 = vmatprep.subr.bf16.mxu0 0
  %10110 = vmatpush1.bf16.msra.mxu0 %v9838
  %10111 = vmatprep.mubr.bf16.mxu0 %v8983
  %10112 = vmatmul.mubr.bf16.gmra.mrb[0].mxu0 %v8982
  %v10113 = vpop.f32.mrb[0].mxu0
  %v10114 = vadd.f32 %v9309, %v10113
  %v10115 = vpop.f32.mrb[0].mxu0
  %v10116 = vpop.f32.mrb[0].mxu0
  %v10117 = vadd.f32 %v9309, %v10116
  %v10118 = vpop.f32.mrb[0].mxu0
  %10119 = vmatprep.mubr.bf16.mxu0 %v8999
  %10120 = vmatmul.mubr.bf16.gmra.mrb[0].mxu0 %v8998
  %v10121 = vpop.f32.mrb[0].mxu0
  %v10122 = vadd.f32 %v9309, %v10121
  %v10123 = vpop.f32.mrb[0].mxu0
  %v10124 = vpop.f32.mrb[0].mxu0
  %v10125 = vadd.f32 %v9309, %v10124
  %v10126 = vpop.f32.mrb[0].mxu0
  %10127 = vmatprep.mubr.bf16.mxu0 %v9015
  %10128 = vmatmul.mubr.bf16.gmra.mrb[0].mxu0 %v9014
  %v10129 = vpop.f32.mrb[0].mxu0
  %v10130 = vadd.f32 %v9309, %v10129
  %v10131 = vpop.f32.mrb[0].mxu0
  %v10132 = vpop.f32.mrb[0].mxu0
  %v10133 = vadd.f32 %v9309, %v10132
  %v10134 = vpop.f32.mrb[0].mxu0
  %10135 = vmatprep.mubr.bf16.mxu0 %v9031
  %10136 = vmatmul.mubr.bf16.gmra.mrb[0].mxu0 %v9030
  %v10137 = vpop.f32.mrb[0].mxu0
  %v10138 = vadd.f32 %v9309, %v10137
  %v10139 = vpop.f32.mrb[0].mxu0
  %v10140 = vpop.f32.mrb[0].mxu0
  %v10141 = vadd.f32 %v9309, %v10140
  %v10142 = vpop.f32.mrb[0].mxu0
  %10143 = vdwg.mxu0
  %10144 = vmatprep.subr.bf16.mxu0 0
  %10145 = vmatpush1.bf16.msra.mxu0 %v9839
  %10146 = vmatprep.subr.bf16.mxu0 0
  %10147 = vmatpush1.bf16.msra.mxu0 %v9840
  %10148 = vmatprep.subr.bf16.mxu0 0
  %10149 = vmatpush1.bf16.msra.mxu0 %v9841
  %10150 = vmatprep.subr.bf16.mxu0 0
  %10151 = vmatpush1.bf16.msra.mxu0 %v9842
  %10152 = vmatprep.subr.bf16.mxu0 0
  %10153 = vmatpush1.bf16.msra.mxu0 %v9843
  %10154 = vmatprep.subr.bf16.mxu0 0
  %10155 = vmatpush1.bf16.msra.mxu0 %v9844
  %10156 = vmatprep.subr.bf16.mxu0 0
  %10157 = vmatpush1.bf16.msra.mxu0 %v9845
  %10158 = vmatprep.subr.bf16.mxu0 0
  %10159 = vmatpush1.bf16.msra.mxu0 %v9846
  %10160 = vmatprep.subr.bf16.mxu0 0
  %10161 = vmatpush1.bf16.msra.mxu0 %v9847
  %10162 = vmatprep.subr.bf16.mxu0 0
  %10163 = vmatpush1.bf16.msra.mxu0 %v9848
  %10164 = vmatprep.subr.bf16.mxu0 0
  %10165 = vmatpush1.bf16.msra.mxu0 %v9849
  %10166 = vmatprep.subr.bf16.mxu0 0
  %10167 = vmatpush1.bf16.msra.mxu0 %v9850
  %10168 = vmatprep.subr.bf16.mxu0 0
  %10169 = vmatpush1.bf16.msra.mxu0 %v9851
  %10170 = vmatprep.subr.bf16.mxu0 0
  %10171 = vmatpush1.bf16.msra.mxu0 %v9852
  %10172 = vmatprep.subr.bf16.mxu0 0
  %10173 = vmatpush1.bf16.msra.mxu0 %v9853
  %10174 = vmatprep.subr.bf16.mxu0 0
  %10175 = vmatpush1.bf16.msra.mxu0 %v9854
  %10176 = vmatprep.mubr.bf16.mxu0 %v8985
  %10177 = vmatmul.mubr.bf16.gmra.mrb[0].mxu0 %v8984
  %v10178 = vpop.f32.mrb[0].mxu0
  %v10179 = vadd.f32 %v10114, %v10178
  %v10180 = vpop.f32.mrb[0].mxu0
  %v10181 = vpop.f32.mrb[0].mxu0
  %v10182 = vadd.f32 %v10117, %v10181
  %v10183 = vpop.f32.mrb[0].mxu0
  %10184 = vmatprep.mubr.bf16.mxu0 %v9001
  %10185 = vmatmul.mubr.bf16.gmra.mrb[0].mxu0 %v9000
  %v10186 = vpop.f32.mrb[0].mxu0
  %v10187 = vadd.f32 %v10122, %v10186
  %v10188 = vpop.f32.mrb[0].mxu0
  %v10189 = vpop.f32.mrb[0].mxu0
  %v10190 = vadd.f32 %v10125, %v10189
  %v10191 = vpop.f32.mrb[0].mxu0
  %10192 = vmatprep.mubr.bf16.mxu0 %v9017
  %10193 = vmatmul.mubr.bf16.gmra.mrb[0].mxu0 %v9016
  %v10194 = vpop.f32.mrb[0].mxu0
  %v10195 = vadd.f32 %v10130, %v10194
  %v10196 = vpop.f32.mrb[0].mxu0
  %v10197 = vpop.f32.mrb[0].mxu0
  %v10198 = vadd.f32 %v10133, %v10197
  %v10199 = vpop.f32.mrb[0].mxu0
  %10200 = vmatprep.mubr.bf16.mxu0 %v9033
  %10201 = vmatmul.mubr.bf16.gmra.mrb[0].mxu0 %v9032
  %v10202 = vpop.f32.mrb[0].mxu0
  %v10203 = vadd.f32 %v10138, %v10202
  %v10204 = vpop.f32.mrb[0].mxu0
  %v10205 = vpop.f32.mrb[0].mxu0
  %v10206 = vadd.f32 %v10141, %v10205
  %v10207 = vpop.f32.mrb[0].mxu0
  %10208 = vdwg.mxu0
  %10209 = vmatprep.subr.bf16.mxu0 0
  %10210 = vmatpush1.bf16.msra.mxu0 %v9855
  %10211 = vmatprep.subr.bf16.mxu0 0
  %10212 = vmatpush1.bf16.msra.mxu0 %v9856
  %10213 = vmatprep.subr.bf16.mxu0 0
  %10214 = vmatpush1.bf16.msra.mxu0 %v9857
  %10215 = vmatprep.subr.bf16.mxu0 0
  %10216 = vmatpush1.bf16.msra.mxu0 %v9858
  %10217 = vmatprep.subr.bf16.mxu0 0
  %10218 = vmatpush1.bf16.msra.mxu0 %v9859
  %10219 = vmatprep.subr.bf16.mxu0 0
  %10220 = vmatpush1.bf16.msra.mxu0 %v9860
  %10221 = vmatprep.subr.bf16.mxu0 0
  %10222 = vmatpush1.bf16.msra.mxu0 %v9861
  %10223 = vmatprep.subr.bf16.mxu0 0
  %10224 = vmatpush1.bf16.msra.mxu0 %v9862
  %10225 = vmatprep.subr.bf16.mxu0 0
  %10226 = vmatpush1.bf16.msra.mxu0 %v9863
  %10227 = vmatprep.subr.bf16.mxu0 0
  %10228 = vmatpush1.bf16.msra.mxu0 %v9864
  %10229 = vmatprep.subr.bf16.mxu0 0
  %10230 = vmatpush1.bf16.msra.mxu0 %v9865
  %10231 = vmatprep.subr.bf16.mxu0 0
  %10232 = vmatpush1.bf16.msra.mxu0 %v9866
  %10233 = vmatprep.subr.bf16.mxu0 0
  %10234 = vmatpush1.bf16.msra.mxu0 %v9867
  %10235 = vmatprep.subr.bf16.mxu0 0
  %10236 = vmatpush1.bf16.msra.mxu0 %v9868
  %10237 = vmatprep.subr.bf16.mxu0 0
  %10238 = vmatpush1.bf16.msra.mxu0 %v9869
  %10239 = vmatprep.subr.bf16.mxu0 0
  %10240 = vmatpush1.bf16.msra.mxu0 %v9870
  %10241 = vmatprep.mubr.bf16.mxu0 %v8987
  %10242 = vmatmul.mubr.bf16.gmra.mrb[0].mxu0 %v8986
  %v10243 = vpop.f32.mrb[0].mxu0
  %v10244 = vadd.f32 %v10179, %v10243
  %v10245 = vpop.f32.mrb[0].mxu0
  %v10246 = vpop.f32.mrb[0].mxu0
  %v10247 = vadd.f32 %v10182, %v10246
  %v10248 = vpop.f32.mrb[0].mxu0
  %10249 = vmatprep.mubr.bf16.mxu0 %v9003
  %10250 = vmatmul.mubr.bf16.gmra.mrb[0].mxu0 %v9002
  %v10251 = vpop.f32.mrb[0].mxu0
  %v10252 = vadd.f32 %v10187, %v10251
  %v10253 = vpop.f32.mrb[0].mxu0
  %v10254 = vpop.f32.mrb[0].mxu0
  %v10255 = vadd.f32 %v10190, %v10254
  %v10256 = vpop.f32.mrb[0].mxu0
  %10257 = vmatprep.mubr.bf16.mxu0 %v9019
  %10258 = vmatmul.mubr.bf16.gmra.mrb[0].mxu0 %v9018
  %v10259 = vpop.f32.mrb[0].mxu0
  %v10260 = vadd.f32 %v10195, %v10259
  %v10261 = vpop.f32.mrb[0].mxu0
  %v10262 = vpop.f32.mrb[0].mxu0
  %v10263 = vadd.f32 %v10198, %v10262
  %v10264 = vpop.f32.mrb[0].mxu0
  %10265 = vmatprep.mubr.bf16.mxu0 %v9035
  %10266 = vmatmul.mubr.bf16.gmra.mrb[0].mxu0 %v9034
  %v10267 = vpop.f32.mrb[0].mxu0
  %v10268 = vadd.f32 %v10203, %v10267
  %v10269 = vpop.f32.mrb[0].mxu0
  %v10270 = vpop.f32.mrb[0].mxu0
  %v10271 = vadd.f32 %v10206, %v10270
  %v10272 = vpop.f32.mrb[0].mxu0
  %10273 = vdwg.mxu0
  %10274 = vmatprep.subr.bf16.mxu0 0
  %10275 = vmatpush1.bf16.msra.mxu0 %v9871
  %10276 = vmatprep.subr.bf16.mxu0 0
  %10277 = vmatpush1.bf16.msra.mxu0 %v9872
  %10278 = vmatprep.subr.bf16.mxu0 0
  %10279 = vmatpush1.bf16.msra.mxu0 %v9873
  %10280 = vmatprep.subr.bf16.mxu0 0
  %10281 = vmatpush1.bf16.msra.mxu0 %v9874
  %10282 = vmatprep.subr.bf16.mxu0 0
  %10283 = vmatpush1.bf16.msra.mxu0 %v9875
  %10284 = vmatprep.subr.bf16.mxu0 0
  %10285 = vmatpush1.bf16.msra.mxu0 %v9876
  %10286 = vmatprep.subr.bf16.mxu0 0
  %10287 = vmatpush1.bf16.msra.mxu0 %v9877
  %10288 = vmatprep.subr.bf16.mxu0 0
  %10289 = vmatpush1.bf16.msra.mxu0 %v9878
  %10290 = vmatprep.subr.bf16.mxu0 0
  %10291 = vmatpush1.bf16.msra.mxu0 %v9879
  %10292 = vmatprep.subr.bf16.mxu0 0
  %10293 = vmatpush1.bf16.msra.mxu0 %v9880
  %10294 = vmatprep.subr.bf16.mxu0 0
  %10295 = vmatpush1.bf16.msra.mxu0 %v9881
  %10296 = vmatprep.subr.bf16.mxu0 0
  %10297 = vmatpush1.bf16.msra.mxu0 %v9882
  %10298 = vmatprep.subr.bf16.mxu0 0
  %10299 = vmatpush1.bf16.msra.mxu0 %v9883
  %10300 = vmatprep.subr.bf16.mxu0 0
  %10301 = vmatpush1.bf16.msra.mxu0 %v9884
  %10302 = vmatprep.subr.bf16.mxu0 0
  %10303 = vmatpush1.bf16.msra.mxu0 %v9885
  %10304 = vmatprep.subr.bf16.mxu0 0
  %10305 = vmatpush1.bf16.msra.mxu0 %v9886
  %10306 = vmatprep.mubr.bf16.mxu0 %v8989
  %10307 = vmatmul.mubr.bf16.gmra.mrb[0].mxu0 %v8988
  %v10308 = vpop.f32.mrb[0].mxu0
  %v10309 = vadd.f32 %v10244, %v10308
  %v10310 = vpop.f32.mrb[0].mxu0
  %v10311 = vpop.f32.mrb[0].mxu0
  %v10312 = vadd.f32 %v10247, %v10311
  %v10313 = vpop.f32.mrb[0].mxu0
  %10314 = vmatprep.mubr.bf16.mxu0 %v9005
  %10315 = vmatmul.mubr.bf16.gmra.mrb[0].mxu0 %v9004
  %v10316 = vpop.f32.mrb[0].mxu0
  %v10317 = vadd.f32 %v10252, %v10316
  %v10318 = vpop.f32.mrb[0].mxu0
  %v10319 = vpop.f32.mrb[0].mxu0
  %v10320 = vadd.f32 %v10255, %v10319
  %v10321 = vpop.f32.mrb[0].mxu0
  %10322 = vmatprep.mubr.bf16.mxu0 %v9021
  %10323 = vmatmul.mubr.bf16.gmra.mrb[0].mxu0 %v9020
  %v10324 = vpop.f32.mrb[0].mxu0
  %v10325 = vadd.f32 %v10260, %v10324
  %v10326 = vpop.f32.mrb[0].mxu0
  %v10327 = vpop.f32.mrb[0].mxu0
  %v10328 = vadd.f32 %v10263, %v10327
  %v10329 = vpop.f32.mrb[0].mxu0
  %10330 = vmatprep.mubr.bf16.mxu0 %v9037
  %10331 = vmatmul.mubr.bf16.gmra.mrb[0].mxu0 %v9036
  %v10332 = vpop.f32.mrb[0].mxu0
  %v10333 = vadd.f32 %v10268, %v10332
  %v10334 = vpop.f32.mrb[0].mxu0
  %v10335 = vpop.f32.mrb[0].mxu0
  %v10336 = vadd.f32 %v10271, %v10335
  %v10337 = vpop.f32.mrb[0].mxu0
  %10338 = vdwg.mxu0
  %10339 = vmatprep.subr.bf16.mxu0 0
  %10340 = vmatpush1.bf16.msra.mxu0 %v9887
  %10341 = vmatprep.subr.bf16.mxu0 0
  %10342 = vmatpush1.bf16.msra.mxu0 %v9888
  %10343 = vmatprep.subr.bf16.mxu0 0
  %10344 = vmatpush1.bf16.msra.mxu0 %v9889
  %10345 = vmatprep.subr.bf16.mxu0 0
  %10346 = vmatpush1.bf16.msra.mxu0 %v9890
  %10347 = vmatprep.subr.bf16.mxu0 0
  %10348 = vmatpush1.bf16.msra.mxu0 %v9891
  %10349 = vmatprep.subr.bf16.mxu0 0
  %10350 = vmatpush1.bf16.msra.mxu0 %v9892
  %10351 = vmatprep.subr.bf16.mxu0 0
  %10352 = vmatpush1.bf16.msra.mxu0 %v9893
  %10353 = vmatprep.subr.bf16.mxu0 0
  %10354 = vmatpush1.bf16.msra.mxu0 %v9894
  %10355 = vmatprep.subr.bf16.mxu0 0
  %10356 = vmatpush1.bf16.msra.mxu0 %v9895
  %10357 = vmatprep.subr.bf16.mxu0 0
  %10358 = vmatpush1.bf16.msra.mxu0 %v9896
  %10359 = vmatprep.subr.bf16.mxu0 0
  %10360 = vmatpush1.bf16.msra.mxu0 %v9897
  %10361 = vmatprep.subr.bf16.mxu0 0
  %10362 = vmatpush1.bf16.msra.mxu0 %v9898
  %10363 = vmatprep.subr.bf16.mxu0 0
  %10364 = vmatpush1.bf16.msra.mxu0 %v9899
  %10365 = vmatprep.subr.bf16.mxu0 0
  %10366 = vmatpush1.bf16.msra.mxu0 %v9900
  %10367 = vmatprep.subr.bf16.mxu0 0
  %10368 = vmatpush1.bf16.msra.mxu0 %v9901
  %10369 = vmatprep.subr.bf16.mxu0 0
  %10370 = vmatpush1.bf16.msra.mxu0 %v9902
  %10371 = vmatprep.mubr.bf16.mxu0 %v8991
  %10372 = vmatmul.mubr.bf16.gmra.mrb[0].mxu0 %v8990
  %v10373 = vpop.f32.mrb[0].mxu0
  %v10374 = vadd.f32 %v10309, %v10373
  %v10375 = vpop.f32.mrb[0].mxu0
  %v10376 = vpop.f32.mrb[0].mxu0
  %v10377 = vadd.f32 %v10312, %v10376
  %v10378 = vpop.f32.mrb[0].mxu0
  %10379 = vmatprep.mubr.bf16.mxu0 %v9007
  %10380 = vmatmul.mubr.bf16.gmra.mrb[0].mxu0 %v9006
  %v10381 = vpop.f32.mrb[0].mxu0
  %v10382 = vadd.f32 %v10317, %v10381
  %v10383 = vpop.f32.mrb[0].mxu0
  %v10384 = vpop.f32.mrb[0].mxu0
  %v10385 = vadd.f32 %v10320, %v10384
  %v10386 = vpop.f32.mrb[0].mxu0
  %10387 = vmatprep.mubr.bf16.mxu0 %v9023
  %10388 = vmatmul.mubr.bf16.gmra.mrb[0].mxu0 %v9022
  %v10389 = vpop.f32.mrb[0].mxu0
  %v10390 = vadd.f32 %v10325, %v10389
  %v10391 = vpop.f32.mrb[0].mxu0
  %v10392 = vpop.f32.mrb[0].mxu0
  %v10393 = vadd.f32 %v10328, %v10392
  %v10394 = vpop.f32.mrb[0].mxu0
  %10395 = vmatprep.mubr.bf16.mxu0 %v9039
  %10396 = vmatmul.mubr.bf16.gmra.mrb[0].mxu0 %v9038
  %v10397 = vpop.f32.mrb[0].mxu0
  %v10398 = vadd.f32 %v10333, %v10397
  %v10399 = vpop.f32.mrb[0].mxu0
  %v10400 = vpop.f32.mrb[0].mxu0
  %v10401 = vadd.f32 %v10336, %v10400
  %v10402 = vpop.f32.mrb[0].mxu0
  %10403 = vdwg.mxu0
  %10404 = vmatprep.subr.bf16.mxu0 0
  %10405 = vmatpush1.bf16.msra.mxu0 %v9903
  %10406 = vmatprep.subr.bf16.mxu0 0
  %10407 = vmatpush1.bf16.msra.mxu0 %v9904
  %10408 = vmatprep.subr.bf16.mxu0 0
  %10409 = vmatpush1.bf16.msra.mxu0 %v9905
  %10410 = vmatprep.subr.bf16.mxu0 0
  %10411 = vmatpush1.bf16.msra.mxu0 %v9906
  %10412 = vmatprep.subr.bf16.mxu0 0
  %10413 = vmatpush1.bf16.msra.mxu0 %v9907
  %10414 = vmatprep.subr.bf16.mxu0 0
  %10415 = vmatpush1.bf16.msra.mxu0 %v9908
  %10416 = vmatprep.subr.bf16.mxu0 0
  %10417 = vmatpush1.bf16.msra.mxu0 %v9909
  %10418 = vmatprep.subr.bf16.mxu0 0
  %10419 = vmatpush1.bf16.msra.mxu0 %v9910
  %10420 = vmatprep.subr.bf16.mxu0 0
  %10421 = vmatpush1.bf16.msra.mxu0 %v9911
  %10422 = vmatprep.subr.bf16.mxu0 0
  %10423 = vmatpush1.bf16.msra.mxu0 %v9912
  %10424 = vmatprep.subr.bf16.mxu0 0
  %10425 = vmatpush1.bf16.msra.mxu0 %v9913
  %10426 = vmatprep.subr.bf16.mxu0 0
  %10427 = vmatpush1.bf16.msra.mxu0 %v9914
  %10428 = vmatprep.subr.bf16.mxu0 0
  %10429 = vmatpush1.bf16.msra.mxu0 %v9915
  %10430 = vmatprep.subr.bf16.mxu0 0
  %10431 = vmatpush1.bf16.msra.mxu0 %v9916
  %10432 = vmatprep.subr.bf16.mxu0 0
  %10433 = vmatpush1.bf16.msra.mxu0 %v9917
  %10434 = vmatprep.subr.bf16.mxu0 0
  %10435 = vmatpush1.bf16.msra.mxu0 %v9918
  %10436 = vmatprep.mubr.bf16.mxu0 %v8993
  %10437 = vmatmul.mubr.bf16.gmra.mrb[0].mxu0 %v8992
  %v10438 = vpop.f32.mrb[0].mxu0
  %v10439 = vadd.f32 %v10374, %v10438
  %v10440 = vpop.f32.mrb[0].mxu0
  %v10441 = vpop.f32.mrb[0].mxu0
  %v10442 = vadd.f32 %v10377, %v10441
  %v10443 = vpop.f32.mrb[0].mxu0
  %10444 = vmatprep.mubr.bf16.mxu0 %v9009
  %10445 = vmatmul.mubr.bf16.gmra.mrb[0].mxu0 %v9008
  %v10446 = vpop.f32.mrb[0].mxu0
  %v10447 = vadd.f32 %v10382, %v10446
  %v10448 = vpop.f32.mrb[0].mxu0
  %v10449 = vpop.f32.mrb[0].mxu0
  %v10450 = vadd.f32 %v10385, %v10449
  %v10451 = vpop.f32.mrb[0].mxu0
  %10452 = vmatprep.mubr.bf16.mxu0 %v9025
  %10453 = vmatmul.mubr.bf16.gmra.mrb[0].mxu0 %v9024
  %v10454 = vpop.f32.mrb[0].mxu0
  %v10455 = vadd.f32 %v10390, %v10454
  %v10456 = vpop.f32.mrb[0].mxu0
  %v10457 = vpop.f32.mrb[0].mxu0
  %v10458 = vadd.f32 %v10393, %v10457
  %v10459 = vpop.f32.mrb[0].mxu0
  %10460 = vmatprep.mubr.bf16.mxu0 %v9041
  %10461 = vmatmul.mubr.bf16.gmra.mrb[0].mxu0 %v9040
  %v10462 = vpop.f32.mrb[0].mxu0
  %v10463 = vadd.f32 %v10398, %v10462
  %v10464 = vpop.f32.mrb[0].mxu0
  %v10465 = vpop.f32.mrb[0].mxu0
  %v10466 = vadd.f32 %v10401, %v10465
  %v10467 = vpop.f32.mrb[0].mxu0
  %10468 = vdwg.mxu0
  %10469 = vmatprep.subr.bf16.mxu0 0
  %10470 = vmatpush1.bf16.msra.mxu0 %v9919
  %10471 = vmatprep.subr.bf16.mxu0 0
  %10472 = vmatpush1.bf16.msra.mxu0 %v9920
  %10473 = vmatprep.subr.bf16.mxu0 0
  %10474 = vmatpush1.bf16.msra.mxu0 %v9921
  %10475 = vmatprep.subr.bf16.mxu0 0
  %10476 = vmatpush1.bf16.msra.mxu0 %v9922
  %10477 = vmatprep.subr.bf16.mxu0 0
  %10478 = vmatpush1.bf16.msra.mxu0 %v9923
  %10479 = vmatprep.subr.bf16.mxu0 0
  %10480 = vmatpush1.bf16.msra.mxu0 %v9924
  %10481 = vmatprep.subr.bf16.mxu0 0
  %10482 = vmatpush1.bf16.msra.mxu0 %v9925
  %10483 = vmatprep.subr.bf16.mxu0 0
  %10484 = vmatpush1.bf16.msra.mxu0 %v9926
  %10485 = vmatprep.subr.bf16.mxu0 0
  %10486 = vmatpush1.bf16.msra.mxu0 %v9927
  %10487 = vmatprep.subr.bf16.mxu0 0
  %10488 = vmatpush1.bf16.msra.mxu0 %v9928
  %10489 = vmatprep.subr.bf16.mxu0 0
  %10490 = vmatpush1.bf16.msra.mxu0 %v9929
  %10491 = vmatprep.subr.bf16.mxu0 0
  %10492 = vmatpush1.bf16.msra.mxu0 %v9930
  %10493 = vmatprep.subr.bf16.mxu0 0
  %10494 = vmatpush1.bf16.msra.mxu0 %v9931
  %10495 = vmatprep.subr.bf16.mxu0 0
  %10496 = vmatpush1.bf16.msra.mxu0 %v9932
  %10497 = vmatprep.subr.bf16.mxu0 0
  %10498 = vmatpush1.bf16.msra.mxu0 %v9933
  %10499 = vmatprep.subr.bf16.mxu0 0
  %10500 = vmatpush1.bf16.msra.mxu0 %v9934
  %10501 = vmatprep.mubr.bf16.mxu0 %v8995
  %10502 = vmatmul.mubr.bf16.gmra.mrb[0].mxu0 %v8994
  %v10503 = vpop.f32.mrb[0].mxu0
  %v10504 = vadd.f32 %v10439, %v10503
  %v10505 = vpop.f32.mrb[0].mxu0
  %v10506 = vpop.f32.mrb[0].mxu0
  %v10507 = vadd.f32 %v10442, %v10506
  %v10508 = vpop.f32.mrb[0].mxu0
  %10509 = vmatprep.mubr.bf16.mxu0 %v9011
  %10510 = vmatmul.mubr.bf16.gmra.mrb[0].mxu0 %v9010
  %v10511 = vpop.f32.mrb[0].mxu0
  %v10512 = vadd.f32 %v10447, %v10511
  %v10513 = vpop.f32.mrb[0].mxu0
  %v10514 = vpop.f32.mrb[0].mxu0
  %v10515 = vadd.f32 %v10450, %v10514
  %v10516 = vpop.f32.mrb[0].mxu0
  %10517 = vmatprep.mubr.bf16.mxu0 %v9027
  %10518 = vmatmul.mubr.bf16.gmra.mrb[0].mxu0 %v9026
  %v10519 = vpop.f32.mrb[0].mxu0
  %v10520 = vadd.f32 %v10455, %v10519
  %v10521 = vpop.f32.mrb[0].mxu0
  %v10522 = vpop.f32.mrb[0].mxu0
  %v10523 = vadd.f32 %v10458, %v10522
  %v10524 = vpop.f32.mrb[0].mxu0
  %10525 = vmatprep.mubr.bf16.mxu0 %v9043
  %10526 = vmatmul.mubr.bf16.gmra.mrb[0].mxu0 %v9042
  %v10527 = vpop.f32.mrb[0].mxu0
  %v10528 = vadd.f32 %v10463, %v10527
  %v10529 = vpop.f32.mrb[0].mxu0
  %v10530 = vpop.f32.mrb[0].mxu0
  %v10531 = vadd.f32 %v10466, %v10530
  %v10532 = vpop.f32.mrb[0].mxu0
  %10533 = vdwg.mxu0
  %10534 = vmatprep.subr.bf16.mxu0 0
  %10535 = vmatpush1.bf16.msra.mxu0 %v9935
  %10536 = vmatprep.subr.bf16.mxu0 0
  %10537 = vmatpush1.bf16.msra.mxu0 %v9936
  %10538 = vmatprep.subr.bf16.mxu0 0
  %10539 = vmatpush1.bf16.msra.mxu0 %v9937
  %10540 = vmatprep.subr.bf16.mxu0 0
  %10541 = vmatpush1.bf16.msra.mxu0 %v9938
  %10542 = vmatprep.subr.bf16.mxu0 0
  %10543 = vmatpush1.bf16.msra.mxu0 %v9939
  %10544 = vmatprep.subr.bf16.mxu0 0
  %10545 = vmatpush1.bf16.msra.mxu0 %v9940
  %10546 = vmatprep.subr.bf16.mxu0 0
  %10547 = vmatpush1.bf16.msra.mxu0 %v9941
  %10548 = vmatprep.subr.bf16.mxu0 0
  %10549 = vmatpush1.bf16.msra.mxu0 %v9942
  %10550 = vmatprep.subr.bf16.mxu0 0
  %10551 = vmatpush1.bf16.msra.mxu0 %v9943
  %10552 = vmatprep.subr.bf16.mxu0 0
  %10553 = vmatpush1.bf16.msra.mxu0 %v9944
  %10554 = vmatprep.subr.bf16.mxu0 0
  %10555 = vmatpush1.bf16.msra.mxu0 %v9945
  %10556 = vmatprep.subr.bf16.mxu0 0
  %10557 = vmatpush1.bf16.msra.mxu0 %v9946
  %10558 = vmatprep.subr.bf16.mxu0 0
  %10559 = vmatpush1.bf16.msra.mxu0 %v9947
  %10560 = vmatprep.subr.bf16.mxu0 0
  %10561 = vmatpush1.bf16.msra.mxu0 %v9948
  %10562 = vmatprep.subr.bf16.mxu0 0
  %10563 = vmatpush1.bf16.msra.mxu0 %v9949
  %10564 = vmatprep.subr.bf16.mxu0 0
  %10565 = vmatpush1.bf16.msra.mxu0 %v9950
  %10566 = vmatprep.mubr.bf16.mxu0 %v8997
  %10567 = vmatmul.mubr.bf16.gmra.mrb[0].mxu0 %v8996
  %v10568 = vpop.f32.mrb[0].mxu0
  %v10569 = vadd.f32 %v10504, %v10568
  %v10570 = vpop.f32.mrb[0].mxu0
  %v10571 = vpop.f32.mrb[0].mxu0
  %v10572 = vadd.f32 %v10507, %v10571
  %v10573 = vpop.f32.mrb[0].mxu0
  %10574 = vmatprep.mubr.bf16.mxu0 %v9013
  %10575 = vmatmul.mubr.bf16.gmra.mrb[0].mxu0 %v9012
  %v10576 = vpop.f32.mrb[0].mxu0
  %v10577 = vadd.f32 %v10512, %v10576
  %v10578 = vpop.f32.mrb[0].mxu0
  %v10579 = vpop.f32.mrb[0].mxu0
  %v10580 = vadd.f32 %v10515, %v10579
  %v10581 = vpop.f32.mrb[0].mxu0
  %10582 = vmatprep.mubr.bf16.mxu0 %v9029
  %10583 = vmatmul.mubr.bf16.gmra.mrb[0].mxu0 %v9028
  %v10584 = vpop.f32.mrb[0].mxu0
  %v10585 = vadd.f32 %v10520, %v10584
  %v10586 = vpop.f32.mrb[0].mxu0
  %v10587 = vpop.f32.mrb[0].mxu0
  %v10588 = vadd.f32 %v10523, %v10587
  %v10589 = vpop.f32.mrb[0].mxu0
  %10590 = vmatprep.mubr.bf16.mxu0 %v9045
  %10591 = vmatmul.mubr.bf16.gmra.mrb[0].mxu0 %v9044
  %v10592 = vpop.f32.mrb[0].mxu0
  %v10593 = vadd.f32 %v10528, %v10592
  %v10594 = vpop.f32.mrb[0].mxu0
  %v10595 = vpop.f32.mrb[0].mxu0
  %v10596 = vadd.f32 %v10531, %v10595
  %v10597 = vpop.f32.mrb[0].mxu0
  %10598 = vdwg.mxu0
  %v10599 = vadd.f32 %v7776, %v10569
  %v10600 = vadd.f32 %v7777, %v10572
  %v10601 = vadd.f32 %v7778, %v10577
  %v10602 = vadd.f32 %v7779, %v10580
  %v10603 = vadd.f32 %v7780, %v10585
  %v10604 = vadd.f32 %v7781, %v10588
  %v10605 = vadd.f32 %v7782, %v10593
  %v10606 = vadd.f32 %v7783, %v10596
  %s10607 = scalar_lea.vmem %s16, 1
  %v10608 = vld [vmem:[%s10607] sm:$0x1]
  %s10609 = scalar_lea.vmem %s17, 1
  %v10610 = vld [vmem:[%s10609] sm:$0x1]
  %v10611 = vsel %vm250, %v10599, 0.0
  %10612 = vadd.xlane.f32.xlu0 %v10611
  %v10613 = vpop.xlane.xlu0 %10612
  %v10614 = vsel %vm250, %v10600, 0.0
  %10615 = vadd.xlane.f32.xlu0 %v10614
  %v10616 = vpop.xlane.xlu0 %10615
  %v10617 = vsel %vm250, %v10601, 0.0
  %10618 = vadd.xlane.f32.xlu0 %v10617
  %v10619 = vpop.xlane.xlu0 %10618
  %v10620 = vsel %vm250, %v10602, 0.0
  %10621 = vadd.xlane.f32.xlu0 %v10620
  %v10622 = vpop.xlane.xlu0 %10621
  %v10623 = vsel %vm250, %v10603, 0.0
  %10624 = vadd.xlane.f32.xlu0 %v10623
  %v10625 = vpop.xlane.xlu0 %10624
  %v10626 = vsel %vm250, %v10604, 0.0
  %10627 = vadd.xlane.f32.xlu0 %v10626
  %v10628 = vpop.xlane.xlu0 %10627
  %v10629 = vsel %vm250, %v10605, 0.0
  %10630 = vadd.xlane.f32.xlu0 %v10629
  %v10631 = vpop.xlane.xlu0 %10630
  %v10632 = vsel %vm250, %v10606, 0.0
  %10633 = vadd.xlane.f32.xlu0 %v10632
  %v10634 = vpop.xlane.xlu0 %10633
  %v10635 = vmul.f32 %v10613, %v2398
  %v10636 = vmul.f32 %v10616, %v2398
  %v10637 = vmul.f32 %v10619, %v2398
  %v10638 = vmul.f32 %v10622, %v2398
  %v10639 = vmul.f32 %v10625, %v2398
  %v10640 = vmul.f32 %v10628, %v2398
  %v10641 = vmul.f32 %v10631, %v2398
  %v10642 = vmul.f32 %v10634, %v2398
  %v10643 = vsub.f32 %v10599, %v10635
  %v10644 = vsub.f32 %v10600, %v10636
  %v10645 = vsub.f32 %v10601, %v10637
  %v10646 = vsub.f32 %v10602, %v10638
  %v10647 = vsub.f32 %v10603, %v10639
  %v10648 = vsub.f32 %v10604, %v10640
  %v10649 = vsub.f32 %v10605, %v10641
  %v10650 = vsub.f32 %v10606, %v10642
  %v10651 = vmul.f32 %v10643, %v10643
  %v10652 = vmul.f32 %v10644, %v10644
  %v10653 = vmul.f32 %v10645, %v10645
  %v10654 = vmul.f32 %v10646, %v10646
  %v10655 = vmul.f32 %v10647, %v10647
  %v10656 = vmul.f32 %v10648, %v10648
  %v10657 = vmul.f32 %v10649, %v10649
  %v10658 = vmul.f32 %v10650, %v10650
  %v10659 = vsel %vm250, %v10651, 0.0
  %10660 = vadd.xlane.f32.xlu0 %v10659
  %v10661 = vpop.xlane.xlu0 %10660
  %v10662 = vsel %vm250, %v10652, 0.0
  %10663 = vadd.xlane.f32.xlu0 %v10662
  %v10664 = vpop.xlane.xlu0 %10663
  %v10665 = vsel %vm250, %v10653, 0.0
  %10666 = vadd.xlane.f32.xlu0 %v10665
  %v10667 = vpop.xlane.xlu0 %10666
  %v10668 = vsel %vm250, %v10654, 0.0
  %10669 = vadd.xlane.f32.xlu0 %v10668
  %v10670 = vpop.xlane.xlu0 %10669
  %v10671 = vsel %vm250, %v10655, 0.0
  %10672 = vadd.xlane.f32.xlu0 %v10671
  %v10673 = vpop.xlane.xlu0 %10672
  %v10674 = vsel %vm250, %v10656, 0.0
  %10675 = vadd.xlane.f32.xlu0 %v10674
  %v10676 = vpop.xlane.xlu0 %10675
  %v10677 = vsel %vm250, %v10657, 0.0
  %10678 = vadd.xlane.f32.xlu0 %v10677
  %v10679 = vpop.xlane.xlu0 %10678
  %v10680 = vsel %vm250, %v10658, 0.0
  %10681 = vadd.xlane.f32.xlu0 %v10680
  %v10682 = vpop.xlane.xlu0 %10681
  %v10683 = vmul.f32 %v10661, %v2398
  %v10684 = vmul.f32 %v10664, %v2398
  %v10685 = vmul.f32 %v10667, %v2398
  %v10686 = vmul.f32 %v10670, %v2398
  %v10687 = vmul.f32 %v10673, %v2398
  %v10688 = vmul.f32 %v10676, %v2398
  %v10689 = vmul.f32 %v10679, %v2398
  %v10690 = vmul.f32 %v10682, %v2398
  %v10691 = vadd.f32 %v10683, 1e-05
  %v10692 = vadd.f32 %v10684, 1e-05
  %v10693 = vadd.f32 %v10685, 1e-05
  %v10694 = vadd.f32 %v10686, 1e-05
  %v10695 = vadd.f32 %v10687, 1e-05
  %v10696 = vadd.f32 %v10688, 1e-05
  %v10697 = vadd.f32 %v10689, 1e-05
  %v10698 = vadd.f32 %v10690, 1e-05
  %v10699 = vrsqrt.pop %v10691
  %v10700 = vrsqrt.pop %v10692
  %v10701 = vrsqrt.pop %v10693
  %v10702 = vrsqrt.pop %v10694
  %v10703 = vrsqrt.pop %v10695
  %v10704 = vrsqrt.pop %v10696
  %v10705 = vrsqrt.pop %v10697
  %v10706 = vrsqrt.pop %v10698
  %v10707 = vmul.f32 %v10643, %v10699
  %v10708 = vmul.f32 %v10644, %v10700
  %v10709 = vmul.f32 %v10645, %v10701
  %v10710 = vmul.f32 %v10646, %v10702
  %v10711 = vmul.f32 %v10647, %v10703
  %v10712 = vmul.f32 %v10648, %v10704
  %v10713 = vmul.f32 %v10649, %v10705
  %v10714 = vmul.f32 %v10650, %v10706
  %v10716 = vlaneseq
  %v10717 = vshrl.u32 %v10716, 7
  %v10718 = vsub.s32 0, %v10717
  %v10719 = vrot.slane %v10608, %v10718
  %v10721 = vmul.f32 %v10707, %v10719
  %v10722 = vmul.f32 %v10708, %v10719
  %v10723 = vmul.f32 %v10709, %v10719
  %v10724 = vmul.f32 %v10710, %v10719
  %v10725 = vmul.f32 %v10711, %v10719
  %v10726 = vmul.f32 %v10712, %v10719
  %v10727 = vmul.f32 %v10713, %v10719
  %v10728 = vmul.f32 %v10714, %v10719
  %v10730 = vlaneseq
  %v10731 = vshrl.u32 %v10730, 7
  %v10732 = vsub.s32 0, %v10731
  %v10733 = vrot.slane %v10610, %v10732
  %v10735 = vadd.f32 %v10721, %v10733
  %v10736 = vadd.f32 %v10722, %v10733
  %v10737 = vadd.f32 %v10723, %v10733
  %v10738 = vadd.f32 %v10724, %v10733
  %v10739 = vadd.f32 %v10725, %v10733
  %v10740 = vadd.f32 %v10726, %v10733
  %v10741 = vadd.f32 %v10727, %v10733
  %v10742 = vadd.f32 %v10728, %v10733
  %v10743 = vld [vmem:[%s3] sm:$0x3]
  %v10745 = vsel %vm250, %v10743, 0
  %10747 = vmatprep.subr.mxu0 0.0
  %10748 = vmatpush1.msra.mxu0 %v10735
  %10749 = vmatprep.subr.mxu0 0.0
  %10750 = vmatpush1.msra.mxu0 %v10736
  %10751 = vmatprep.subr.mxu0 0.0
  %10752 = vmatpush1.msra.mxu0 %v10737
  %10753 = vmatprep.subr.mxu0 0.0
  %10754 = vmatpush1.msra.mxu0 %v10738
  %10755 = vmatprep.subr.mxu0 0.0
  %10756 = vmatpush1.msra.mxu0 %v10739
  %10757 = vmatprep.subr.mxu0 0.0
  %10758 = vmatpush1.msra.mxu0 %v10740
  %10759 = vmatprep.subr.mxu0 0.0
  %10760 = vmatpush1.msra.mxu0 %v10741
  %10761 = vmatprep.subr.mxu0 0.0
  %10762 = vmatpush1.msra.mxu0 %v10742
  %10763 = vmatprep.subr.mxu0 0.0
  %10764 = vmatpush1.msra.mxu0 0.0
  %10765 = vmatprep.subr.mxu0 0.0
  %10766 = vmatpush1.msra.mxu0 0.0
  %10767 = vmatprep.subr.mxu0 0.0
  %10768 = vmatpush1.msra.mxu0 0.0
  %10769 = vmatprep.subr.mxu0 0.0
  %10770 = vmatpush1.msra.mxu0 0.0
  %10771 = vmatprep.subr.mxu0 0.0
  %10772 = vmatpush1.msra.mxu0 0.0
  %10773 = vmatprep.subr.mxu0 0.0
  %10774 = vmatpush1.msra.mxu0 0.0
  %10775 = vmatprep.subr.mxu0 0.0
  %10776 = vmatpush1.msra.mxu0 0.0
  %10777 = vmatprep.subr.mxu0 0.0
  %10778 = vmatpush1.msra.mxu0 0.0
  %10779 = vmatprep.subr.mxu0 0.0
  %10780 = vmatpush1.msra.mxu0 0.0
  %10781 = vmatprep.subr.mxu0 0.0
  %10782 = vmatpush1.msra.mxu0 0.0
  %10783 = vmatprep.subr.mxu0 0.0
  %10784 = vmatpush1.msra.mxu0 0.0
  %10785 = vmatprep.subr.mxu0 0.0
  %10786 = vmatpush1.msra.mxu0 0.0
  %10787 = vmatprep.subr.mxu0 0.0
  %10788 = vmatpush1.msra.mxu0 0.0
  %10789 = vmatprep.subr.mxu0 0.0
  %10790 = vmatpush1.msra.mxu0 0.0
  %10791 = vmatprep.subr.mxu0 0.0
  %10792 = vmatpush1.msra.mxu0 0.0
  %10793 = vmatprep.subr.mxu0 0.0
  %10794 = vmatpush1.msra.mxu0 0.0
  %10795 = vmatprep.subr.mxu0 0.0
  %10796 = vmatpush1.msra.mxu0 0.0
  %10797 = vmatprep.subr.mxu0 0.0
  %10798 = vmatpush1.msra.mxu0 0.0
  %10799 = vmatprep.subr.mxu0 0.0
  %10800 = vmatpush1.msra.mxu0 0.0
  %10801 = vmatprep.subr.mxu0 0.0
  %10802 = vmatpush1.msra.mxu0 0.0
  %10803 = vmatprep.subr.mxu0 0.0
  %10804 = vmatpush1.msra.mxu0 0.0
  %10805 = vmatprep.subr.mxu0 0.0
  %10806 = vmatpush1.msra.mxu0 0.0
  %10807 = vmatprep.subr.mxu0 0.0
  %10808 = vmatpush1.msra.mxu0 0.0
  %10809 = vmatprep.subr.mxu0 0.0
  %10810 = vmatpush1.msra.mxu0 0.0
  %10811 = vmatprep.mubr.f32.mxu0 0.0
  %10812 = vmatmul.mubr.f32.gmra.mrb[0].mxu0 %v10745
  %v10813 = vpop.f32.mrb[0].mxu0
  %v10814 = vadd.f32 0.0, %v10813
  %v10815 = vpop.f32.mrb[0].mxu0
  %10816 = vdwg.mxu0
  %vm10817 = vcmask 517120
  %10818 = vst.msk [vmem:[%s18] sm:$0x3] %vm10817, %v10814
  // Predicated region
  $region74: #{earthquake_transformer_forward.1} parent=0 // pred_check
    _
  $region75: #{earthquake_transformer_forward.1} parent=0 // pred_check_branch
    %10820 = sbr.rel (0) target = $region77
  $region76: #{earthquake_transformer_forward.1} parent=0 // pred_region
    _
  $region77: #{earthquake_transformer_forward.1} parent=0 // pred_fallthru
    _
  // Predicated region
  $region78: #{earthquake_transformer_forward.1} parent=0 // pred_check
    _
  $region79: #{earthquake_transformer_forward.1} parent=0 // pred_check_branch
    %10822 = sbr.rel (0) target = $region81
  $region80: #{earthquake_transformer_forward.1} parent=0 // pred_region
    _
  $region81: #{earthquake_transformer_forward.1} parent=0 // pred_fallthru
    _

</llo_original>
